<compile_context>
chip_gen: v6e
topology: v6e:2x2x1
jax: 0.10.0
libtpu: 0.0.40
codegen_flags: <defaults>
</compile_context>

<pallas_src>
from functools import partial

import numpy as np
import jax
import jax.numpy as jnp
from jax.experimental import pallas as pl
from jax.experimental.pallas import tpu as pltpu

EPS_MAG = 1e-7          # torch: magnitude = |fft| + 1e-7
BN_EPS = 1e-5           # torch BatchNorm2d default eps
_TAN_PI_8 = 0.41421356237309503
_PI = float(np.pi)
_PI_2 = float(np.pi / 2.0)
_PI_4 = float(np.pi / 4.0)

# f32-accurate MXU path for the DFT matmuls.  Drop to Precision.HIGH for large
# H/W only after re-validating phase/magnitude error against the reference.
DFT_PRECISION = jax.lax.Precision.HIGHEST


def _atan2(y, x):
    """float32-accurate atan2 from VPU ops only (Cephes atanf polynomial).

    Matches torch.angle to ~1e-6 rad, including x<0,y==0 -> pi and (0,0) -> 0.
    """
    ax = jnp.abs(x)
    ay = jnp.abs(y)
    mx = jnp.maximum(ax, ay)
    mn = jnp.minimum(ax, ay)
    a = mn / jnp.where(mx > 0.0, mx, 1.0)           # a in [0, 1]
    red = a > _TAN_PI_8                              # reduce to [-tan(pi/8), tan(pi/8)]
    a = jnp.where(red, (a - 1.0) / (a + 1.0), a)
    z = a * a
    p = (((8.05374449538e-2 * z - 1.38776856032e-1) * z
          + 1.99777106478e-1) * z - 3.33329491539e-1) * z * a + a
    r = jnp.where(red, p + _PI_4, p)
    r = jnp.where(ay > ax, _PI_2 - r, r)
    r = jnp.where(x < 0.0, _PI - r, r)
    return jnp.where(y < 0.0, -r, r)


def _lfsm_kernel(x_ref, cw_ref, sw_ref, chh_ref, shh_ref,
                 wc_ref, b1_ref, gamma_ref, beta_ref, w2_ref, misc_ref,
                 high_ref, low_ref, phase_ref, y1_ref, *, num_images, img_h):
    B = num_images
    H = img_h
    BH, W = x_ref.shape[1], x_ref.shape[2]          # B*H rows, spatial width
    Wfp = cw_ref.shape[1]                           # lane-padded freq width
    Wf = W // 2 + 1                                 # real rFFT width
    C_MID = b1_ref.shape[0]                         # 8
    s = pl.program_id(0)                            # stream: 0 = rgb, 1 = ir

    def mm(a, b):
        return jnp.dot(a, b, preferred_element_type=jnp.float32,
                       precision=DFT_PRECISION)

    x = x_ref[0]                                    # (B*H, W)

    # ---- batched 2-D rFFT: one column-DFT matmul for the whole batch, then
    #      the row DFT through the block-diagonal (B*H, B*H) cos/sin matrices.
    yre = mm(x, cw_ref[...])                        # (B*H, Wfp)
    yim = -mm(x, sw_ref[...])
    chh = chh_ref[...]
    shh = shh_ref[...]
    xre = mm(chh, yre) + mm(shh, yim)
    xim = mm(chh, yim) - mm(shh, yre)

    # ---- phase = angle(fft) for the whole batch (no re/im HBM writeback)
    phase_ref[0] = _atan2(xim, xre)

    row = jax.lax.broadcasted_iota(jnp.int32, (BH, Wfp), 0)
    col = jax.lax.broadcasted_iota(jnp.int32, (BH, Wfp), 1)
    in_cols = col < Wf                              # real (non-padded) columns
    top = row == 0                                  # first row of each image
    bot = row == (H - 1)                            # last row of each image
    for b in range(1, B):                           # cheap: 2(B-1) mask ops, traced once
        top = jnp.logical_or(top, row == b * H)
        bot = jnp.logical_or(bot, row == (b * H + H - 1))

    mag = jnp.sqrt(xre * xre + xim * xim) + EPS_MAG
    mag = jnp.where(in_cols, mag, 0.0)              # keep padded lanes at 0

    # ---- 3x3 "same" conv windows via XLU rolls + border masks, whole batch.
    #      window(di,dj)[i,j] = zero-padded mag[i+di-1, j+dj-1] (per image).
    up = jnp.where(top, 0.0, pltpu.roll(mag, shift=1, axis=0))          # di=0
    down = jnp.where(bot, 0.0, pltpu.roll(mag, shift=BH - 1, axis=0))   # di=2
    wins = []
    for r in (up, mag, down):
        left = jnp.where(col == 0, 0.0, pltpu.roll(r, shift=1, axis=1))            # dj=0
        right = jnp.where(col == Wf - 1, 0.0, pltpu.roll(r, shift=Wfp - 1, axis=1))  # dj=2
        wins.extend([left, r, right])               # tap order t = di*3 + dj
    # NOTE: the lane rolls leak real columns into padded lanes; this is safe
    # because BN stats mask with in_cols and the wrapper slices outputs to :Wf.

    # ---- folded (3x3 conv 1->16) ∘ (1x1 conv 16->8), BN stats fused in.
    inv_n = 1.0 / float(B * H * Wf)
    sums = []
    sumsqs = []
    for o in range(C_MID):
        acc = wins[0] * wc_ref[s, o * 9]
        for t in range(1, 9):
            acc = acc + wins[t] * wc_ref[s, o * 9 + t]
        acc = acc + b1_ref[o]
        y1_ref[o] = acc                             # explicit VMEM scratch plane
        m = jnp.where(in_cols, acc, 0.0)
        sums.append(jnp.sum(m))
        sumsqs.append(jnp.sum(m * m))

    # ---- BatchNorm2d (training-mode biased batch stats, per stream) + ReLU,
    #      1x1 conv 8->1 (+bias), sigmoid, learnable-threshold gating, clamp.
    b2 = misc_ref[0]
    thr = misc_ref[1]
    sf = misc_ref[2]
    y2 = None
    for o in range(C_MID):
        mean = sums[o] * inv_n
        var = jnp.maximum(sumsqs[o] * inv_n - mean * mean, 0.0)
        scale = gamma_ref[o] * jax.lax.rsqrt(var + BN_EPS)
        shift = beta_ref[o] - mean * scale
        act = jnp.maximum(y1_ref[o] * scale + shift, 0.0)   # normalize in place
        y2 = act * w2_ref[o] if y2 is None else y2 + act * w2_ref[o]

    filt = jax.nn.sigmoid(y2 + b2)                  # EUP path
    gate = jax.nn.sigmoid((filt - thr) * sf)
    high_ref[0] = jnp.clip(filt * gate, 0.0, 5.0)
    low_ref[0] = jnp.clip(filt * (1.0 - gate), 0.0, 5.0)


def _dft_matrices(num_images, H, W, Wfp):
    """DFT matmul matrices.  Column-DFT cos/sin are zero-padded to Wfp lanes;
    the row-DFT matrices are block-diagonal over the batch so the row DFT of
    all images is a single matmul."""
    Wf = W // 2 + 1
    ang_w = 2.0 * np.pi * np.outer(np.arange(W), np.arange(Wf)) / W
    cw = np.zeros((W, Wfp), np.float32)
    sw = np.zeros((W, Wfp), np.float32)
    cw[:, :Wf] = np.cos(ang_w)
    sw[:, :Wf] = np.sin(ang_w)
    ang_h = 2.0 * np.pi * np.outer(np.arange(H), np.arange(H)) / H
    ch = np.cos(ang_h).astype(np.float32)
    sh = np.sin(ang_h).astype(np.float32)
    BH = num_images * H
    chh_bd = np.zeros((BH, BH), np.float32)
    shh_bd = np.zeros((BH, BH), np.float32)
    for b in range(num_images):
        sl = slice(b * H, (b + 1) * H)
        chh_bd[sl, sl] = ch
        shh_bd[sl, sl] = sh
    return (jnp.asarray(cw), jnp.asarray(sw),
            jnp.asarray(chh_bd), jnp.asarray(shh_bd))


def _vmem_limit_bytes(kernel_buffer_bytes):
    """Generation-aware VMEM limit: >= default 32 MiB, scaled to the actual
    buffers with margin, capped at ~70% of physical VMEM (protects v7x)."""
    phys = 128 * 1024 * 1024
    try:
        info = pltpu.get_tpu_info()
        phys = int(getattr(info, "vmem_capacity_bytes", phys) or phys)
    except Exception:
        pass
    cap = int(phys * 0.7)
    want = max(32 * 1024 * 1024, 4 * int(kernel_buffer_bytes))
    return min(want, cap)


def init_lfsm_params(key):
    k = jax.random.split(key, 6)
    rgb_filter = jax.random.normal(k[0], (16, 1, 3, 3), jnp.float32) * 0.01
    ir_filter = jax.random.normal(k[1], (16, 1, 3, 3), jnp.float32) * 0.01
    w1 = jax.random.normal(k[2], (8, 16, 1, 1), jnp.float32) * 0.1   # Conv2d(16,8,1)
    b1 = jax.random.normal(k[3], (8,), jnp.float32) * 0.1
    w2 = jax.random.normal(k[4], (1, 8, 1, 1), jnp.float32) * 0.1    # Conv2d(8,1,1)
    b2 = jax.random.normal(k[5], (1,), jnp.float32) * 0.1
    misc = jnp.concatenate(
        [b2.reshape(1),
         jnp.array([0.5, 5.0], jnp.float32)])   # [conv2 bias, threshold, scale]
    return {
        "rgb_filter": rgb_filter.reshape(16, 9),
        "ir_filter": ir_filter.reshape(16, 9),
        "w1": w1.reshape(8, 16),
        "b1": b1,
        "gamma": jnp.ones((8,), jnp.float32),    # BatchNorm2d weight
        "beta": jnp.zeros((8,), jnp.float32),    # BatchNorm2d bias
        "w2": w2.reshape(8),
        "misc": misc,
    }


def lfsm_forward(params, vis_img, ir_img):
    B, C, H, W = vis_img.shape
    assert C == 1 and ir_img.shape == vis_img.shape, "LFSM expects (B,1,H,W) pairs"
    Wf = W // 2 + 1
    Wfp = ((Wf + 127) // 128) * 128            # lane-dense padded freq width
    BH = B * H

    # Stack both streams on a leading axis; flatten (B,H) -> rows for the kernel.
    x = jnp.stack([vis_img[:, 0], ir_img[:, 0]], axis=0)
    x = x.astype(jnp.float32).reshape(2, BH, W)
    cw, sw, chh_bd, shh_bd = _dft_matrices(B, H, W, Wfp)

    # Fold the 1x1 conv (16->8) into each stream's 3x3 filter (exact, linear).
    hdot = lambda a, b: jnp.dot(a, b, precision=jax.lax.Precision.HIGHEST)
    wc = jnp.stack([hdot(params["w1"], params["rgb_filter"]),
                    hdot(params["w1"], params["ir_filter"])], axis=0)   # (2, 8, 9)
    wc = wc.reshape(2, 72)

    smem = pl.BlockSpec(memory_space=pltpu.MemorySpace.SMEM)
    const2d = lambda shape: pl.BlockSpec(shape, lambda s: (0, 0))

    out_sd = jax.ShapeDtypeStruct((2, BH, Wfp), jnp.float32)
    out_spec = pl.BlockSpec((1, BH, Wfp), lambda s: (s, 0, 0))

    # Rough resident-buffer accounting for the VMEM limit (double buffers on
    # pipelined operands, the y1 scratch and in-flight activation planes).
    buf_bytes = 4 * (2 * BH * W                     # x
                     + 2 * 2 * W * Wfp              # cw, sw
                     + 2 * 2 * BH * BH              # chh_bd, shh_bd
                     + 3 * 2 * BH * Wfp             # high/low/phase blocks
                     + 8 * BH * Wfp                 # y1 scratch
                     + 24 * BH * Wfp)               # windows / fft temporaries

    kernel = partial(_lfsm_kernel, num_images=B, img_h=H)

    high, low, phase = pl.pallas_call(
        kernel,
        out_shape=(out_sd, out_sd, out_sd),
        grid=(2,),                                       # stream axis: rgb, ir
        in_specs=[pl.BlockSpec((1, BH, W), lambda s: (s, 0, 0)),   # images
                  const2d((W, Wfp)), const2d((W, Wfp)),            # cw, sw
                  const2d((BH, BH)), const2d((BH, BH)),            # chh_bd, shh_bd
                  smem, smem, smem, smem, smem, smem],             # small params
        out_specs=(out_spec, out_spec, out_spec),
        scratch_shapes=[pltpu.VMEM((8, BH, Wfp), jnp.float32)],    # pre-BN planes
        compiler_params=pltpu.CompilerParams(
            dimension_semantics=("parallel",),           # both TCs on v7x
            vmem_limit_bytes=_vmem_limit_bytes(buf_bytes)),
    )(x, cw, sw, chh_bd, shh_bd,
      wc, params["b1"], params["gamma"], params["beta"], params["w2"],
      params["misc"])

    def pack(arr, stream):                               # -> (B, 1, H, Wf) NCHW
        return arr[stream].reshape(B, H, Wfp)[:, :, :Wf][:, None, :, :]

    def comp(stream):
        return {"low_freq": pack(low, stream),
                "high_freq": pack(high, stream),
                "phase": pack(phase, stream),
                "spatial_size": (H, W),
                "freq_size": (H, Wf)}

    return {"rgb": comp(0), "ir": comp(1)}


if __name__ == "__main__":
    key = jax.random.PRNGKey(0)
    kp, kv, ki = jax.random.split(key, 3)
    params = init_lfsm_params(kp)

    B, H, W = 2, 16, 16
    vis_img = jax.random.normal(kv, (B, 1, H, W), jnp.float32)
    ir_img = jax.random.normal(ki, (B, 1, H, W), jnp.float32)

    out = lfsm_forward(params, vis_img, ir_img)
    arrays = [out[s][k] for s in ("rgb", "ir")
              for k in ("high_freq", "low_freq", "phase")]
    jax.block_until_ready(arrays)
    print("KERNEL_OK")
</pallas_src>

<mosaic_0001>
module attributes {stable_mosaic.version = 11 : i64} {
  func.func @_lfsm_kernel(%arg0: i32, %arg1: memref<1x32x16xf32, #tpu.memory_space<vmem>>, %arg2: memref<16x128xf32, #tpu.memory_space<vmem>>, %arg3: memref<16x128xf32, #tpu.memory_space<vmem>>, %arg4: memref<32x32xf32, #tpu.memory_space<vmem>>, %arg5: memref<32x32xf32, #tpu.memory_space<vmem>>, %arg6: memref<2x72xf32, #tpu.memory_space<smem>>, %arg7: memref<8xf32, #tpu.memory_space<smem>>, %arg8: memref<8xf32, #tpu.memory_space<smem>>, %arg9: memref<8xf32, #tpu.memory_space<smem>>, %arg10: memref<8xf32, #tpu.memory_space<smem>>, %arg11: memref<3xf32, #tpu.memory_space<smem>>, %arg12: memref<1x32x128xf32, #tpu.memory_space<vmem>>, %arg13: memref<1x32x128xf32, #tpu.memory_space<vmem>>, %arg14: memref<1x32x128xf32, #tpu.memory_space<vmem>>, %arg15: memref<8x32x128xf32, #tpu.memory_space<vmem>>) attributes {dimension_semantics = [#tpu.dimension_semantics<parallel>], iteration_bounds = array<i64: 2>, scalar_prefetch = 0 : i64, scratch_operands = 1 : i64, tpu.core_type = #tpu.core_type<tc>, window_params = [{transform_indices = @transform_0, window_bounds = array<i64: 1, 32, 16>}, {pipeline_mode = #tpu.pipeline_mode<synchronous>, transform_indices = @transform_1, window_bounds = array<i64: 16, 128>}, {pipeline_mode = #tpu.pipeline_mode<synchronous>, transform_indices = @transform_2, window_bounds = array<i64: 16, 128>}, {pipeline_mode = #tpu.pipeline_mode<synchronous>, transform_indices = @transform_3, window_bounds = array<i64: 32, 32>}, {pipeline_mode = #tpu.pipeline_mode<synchronous>, transform_indices = @transform_4, window_bounds = array<i64: 32, 32>}, {transform_indices = @transform_5, window_bounds = array<i64: 2, 72>}, {transform_indices = @transform_6, window_bounds = array<i64: 8>}, {transform_indices = @transform_7, window_bounds = array<i64: 8>}, {transform_indices = @transform_8, window_bounds = array<i64: 8>}, {transform_indices = @transform_9, window_bounds = array<i64: 8>}, {transform_indices = @transform_10, window_bounds = array<i64: 3>}, {transform_indices = @transform_11, window_bounds = array<i64: 1, 32, 128>}, {transform_indices = @transform_12, window_bounds = array<i64: 1, 32, 128>}, {transform_indices = @transform_13, window_bounds = array<i64: 1, 32, 128>}]} {
    %c0 = arith.constant 0 : index
    %c0_0 = arith.constant 0 : index
    %c0_1 = arith.constant 0 : index
    %0 = vector.load %arg1[%c0, %c0_0, %c0_1] : memref<1x32x16xf32, #tpu.memory_space<vmem>>, vector<1x32x16xf32>
    %1 = vector.shape_cast %0 : vector<1x32x16xf32> to vector<32x16xf32>
    %c0_2 = arith.constant 0 : index
    %c0_3 = arith.constant 0 : index
    %2 = vector.load %arg2[%c0_2, %c0_3] : memref<16x128xf32, #tpu.memory_space<vmem>>, vector<16x128xf32>
    %cst = arith.constant dense<0.000000e+00> : vector<32x128xf32>
    %3 = tpu.matmul %1, %2, %cst {dimension_numbers = #tpu.dot_dimension_numbers<[1], [0], [0], [1], [0, 0, 1, 1], [], []>, precision = #tpu.contract_precision<fp32>} : vector<32x16xf32>, vector<16x128xf32>, vector<32x128xf32> -> vector<32x128xf32>
    %c0_4 = arith.constant 0 : index
    %c0_5 = arith.constant 0 : index
    %4 = vector.load %arg3[%c0_4, %c0_5] : memref<16x128xf32, #tpu.memory_space<vmem>>, vector<16x128xf32>
    %cst_6 = arith.constant dense<0.000000e+00> : vector<32x128xf32>
    %5 = tpu.matmul %1, %4, %cst_6 {dimension_numbers = #tpu.dot_dimension_numbers<[1], [0], [0], [1], [0, 0, 1, 1], [], []>, precision = #tpu.contract_precision<fp32>} : vector<32x16xf32>, vector<16x128xf32>, vector<32x128xf32> -> vector<32x128xf32>
    %cst_7 = arith.constant 0.000000e+00 : f32
    %6 = vector.broadcast %cst_7 : f32 to vector<32x128xf32>
    %7 = arith.subf %6, %5 : vector<32x128xf32>
    %c0_8 = arith.constant 0 : index
    %c0_9 = arith.constant 0 : index
    %8 = vector.load %arg4[%c0_8, %c0_9] : memref<32x32xf32, #tpu.memory_space<vmem>>, vector<32x32xf32>
    %c0_10 = arith.constant 0 : index
    %c0_11 = arith.constant 0 : index
    %9 = vector.load %arg5[%c0_10, %c0_11] : memref<32x32xf32, #tpu.memory_space<vmem>>, vector<32x32xf32>
    %cst_12 = arith.constant dense<0.000000e+00> : vector<32x128xf32>
    %10 = tpu.matmul %8, %3, %cst_12 {dimension_numbers = #tpu.dot_dimension_numbers<[1], [0], [0], [1], [0, 0, 1, 1], [], []>, precision = #tpu.contract_precision<fp32>} : vector<32x32xf32>, vector<32x128xf32>, vector<32x128xf32> -> vector<32x128xf32>
    %cst_13 = arith.constant dense<0.000000e+00> : vector<32x128xf32>
    %11 = tpu.matmul %9, %7, %cst_13 {dimension_numbers = #tpu.dot_dimension_numbers<[1], [0], [0], [1], [0, 0, 1, 1], [], []>, precision = #tpu.contract_precision<fp32>} : vector<32x32xf32>, vector<32x128xf32>, vector<32x128xf32> -> vector<32x128xf32>
    %12 = arith.addf %10, %11 : vector<32x128xf32>
    %cst_14 = arith.constant dense<0.000000e+00> : vector<32x128xf32>
    %13 = tpu.matmul %8, %7, %cst_14 {dimension_numbers = #tpu.dot_dimension_numbers<[1], [0], [0], [1], [0, 0, 1, 1], [], []>, precision = #tpu.contract_precision<fp32>} : vector<32x32xf32>, vector<32x128xf32>, vector<32x128xf32> -> vector<32x128xf32>
    %cst_15 = arith.constant dense<0.000000e+00> : vector<32x128xf32>
    %14 = tpu.matmul %9, %3, %cst_15 {dimension_numbers = #tpu.dot_dimension_numbers<[1], [0], [0], [1], [0, 0, 1, 1], [], []>, precision = #tpu.contract_precision<fp32>} : vector<32x32xf32>, vector<32x128xf32>, vector<32x128xf32> -> vector<32x128xf32>
    %15 = arith.subf %13, %14 : vector<32x128xf32>
    %16 = math.absf %12 : vector<32x128xf32>
    %17 = math.absf %15 : vector<32x128xf32>
    %18 = arith.maximumf %16, %17 : vector<32x128xf32>
    %19 = arith.minimumf %16, %17 : vector<32x128xf32>
    %cst_16 = arith.constant 0.000000e+00 : f32
    %20 = vector.broadcast %cst_16 : f32 to vector<32x128xf32>
    %21 = arith.cmpf ogt, %18, %20 : vector<32x128xf32>
    %cst_17 = arith.constant 1.000000e+00 : f32
    %22 = vector.broadcast %cst_17 : f32 to vector<32x128xf32>
    %23 = arith.select %21, %18, %22 : vector<32x128xi1>, vector<32x128xf32>
    %24 = arith.divf %19, %23 : vector<32x128xf32>
    %cst_18 = arith.constant 0.414213568 : f32
    %25 = vector.broadcast %cst_18 : f32 to vector<32x128xf32>
    %26 = arith.cmpf ogt, %24, %25 : vector<32x128xf32>
    %cst_19 = arith.constant 1.000000e+00 : f32
    %27 = vector.broadcast %cst_19 : f32 to vector<32x128xf32>
    %28 = arith.subf %24, %27 : vector<32x128xf32>
    %cst_20 = arith.constant 1.000000e+00 : f32
    %29 = vector.broadcast %cst_20 : f32 to vector<32x128xf32>
    %30 = arith.addf %24, %29 : vector<32x128xf32>
    %31 = arith.divf %28, %30 : vector<32x128xf32>
    %32 = arith.select %26, %31, %24 : vector<32x128xi1>, vector<32x128xf32>
    %33 = arith.mulf %32, %32 : vector<32x128xf32>
    %cst_21 = arith.constant 0.0805374458 : f32
    %34 = vector.broadcast %cst_21 : f32 to vector<32x128xf32>
    %35 = arith.mulf %34, %33 : vector<32x128xf32>
    %cst_22 = arith.constant 0.138776854 : f32
    %36 = vector.broadcast %cst_22 : f32 to vector<32x128xf32>
    %37 = arith.subf %35, %36 : vector<32x128xf32>
    %38 = arith.mulf %37, %33 : vector<32x128xf32>
    %cst_23 = arith.constant 0.199777111 : f32
    %39 = vector.broadcast %cst_23 : f32 to vector<32x128xf32>
    %40 = arith.addf %38, %39 : vector<32x128xf32>
    %41 = arith.mulf %40, %33 : vector<32x128xf32>
    %cst_24 = arith.constant 0.333329499 : f32
    %42 = vector.broadcast %cst_24 : f32 to vector<32x128xf32>
    %43 = arith.subf %41, %42 : vector<32x128xf32>
    %44 = arith.mulf %43, %33 : vector<32x128xf32>
    %45 = arith.mulf %44, %32 : vector<32x128xf32>
    %46 = arith.addf %45, %32 : vector<32x128xf32>
    %cst_25 = arith.constant 0.785398185 : f32
    %47 = vector.broadcast %cst_25 : f32 to vector<32x128xf32>
    %48 = arith.addf %46, %47 : vector<32x128xf32>
    %49 = arith.select %26, %48, %46 : vector<32x128xi1>, vector<32x128xf32>
    %50 = arith.cmpf ogt, %17, %16 : vector<32x128xf32>
    %cst_26 = arith.constant 1.57079637 : f32
    %51 = vector.broadcast %cst_26 : f32 to vector<32x128xf32>
    %52 = arith.subf %51, %49 : vector<32x128xf32>
    %53 = arith.select %50, %52, %49 : vector<32x128xi1>, vector<32x128xf32>
    %cst_27 = arith.constant 0.000000e+00 : f32
    %54 = vector.broadcast %cst_27 : f32 to vector<32x128xf32>
    %55 = arith.cmpf olt, %12, %54 : vector<32x128xf32>
    %cst_28 = arith.constant 3.14159274 : f32
    %56 = vector.broadcast %cst_28 : f32 to vector<32x128xf32>
    %57 = arith.subf %56, %53 : vector<32x128xf32>
    %58 = arith.select %55, %57, %53 : vector<32x128xi1>, vector<32x128xf32>
    %cst_29 = arith.constant 0.000000e+00 : f32
    %59 = vector.broadcast %cst_29 : f32 to vector<32x128xf32>
    %60 = arith.cmpf olt, %15, %59 : vector<32x128xf32>
    %cst_30 = arith.constant 0.000000e+00 : f32
    %61 = vector.broadcast %cst_30 : f32 to vector<32x128xf32>
    %62 = arith.subf %61, %58 : vector<32x128xf32>
    %63 = arith.select %60, %62, %58 : vector<32x128xi1>, vector<32x128xf32>
    %c0_31 = arith.constant 0 : index
    %c0_32 = arith.constant 0 : index
    %c0_33 = arith.constant 0 : index
    %64 = vector.load %arg14[%c0_31, %c0_32, %c0_33] : memref<1x32x128xf32, #tpu.memory_space<vmem>>, vector<1x32x128xf32>
    %65 = vector.shape_cast %64 : vector<1x32x128xf32> to vector<32x128xf32>
    %66 = vector.shape_cast %63 : vector<32x128xf32> to vector<1x32x128xf32>
    tpu.vector_store %arg14[%c0_31, %c0_32, %c0_33], %66 {strides = array<i32>} : memref<1x32x128xf32, #tpu.memory_space<vmem>>, vector<1x32x128xf32>,
    %67 = tpu.iota {dimensions = array<i32: 0>} : vector<32x128xi32>
    %68 = tpu.iota {dimensions = array<i32: 1>} : vector<32x128xi32>
    %c9_i32 = arith.constant 9 : i32
    %69 = vector.broadcast %c9_i32 : i32 to vector<32x128xi32>
    %70 = arith.cmpi slt, %68, %69 : vector<32x128xi32>
    %c0_i32 = arith.constant 0 : i32
    %71 = vector.broadcast %c0_i32 : i32 to vector<32x128xi32>
    %72 = arith.cmpi eq, %67, %71 : vector<32x128xi32>
    %c15_i32 = arith.constant 15 : i32
    %73 = vector.broadcast %c15_i32 : i32 to vector<32x128xi32>
    %74 = arith.cmpi eq, %67, %73 : vector<32x128xi32>
    %c16_i32 = arith.constant 16 : i32
    %75 = vector.broadcast %c16_i32 : i32 to vector<32x128xi32>
    %76 = arith.cmpi eq, %67, %75 : vector<32x128xi32>
    %77 = arith.ori %72, %76 : vector<32x128xi1>
    %c31_i32 = arith.constant 31 : i32
    %78 = vector.broadcast %c31_i32 : i32 to vector<32x128xi32>
    %79 = arith.cmpi eq, %67, %78 : vector<32x128xi32>
    %80 = arith.ori %74, %79 : vector<32x128xi1>
    %81 = arith.mulf %12, %12 : vector<32x128xf32>
    %82 = arith.mulf %15, %15 : vector<32x128xf32>
    %83 = arith.addf %81, %82 : vector<32x128xf32>
    %84 = math.sqrt %83 : vector<32x128xf32>
    %cst_34 = arith.constant 1.000000e-07 : f32
    %85 = vector.broadcast %cst_34 : f32 to vector<32x128xf32>
    %86 = arith.addf %84, %85 : vector<32x128xf32>
    %cst_35 = arith.constant 0.000000e+00 : f32
    %87 = vector.broadcast %cst_35 : f32 to vector<32x128xf32>
    %88 = arith.select %70, %86, %87 : vector<32x128xi1>, vector<32x128xf32>
    %c1_i32 = arith.constant 1 : i32
    %89 = tpu.dynamic_rotate %88 by %c1_i32 dim 0 : vector<32x128xf32>, i32 -> vector<32x128xf32>
    %cst_36 = arith.constant 0.000000e+00 : f32
    %90 = vector.broadcast %cst_36 : f32 to vector<32x128xf32>
    %91 = arith.select %77, %90, %89 : vector<32x128xi1>, vector<32x128xf32>
    %c31_i32_37 = arith.constant 31 : i32
    %92 = tpu.dynamic_rotate %88 by %c31_i32_37 dim 0 : vector<32x128xf32>, i32 -> vector<32x128xf32>
    %cst_38 = arith.constant 0.000000e+00 : f32
    %93 = vector.broadcast %cst_38 : f32 to vector<32x128xf32>
    %94 = arith.select %80, %93, %92 : vector<32x128xi1>, vector<32x128xf32>
    %c0_i32_39 = arith.constant 0 : i32
    %95 = vector.broadcast %c0_i32_39 : i32 to vector<32x128xi32>
    %96 = arith.cmpi eq, %68, %95 : vector<32x128xi32>
    %c1_i32_40 = arith.constant 1 : i32
    %97 = tpu.dynamic_rotate %91 by %c1_i32_40 dim 1 : vector<32x128xf32>, i32 -> vector<32x128xf32>
    %cst_41 = arith.constant 0.000000e+00 : f32
    %98 = vector.broadcast %cst_41 : f32 to vector<32x128xf32>
    %99 = arith.select %96, %98, %97 : vector<32x128xi1>, vector<32x128xf32>
    %c8_i32 = arith.constant 8 : i32
    %100 = vector.broadcast %c8_i32 : i32 to vector<32x128xi32>
    %101 = arith.cmpi eq, %68, %100 : vector<32x128xi32>
    %c127_i32 = arith.constant 127 : i32
    %102 = tpu.dynamic_rotate %91 by %c127_i32 dim 1 : vector<32x128xf32>, i32 -> vector<32x128xf32>
    %cst_42 = arith.constant 0.000000e+00 : f32
    %103 = vector.broadcast %cst_42 : f32 to vector<32x128xf32>
    %104 = arith.select %101, %103, %102 : vector<32x128xi1>, vector<32x128xf32>
    %c0_i32_43 = arith.constant 0 : i32
    %105 = vector.broadcast %c0_i32_43 : i32 to vector<32x128xi32>
    %106 = arith.cmpi eq, %68, %105 : vector<32x128xi32>
    %c1_i32_44 = arith.constant 1 : i32
    %107 = tpu.dynamic_rotate %88 by %c1_i32_44 dim 1 : vector<32x128xf32>, i32 -> vector<32x128xf32>
    %cst_45 = arith.constant 0.000000e+00 : f32
    %108 = vector.broadcast %cst_45 : f32 to vector<32x128xf32>
    %109 = arith.select %106, %108, %107 : vector<32x128xi1>, vector<32x128xf32>
    %c8_i32_46 = arith.constant 8 : i32
    %110 = vector.broadcast %c8_i32_46 : i32 to vector<32x128xi32>
    %111 = arith.cmpi eq, %68, %110 : vector<32x128xi32>
    %c127_i32_47 = arith.constant 127 : i32
    %112 = tpu.dynamic_rotate %88 by %c127_i32_47 dim 1 : vector<32x128xf32>, i32 -> vector<32x128xf32>
    %cst_48 = arith.constant 0.000000e+00 : f32
    %113 = vector.broadcast %cst_48 : f32 to vector<32x128xf32>
    %114 = arith.select %111, %113, %112 : vector<32x128xi1>, vector<32x128xf32>
    %c0_i32_49 = arith.constant 0 : i32
    %115 = vector.broadcast %c0_i32_49 : i32 to vector<32x128xi32>
    %116 = arith.cmpi eq, %68, %115 : vector<32x128xi32>
    %c1_i32_50 = arith.constant 1 : i32
    %117 = tpu.dynamic_rotate %94 by %c1_i32_50 dim 1 : vector<32x128xf32>, i32 -> vector<32x128xf32>
    %cst_51 = arith.constant 0.000000e+00 : f32
    %118 = vector.broadcast %cst_51 : f32 to vector<32x128xf32>
    %119 = arith.select %116, %118, %117 : vector<32x128xi1>, vector<32x128xf32>
    %c8_i32_52 = arith.constant 8 : i32
    %120 = vector.broadcast %c8_i32_52 : i32 to vector<32x128xi32>
    %121 = arith.cmpi eq, %68, %120 : vector<32x128xi32>
    %c127_i32_53 = arith.constant 127 : i32
    %122 = tpu.dynamic_rotate %94 by %c127_i32_53 dim 1 : vector<32x128xf32>, i32 -> vector<32x128xf32>
    %cst_54 = arith.constant 0.000000e+00 : f32
    %123 = vector.broadcast %cst_54 : f32 to vector<32x128xf32>
    %124 = arith.select %121, %123, %122 : vector<32x128xi1>, vector<32x128xf32>
    %125 = arith.index_cast %arg0 : i32 to index
    %c0_55 = arith.constant 0 : index
    %126 = memref.load %arg6[%125, %c0_55] : memref<2x72xf32, #tpu.memory_space<smem>>
    %127 = vector.broadcast %126 : f32 to vector<32x128xf32>
    %128 = arith.mulf %99, %127 : vector<32x128xf32>
    %129 = arith.index_cast %arg0 : i32 to index
    %c1 = arith.constant 1 : index
    %130 = memref.load %arg6[%129, %c1] : memref<2x72xf32, #tpu.memory_space<smem>>
    %131 = vector.broadcast %130 : f32 to vector<32x128xf32>
    %132 = arith.mulf %91, %131 : vector<32x128xf32>
    %133 = arith.addf %128, %132 : vector<32x128xf32>
    %134 = arith.index_cast %arg0 : i32 to index
    %c2 = arith.constant 2 : index
    %135 = memref.load %arg6[%134, %c2] : memref<2x72xf32, #tpu.memory_space<smem>>
    %136 = vector.broadcast %135 : f32 to vector<32x128xf32>
    %137 = arith.mulf %104, %136 : vector<32x128xf32>
    %138 = arith.addf %133, %137 : vector<32x128xf32>
    %139 = arith.index_cast %arg0 : i32 to index
    %c3 = arith.constant 3 : index
    %140 = memref.load %arg6[%139, %c3] : memref<2x72xf32, #tpu.memory_space<smem>>
    %141 = vector.broadcast %140 : f32 to vector<32x128xf32>
    %142 = arith.mulf %109, %141 : vector<32x128xf32>
    %143 = arith.addf %138, %142 : vector<32x128xf32>
    %144 = arith.index_cast %arg0 : i32 to index
    %c4 = arith.constant 4 : index
    %145 = memref.load %arg6[%144, %c4] : memref<2x72xf32, #tpu.memory_space<smem>>
    %146 = vector.broadcast %145 : f32 to vector<32x128xf32>
    %147 = arith.mulf %88, %146 : vector<32x128xf32>
    %148 = arith.addf %143, %147 : vector<32x128xf32>
    %149 = arith.index_cast %arg0 : i32 to index
    %c5 = arith.constant 5 : index
    %150 = memref.load %arg6[%149, %c5] : memref<2x72xf32, #tpu.memory_space<smem>>
    %151 = vector.broadcast %150 : f32 to vector<32x128xf32>
    %152 = arith.mulf %114, %151 : vector<32x128xf32>
    %153 = arith.addf %148, %152 : vector<32x128xf32>
    %154 = arith.index_cast %arg0 : i32 to index
    %c6 = arith.constant 6 : index
    %155 = memref.load %arg6[%154, %c6] : memref<2x72xf32, #tpu.memory_space<smem>>
    %156 = vector.broadcast %155 : f32 to vector<32x128xf32>
    %157 = arith.mulf %119, %156 : vector<32x128xf32>
    %158 = arith.addf %153, %157 : vector<32x128xf32>
    %159 = arith.index_cast %arg0 : i32 to index
    %c7 = arith.constant 7 : index
    %160 = memref.load %arg6[%159, %c7] : memref<2x72xf32, #tpu.memory_space<smem>>
    %161 = vector.broadcast %160 : f32 to vector<32x128xf32>
    %162 = arith.mulf %94, %161 : vector<32x128xf32>
    %163 = arith.addf %158, %162 : vector<32x128xf32>
    %164 = arith.index_cast %arg0 : i32 to index
    %c8 = arith.constant 8 : index
    %165 = memref.load %arg6[%164, %c8] : memref<2x72xf32, #tpu.memory_space<smem>>
    %166 = vector.broadcast %165 : f32 to vector<32x128xf32>
    %167 = arith.mulf %124, %166 : vector<32x128xf32>
    %168 = arith.addf %163, %167 : vector<32x128xf32>
    %c0_56 = arith.constant 0 : index
    %169 = memref.load %arg7[%c0_56] : memref<8xf32, #tpu.memory_space<smem>>
    %170 = vector.broadcast %169 : f32 to vector<32x128xf32>
    %171 = arith.addf %168, %170 : vector<32x128xf32>
    %c0_57 = arith.constant 0 : index
    %c0_58 = arith.constant 0 : index
    %c0_59 = arith.constant 0 : index
    %172 = vector.load %arg15[%c0_57, %c0_58, %c0_59] : memref<8x32x128xf32, #tpu.memory_space<vmem>>, vector<1x32x128xf32>
    %173 = vector.shape_cast %172 : vector<1x32x128xf32> to vector<32x128xf32>
    %174 = vector.shape_cast %171 : vector<32x128xf32> to vector<1x32x128xf32>
    tpu.vector_store %arg15[%c0_57, %c0_58, %c0_59], %174 {strides = array<i32>} : memref<8x32x128xf32, #tpu.memory_space<vmem>>, vector<1x32x128xf32>,
    %cst_60 = arith.constant 0.000000e+00 : f32
    %175 = vector.broadcast %cst_60 : f32 to vector<32x128xf32>
    %176 = arith.select %70, %171, %175 : vector<32x128xi1>, vector<32x128xf32>
    %177 = vector.shape_cast %176 : vector<32x128xf32> to vector<1x32x128xf32>
    %cst_61 = arith.constant dense<0.000000e+00> : vector<1xf32>
    %178 = vector.multi_reduction <add>, %177, %cst_61 [1, 2] : vector<1x32x128xf32> to vector<1xf32>
    %179 = vector.shape_cast %178 : vector<1xf32> to vector<1x1x1xf32>
    %180 = vector.extract %179[0, 0, 0] : f32 from vector<1x1x1xf32>
    %181 = arith.mulf %176, %176 : vector<32x128xf32>
    %182 = vector.shape_cast %181 : vector<32x128xf32> to vector<1x32x128xf32>
    %cst_62 = arith.constant dense<0.000000e+00> : vector<1xf32>
    %183 = vector.multi_reduction <add>, %182, %cst_62 [1, 2] : vector<1x32x128xf32> to vector<1xf32>
    %184 = vector.shape_cast %183 : vector<1xf32> to vector<1x1x1xf32>
    %185 = vector.extract %184[0, 0, 0] : f32 from vector<1x1x1xf32>
    %186 = arith.index_cast %arg0 : i32 to index
    %c9 = arith.constant 9 : index
    %187 = memref.load %arg6[%186, %c9] : memref<2x72xf32, #tpu.memory_space<smem>>
    %188 = vector.broadcast %187 : f32 to vector<32x128xf32>
    %189 = arith.mulf %99, %188 : vector<32x128xf32>
    %190 = arith.index_cast %arg0 : i32 to index
    %c10 = arith.constant 10 : index
    %191 = memref.load %arg6[%190, %c10] : memref<2x72xf32, #tpu.memory_space<smem>>
    %192 = vector.broadcast %191 : f32 to vector<32x128xf32>
    %193 = arith.mulf %91, %192 : vector<32x128xf32>
    %194 = arith.addf %189, %193 : vector<32x128xf32>
    %195 = arith.index_cast %arg0 : i32 to index
    %c11 = arith.constant 11 : index
    %196 = memref.load %arg6[%195, %c11] : memref<2x72xf32, #tpu.memory_space<smem>>
    %197 = vector.broadcast %196 : f32 to vector<32x128xf32>
    %198 = arith.mulf %104, %197 : vector<32x128xf32>
    %199 = arith.addf %194, %198 : vector<32x128xf32>
    %200 = arith.index_cast %arg0 : i32 to index
    %c12 = arith.constant 12 : index
    %201 = memref.load %arg6[%200, %c12] : memref<2x72xf32, #tpu.memory_space<smem>>
    %202 = vector.broadcast %201 : f32 to vector<32x128xf32>
    %203 = arith.mulf %109, %202 : vector<32x128xf32>
    %204 = arith.addf %199, %203 : vector<32x128xf32>
    %205 = arith.index_cast %arg0 : i32 to index
    %c13 = arith.constant 13 : index
    %206 = memref.load %arg6[%205, %c13] : memref<2x72xf32, #tpu.memory_space<smem>>
    %207 = vector.broadcast %206 : f32 to vector<32x128xf32>
    %208 = arith.mulf %88, %207 : vector<32x128xf32>
    %209 = arith.addf %204, %208 : vector<32x128xf32>
    %210 = arith.index_cast %arg0 : i32 to index
    %c14 = arith.constant 14 : index
    %211 = memref.load %arg6[%210, %c14] : memref<2x72xf32, #tpu.memory_space<smem>>
    %212 = vector.broadcast %211 : f32 to vector<32x128xf32>
    %213 = arith.mulf %114, %212 : vector<32x128xf32>
    %214 = arith.addf %209, %213 : vector<32x128xf32>
    %215 = arith.index_cast %arg0 : i32 to index
    %c15 = arith.constant 15 : index
    %216 = memref.load %arg6[%215, %c15] : memref<2x72xf32, #tpu.memory_space<smem>>
    %217 = vector.broadcast %216 : f32 to vector<32x128xf32>
    %218 = arith.mulf %119, %217 : vector<32x128xf32>
    %219 = arith.addf %214, %218 : vector<32x128xf32>
    %220 = arith.index_cast %arg0 : i32 to index
    %c16 = arith.constant 16 : index
    %221 = memref.load %arg6[%220, %c16] : memref<2x72xf32, #tpu.memory_space<smem>>
    %222 = vector.broadcast %221 : f32 to vector<32x128xf32>
    %223 = arith.mulf %94, %222 : vector<32x128xf32>
    %224 = arith.addf %219, %223 : vector<32x128xf32>
    %225 = arith.index_cast %arg0 : i32 to index
    %c17 = arith.constant 17 : index
    %226 = memref.load %arg6[%225, %c17] : memref<2x72xf32, #tpu.memory_space<smem>>
    %227 = vector.broadcast %226 : f32 to vector<32x128xf32>
    %228 = arith.mulf %124, %227 : vector<32x128xf32>
    %229 = arith.addf %224, %228 : vector<32x128xf32>
    %c1_63 = arith.constant 1 : index
    %230 = memref.load %arg7[%c1_63] : memref<8xf32, #tpu.memory_space<smem>>
    %231 = vector.broadcast %230 : f32 to vector<32x128xf32>
    %232 = arith.addf %229, %231 : vector<32x128xf32>
    %c1_64 = arith.constant 1 : index
    %c0_65 = arith.constant 0 : index
    %c0_66 = arith.constant 0 : index
    %233 = vector.load %arg15[%c1_64, %c0_65, %c0_66] : memref<8x32x128xf32, #tpu.memory_space<vmem>>, vector<1x32x128xf32>
    %234 = vector.shape_cast %233 : vector<1x32x128xf32> to vector<32x128xf32>
    %235 = vector.shape_cast %232 : vector<32x128xf32> to vector<1x32x128xf32>
    tpu.vector_store %arg15[%c1_64, %c0_65, %c0_66], %235 {strides = array<i32>} : memref<8x32x128xf32, #tpu.memory_space<vmem>>, vector<1x32x128xf32>,
    %cst_67 = arith.constant 0.000000e+00 : f32
    %236 = vector.broadcast %cst_67 : f32 to vector<32x128xf32>
    %237 = arith.select %70, %232, %236 : vector<32x128xi1>, vector<32x128xf32>
    %238 = vector.shape_cast %237 : vector<32x128xf32> to vector<1x32x128xf32>
    %cst_68 = arith.constant dense<0.000000e+00> : vector<1xf32>
    %239 = vector.multi_reduction <add>, %238, %cst_68 [1, 2] : vector<1x32x128xf32> to vector<1xf32>
    %240 = vector.shape_cast %239 : vector<1xf32> to vector<1x1x1xf32>
    %241 = vector.extract %240[0, 0, 0] : f32 from vector<1x1x1xf32>
    %242 = arith.mulf %237, %237 : vector<32x128xf32>
    %243 = vector.shape_cast %242 : vector<32x128xf32> to vector<1x32x128xf32>
    %cst_69 = arith.constant dense<0.000000e+00> : vector<1xf32>
    %244 = vector.multi_reduction <add>, %243, %cst_69 [1, 2] : vector<1x32x128xf32> to vector<1xf32>
    %245 = vector.shape_cast %244 : vector<1xf32> to vector<1x1x1xf32>
    %246 = vector.extract %245[0, 0, 0] : f32 from vector<1x1x1xf32>
    %247 = arith.index_cast %arg0 : i32 to index
    %c18 = arith.constant 18 : index
    %248 = memref.load %arg6[%247, %c18] : memref<2x72xf32, #tpu.memory_space<smem>>
    %249 = vector.broadcast %248 : f32 to vector<32x128xf32>
    %250 = arith.mulf %99, %249 : vector<32x128xf32>
    %251 = arith.index_cast %arg0 : i32 to index
    %c19 = arith.constant 19 : index
    %252 = memref.load %arg6[%251, %c19] : memref<2x72xf32, #tpu.memory_space<smem>>
    %253 = vector.broadcast %252 : f32 to vector<32x128xf32>
    %254 = arith.mulf %91, %253 : vector<32x128xf32>
    %255 = arith.addf %250, %254 : vector<32x128xf32>
    %256 = arith.index_cast %arg0 : i32 to index
    %c20 = arith.constant 20 : index
    %257 = memref.load %arg6[%256, %c20] : memref<2x72xf32, #tpu.memory_space<smem>>
    %258 = vector.broadcast %257 : f32 to vector<32x128xf32>
    %259 = arith.mulf %104, %258 : vector<32x128xf32>
    %260 = arith.addf %255, %259 : vector<32x128xf32>
    %261 = arith.index_cast %arg0 : i32 to index
    %c21 = arith.constant 21 : index
    %262 = memref.load %arg6[%261, %c21] : memref<2x72xf32, #tpu.memory_space<smem>>
    %263 = vector.broadcast %262 : f32 to vector<32x128xf32>
    %264 = arith.mulf %109, %263 : vector<32x128xf32>
    %265 = arith.addf %260, %264 : vector<32x128xf32>
    %266 = arith.index_cast %arg0 : i32 to index
    %c22 = arith.constant 22 : index
    %267 = memref.load %arg6[%266, %c22] : memref<2x72xf32, #tpu.memory_space<smem>>
    %268 = vector.broadcast %267 : f32 to vector<32x128xf32>
    %269 = arith.mulf %88, %268 : vector<32x128xf32>
    %270 = arith.addf %265, %269 : vector<32x128xf32>
    %271 = arith.index_cast %arg0 : i32 to index
    %c23 = arith.constant 23 : index
    %272 = memref.load %arg6[%271, %c23] : memref<2x72xf32, #tpu.memory_space<smem>>
    %273 = vector.broadcast %272 : f32 to vector<32x128xf32>
    %274 = arith.mulf %114, %273 : vector<32x128xf32>
    %275 = arith.addf %270, %274 : vector<32x128xf32>
    %276 = arith.index_cast %arg0 : i32 to index
    %c24 = arith.constant 24 : index
    %277 = memref.load %arg6[%276, %c24] : memref<2x72xf32, #tpu.memory_space<smem>>
    %278 = vector.broadcast %277 : f32 to vector<32x128xf32>
    %279 = arith.mulf %119, %278 : vector<32x128xf32>
    %280 = arith.addf %275, %279 : vector<32x128xf32>
    %281 = arith.index_cast %arg0 : i32 to index
    %c25 = arith.constant 25 : index
    %282 = memref.load %arg6[%281, %c25] : memref<2x72xf32, #tpu.memory_space<smem>>
    %283 = vector.broadcast %282 : f32 to vector<32x128xf32>
    %284 = arith.mulf %94, %283 : vector<32x128xf32>
    %285 = arith.addf %280, %284 : vector<32x128xf32>
    %286 = arith.index_cast %arg0 : i32 to index
    %c26 = arith.constant 26 : index
    %287 = memref.load %arg6[%286, %c26] : memref<2x72xf32, #tpu.memory_space<smem>>
    %288 = vector.broadcast %287 : f32 to vector<32x128xf32>
    %289 = arith.mulf %124, %288 : vector<32x128xf32>
    %290 = arith.addf %285, %289 : vector<32x128xf32>
    %c2_70 = arith.constant 2 : index
    %291 = memref.load %arg7[%c2_70] : memref<8xf32, #tpu.memory_space<smem>>
    %292 = vector.broadcast %291 : f32 to vector<32x128xf32>
    %293 = arith.addf %290, %292 : vector<32x128xf32>
    %c2_71 = arith.constant 2 : index
    %c0_72 = arith.constant 0 : index
    %c0_73 = arith.constant 0 : index
    %294 = vector.load %arg15[%c2_71, %c0_72, %c0_73] : memref<8x32x128xf32, #tpu.memory_space<vmem>>, vector<1x32x128xf32>
    %295 = vector.shape_cast %294 : vector<1x32x128xf32> to vector<32x128xf32>
    %296 = vector.shape_cast %293 : vector<32x128xf32> to vector<1x32x128xf32>
    tpu.vector_store %arg15[%c2_71, %c0_72, %c0_73], %296 {strides = array<i32>} : memref<8x32x128xf32, #tpu.memory_space<vmem>>, vector<1x32x128xf32>,
    %cst_74 = arith.constant 0.000000e+00 : f32
    %297 = vector.broadcast %cst_74 : f32 to vector<32x128xf32>
    %298 = arith.select %70, %293, %297 : vector<32x128xi1>, vector<32x128xf32>
    %299 = vector.shape_cast %298 : vector<32x128xf32> to vector<1x32x128xf32>
    %cst_75 = arith.constant dense<0.000000e+00> : vector<1xf32>
    %300 = vector.multi_reduction <add>, %299, %cst_75 [1, 2] : vector<1x32x128xf32> to vector<1xf32>
    %301 = vector.shape_cast %300 : vector<1xf32> to vector<1x1x1xf32>
    %302 = vector.extract %301[0, 0, 0] : f32 from vector<1x1x1xf32>
    %303 = arith.mulf %298, %298 : vector<32x128xf32>
    %304 = vector.shape_cast %303 : vector<32x128xf32> to vector<1x32x128xf32>
    %cst_76 = arith.constant dense<0.000000e+00> : vector<1xf32>
    %305 = vector.multi_reduction <add>, %304, %cst_76 [1, 2] : vector<1x32x128xf32> to vector<1xf32>
    %306 = vector.shape_cast %305 : vector<1xf32> to vector<1x1x1xf32>
    %307 = vector.extract %306[0, 0, 0] : f32 from vector<1x1x1xf32>
    %308 = arith.index_cast %arg0 : i32 to index
    %c27 = arith.constant 27 : index
    %309 = memref.load %arg6[%308, %c27] : memref<2x72xf32, #tpu.memory_space<smem>>
    %310 = vector.broadcast %309 : f32 to vector<32x128xf32>
    %311 = arith.mulf %99, %310 : vector<32x128xf32>
    %312 = arith.index_cast %arg0 : i32 to index
    %c28 = arith.constant 28 : index
    %313 = memref.load %arg6[%312, %c28] : memref<2x72xf32, #tpu.memory_space<smem>>
    %314 = vector.broadcast %313 : f32 to vector<32x128xf32>
    %315 = arith.mulf %91, %314 : vector<32x128xf32>
    %316 = arith.addf %311, %315 : vector<32x128xf32>
    %317 = arith.index_cast %arg0 : i32 to index
    %c29 = arith.constant 29 : index
    %318 = memref.load %arg6[%317, %c29] : memref<2x72xf32, #tpu.memory_space<smem>>
    %319 = vector.broadcast %318 : f32 to vector<32x128xf32>
    %320 = arith.mulf %104, %319 : vector<32x128xf32>
    %321 = arith.addf %316, %320 : vector<32x128xf32>
    %322 = arith.index_cast %arg0 : i32 to index
    %c30 = arith.constant 30 : index
    %323 = memref.load %arg6[%322, %c30] : memref<2x72xf32, #tpu.memory_space<smem>>
    %324 = vector.broadcast %323 : f32 to vector<32x128xf32>
    %325 = arith.mulf %109, %324 : vector<32x128xf32>
    %326 = arith.addf %321, %325 : vector<32x128xf32>
    %327 = arith.index_cast %arg0 : i32 to index
    %c31 = arith.constant 31 : index
    %328 = memref.load %arg6[%327, %c31] : memref<2x72xf32, #tpu.memory_space<smem>>
    %329 = vector.broadcast %328 : f32 to vector<32x128xf32>
    %330 = arith.mulf %88, %329 : vector<32x128xf32>
    %331 = arith.addf %326, %330 : vector<32x128xf32>
    %332 = arith.index_cast %arg0 : i32 to index
    %c32 = arith.constant 32 : index
    %333 = memref.load %arg6[%332, %c32] : memref<2x72xf32, #tpu.memory_space<smem>>
    %334 = vector.broadcast %333 : f32 to vector<32x128xf32>
    %335 = arith.mulf %114, %334 : vector<32x128xf32>
    %336 = arith.addf %331, %335 : vector<32x128xf32>
    %337 = arith.index_cast %arg0 : i32 to index
    %c33 = arith.constant 33 : index
    %338 = memref.load %arg6[%337, %c33] : memref<2x72xf32, #tpu.memory_space<smem>>
    %339 = vector.broadcast %338 : f32 to vector<32x128xf32>
    %340 = arith.mulf %119, %339 : vector<32x128xf32>
    %341 = arith.addf %336, %340 : vector<32x128xf32>
    %342 = arith.index_cast %arg0 : i32 to index
    %c34 = arith.constant 34 : index
    %343 = memref.load %arg6[%342, %c34] : memref<2x72xf32, #tpu.memory_space<smem>>
    %344 = vector.broadcast %343 : f32 to vector<32x128xf32>
    %345 = arith.mulf %94, %344 : vector<32x128xf32>
    %346 = arith.addf %341, %345 : vector<32x128xf32>
    %347 = arith.index_cast %arg0 : i32 to index
    %c35 = arith.constant 35 : index
    %348 = memref.load %arg6[%347, %c35] : memref<2x72xf32, #tpu.memory_space<smem>>
    %349 = vector.broadcast %348 : f32 to vector<32x128xf32>
    %350 = arith.mulf %124, %349 : vector<32x128xf32>
    %351 = arith.addf %346, %350 : vector<32x128xf32>
    %c3_77 = arith.constant 3 : index
    %352 = memref.load %arg7[%c3_77] : memref<8xf32, #tpu.memory_space<smem>>
    %353 = vector.broadcast %352 : f32 to vector<32x128xf32>
    %354 = arith.addf %351, %353 : vector<32x128xf32>
    %c3_78 = arith.constant 3 : index
    %c0_79 = arith.constant 0 : index
    %c0_80 = arith.constant 0 : index
    %355 = vector.load %arg15[%c3_78, %c0_79, %c0_80] : memref<8x32x128xf32, #tpu.memory_space<vmem>>, vector<1x32x128xf32>
    %356 = vector.shape_cast %355 : vector<1x32x128xf32> to vector<32x128xf32>
    %357 = vector.shape_cast %354 : vector<32x128xf32> to vector<1x32x128xf32>
    tpu.vector_store %arg15[%c3_78, %c0_79, %c0_80], %357 {strides = array<i32>} : memref<8x32x128xf32, #tpu.memory_space<vmem>>, vector<1x32x128xf32>,
    %cst_81 = arith.constant 0.000000e+00 : f32
    %358 = vector.broadcast %cst_81 : f32 to vector<32x128xf32>
    %359 = arith.select %70, %354, %358 : vector<32x128xi1>, vector<32x128xf32>
    %360 = vector.shape_cast %359 : vector<32x128xf32> to vector<1x32x128xf32>
    %cst_82 = arith.constant dense<0.000000e+00> : vector<1xf32>
    %361 = vector.multi_reduction <add>, %360, %cst_82 [1, 2] : vector<1x32x128xf32> to vector<1xf32>
    %362 = vector.shape_cast %361 : vector<1xf32> to vector<1x1x1xf32>
    %363 = vector.extract %362[0, 0, 0] : f32 from vector<1x1x1xf32>
    %364 = arith.mulf %359, %359 : vector<32x128xf32>
    %365 = vector.shape_cast %364 : vector<32x128xf32> to vector<1x32x128xf32>
    %cst_83 = arith.constant dense<0.000000e+00> : vector<1xf32>
    %366 = vector.multi_reduction <add>, %365, %cst_83 [1, 2] : vector<1x32x128xf32> to vector<1xf32>
    %367 = vector.shape_cast %366 : vector<1xf32> to vector<1x1x1xf32>
    %368 = vector.extract %367[0, 0, 0] : f32 from vector<1x1x1xf32>
    %369 = arith.index_cast %arg0 : i32 to index
    %c36 = arith.constant 36 : index
    %370 = memref.load %arg6[%369, %c36] : memref<2x72xf32, #tpu.memory_space<smem>>
    %371 = vector.broadcast %370 : f32 to vector<32x128xf32>
    %372 = arith.mulf %99, %371 : vector<32x128xf32>
    %373 = arith.index_cast %arg0 : i32 to index
    %c37 = arith.constant 37 : index
    %374 = memref.load %arg6[%373, %c37] : memref<2x72xf32, #tpu.memory_space<smem>>
    %375 = vector.broadcast %374 : f32 to vector<32x128xf32>
    %376 = arith.mulf %91, %375 : vector<32x128xf32>
    %377 = arith.addf %372, %376 : vector<32x128xf32>
    %378 = arith.index_cast %arg0 : i32 to index
    %c38 = arith.constant 38 : index
    %379 = memref.load %arg6[%378, %c38] : memref<2x72xf32, #tpu.memory_space<smem>>
    %380 = vector.broadcast %379 : f32 to vector<32x128xf32>
    %381 = arith.mulf %104, %380 : vector<32x128xf32>
    %382 = arith.addf %377, %381 : vector<32x128xf32>
    %383 = arith.index_cast %arg0 : i32 to index
    %c39 = arith.constant 39 : index
    %384 = memref.load %arg6[%383, %c39] : memref<2x72xf32, #tpu.memory_space<smem>>
    %385 = vector.broadcast %384 : f32 to vector<32x128xf32>
    %386 = arith.mulf %109, %385 : vector<32x128xf32>
    %387 = arith.addf %382, %386 : vector<32x128xf32>
    %388 = arith.index_cast %arg0 : i32 to index
    %c40 = arith.constant 40 : index
    %389 = memref.load %arg6[%388, %c40] : memref<2x72xf32, #tpu.memory_space<smem>>
    %390 = vector.broadcast %389 : f32 to vector<32x128xf32>
    %391 = arith.mulf %88, %390 : vector<32x128xf32>
    %392 = arith.addf %387, %391 : vector<32x128xf32>
    %393 = arith.index_cast %arg0 : i32 to index
    %c41 = arith.constant 41 : index
    %394 = memref.load %arg6[%393, %c41] : memref<2x72xf32, #tpu.memory_space<smem>>
    %395 = vector.broadcast %394 : f32 to vector<32x128xf32>
    %396 = arith.mulf %114, %395 : vector<32x128xf32>
    %397 = arith.addf %392, %396 : vector<32x128xf32>
    %398 = arith.index_cast %arg0 : i32 to index
    %c42 = arith.constant 42 : index
    %399 = memref.load %arg6[%398, %c42] : memref<2x72xf32, #tpu.memory_space<smem>>
    %400 = vector.broadcast %399 : f32 to vector<32x128xf32>
    %401 = arith.mulf %119, %400 : vector<32x128xf32>
    %402 = arith.addf %397, %401 : vector<32x128xf32>
    %403 = arith.index_cast %arg0 : i32 to index
    %c43 = arith.constant 43 : index
    %404 = memref.load %arg6[%403, %c43] : memref<2x72xf32, #tpu.memory_space<smem>>
    %405 = vector.broadcast %404 : f32 to vector<32x128xf32>
    %406 = arith.mulf %94, %405 : vector<32x128xf32>
    %407 = arith.addf %402, %406 : vector<32x128xf32>
    %408 = arith.index_cast %arg0 : i32 to index
    %c44 = arith.constant 44 : index
    %409 = memref.load %arg6[%408, %c44] : memref<2x72xf32, #tpu.memory_space<smem>>
    %410 = vector.broadcast %409 : f32 to vector<32x128xf32>
    %411 = arith.mulf %124, %410 : vector<32x128xf32>
    %412 = arith.addf %407, %411 : vector<32x128xf32>
    %c4_84 = arith.constant 4 : index
    %413 = memref.load %arg7[%c4_84] : memref<8xf32, #tpu.memory_space<smem>>
    %414 = vector.broadcast %413 : f32 to vector<32x128xf32>
    %415 = arith.addf %412, %414 : vector<32x128xf32>
    %c4_85 = arith.constant 4 : index
    %c0_86 = arith.constant 0 : index
    %c0_87 = arith.constant 0 : index
    %416 = vector.load %arg15[%c4_85, %c0_86, %c0_87] : memref<8x32x128xf32, #tpu.memory_space<vmem>>, vector<1x32x128xf32>
    %417 = vector.shape_cast %416 : vector<1x32x128xf32> to vector<32x128xf32>
    %418 = vector.shape_cast %415 : vector<32x128xf32> to vector<1x32x128xf32>
    tpu.vector_store %arg15[%c4_85, %c0_86, %c0_87], %418 {strides = array<i32>} : memref<8x32x128xf32, #tpu.memory_space<vmem>>, vector<1x32x128xf32>,
    %cst_88 = arith.constant 0.000000e+00 : f32
    %419 = vector.broadcast %cst_88 : f32 to vector<32x128xf32>
    %420 = arith.select %70, %415, %419 : vector<32x128xi1>, vector<32x128xf32>
    %421 = vector.shape_cast %420 : vector<32x128xf32> to vector<1x32x128xf32>
    %cst_89 = arith.constant dense<0.000000e+00> : vector<1xf32>
    %422 = vector.multi_reduction <add>, %421, %cst_89 [1, 2] : vector<1x32x128xf32> to vector<1xf32>
    %423 = vector.shape_cast %422 : vector<1xf32> to vector<1x1x1xf32>
    %424 = vector.extract %423[0, 0, 0] : f32 from vector<1x1x1xf32>
    %425 = arith.mulf %420, %420 : vector<32x128xf32>
    %426 = vector.shape_cast %425 : vector<32x128xf32> to vector<1x32x128xf32>
    %cst_90 = arith.constant dense<0.000000e+00> : vector<1xf32>
    %427 = vector.multi_reduction <add>, %426, %cst_90 [1, 2] : vector<1x32x128xf32> to vector<1xf32>
    %428 = vector.shape_cast %427 : vector<1xf32> to vector<1x1x1xf32>
    %429 = vector.extract %428[0, 0, 0] : f32 from vector<1x1x1xf32>
    %430 = arith.index_cast %arg0 : i32 to index
    %c45 = arith.constant 45 : index
    %431 = memref.load %arg6[%430, %c45] : memref<2x72xf32, #tpu.memory_space<smem>>
    %432 = vector.broadcast %431 : f32 to vector<32x128xf32>
    %433 = arith.mulf %99, %432 : vector<32x128xf32>
    %434 = arith.index_cast %arg0 : i32 to index
    %c46 = arith.constant 46 : index
    %435 = memref.load %arg6[%434, %c46] : memref<2x72xf32, #tpu.memory_space<smem>>
    %436 = vector.broadcast %435 : f32 to vector<32x128xf32>
    %437 = arith.mulf %91, %436 : vector<32x128xf32>
    %438 = arith.addf %433, %437 : vector<32x128xf32>
    %439 = arith.index_cast %arg0 : i32 to index
    %c47 = arith.constant 47 : index
    %440 = memref.load %arg6[%439, %c47] : memref<2x72xf32, #tpu.memory_space<smem>>
    %441 = vector.broadcast %440 : f32 to vector<32x128xf32>
    %442 = arith.mulf %104, %441 : vector<32x128xf32>
    %443 = arith.addf %438, %442 : vector<32x128xf32>
    %444 = arith.index_cast %arg0 : i32 to index
    %c48 = arith.constant 48 : index
    %445 = memref.load %arg6[%444, %c48] : memref<2x72xf32, #tpu.memory_space<smem>>
    %446 = vector.broadcast %445 : f32 to vector<32x128xf32>
    %447 = arith.mulf %109, %446 : vector<32x128xf32>
    %448 = arith.addf %443, %447 : vector<32x128xf32>
    %449 = arith.index_cast %arg0 : i32 to index
    %c49 = arith.constant 49 : index
    %450 = memref.load %arg6[%449, %c49] : memref<2x72xf32, #tpu.memory_space<smem>>
    %451 = vector.broadcast %450 : f32 to vector<32x128xf32>
    %452 = arith.mulf %88, %451 : vector<32x128xf32>
    %453 = arith.addf %448, %452 : vector<32x128xf32>
    %454 = arith.index_cast %arg0 : i32 to index
    %c50 = arith.constant 50 : index
    %455 = memref.load %arg6[%454, %c50] : memref<2x72xf32, #tpu.memory_space<smem>>
    %456 = vector.broadcast %455 : f32 to vector<32x128xf32>
    %457 = arith.mulf %114, %456 : vector<32x128xf32>
    %458 = arith.addf %453, %457 : vector<32x128xf32>
    %459 = arith.index_cast %arg0 : i32 to index
    %c51 = arith.constant 51 : index
    %460 = memref.load %arg6[%459, %c51] : memref<2x72xf32, #tpu.memory_space<smem>>
    %461 = vector.broadcast %460 : f32 to vector<32x128xf32>
    %462 = arith.mulf %119, %461 : vector<32x128xf32>
    %463 = arith.addf %458, %462 : vector<32x128xf32>
    %464 = arith.index_cast %arg0 : i32 to index
    %c52 = arith.constant 52 : index
    %465 = memref.load %arg6[%464, %c52] : memref<2x72xf32, #tpu.memory_space<smem>>
    %466 = vector.broadcast %465 : f32 to vector<32x128xf32>
    %467 = arith.mulf %94, %466 : vector<32x128xf32>
    %468 = arith.addf %463, %467 : vector<32x128xf32>
    %469 = arith.index_cast %arg0 : i32 to index
    %c53 = arith.constant 53 : index
    %470 = memref.load %arg6[%469, %c53] : memref<2x72xf32, #tpu.memory_space<smem>>
    %471 = vector.broadcast %470 : f32 to vector<32x128xf32>
    %472 = arith.mulf %124, %471 : vector<32x128xf32>
    %473 = arith.addf %468, %472 : vector<32x128xf32>
    %c5_91 = arith.constant 5 : index
    %474 = memref.load %arg7[%c5_91] : memref<8xf32, #tpu.memory_space<smem>>
    %475 = vector.broadcast %474 : f32 to vector<32x128xf32>
    %476 = arith.addf %473, %475 : vector<32x128xf32>
    %c5_92 = arith.constant 5 : index
    %c0_93 = arith.constant 0 : index
    %c0_94 = arith.constant 0 : index
    %477 = vector.load %arg15[%c5_92, %c0_93, %c0_94] : memref<8x32x128xf32, #tpu.memory_space<vmem>>, vector<1x32x128xf32>
    %478 = vector.shape_cast %477 : vector<1x32x128xf32> to vector<32x128xf32>
    %479 = vector.shape_cast %476 : vector<32x128xf32> to vector<1x32x128xf32>
    tpu.vector_store %arg15[%c5_92, %c0_93, %c0_94], %479 {strides = array<i32>} : memref<8x32x128xf32, #tpu.memory_space<vmem>>, vector<1x32x128xf32>,
    %cst_95 = arith.constant 0.000000e+00 : f32
    %480 = vector.broadcast %cst_95 : f32 to vector<32x128xf32>
    %481 = arith.select %70, %476, %480 : vector<32x128xi1>, vector<32x128xf32>
    %482 = vector.shape_cast %481 : vector<32x128xf32> to vector<1x32x128xf32>
    %cst_96 = arith.constant dense<0.000000e+00> : vector<1xf32>
    %483 = vector.multi_reduction <add>, %482, %cst_96 [1, 2] : vector<1x32x128xf32> to vector<1xf32>
    %484 = vector.shape_cast %483 : vector<1xf32> to vector<1x1x1xf32>
    %485 = vector.extract %484[0, 0, 0] : f32 from vector<1x1x1xf32>
    %486 = arith.mulf %481, %481 : vector<32x128xf32>
    %487 = vector.shape_cast %486 : vector<32x128xf32> to vector<1x32x128xf32>
    %cst_97 = arith.constant dense<0.000000e+00> : vector<1xf32>
    %488 = vector.multi_reduction <add>, %487, %cst_97 [1, 2] : vector<1x32x128xf32> to vector<1xf32>
    %489 = vector.shape_cast %488 : vector<1xf32> to vector<1x1x1xf32>
    %490 = vector.extract %489[0, 0, 0] : f32 from vector<1x1x1xf32>
    %491 = arith.index_cast %arg0 : i32 to index
    %c54 = arith.constant 54 : index
    %492 = memref.load %arg6[%491, %c54] : memref<2x72xf32, #tpu.memory_space<smem>>
    %493 = vector.broadcast %492 : f32 to vector<32x128xf32>
    %494 = arith.mulf %99, %493 : vector<32x128xf32>
    %495 = arith.index_cast %arg0 : i32 to index
    %c55 = arith.constant 55 : index
    %496 = memref.load %arg6[%495, %c55] : memref<2x72xf32, #tpu.memory_space<smem>>
    %497 = vector.broadcast %496 : f32 to vector<32x128xf32>
    %498 = arith.mulf %91, %497 : vector<32x128xf32>
    %499 = arith.addf %494, %498 : vector<32x128xf32>
    %500 = arith.index_cast %arg0 : i32 to index
    %c56 = arith.constant 56 : index
    %501 = memref.load %arg6[%500, %c56] : memref<2x72xf32, #tpu.memory_space<smem>>
    %502 = vector.broadcast %501 : f32 to vector<32x128xf32>
    %503 = arith.mulf %104, %502 : vector<32x128xf32>
    %504 = arith.addf %499, %503 : vector<32x128xf32>
    %505 = arith.index_cast %arg0 : i32 to index
    %c57 = arith.constant 57 : index
    %506 = memref.load %arg6[%505, %c57] : memref<2x72xf32, #tpu.memory_space<smem>>
    %507 = vector.broadcast %506 : f32 to vector<32x128xf32>
    %508 = arith.mulf %109, %507 : vector<32x128xf32>
    %509 = arith.addf %504, %508 : vector<32x128xf32>
    %510 = arith.index_cast %arg0 : i32 to index
    %c58 = arith.constant 58 : index
    %511 = memref.load %arg6[%510, %c58] : memref<2x72xf32, #tpu.memory_space<smem>>
    %512 = vector.broadcast %511 : f32 to vector<32x128xf32>
    %513 = arith.mulf %88, %512 : vector<32x128xf32>
    %514 = arith.addf %509, %513 : vector<32x128xf32>
    %515 = arith.index_cast %arg0 : i32 to index
    %c59 = arith.constant 59 : index
    %516 = memref.load %arg6[%515, %c59] : memref<2x72xf32, #tpu.memory_space<smem>>
    %517 = vector.broadcast %516 : f32 to vector<32x128xf32>
    %518 = arith.mulf %114, %517 : vector<32x128xf32>
    %519 = arith.addf %514, %518 : vector<32x128xf32>
    %520 = arith.index_cast %arg0 : i32 to index
    %c60 = arith.constant 60 : index
    %521 = memref.load %arg6[%520, %c60] : memref<2x72xf32, #tpu.memory_space<smem>>
    %522 = vector.broadcast %521 : f32 to vector<32x128xf32>
    %523 = arith.mulf %119, %522 : vector<32x128xf32>
    %524 = arith.addf %519, %523 : vector<32x128xf32>
    %525 = arith.index_cast %arg0 : i32 to index
    %c61 = arith.constant 61 : index
    %526 = memref.load %arg6[%525, %c61] : memref<2x72xf32, #tpu.memory_space<smem>>
    %527 = vector.broadcast %526 : f32 to vector<32x128xf32>
    %528 = arith.mulf %94, %527 : vector<32x128xf32>
    %529 = arith.addf %524, %528 : vector<32x128xf32>
    %530 = arith.index_cast %arg0 : i32 to index
    %c62 = arith.constant 62 : index
    %531 = memref.load %arg6[%530, %c62] : memref<2x72xf32, #tpu.memory_space<smem>>
    %532 = vector.broadcast %531 : f32 to vector<32x128xf32>
    %533 = arith.mulf %124, %532 : vector<32x128xf32>
    %534 = arith.addf %529, %533 : vector<32x128xf32>
    %c6_98 = arith.constant 6 : index
    %535 = memref.load %arg7[%c6_98] : memref<8xf32, #tpu.memory_space<smem>>
    %536 = vector.broadcast %535 : f32 to vector<32x128xf32>
    %537 = arith.addf %534, %536 : vector<32x128xf32>
    %c6_99 = arith.constant 6 : index
    %c0_100 = arith.constant 0 : index
    %c0_101 = arith.constant 0 : index
    %538 = vector.load %arg15[%c6_99, %c0_100, %c0_101] : memref<8x32x128xf32, #tpu.memory_space<vmem>>, vector<1x32x128xf32>
    %539 = vector.shape_cast %538 : vector<1x32x128xf32> to vector<32x128xf32>
    %540 = vector.shape_cast %537 : vector<32x128xf32> to vector<1x32x128xf32>
    tpu.vector_store %arg15[%c6_99, %c0_100, %c0_101], %540 {strides = array<i32>} : memref<8x32x128xf32, #tpu.memory_space<vmem>>, vector<1x32x128xf32>,
    %cst_102 = arith.constant 0.000000e+00 : f32
    %541 = vector.broadcast %cst_102 : f32 to vector<32x128xf32>
    %542 = arith.select %70, %537, %541 : vector<32x128xi1>, vector<32x128xf32>
    %543 = vector.shape_cast %542 : vector<32x128xf32> to vector<1x32x128xf32>
    %cst_103 = arith.constant dense<0.000000e+00> : vector<1xf32>
    %544 = vector.multi_reduction <add>, %543, %cst_103 [1, 2] : vector<1x32x128xf32> to vector<1xf32>
    %545 = vector.shape_cast %544 : vector<1xf32> to vector<1x1x1xf32>
    %546 = vector.extract %545[0, 0, 0] : f32 from vector<1x1x1xf32>
    %547 = arith.mulf %542, %542 : vector<32x128xf32>
    %548 = vector.shape_cast %547 : vector<32x128xf32> to vector<1x32x128xf32>
    %cst_104 = arith.constant dense<0.000000e+00> : vector<1xf32>
    %549 = vector.multi_reduction <add>, %548, %cst_104 [1, 2] : vector<1x32x128xf32> to vector<1xf32>
    %550 = vector.shape_cast %549 : vector<1xf32> to vector<1x1x1xf32>
    %551 = vector.extract %550[0, 0, 0] : f32 from vector<1x1x1xf32>
    %552 = arith.index_cast %arg0 : i32 to index
    %c63 = arith.constant 63 : index
    %553 = memref.load %arg6[%552, %c63] : memref<2x72xf32, #tpu.memory_space<smem>>
    %554 = vector.broadcast %553 : f32 to vector<32x128xf32>
    %555 = arith.mulf %99, %554 : vector<32x128xf32>
    %556 = arith.index_cast %arg0 : i32 to index
    %c64 = arith.constant 64 : index
    %557 = memref.load %arg6[%556, %c64] : memref<2x72xf32, #tpu.memory_space<smem>>
    %558 = vector.broadcast %557 : f32 to vector<32x128xf32>
    %559 = arith.mulf %91, %558 : vector<32x128xf32>
    %560 = arith.addf %555, %559 : vector<32x128xf32>
    %561 = arith.index_cast %arg0 : i32 to index
    %c65 = arith.constant 65 : index
    %562 = memref.load %arg6[%561, %c65] : memref<2x72xf32, #tpu.memory_space<smem>>
    %563 = vector.broadcast %562 : f32 to vector<32x128xf32>
    %564 = arith.mulf %104, %563 : vector<32x128xf32>
    %565 = arith.addf %560, %564 : vector<32x128xf32>
    %566 = arith.index_cast %arg0 : i32 to index
    %c66 = arith.constant 66 : index
    %567 = memref.load %arg6[%566, %c66] : memref<2x72xf32, #tpu.memory_space<smem>>
    %568 = vector.broadcast %567 : f32 to vector<32x128xf32>
    %569 = arith.mulf %109, %568 : vector<32x128xf32>
    %570 = arith.addf %565, %569 : vector<32x128xf32>
    %571 = arith.index_cast %arg0 : i32 to index
    %c67 = arith.constant 67 : index
    %572 = memref.load %arg6[%571, %c67] : memref<2x72xf32, #tpu.memory_space<smem>>
    %573 = vector.broadcast %572 : f32 to vector<32x128xf32>
    %574 = arith.mulf %88, %573 : vector<32x128xf32>
    %575 = arith.addf %570, %574 : vector<32x128xf32>
    %576 = arith.index_cast %arg0 : i32 to index
    %c68 = arith.constant 68 : index
    %577 = memref.load %arg6[%576, %c68] : memref<2x72xf32, #tpu.memory_space<smem>>
    %578 = vector.broadcast %577 : f32 to vector<32x128xf32>
    %579 = arith.mulf %114, %578 : vector<32x128xf32>
    %580 = arith.addf %575, %579 : vector<32x128xf32>
    %581 = arith.index_cast %arg0 : i32 to index
    %c69 = arith.constant 69 : index
    %582 = memref.load %arg6[%581, %c69] : memref<2x72xf32, #tpu.memory_space<smem>>
    %583 = vector.broadcast %582 : f32 to vector<32x128xf32>
    %584 = arith.mulf %119, %583 : vector<32x128xf32>
    %585 = arith.addf %580, %584 : vector<32x128xf32>
    %586 = arith.index_cast %arg0 : i32 to index
    %c70 = arith.constant 70 : index
    %587 = memref.load %arg6[%586, %c70] : memref<2x72xf32, #tpu.memory_space<smem>>
    %588 = vector.broadcast %587 : f32 to vector<32x128xf32>
    %589 = arith.mulf %94, %588 : vector<32x128xf32>
    %590 = arith.addf %585, %589 : vector<32x128xf32>
    %591 = arith.index_cast %arg0 : i32 to index
    %c71 = arith.constant 71 : index
    %592 = memref.load %arg6[%591, %c71] : memref<2x72xf32, #tpu.memory_space<smem>>
    %593 = vector.broadcast %592 : f32 to vector<32x128xf32>
    %594 = arith.mulf %124, %593 : vector<32x128xf32>
    %595 = arith.addf %590, %594 : vector<32x128xf32>
    %c7_105 = arith.constant 7 : index
    %596 = memref.load %arg7[%c7_105] : memref<8xf32, #tpu.memory_space<smem>>
    %597 = vector.broadcast %596 : f32 to vector<32x128xf32>
    %598 = arith.addf %595, %597 : vector<32x128xf32>
    %c7_106 = arith.constant 7 : index
    %c0_107 = arith.constant 0 : index
    %c0_108 = arith.constant 0 : index
    %599 = vector.load %arg15[%c7_106, %c0_107, %c0_108] : memref<8x32x128xf32, #tpu.memory_space<vmem>>, vector<1x32x128xf32>
    %600 = vector.shape_cast %599 : vector<1x32x128xf32> to vector<32x128xf32>
    %601 = vector.shape_cast %598 : vector<32x128xf32> to vector<1x32x128xf32>
    tpu.vector_store %arg15[%c7_106, %c0_107, %c0_108], %601 {strides = array<i32>} : memref<8x32x128xf32, #tpu.memory_space<vmem>>, vector<1x32x128xf32>,
    %cst_109 = arith.constant 0.000000e+00 : f32
    %602 = vector.broadcast %cst_109 : f32 to vector<32x128xf32>
    %603 = arith.select %70, %598, %602 : vector<32x128xi1>, vector<32x128xf32>
    %604 = vector.shape_cast %603 : vector<32x128xf32> to vector<1x32x128xf32>
    %cst_110 = arith.constant dense<0.000000e+00> : vector<1xf32>
    %605 = vector.multi_reduction <add>, %604, %cst_110 [1, 2] : vector<1x32x128xf32> to vector<1xf32>
    %606 = vector.shape_cast %605 : vector<1xf32> to vector<1x1x1xf32>
    %607 = vector.extract %606[0, 0, 0] : f32 from vector<1x1x1xf32>
    %608 = arith.mulf %603, %603 : vector<32x128xf32>
    %609 = vector.shape_cast %608 : vector<32x128xf32> to vector<1x32x128xf32>
    %cst_111 = arith.constant dense<0.000000e+00> : vector<1xf32>
    %610 = vector.multi_reduction <add>, %609, %cst_111 [1, 2] : vector<1x32x128xf32> to vector<1xf32>
    %611 = vector.shape_cast %610 : vector<1xf32> to vector<1x1x1xf32>
    %612 = vector.extract %611[0, 0, 0] : f32 from vector<1x1x1xf32>
    %c0_112 = arith.constant 0 : index
    %613 = memref.load %arg11[%c0_112] : memref<3xf32, #tpu.memory_space<smem>>
    %c1_113 = arith.constant 1 : index
    %614 = memref.load %arg11[%c1_113] : memref<3xf32, #tpu.memory_space<smem>>
    %c2_114 = arith.constant 2 : index
    %615 = memref.load %arg11[%c2_114] : memref<3xf32, #tpu.memory_space<smem>>
    %cst_115 = arith.constant 0.00347222225 : f32
    %616 = arith.mulf %180, %cst_115 : f32
    %cst_116 = arith.constant 0.00347222225 : f32
    %617 = arith.mulf %185, %cst_116 : f32
    %618 = arith.mulf %616, %616 : f32
    %619 = arith.subf %617, %618 : f32
    %cst_117 = arith.constant 0.000000e+00 : f32
    %620 = arith.maximumf %619, %cst_117 : f32
    %c0_118 = arith.constant 0 : index
    %621 = memref.load %arg8[%c0_118] : memref<8xf32, #tpu.memory_space<smem>>
    %cst_119 = arith.constant 9.99999974E-6 : f32
    %622 = arith.addf %620, %cst_119 : f32
    %623 = math.rsqrt %622 : f32
    %624 = arith.mulf %621, %623 : f32
    %c0_120 = arith.constant 0 : index
    %625 = memref.load %arg9[%c0_120] : memref<8xf32, #tpu.memory_space<smem>>
    %626 = arith.mulf %616, %624 : f32
    %627 = arith.subf %625, %626 : f32
    %c0_121 = arith.constant 0 : index
    %c0_122 = arith.constant 0 : index
    %c0_123 = arith.constant 0 : index
    %628 = vector.load %arg15[%c0_121, %c0_122, %c0_123] : memref<8x32x128xf32, #tpu.memory_space<vmem>>, vector<1x32x128xf32>
    %629 = vector.shape_cast %628 : vector<1x32x128xf32> to vector<32x128xf32>
    %630 = vector.broadcast %624 : f32 to vector<32x128xf32>
    %631 = arith.mulf %629, %630 : vector<32x128xf32>
    %632 = vector.broadcast %627 : f32 to vector<32x128xf32>
    %633 = arith.addf %631, %632 : vector<32x128xf32>
    %cst_124 = arith.constant 0.000000e+00 : f32
    %634 = vector.broadcast %cst_124 : f32 to vector<32x128xf32>
    %635 = arith.maximumf %633, %634 : vector<32x128xf32>
    %c0_125 = arith.constant 0 : index
    %636 = memref.load %arg10[%c0_125] : memref<8xf32, #tpu.memory_space<smem>>
    %637 = vector.broadcast %636 : f32 to vector<32x128xf32>
    %638 = arith.mulf %635, %637 : vector<32x128xf32>
    %cst_126 = arith.constant 0.00347222225 : f32
    %639 = arith.mulf %241, %cst_126 : f32
    %cst_127 = arith.constant 0.00347222225 : f32
    %640 = arith.mulf %246, %cst_127 : f32
    %641 = arith.mulf %639, %639 : f32
    %642 = arith.subf %640, %641 : f32
    %cst_128 = arith.constant 0.000000e+00 : f32
    %643 = arith.maximumf %642, %cst_128 : f32
    %c1_129 = arith.constant 1 : index
    %644 = memref.load %arg8[%c1_129] : memref<8xf32, #tpu.memory_space<smem>>
    %cst_130 = arith.constant 9.99999974E-6 : f32
    %645 = arith.addf %643, %cst_130 : f32
    %646 = math.rsqrt %645 : f32
    %647 = arith.mulf %644, %646 : f32
    %c1_131 = arith.constant 1 : index
    %648 = memref.load %arg9[%c1_131] : memref<8xf32, #tpu.memory_space<smem>>
    %649 = arith.mulf %639, %647 : f32
    %650 = arith.subf %648, %649 : f32
    %c1_132 = arith.constant 1 : index
    %c0_133 = arith.constant 0 : index
    %c0_134 = arith.constant 0 : index
    %651 = vector.load %arg15[%c1_132, %c0_133, %c0_134] : memref<8x32x128xf32, #tpu.memory_space<vmem>>, vector<1x32x128xf32>
    %652 = vector.shape_cast %651 : vector<1x32x128xf32> to vector<32x128xf32>
    %653 = vector.broadcast %647 : f32 to vector<32x128xf32>
    %654 = arith.mulf %652, %653 : vector<32x128xf32>
    %655 = vector.broadcast %650 : f32 to vector<32x128xf32>
    %656 = arith.addf %654, %655 : vector<32x128xf32>
    %cst_135 = arith.constant 0.000000e+00 : f32
    %657 = vector.broadcast %cst_135 : f32 to vector<32x128xf32>
    %658 = arith.maximumf %656, %657 : vector<32x128xf32>
    %c1_136 = arith.constant 1 : index
    %659 = memref.load %arg10[%c1_136] : memref<8xf32, #tpu.memory_space<smem>>
    %660 = vector.broadcast %659 : f32 to vector<32x128xf32>
    %661 = arith.mulf %658, %660 : vector<32x128xf32>
    %662 = arith.addf %638, %661 : vector<32x128xf32>
    %cst_137 = arith.constant 0.00347222225 : f32
    %663 = arith.mulf %302, %cst_137 : f32
    %cst_138 = arith.constant 0.00347222225 : f32
    %664 = arith.mulf %307, %cst_138 : f32
    %665 = arith.mulf %663, %663 : f32
    %666 = arith.subf %664, %665 : f32
    %cst_139 = arith.constant 0.000000e+00 : f32
    %667 = arith.maximumf %666, %cst_139 : f32
    %c2_140 = arith.constant 2 : index
    %668 = memref.load %arg8[%c2_140] : memref<8xf32, #tpu.memory_space<smem>>
    %cst_141 = arith.constant 9.99999974E-6 : f32
    %669 = arith.addf %667, %cst_141 : f32
    %670 = math.rsqrt %669 : f32
    %671 = arith.mulf %668, %670 : f32
    %c2_142 = arith.constant 2 : index
    %672 = memref.load %arg9[%c2_142] : memref<8xf32, #tpu.memory_space<smem>>
    %673 = arith.mulf %663, %671 : f32
    %674 = arith.subf %672, %673 : f32
    %c2_143 = arith.constant 2 : index
    %c0_144 = arith.constant 0 : index
    %c0_145 = arith.constant 0 : index
    %675 = vector.load %arg15[%c2_143, %c0_144, %c0_145] : memref<8x32x128xf32, #tpu.memory_space<vmem>>, vector<1x32x128xf32>
    %676 = vector.shape_cast %675 : vector<1x32x128xf32> to vector<32x128xf32>
    %677 = vector.broadcast %671 : f32 to vector<32x128xf32>
    %678 = arith.mulf %676, %677 : vector<32x128xf32>
    %679 = vector.broadcast %674 : f32 to vector<32x128xf32>
    %680 = arith.addf %678, %679 : vector<32x128xf32>
    %cst_146 = arith.constant 0.000000e+00 : f32
    %681 = vector.broadcast %cst_146 : f32 to vector<32x128xf32>
    %682 = arith.maximumf %680, %681 : vector<32x128xf32>
    %c2_147 = arith.constant 2 : index
    %683 = memref.load %arg10[%c2_147] : memref<8xf32, #tpu.memory_space<smem>>
    %684 = vector.broadcast %683 : f32 to vector<32x128xf32>
    %685 = arith.mulf %682, %684 : vector<32x128xf32>
    %686 = arith.addf %662, %685 : vector<32x128xf32>
    %cst_148 = arith.constant 0.00347222225 : f32
    %687 = arith.mulf %363, %cst_148 : f32
    %cst_149 = arith.constant 0.00347222225 : f32
    %688 = arith.mulf %368, %cst_149 : f32
    %689 = arith.mulf %687, %687 : f32
    %690 = arith.subf %688, %689 : f32
    %cst_150 = arith.constant 0.000000e+00 : f32
    %691 = arith.maximumf %690, %cst_150 : f32
    %c3_151 = arith.constant 3 : index
    %692 = memref.load %arg8[%c3_151] : memref<8xf32, #tpu.memory_space<smem>>
    %cst_152 = arith.constant 9.99999974E-6 : f32
    %693 = arith.addf %691, %cst_152 : f32
    %694 = math.rsqrt %693 : f32
    %695 = arith.mulf %692, %694 : f32
    %c3_153 = arith.constant 3 : index
    %696 = memref.load %arg9[%c3_153] : memref<8xf32, #tpu.memory_space<smem>>
    %697 = arith.mulf %687, %695 : f32
    %698 = arith.subf %696, %697 : f32
    %c3_154 = arith.constant 3 : index
    %c0_155 = arith.constant 0 : index
    %c0_156 = arith.constant 0 : index
    %699 = vector.load %arg15[%c3_154, %c0_155, %c0_156] : memref<8x32x128xf32, #tpu.memory_space<vmem>>, vector<1x32x128xf32>
    %700 = vector.shape_cast %699 : vector<1x32x128xf32> to vector<32x128xf32>
    %701 = vector.broadcast %695 : f32 to vector<32x128xf32>
    %702 = arith.mulf %700, %701 : vector<32x128xf32>
    %703 = vector.broadcast %698 : f32 to vector<32x128xf32>
    %704 = arith.addf %702, %703 : vector<32x128xf32>
    %cst_157 = arith.constant 0.000000e+00 : f32
    %705 = vector.broadcast %cst_157 : f32 to vector<32x128xf32>
    %706 = arith.maximumf %704, %705 : vector<32x128xf32>
    %c3_158 = arith.constant 3 : index
    %707 = memref.load %arg10[%c3_158] : memref<8xf32, #tpu.memory_space<smem>>
    %708 = vector.broadcast %707 : f32 to vector<32x128xf32>
    %709 = arith.mulf %706, %708 : vector<32x128xf32>
    %710 = arith.addf %686, %709 : vector<32x128xf32>
    %cst_159 = arith.constant 0.00347222225 : f32
    %711 = arith.mulf %424, %cst_159 : f32
    %cst_160 = arith.constant 0.00347222225 : f32
    %712 = arith.mulf %429, %cst_160 : f32
    %713 = arith.mulf %711, %711 : f32
    %714 = arith.subf %712, %713 : f32
    %cst_161 = arith.constant 0.000000e+00 : f32
    %715 = arith.maximumf %714, %cst_161 : f32
    %c4_162 = arith.constant 4 : index
    %716 = memref.load %arg8[%c4_162] : memref<8xf32, #tpu.memory_space<smem>>
    %cst_163 = arith.constant 9.99999974E-6 : f32
    %717 = arith.addf %715, %cst_163 : f32
    %718 = math.rsqrt %717 : f32
    %719 = arith.mulf %716, %718 : f32
    %c4_164 = arith.constant 4 : index
    %720 = memref.load %arg9[%c4_164] : memref<8xf32, #tpu.memory_space<smem>>
    %721 = arith.mulf %711, %719 : f32
    %722 = arith.subf %720, %721 : f32
    %c4_165 = arith.constant 4 : index
    %c0_166 = arith.constant 0 : index
    %c0_167 = arith.constant 0 : index
    %723 = vector.load %arg15[%c4_165, %c0_166, %c0_167] : memref<8x32x128xf32, #tpu.memory_space<vmem>>, vector<1x32x128xf32>
    %724 = vector.shape_cast %723 : vector<1x32x128xf32> to vector<32x128xf32>
    %725 = vector.broadcast %719 : f32 to vector<32x128xf32>
    %726 = arith.mulf %724, %725 : vector<32x128xf32>
    %727 = vector.broadcast %722 : f32 to vector<32x128xf32>
    %728 = arith.addf %726, %727 : vector<32x128xf32>
    %cst_168 = arith.constant 0.000000e+00 : f32
    %729 = vector.broadcast %cst_168 : f32 to vector<32x128xf32>
    %730 = arith.maximumf %728, %729 : vector<32x128xf32>
    %c4_169 = arith.constant 4 : index
    %731 = memref.load %arg10[%c4_169] : memref<8xf32, #tpu.memory_space<smem>>
    %732 = vector.broadcast %731 : f32 to vector<32x128xf32>
    %733 = arith.mulf %730, %732 : vector<32x128xf32>
    %734 = arith.addf %710, %733 : vector<32x128xf32>
    %cst_170 = arith.constant 0.00347222225 : f32
    %735 = arith.mulf %485, %cst_170 : f32
    %cst_171 = arith.constant 0.00347222225 : f32
    %736 = arith.mulf %490, %cst_171 : f32
    %737 = arith.mulf %735, %735 : f32
    %738 = arith.subf %736, %737 : f32
    %cst_172 = arith.constant 0.000000e+00 : f32
    %739 = arith.maximumf %738, %cst_172 : f32
    %c5_173 = arith.constant 5 : index
    %740 = memref.load %arg8[%c5_173] : memref<8xf32, #tpu.memory_space<smem>>
    %cst_174 = arith.constant 9.99999974E-6 : f32
    %741 = arith.addf %739, %cst_174 : f32
    %742 = math.rsqrt %741 : f32
    %743 = arith.mulf %740, %742 : f32
    %c5_175 = arith.constant 5 : index
    %744 = memref.load %arg9[%c5_175] : memref<8xf32, #tpu.memory_space<smem>>
    %745 = arith.mulf %735, %743 : f32
    %746 = arith.subf %744, %745 : f32
    %c5_176 = arith.constant 5 : index
    %c0_177 = arith.constant 0 : index
    %c0_178 = arith.constant 0 : index
    %747 = vector.load %arg15[%c5_176, %c0_177, %c0_178] : memref<8x32x128xf32, #tpu.memory_space<vmem>>, vector<1x32x128xf32>
    %748 = vector.shape_cast %747 : vector<1x32x128xf32> to vector<32x128xf32>
    %749 = vector.broadcast %743 : f32 to vector<32x128xf32>
    %750 = arith.mulf %748, %749 : vector<32x128xf32>
    %751 = vector.broadcast %746 : f32 to vector<32x128xf32>
    %752 = arith.addf %750, %751 : vector<32x128xf32>
    %cst_179 = arith.constant 0.000000e+00 : f32
    %753 = vector.broadcast %cst_179 : f32 to vector<32x128xf32>
    %754 = arith.maximumf %752, %753 : vector<32x128xf32>
    %c5_180 = arith.constant 5 : index
    %755 = memref.load %arg10[%c5_180] : memref<8xf32, #tpu.memory_space<smem>>
    %756 = vector.broadcast %755 : f32 to vector<32x128xf32>
    %757 = arith.mulf %754, %756 : vector<32x128xf32>
    %758 = arith.addf %734, %757 : vector<32x128xf32>
    %cst_181 = arith.constant 0.00347222225 : f32
    %759 = arith.mulf %546, %cst_181 : f32
    %cst_182 = arith.constant 0.00347222225 : f32
    %760 = arith.mulf %551, %cst_182 : f32
    %761 = arith.mulf %759, %759 : f32
    %762 = arith.subf %760, %761 : f32
    %cst_183 = arith.constant 0.000000e+00 : f32
    %763 = arith.maximumf %762, %cst_183 : f32
    %c6_184 = arith.constant 6 : index
    %764 = memref.load %arg8[%c6_184] : memref<8xf32, #tpu.memory_space<smem>>
    %cst_185 = arith.constant 9.99999974E-6 : f32
    %765 = arith.addf %763, %cst_185 : f32
    %766 = math.rsqrt %765 : f32
    %767 = arith.mulf %764, %766 : f32
    %c6_186 = arith.constant 6 : index
    %768 = memref.load %arg9[%c6_186] : memref<8xf32, #tpu.memory_space<smem>>
    %769 = arith.mulf %759, %767 : f32
    %770 = arith.subf %768, %769 : f32
    %c6_187 = arith.constant 6 : index
    %c0_188 = arith.constant 0 : index
    %c0_189 = arith.constant 0 : index
    %771 = vector.load %arg15[%c6_187, %c0_188, %c0_189] : memref<8x32x128xf32, #tpu.memory_space<vmem>>, vector<1x32x128xf32>
    %772 = vector.shape_cast %771 : vector<1x32x128xf32> to vector<32x128xf32>
    %773 = vector.broadcast %767 : f32 to vector<32x128xf32>
    %774 = arith.mulf %772, %773 : vector<32x128xf32>
    %775 = vector.broadcast %770 : f32 to vector<32x128xf32>
    %776 = arith.addf %774, %775 : vector<32x128xf32>
    %cst_190 = arith.constant 0.000000e+00 : f32
    %777 = vector.broadcast %cst_190 : f32 to vector<32x128xf32>
    %778 = arith.maximumf %776, %777 : vector<32x128xf32>
    %c6_191 = arith.constant 6 : index
    %779 = memref.load %arg10[%c6_191] : memref<8xf32, #tpu.memory_space<smem>>
    %780 = vector.broadcast %779 : f32 to vector<32x128xf32>
    %781 = arith.mulf %778, %780 : vector<32x128xf32>
    %782 = arith.addf %758, %781 : vector<32x128xf32>
    %cst_192 = arith.constant 0.00347222225 : f32
    %783 = arith.mulf %607, %cst_192 : f32
    %cst_193 = arith.constant 0.00347222225 : f32
    %784 = arith.mulf %612, %cst_193 : f32
    %785 = arith.mulf %783, %783 : f32
    %786 = arith.subf %784, %785 : f32
    %cst_194 = arith.constant 0.000000e+00 : f32
    %787 = arith.maximumf %786, %cst_194 : f32
    %c7_195 = arith.constant 7 : index
    %788 = memref.load %arg8[%c7_195] : memref<8xf32, #tpu.memory_space<smem>>
    %cst_196 = arith.constant 9.99999974E-6 : f32
    %789 = arith.addf %787, %cst_196 : f32
    %790 = math.rsqrt %789 : f32
    %791 = arith.mulf %788, %790 : f32
    %c7_197 = arith.constant 7 : index
    %792 = memref.load %arg9[%c7_197] : memref<8xf32, #tpu.memory_space<smem>>
    %793 = arith.mulf %783, %791 : f32
    %794 = arith.subf %792, %793 : f32
    %c7_198 = arith.constant 7 : index
    %c0_199 = arith.constant 0 : index
    %c0_200 = arith.constant 0 : index
    %795 = vector.load %arg15[%c7_198, %c0_199, %c0_200] : memref<8x32x128xf32, #tpu.memory_space<vmem>>, vector<1x32x128xf32>
    %796 = vector.shape_cast %795 : vector<1x32x128xf32> to vector<32x128xf32>
    %797 = vector.broadcast %791 : f32 to vector<32x128xf32>
    %798 = arith.mulf %796, %797 : vector<32x128xf32>
    %799 = vector.broadcast %794 : f32 to vector<32x128xf32>
    %800 = arith.addf %798, %799 : vector<32x128xf32>
    %cst_201 = arith.constant 0.000000e+00 : f32
    %801 = vector.broadcast %cst_201 : f32 to vector<32x128xf32>
    %802 = arith.maximumf %800, %801 : vector<32x128xf32>
    %c7_202 = arith.constant 7 : index
    %803 = memref.load %arg10[%c7_202] : memref<8xf32, #tpu.memory_space<smem>>
    %804 = vector.broadcast %803 : f32 to vector<32x128xf32>
    %805 = arith.mulf %802, %804 : vector<32x128xf32>
    %806 = arith.addf %782, %805 : vector<32x128xf32>
    %807 = vector.broadcast %613 : f32 to vector<32x128xf32>
    %808 = arith.addf %806, %807 : vector<32x128xf32>
    %809 = arith.negf %808 : vector<32x128xf32>
    %810 = math.exp %809 : vector<32x128xf32>
    %cst_203 = arith.constant 1.000000e+00 : f32
    %811 = vector.broadcast %cst_203 : f32 to vector<32x128xf32>
    %812 = arith.addf %811, %810 : vector<32x128xf32>
    %813 = arith.divf %811, %812 : vector<32x128xf32>
    %814 = vector.broadcast %614 : f32 to vector<32x128xf32>
    %815 = arith.subf %813, %814 : vector<32x128xf32>
    %816 = vector.broadcast %615 : f32 to vector<32x128xf32>
    %817 = arith.mulf %815, %816 : vector<32x128xf32>
    %818 = arith.negf %817 : vector<32x128xf32>
    %819 = math.exp %818 : vector<32x128xf32>
    %cst_204 = arith.constant 1.000000e+00 : f32
    %820 = vector.broadcast %cst_204 : f32 to vector<32x128xf32>
    %821 = arith.addf %820, %819 : vector<32x128xf32>
    %822 = arith.divf %820, %821 : vector<32x128xf32>
    %823 = arith.mulf %813, %822 : vector<32x128xf32>
    %cst_205 = arith.constant 0.000000e+00 : f32
    %cst_206 = arith.constant 5.000000e+00 : f32
    %824 = vector.broadcast %cst_205 : f32 to vector<32x128xf32>
    %825 = arith.maximumf %824, %823 : vector<32x128xf32>
    %826 = vector.broadcast %cst_206 : f32 to vector<32x128xf32>
    %827 = arith.minimumf %826, %825 : vector<32x128xf32>
    %c0_207 = arith.constant 0 : index
    %c0_208 = arith.constant 0 : index
    %c0_209 = arith.constant 0 : index
    %828 = vector.load %arg12[%c0_207, %c0_208, %c0_209] : memref<1x32x128xf32, #tpu.memory_space<vmem>>, vector<1x32x128xf32>
    %829 = vector.shape_cast %828 : vector<1x32x128xf32> to vector<32x128xf32>
    %830 = vector.shape_cast %827 : vector<32x128xf32> to vector<1x32x128xf32>
    tpu.vector_store %arg12[%c0_207, %c0_208, %c0_209], %830 {strides = array<i32>} : memref<1x32x128xf32, #tpu.memory_space<vmem>>, vector<1x32x128xf32>,
    %cst_210 = arith.constant 1.000000e+00 : f32
    %831 = vector.broadcast %cst_210 : f32 to vector<32x128xf32>
    %832 = arith.subf %831, %822 : vector<32x128xf32>
    %833 = arith.mulf %813, %832 : vector<32x128xf32>
    %cst_211 = arith.constant 0.000000e+00 : f32
    %cst_212 = arith.constant 5.000000e+00 : f32
    %834 = vector.broadcast %cst_211 : f32 to vector<32x128xf32>
    %835 = arith.maximumf %834, %833 : vector<32x128xf32>
    %836 = vector.broadcast %cst_212 : f32 to vector<32x128xf32>
    %837 = arith.minimumf %836, %835 : vector<32x128xf32>
    %c0_213 = arith.constant 0 : index
    %c0_214 = arith.constant 0 : index
    %c0_215 = arith.constant 0 : index
    %838 = vector.load %arg13[%c0_213, %c0_214, %c0_215] : memref<1x32x128xf32, #tpu.memory_space<vmem>>, vector<1x32x128xf32>
    %839 = vector.shape_cast %838 : vector<1x32x128xf32> to vector<32x128xf32>
    %840 = vector.shape_cast %837 : vector<32x128xf32> to vector<1x32x128xf32>
    tpu.vector_store %arg13[%c0_213, %c0_214, %c0_215], %840 {strides = array<i32>} : memref<1x32x128xf32, #tpu.memory_space<vmem>>, vector<1x32x128xf32>,
    return
  }
  func.func @transform_0(%arg0: i32) -> (i32, i32, i32) {
    %c0_i32 = arith.constant 0 : i32
    %c0_i32_0 = arith.constant 0 : i32
    %c0_i32_1 = arith.constant 0 : i32
    return %arg0, %c0_i32, %c0_i32_0 : i32, i32, i32
  }
  func.func @transform_1(%arg0: i32) -> (i32, i32) {
    %c0_i32 = arith.constant 0 : i32
    %c0_i32_0 = arith.constant 0 : i32
    %c0_i32_1 = arith.constant 0 : i32
    return %c0_i32, %c0_i32_0 : i32, i32
  }
  func.func @transform_2(%arg0: i32) -> (i32, i32) {
    %c0_i32 = arith.constant 0 : i32
    %c0_i32_0 = arith.constant 0 : i32
    %c0_i32_1 = arith.constant 0 : i32
    return %c0_i32, %c0_i32_0 : i32, i32
  }
  func.func @transform_3(%arg0: i32) -> (i32, i32) {
    %c0_i32 = arith.constant 0 : i32
    %c0_i32_0 = arith.constant 0 : i32
    %c0_i32_1 = arith.constant 0 : i32
    return %c0_i32, %c0_i32_0 : i32, i32
  }
  func.func @transform_4(%arg0: i32) -> (i32, i32) {
    %c0_i32 = arith.constant 0 : i32
    %c0_i32_0 = arith.constant 0 : i32
    %c0_i32_1 = arith.constant 0 : i32
    return %c0_i32, %c0_i32_0 : i32, i32
  }
  func.func @transform_5(%arg0: i32) -> (i32, i32) {
    %c0_i32 = arith.constant 0 : i32
    %c0_i32_0 = arith.constant 0 : i32
    %c0_i32_1 = arith.constant 0 : i32
    return %c0_i32, %c0_i32_0 : i32, i32
  }
  func.func @transform_6(%arg0: i32) -> i32 {
    %c0_i32 = arith.constant 0 : i32
    %c0_i32_0 = arith.constant 0 : i32
    return %c0_i32 : i32
  }
  func.func @transform_7(%arg0: i32) -> i32 {
    %c0_i32 = arith.constant 0 : i32
    %c0_i32_0 = arith.constant 0 : i32
    return %c0_i32 : i32
  }
  func.func @transform_8(%arg0: i32) -> i32 {
    %c0_i32 = arith.constant 0 : i32
    %c0_i32_0 = arith.constant 0 : i32
    return %c0_i32 : i32
  }
  func.func @transform_9(%arg0: i32) -> i32 {
    %c0_i32 = arith.constant 0 : i32
    %c0_i32_0 = arith.constant 0 : i32
    return %c0_i32 : i32
  }
  func.func @transform_10(%arg0: i32) -> i32 {
    %c0_i32 = arith.constant 0 : i32
    %c0_i32_0 = arith.constant 0 : i32
    return %c0_i32 : i32
  }
  func.func @transform_11(%arg0: i32) -> (i32, i32, i32) {
    %c0_i32 = arith.constant 0 : i32
    %c0_i32_0 = arith.constant 0 : i32
    %c0_i32_1 = arith.constant 0 : i32
    return %arg0, %c0_i32, %c0_i32_0 : i32, i32, i32
  }
  func.func @transform_12(%arg0: i32) -> (i32, i32, i32) {
    %c0_i32 = arith.constant 0 : i32
    %c0_i32_0 = arith.constant 0 : i32
    %c0_i32_1 = arith.constant 0 : i32
    return %arg0, %c0_i32, %c0_i32_0 : i32, i32, i32
  }
  func.func @transform_13(%arg0: i32) -> (i32, i32, i32) {
    %c0_i32 = arith.constant 0 : i32
    %c0_i32_0 = arith.constant 0 : i32
    %c0_i32_1 = arith.constant 0 : i32
    return %arg0, %c0_i32, %c0_i32_0 : i32, i32, i32
  }
}

</mosaic_0001>

<llo_original>
// kernel: tpu_custom_call.1
$region0: #{tpu_custom_call.1}
  #allocation0 [shape = 'u32[]', space=smem, size = 0x4, offset = 0x4, fixed_abs, tag = 'smem constant byte address 0x4 - core index']
  #allocation1 [shape = 'u32[144,128]{1,0:T(1,128)}', space=vmem, size = 0x12000, scoped, tag = 'internal scratch']
  #allocation2 [shape = 'f32[8,32,128]{2,1,0:T(8,128)}', space=vmem, size = 0x20000, scoped, tag = 'scratch operand']
  %s0 = inlined_call_operand.vmem [shape: f32[2,32,16], index: 0, kind: input, shape index: {}]
  %s1 = inlined_call_operand.vmem [shape: f32[16,128], index: 1, kind: input, shape index: {}]
  %s2 = inlined_call_operand.vmem [shape: f32[16,128], index: 2, kind: input, shape index: {}]
  %s3 = inlined_call_operand.vmem [shape: f32[32,32], index: 3, kind: input, shape index: {}]
  %s4 = inlined_call_operand.vmem [shape: f32[32,32], index: 4, kind: input, shape index: {}]
  %s5 = inlined_call_operand.vmem [shape: f32[2,72], index: 5, kind: input, shape index: {}]
  %s6 = inlined_call_operand.vmem [shape: f32[8], index: 6, kind: input, shape index: {}]
  %s7 = inlined_call_operand.vmem [shape: f32[8], index: 7, kind: input, shape index: {}]
  %s8 = inlined_call_operand.vmem [shape: f32[8], index: 8, kind: input, shape index: {}]
  %s9 = inlined_call_operand.vmem [shape: f32[8], index: 9, kind: input, shape index: {}]
  %s10 = inlined_call_operand.vmem [shape: f32[3], index: 10, kind: input, shape index: {}]
  %s11 = inlined_call_operand.hbm [shape: f32[2,32,128], index: 11, kind: output, shape index: {0}]
  %s12 = inlined_call_operand.hbm [shape: f32[2,32,128], index: 12, kind: output, shape index: {1}]
  %s13 = inlined_call_operand.hbm [shape: f32[2,32,128], index: 13, kind: output, shape index: {2}]
  %14 = xla_tuple %s11, %s12, %s13
  %s15 = sld [smem:[#allocation0]]
  $region117: #{tpu_custom_call.1} parent=0
    _
  %s17 = ssub.s32 1, %s15
  %s18 = scalar_select 0, %s17, %s15
  $region1: #{tpu_custom_call.1} parent=0
    #allocation3 [shape = 'u8[1024]{0}', space=smem, size = 0x400, scoped, tag = 'input window, operand 5, single buffered']
    #allocation4 [shape = 's32[2]{0}', space=sflag, size = 0x8, scoped, tag = 'scoped memory for tpu_custom_call.1']
    #allocation5 [shape = 's32[2]{0}', space=sflag, size = 0x8, scoped, tag = 'scoped memory for tpu_custom_call.1']
    #allocation6 [shape = 'u8[512]{0}', space=smem, size = 0x200, scoped, tag = 'input window, operand 6, single buffered']
    #allocation7 [shape = 's32[1]{0}', space=sflag, size = 0x4, scoped, tag = 'scoped memory for tpu_custom_call.1']
    #allocation8 [shape = 'u8[512]{0}', space=smem, size = 0x200, scoped, tag = 'input window, operand 7, single buffered']
    #allocation9 [shape = 'u8[512]{0}', space=smem, size = 0x200, scoped, tag = 'input window, operand 8, single buffered']
    #allocation10 [shape = 's32[1]{0}', space=sflag, size = 0x4, scoped, tag = 'scoped memory for tpu_custom_call.1']
    #allocation11 [shape = 'u8[512]{0}', space=smem, size = 0x200, scoped, tag = 'input window, operand 9, single buffered']
    #allocation12 [shape = 'u8[512]{0}', space=smem, size = 0x200, scoped, tag = 'input window, operand 10, single buffered']
    #allocation13 [shape = 's32[1]{0}', space=sflag, size = 0x4, scoped, tag = 'scoped memory for tpu_custom_call.1']
    #allocation14 [shape = 'u8[32768]{0}', space=vmem, size = 0x8000, scoped, tag = 'output window, operand 0']
    #allocation15 [shape = 'u8[32768]{0}', space=vmem, size = 0x8000, scoped, tag = 'output window, operand 1']
    #allocation16 [shape = 's32[2]{0}', space=sflag, size = 0x8, scoped, tag = 'scoped memory for tpu_custom_call.1']
    #allocation17 [shape = 'u8[32768]{0}', space=vmem, size = 0x8000, scoped, tag = 'output window, operand 2']
    %19 = vsyncpa [#allocation5], 0
    %20 = vsyncpa [#allocation7], 0
    %21 = vsyncpa [#allocation10], 0
    %22 = vsyncpa [#allocation13], 0
    %23 = vsyncpa [#allocation4], 0
    %s24 = scalar_lea.sflag [#allocation4], 1
    %25 = vsyncpa %s24, 0
    %26 = vsyncpa [#allocation16], 0
    %s27 = scalar_lea.sflag [#allocation16], 1
    %28 = vsyncpa %s27, 0
    loop: start=0, step=1, limit=4
    $region2: #{tpu_custom_call.1} parent=1 // loop_pre_header
      _
    $region3: #{tpu_custom_call.1} parent=1 // loop_header
      %s30 = sphi 0, %s34
      %p31 = scmp.ge.s32.totalorder %s30, 4
      %s40 = sphi 0, %s42
      %s43 = sphi 0, %s40
      %s44 = sphi 0, %s43
      %s60 = sphi 0, %s44
      %s64 = sphi 0, %s64
      %s66 = sphi 0, %s64
      %s67 = sphi 0, %s66
      %s81 = sphi 0, %s67
      %s85 = sphi 0, %s85
      %s87 = sphi 0, %s85
      %s88 = sphi 0, %s87
      %s102 = sphi 0, %s88
      %s106 = sphi 0, %s106
      %s108 = sphi 0, %s106
      %s109 = sphi 0, %s108
      %s123 = sphi 0, %s109
      %s127 = sphi 0, %s127
      %s129 = sphi 0, %s127
      %s130 = sphi 0, %s129
      %s144 = sphi 0, %s130
      %s148 = sphi 0, %s148
      %s150 = sphi 0, %s148
      %s151 = sphi 0, %s150
      %s165 = sphi 0, %s151
      %s169 = sphi 0, %s169
      %s171 = sphi 0, %s169
      %s172 = sphi 0, %s171
      %s186 = sphi 0, %s172
      %s190 = sphi 0, %s190
      %s192 = sphi 0, %s190
      %s193 = sphi 0, %s192
      %s207 = sphi 0, %s193
      %s211 = sphi 0, %s211
      %s213 = sphi 0, %s211
      %s214 = sphi 0, %s213
      %s228 = sphi 0, %s214
      %s232 = sphi 0, %s232
      %s234 = sphi 0, %s232
      %s235 = sphi 0, %s234
      %s249 = sphi 0, %s235
      %s253 = sphi 0, %s253
      %s255 = sphi 0, %s253
      %s256 = sphi 0, %s255
      %s270 = sphi 0, %s256
      %s276 = sphi 0, %s278
      %s279 = sphi 0, %s276
      %s280 = sphi 0, %s279
      %s296 = sphi 0, %s280
      %s302 = sphi 0, %s304
      %s305 = sphi 0, %s302
      %s306 = sphi 0, %s305
      %s322 = sphi 0, %s306
      %s328 = sphi 0, %s330
      %s331 = sphi 0, %s328
      %s332 = sphi 0, %s331
      %s348 = sphi 0, %s332
    $region4: #{tpu_custom_call.1} parent=1 // loop_header_branch
      %33 = sbr.rel (%p31) target = $region8
    $region5: #{tpu_custom_call.1} parent=1 // loop_body
      %s35 = ssub.s32 %s30, 1
      %s36 = ssub.s32 %s30, 2
      %s37 = sadd.s32 %s30, 1
      %s38 = ssub.s32 %s30, %s37
      %p39 = scmp.eq.s32.totalorder %s38, 0
      %s41 = sadd.s32 %s40, 1
      %s42 = scalar_select %p39, %s40, %s41
      %p45 = pneg %p39
      %p46 = scmp.eq.s32.totalorder %s30, 1
      %p47 = por %p45, %p46
      %p48 = scmp.ne.s32.totalorder %s40, %s43
      %p49 = scmp.eq.s32.totalorder %s30, 0
      %p50 = por %p48, %p49
      %p51 = scmp.ne.s32.totalorder %s40, %s43
      %p52 = scmp.eq.s32.totalorder %s35, 1
      %p53 = por %p51, %p52
      %p54 = scmp.ne.s32.totalorder %s43, %s44
      %p55 = scmp.eq.s32.totalorder %s35, 0
      %p56 = por %p54, %p55
      %p57 = scmp.ne.s32.totalorder %s43, %s44
      %p58 = scmp.eq.s32.totalorder %s36, 1
      %p59 = por %p57, %p58
      %p61 = scmp.ne.s32.totalorder %s44, %s60
      %p62 = scmp.eq.s32.totalorder %s36, 0
      %p63 = por %p61, %p62
      %s65 = sadd.s32 %s64, 1
      %p68 = scmp.eq.s32.totalorder %s30, 1
      %p69 = scmp.ne.s32.totalorder %s64, %s66
      %p70 = scmp.eq.s32.totalorder %s30, 0
      %p71 = por %p69, %p70
      %p72 = scmp.ne.s32.totalorder %s64, %s66
      %p73 = scmp.eq.s32.totalorder %s35, 1
      %p74 = por %p72, %p73
      %p75 = scmp.ne.s32.totalorder %s66, %s67
      %p76 = scmp.eq.s32.totalorder %s35, 0
      %p77 = por %p75, %p76
      %p78 = scmp.ne.s32.totalorder %s66, %s67
      %p79 = scmp.eq.s32.totalorder %s36, 1
      %p80 = por %p78, %p79
      %p82 = scmp.ne.s32.totalorder %s67, %s81
      %p83 = scmp.eq.s32.totalorder %s36, 0
      %p84 = por %p82, %p83
      %s86 = sadd.s32 %s85, 1
      %p89 = scmp.eq.s32.totalorder %s30, 1
      %p90 = scmp.ne.s32.totalorder %s85, %s87
      %p91 = scmp.eq.s32.totalorder %s30, 0
      %p92 = por %p90, %p91
      %p93 = scmp.ne.s32.totalorder %s85, %s87
      %p94 = scmp.eq.s32.totalorder %s35, 1
      %p95 = por %p93, %p94
      %p96 = scmp.ne.s32.totalorder %s87, %s88
      %p97 = scmp.eq.s32.totalorder %s35, 0
      %p98 = por %p96, %p97
      %p99 = scmp.ne.s32.totalorder %s87, %s88
      %p100 = scmp.eq.s32.totalorder %s36, 1
      %p101 = por %p99, %p100
      %p103 = scmp.ne.s32.totalorder %s88, %s102
      %p104 = scmp.eq.s32.totalorder %s36, 0
      %p105 = por %p103, %p104
      %s107 = sadd.s32 %s106, 1
      %p110 = scmp.eq.s32.totalorder %s30, 1
      %p111 = scmp.ne.s32.totalorder %s106, %s108
      %p112 = scmp.eq.s32.totalorder %s30, 0
      %p113 = por %p111, %p112
      %p114 = scmp.ne.s32.totalorder %s106, %s108
      %p115 = scmp.eq.s32.totalorder %s35, 1
      %p116 = por %p114, %p115
      %p117 = scmp.ne.s32.totalorder %s108, %s109
      %p118 = scmp.eq.s32.totalorder %s35, 0
      %p119 = por %p117, %p118
      %p120 = scmp.ne.s32.totalorder %s108, %s109
      %p121 = scmp.eq.s32.totalorder %s36, 1
      %p122 = por %p120, %p121
      %p124 = scmp.ne.s32.totalorder %s109, %s123
      %p125 = scmp.eq.s32.totalorder %s36, 0
      %p126 = por %p124, %p125
      %s128 = sadd.s32 %s127, 1
      %p131 = scmp.eq.s32.totalorder %s30, 1
      %p132 = scmp.ne.s32.totalorder %s127, %s129
      %p133 = scmp.eq.s32.totalorder %s30, 0
      %p134 = por %p132, %p133
      %p135 = scmp.ne.s32.totalorder %s127, %s129
      %p136 = scmp.eq.s32.totalorder %s35, 1
      %p137 = por %p135, %p136
      %p138 = scmp.ne.s32.totalorder %s129, %s130
      %p139 = scmp.eq.s32.totalorder %s35, 0
      %p140 = por %p138, %p139
      %p141 = scmp.ne.s32.totalorder %s129, %s130
      %p142 = scmp.eq.s32.totalorder %s36, 1
      %p143 = por %p141, %p142
      %p145 = scmp.ne.s32.totalorder %s130, %s144
      %p146 = scmp.eq.s32.totalorder %s36, 0
      %p147 = por %p145, %p146
      %s149 = sadd.s32 %s148, 1
      %p152 = scmp.eq.s32.totalorder %s30, 1
      %p153 = scmp.ne.s32.totalorder %s148, %s150
      %p154 = scmp.eq.s32.totalorder %s30, 0
      %p155 = por %p153, %p154
      %p156 = scmp.ne.s32.totalorder %s148, %s150
      %p157 = scmp.eq.s32.totalorder %s35, 1
      %p158 = por %p156, %p157
      %p159 = scmp.ne.s32.totalorder %s150, %s151
      %p160 = scmp.eq.s32.totalorder %s35, 0
      %p161 = por %p159, %p160
      %p162 = scmp.ne.s32.totalorder %s150, %s151
      %p163 = scmp.eq.s32.totalorder %s36, 1
      %p164 = por %p162, %p163
      %p166 = scmp.ne.s32.totalorder %s151, %s165
      %p167 = scmp.eq.s32.totalorder %s36, 0
      %p168 = por %p166, %p167
      %s170 = sadd.s32 %s169, 1
      %p173 = scmp.eq.s32.totalorder %s30, 1
      %p174 = scmp.ne.s32.totalorder %s169, %s171
      %p175 = scmp.eq.s32.totalorder %s30, 0
      %p176 = por %p174, %p175
      %p177 = scmp.ne.s32.totalorder %s169, %s171
      %p178 = scmp.eq.s32.totalorder %s35, 1
      %p179 = por %p177, %p178
      %p180 = scmp.ne.s32.totalorder %s171, %s172
      %p181 = scmp.eq.s32.totalorder %s35, 0
      %p182 = por %p180, %p181
      %p183 = scmp.ne.s32.totalorder %s171, %s172
      %p184 = scmp.eq.s32.totalorder %s36, 1
      %p185 = por %p183, %p184
      %p187 = scmp.ne.s32.totalorder %s172, %s186
      %p188 = scmp.eq.s32.totalorder %s36, 0
      %p189 = por %p187, %p188
      %s191 = sadd.s32 %s190, 1
      %p194 = scmp.eq.s32.totalorder %s30, 1
      %p195 = scmp.ne.s32.totalorder %s190, %s192
      %p196 = scmp.eq.s32.totalorder %s30, 0
      %p197 = por %p195, %p196
      %p198 = scmp.ne.s32.totalorder %s190, %s192
      %p199 = scmp.eq.s32.totalorder %s35, 1
      %p200 = por %p198, %p199
      %p201 = scmp.ne.s32.totalorder %s192, %s193
      %p202 = scmp.eq.s32.totalorder %s35, 0
      %p203 = por %p201, %p202
      %p204 = scmp.ne.s32.totalorder %s192, %s193
      %p205 = scmp.eq.s32.totalorder %s36, 1
      %p206 = por %p204, %p205
      %p208 = scmp.ne.s32.totalorder %s193, %s207
      %p209 = scmp.eq.s32.totalorder %s36, 0
      %p210 = por %p208, %p209
      %s212 = sadd.s32 %s211, 1
      %p215 = scmp.eq.s32.totalorder %s30, 1
      %p216 = scmp.ne.s32.totalorder %s211, %s213
      %p217 = scmp.eq.s32.totalorder %s30, 0
      %p218 = por %p216, %p217
      %p219 = scmp.ne.s32.totalorder %s211, %s213
      %p220 = scmp.eq.s32.totalorder %s35, 1
      %p221 = por %p219, %p220
      %p222 = scmp.ne.s32.totalorder %s213, %s214
      %p223 = scmp.eq.s32.totalorder %s35, 0
      %p224 = por %p222, %p223
      %p225 = scmp.ne.s32.totalorder %s213, %s214
      %p226 = scmp.eq.s32.totalorder %s36, 1
      %p227 = por %p225, %p226
      %p229 = scmp.ne.s32.totalorder %s214, %s228
      %p230 = scmp.eq.s32.totalorder %s36, 0
      %p231 = por %p229, %p230
      %s233 = sadd.s32 %s232, 1
      %p236 = scmp.eq.s32.totalorder %s30, 1
      %p237 = scmp.ne.s32.totalorder %s232, %s234
      %p238 = scmp.eq.s32.totalorder %s30, 0
      %p239 = por %p237, %p238
      %p240 = scmp.ne.s32.totalorder %s232, %s234
      %p241 = scmp.eq.s32.totalorder %s35, 1
      %p242 = por %p240, %p241
      %p243 = scmp.ne.s32.totalorder %s234, %s235
      %p244 = scmp.eq.s32.totalorder %s35, 0
      %p245 = por %p243, %p244
      %p246 = scmp.ne.s32.totalorder %s234, %s235
      %p247 = scmp.eq.s32.totalorder %s36, 1
      %p248 = por %p246, %p247
      %p250 = scmp.ne.s32.totalorder %s235, %s249
      %p251 = scmp.eq.s32.totalorder %s36, 0
      %p252 = por %p250, %p251
      %s254 = sadd.s32 %s253, 1
      %p257 = scmp.eq.s32.totalorder %s30, 1
      %p258 = scmp.ne.s32.totalorder %s253, %s255
      %p259 = scmp.eq.s32.totalorder %s30, 0
      %p260 = por %p258, %p259
      %p261 = scmp.ne.s32.totalorder %s253, %s255
      %p262 = scmp.eq.s32.totalorder %s35, 1
      %p263 = por %p261, %p262
      %p264 = scmp.ne.s32.totalorder %s255, %s256
      %p265 = scmp.eq.s32.totalorder %s35, 0
      %p266 = por %p264, %p265
      %p267 = scmp.ne.s32.totalorder %s255, %s256
      %p268 = scmp.eq.s32.totalorder %s36, 1
      %p269 = por %p267, %p268
      %p271 = scmp.ne.s32.totalorder %s256, %s270
      %p272 = scmp.eq.s32.totalorder %s36, 0
      %p273 = por %p271, %p272
      %s274 = ssub.s32 %s30, %s37
      %p275 = scmp.eq.s32.totalorder %s274, 0
      %s277 = sadd.s32 %s276, 1
      %s278 = scalar_select %p275, %s276, %s277
      %p281 = pneg %p275
      %p282 = scmp.eq.s32.totalorder %s30, 1
      %p283 = por %p281, %p282
      %p284 = scmp.ne.s32.totalorder %s276, %s279
      %p285 = scmp.eq.s32.totalorder %s30, 0
      %p286 = por %p284, %p285
      %p287 = scmp.ne.s32.totalorder %s276, %s279
      %p288 = scmp.eq.s32.totalorder %s35, 1
      %p289 = por %p287, %p288
      %p290 = scmp.ne.s32.totalorder %s279, %s280
      %p291 = scmp.eq.s32.totalorder %s35, 0
      %p292 = por %p290, %p291
      %p293 = scmp.ne.s32.totalorder %s279, %s280
      %p294 = scmp.eq.s32.totalorder %s36, 1
      %p295 = por %p293, %p294
      %p297 = scmp.ne.s32.totalorder %s280, %s296
      %p298 = scmp.eq.s32.totalorder %s36, 0
      %p299 = por %p297, %p298
      %s300 = ssub.s32 %s30, %s37
      %p301 = scmp.eq.s32.totalorder %s300, 0
      %s303 = sadd.s32 %s302, 1
      %s304 = scalar_select %p301, %s302, %s303
      %p307 = pneg %p301
      %p308 = scmp.eq.s32.totalorder %s30, 1
      %p309 = por %p307, %p308
      %p310 = scmp.ne.s32.totalorder %s302, %s305
      %p311 = scmp.eq.s32.totalorder %s30, 0
      %p312 = por %p310, %p311
      %p313 = scmp.ne.s32.totalorder %s302, %s305
      %p314 = scmp.eq.s32.totalorder %s35, 1
      %p315 = por %p313, %p314
      %p316 = scmp.ne.s32.totalorder %s305, %s306
      %p317 = scmp.eq.s32.totalorder %s35, 0
      %p318 = por %p316, %p317
      %p319 = scmp.ne.s32.totalorder %s305, %s306
      %p320 = scmp.eq.s32.totalorder %s36, 1
      %p321 = por %p319, %p320
      %p323 = scmp.ne.s32.totalorder %s306, %s322
      %p324 = scmp.eq.s32.totalorder %s36, 0
      %p325 = por %p323, %p324
      %s326 = ssub.s32 %s30, %s37
      %p327 = scmp.eq.s32.totalorder %s326, 0
      %s329 = sadd.s32 %s328, 1
      %s330 = scalar_select %p327, %s328, %s329
      %p333 = pneg %p327
      %p334 = scmp.eq.s32.totalorder %s30, 1
      %p335 = por %p333, %p334
      %p336 = scmp.ne.s32.totalorder %s328, %s331
      %p337 = scmp.eq.s32.totalorder %s30, 0
      %p338 = por %p336, %p337
      %p339 = scmp.ne.s32.totalorder %s328, %s331
      %p340 = scmp.eq.s32.totalorder %s35, 1
      %p341 = por %p339, %p340
      %p342 = scmp.ne.s32.totalorder %s331, %s332
      %p343 = scmp.eq.s32.totalorder %s35, 0
      %p344 = por %p342, %p343
      %p345 = scmp.ne.s32.totalorder %s331, %s332
      %p346 = scmp.eq.s32.totalorder %s36, 1
      %p347 = por %p345, %p346
      %p349 = scmp.ne.s32.totalorder %s332, %s348
      %p350 = scmp.eq.s32.totalorder %s36, 0
      %p351 = por %p349, %p350
      %p352 = scmp.le.s32.totalorder 1, %s30
      %p353 = scmp.lt.s32.totalorder %s30, 3
      %p354 = pnand %p352, %p353
      %p355 = pneg %p354
      // Predicated region
      $region9: #{tpu_custom_call.1} parent=5 // pred_check
        _
      $region10: #{tpu_custom_call.1} parent=5 // pred_check_branch
        %357 = sbr.rel (%p354) target = $region12
      $region11: #{tpu_custom_call.1} parent=5 // pred_region
        %s358 = ssub.s32 %s30, 1
        // Predicated region
        $region13: #{tpu_custom_call.1} parent=11 // pred_check
          %p359 = pneg %p77
        $region14: #{tpu_custom_call.1} parent=11 // pred_check_branch
          %361 = sbr.rel (%p359) target = $region16
        $region15: #{tpu_custom_call.1} parent=11 // pred_region
          _
        $region16: #{tpu_custom_call.1} parent=11 // pred_fallthru
          _
        // Predicated region
        $region17: #{tpu_custom_call.1} parent=11 // pred_check
          %p362 = pneg %p98
        $region18: #{tpu_custom_call.1} parent=11 // pred_check_branch
          %364 = sbr.rel (%p362) target = $region20
        $region19: #{tpu_custom_call.1} parent=11 // pred_region
          _
        $region20: #{tpu_custom_call.1} parent=11 // pred_fallthru
          _
        // Predicated region
        $region21: #{tpu_custom_call.1} parent=11 // pred_check
          %p365 = pneg %p119
        $region22: #{tpu_custom_call.1} parent=11 // pred_check_branch
          %367 = sbr.rel (%p365) target = $region24
        $region23: #{tpu_custom_call.1} parent=11 // pred_region
          _
        $region24: #{tpu_custom_call.1} parent=11 // pred_fallthru
          _
        // Predicated region
        $region25: #{tpu_custom_call.1} parent=11 // pred_check
          %p368 = pneg %p140
        $region26: #{tpu_custom_call.1} parent=11 // pred_check_branch
          %370 = sbr.rel (%p368) target = $region28
        $region27: #{tpu_custom_call.1} parent=11 // pred_region
          _
        $region28: #{tpu_custom_call.1} parent=11 // pred_fallthru
          _
        // Predicated region
        $region29: #{tpu_custom_call.1} parent=11 // pred_check
          %p371 = pneg %p161
        $region30: #{tpu_custom_call.1} parent=11 // pred_check_branch
          %373 = sbr.rel (%p371) target = $region32
        $region31: #{tpu_custom_call.1} parent=11 // pred_region
          %s375 = ssub.s32 32, 32
          %376 = vsyncadd [#allocation5], %s375
          %s378 = sshll.u32 %s5, 4
          %s379 = int_to_ptr.vmem [resolvable:$true] %s378
          %381 = dma.vmem_to_smem %s379, 32, [#allocation3], [#allocation5]
        $region32: #{tpu_custom_call.1} parent=11 // pred_fallthru
          _
        // Predicated region
        $region33: #{tpu_custom_call.1} parent=11 // pred_check
          %p382 = pneg %p182
        $region34: #{tpu_custom_call.1} parent=11 // pred_check_branch
          %384 = sbr.rel (%p382) target = $region36
        $region35: #{tpu_custom_call.1} parent=11 // pred_region
          %s386 = ssub.s32 16, 16
          %387 = vsyncadd [#allocation7], %s386
          %s389 = sshll.u32 %s6, 4
          %s390 = int_to_ptr.vmem [resolvable:$true] %s389
          %392 = dma.vmem_to_smem %s390, 16, [#allocation6], [#allocation7]
        $region36: #{tpu_custom_call.1} parent=11 // pred_fallthru
          _
        // Predicated region
        $region37: #{tpu_custom_call.1} parent=11 // pred_check
          %p393 = pneg %p203
        $region38: #{tpu_custom_call.1} parent=11 // pred_check_branch
          %395 = sbr.rel (%p393) target = $region40
        $region39: #{tpu_custom_call.1} parent=11 // pred_region
          %s397 = ssub.s32 16, 16
          %398 = vsyncadd [#allocation7], %s397
          %s400 = sshll.u32 %s7, 4
          %s401 = int_to_ptr.vmem [resolvable:$true] %s400
          %403 = dma.vmem_to_smem %s401, 16, [#allocation8], [#allocation7]
        $region40: #{tpu_custom_call.1} parent=11 // pred_fallthru
          _
        // Predicated region
        $region41: #{tpu_custom_call.1} parent=11 // pred_check
          %p404 = pneg %p224
        $region42: #{tpu_custom_call.1} parent=11 // pred_check_branch
          %406 = sbr.rel (%p404) target = $region44
        $region43: #{tpu_custom_call.1} parent=11 // pred_region
          %s408 = ssub.s32 16, 16
          %409 = vsyncadd [#allocation10], %s408
          %s411 = sshll.u32 %s8, 4
          %s412 = int_to_ptr.vmem [resolvable:$true] %s411
          %414 = dma.vmem_to_smem %s412, 16, [#allocation9], [#allocation10]
        $region44: #{tpu_custom_call.1} parent=11 // pred_fallthru
          _
        // Predicated region
        $region45: #{tpu_custom_call.1} parent=11 // pred_check
          %p415 = pneg %p245
        $region46: #{tpu_custom_call.1} parent=11 // pred_check_branch
          %417 = sbr.rel (%p415) target = $region48
        $region47: #{tpu_custom_call.1} parent=11 // pred_region
          %s419 = ssub.s32 16, 16
          %420 = vsyncadd [#allocation10], %s419
          %s422 = sshll.u32 %s9, 4
          %s423 = int_to_ptr.vmem [resolvable:$true] %s422
          %425 = dma.vmem_to_smem %s423, 16, [#allocation11], [#allocation10]
        $region48: #{tpu_custom_call.1} parent=11 // pred_fallthru
          _
        // Predicated region
        $region49: #{tpu_custom_call.1} parent=11 // pred_check
          %p426 = pneg %p266
        $region50: #{tpu_custom_call.1} parent=11 // pred_check_branch
          %428 = sbr.rel (%p426) target = $region52
        $region51: #{tpu_custom_call.1} parent=11 // pred_region
          %s430 = ssub.s32 16, 16
          %431 = vsyncadd [#allocation13], %s430
          %s433 = sshll.u32 %s10, 4
          %s434 = int_to_ptr.vmem [resolvable:$true] %s433
          %436 = dma.vmem_to_smem %s434, 16, [#allocation12], [#allocation13]
        $region52: #{tpu_custom_call.1} parent=11 // pred_fallthru
          _
      $region12: #{tpu_custom_call.1} parent=5 // pred_fallthru
        _
      %p437 = scmp.lt.s32.totalorder %s30, 2
      // Predicated region
      $region53: #{tpu_custom_call.1} parent=5 // pred_check
        %p438 = pneg %p437
      $region54: #{tpu_custom_call.1} parent=5 // pred_check_branch
        %440 = sbr.rel (%p438) target = $region56
      $region55: #{tpu_custom_call.1} parent=5 // pred_region
        // Predicated region
        $region57: #{tpu_custom_call.1} parent=55 // pred_check
          %p441 = pneg %p50
        $region58: #{tpu_custom_call.1} parent=55 // pred_check_branch
          %443 = sbr.rel (%p441) target = $region60
        $region59: #{tpu_custom_call.1} parent=55 // pred_region
          %p444 = scmp.lt.s32.totalorder %s30, 1
          %s445 = scalar_select %p444, %s30, 1
          %s446 = smul.addr %s445, 4
          %s447 = smul.addr %s446, 8
          %s448 = scalar_lea.vmem %s0, %s447
        $region60: #{tpu_custom_call.1} parent=55 // pred_fallthru
          _
      $region56: #{tpu_custom_call.1} parent=5 // pred_fallthru
        _
      %p449 = scmp.le.s32.totalorder 1, %s30
      %p450 = scmp.lt.s32.totalorder %s30, 3
      %p451 = pnand %p449, %p450
      %p452 = pneg %p451
      // Predicated region
      $region61: #{tpu_custom_call.1} parent=5 // pred_check
        _
      $region62: #{tpu_custom_call.1} parent=5 // pred_check_branch
        %454 = sbr.rel (%p451) target = $region64
      $region63: #{tpu_custom_call.1} parent=5 // pred_region
        %s455 = ssub.s32 %s30, 1
        // Predicated region
        $region65: #{tpu_custom_call.1} parent=63 // pred_check
          %p456 = pneg %p161
        $region66: #{tpu_custom_call.1} parent=63 // pred_check_branch
          %458 = sbr.rel (%p456) target = $region68
        $region67: #{tpu_custom_call.1} parent=63 // pred_region
          %459 = dma.done [#allocation5], 32
        $region68: #{tpu_custom_call.1} parent=63 // pred_fallthru
          _
        // Predicated region
        $region69: #{tpu_custom_call.1} parent=63 // pred_check
          %p460 = pneg %p182
        $region70: #{tpu_custom_call.1} parent=63 // pred_check_branch
          %462 = sbr.rel (%p460) target = $region72
        $region71: #{tpu_custom_call.1} parent=63 // pred_region
          %463 = dma.done [#allocation7], 16
        $region72: #{tpu_custom_call.1} parent=63 // pred_fallthru
          _
        // Predicated region
        $region73: #{tpu_custom_call.1} parent=63 // pred_check
          %p464 = pneg %p203
        $region74: #{tpu_custom_call.1} parent=63 // pred_check_branch
          %466 = sbr.rel (%p464) target = $region76
        $region75: #{tpu_custom_call.1} parent=63 // pred_region
          %467 = dma.done [#allocation7], 16
        $region76: #{tpu_custom_call.1} parent=63 // pred_fallthru
          _
        // Predicated region
        $region77: #{tpu_custom_call.1} parent=63 // pred_check
          %p468 = pneg %p224
        $region78: #{tpu_custom_call.1} parent=63 // pred_check_branch
          %470 = sbr.rel (%p468) target = $region80
        $region79: #{tpu_custom_call.1} parent=63 // pred_region
          %471 = dma.done [#allocation10], 16
        $region80: #{tpu_custom_call.1} parent=63 // pred_fallthru
          _
        // Predicated region
        $region81: #{tpu_custom_call.1} parent=63 // pred_check
          %p472 = pneg %p245
        $region82: #{tpu_custom_call.1} parent=63 // pred_check_branch
          %474 = sbr.rel (%p472) target = $region84
        $region83: #{tpu_custom_call.1} parent=63 // pred_region
          %475 = dma.done [#allocation10], 16
        $region84: #{tpu_custom_call.1} parent=63 // pred_fallthru
          _
        // Predicated region
        $region85: #{tpu_custom_call.1} parent=63 // pred_check
          %p476 = pneg %p266
        $region86: #{tpu_custom_call.1} parent=63 // pred_check_branch
          %478 = sbr.rel (%p476) target = $region88
        $region87: #{tpu_custom_call.1} parent=63 // pred_region
          %479 = dma.done [#allocation13], 16
        $region88: #{tpu_custom_call.1} parent=63 // pred_fallthru
          _
        %480 = sfence
        %p481 = scmp.lt.s32.totalorder %s35, 1
        %s482 = scalar_select %p481, %s35, 1
        %s483 = smul.addr %s482, 4
        %s484 = smul.addr %s483, 8
        %s485 = scalar_lea.vmem %s0, %s484
        %p486 = pneg %p56
        %p487 = pneg %p53
        %p488 = pneg %p77
        %p489 = pneg %p74
        %p490 = pneg %p98
        %p491 = pneg %p95
        %p492 = pneg %p119
        %p493 = pneg %p116
        %p494 = pneg %p140
        %p495 = pneg %p137
        %p496 = pneg %p161
        %p497 = pneg %p158
        %p498 = pneg %p182
        %p499 = pneg %p179
        %p500 = pneg %p203
        %p501 = pneg %p200
        %p502 = pneg %p224
        %p503 = pneg %p221
        %p504 = pneg %p245
        %p505 = pneg %p242
        %p506 = pneg %p266
        %p507 = pneg %p263
        %p508 = pneg %p292
        %p509 = pneg %p289
        %s510 = sand.u32 %s279, 1
        %s511 = scalar_lea.sflag [#allocation4], %s510
        %s512 = sand.u32 %s279, 1
        %s513 = smul.addr %s512, 32
        %s514 = scalar_lea.vmem [#allocation14], %s513
        %p515 = pneg %p318
        %p516 = pneg %p315
        %s517 = sand.u32 %s35, 1
        %s518 = scalar_lea.sflag [#allocation16], %s517
        %s519 = sand.u32 %s305, 1
        %s520 = smul.addr %s519, 32
        %s521 = scalar_lea.vmem [#allocation15], %s520
        %p522 = pneg %p344
        %p523 = pneg %p341
        %s524 = sand.u32 %s35, 1
        %s525 = scalar_lea.sflag [#allocation16], %s524
        %s526 = sand.u32 %s331, 1
        %s527 = smul.addr %s526, 32
        %s528 = scalar_lea.vmem [#allocation17], %s527
        %p529 = scmp.lt.s32.totalorder %s35, 1
        %s530 = scalar_select %p529, %s35, 1
        %s531 = smul.addr %s530, 4
        %s532 = smul.addr %s531, 8
        %s533 = scalar_lea.vmem %s0, %s532
        %v534 = vld [vmem:[%s533] sm:$0xff]
        %v535 = vld [vmem:[%s533 + $0x8] sm:$0xff]
        %v536 = vld [vmem:[%s533 + $0x10] sm:$0xff]
        %v537 = vld [vmem:[%s533 + $0x18] sm:$0xff]
        %v538 = vld [vmem:[%s1] sm:$0xff]
        %v539 = vld [vmem:[%s1 + $0x8] sm:$0xff]
        %vm540 = vcmask 130048
        %v542 = vsel %vm540, %v534, 0
        %v545 = vsel %vm540, %v535, 0
        %v548 = vsel %vm540, %v536, 0
        %v551 = vsel %vm540, %v537, 0
        %553 = vmatprep.subr.mxu0 0.0
        %554 = vmatpush1.msra.mxu0 0.0
        %555 = vmatprep.subr.mxu0 0.0
        %556 = vmatpush1.msra.mxu0 0.0
        %557 = vmatprep.subr.mxu0 0.0
        %558 = vmatpush1.msra.mxu0 0.0
        %559 = vmatprep.subr.mxu0 0.0
        %560 = vmatpush1.msra.mxu0 0.0
        %561 = vmatprep.subr.mxu0 0.0
        %562 = vmatpush1.msra.mxu0 0.0
        %563 = vmatprep.subr.mxu0 0.0
        %564 = vmatpush1.msra.mxu0 0.0
        %565 = vmatprep.subr.mxu0 0.0
        %566 = vmatpush1.msra.mxu0 0.0
        %567 = vmatprep.subr.mxu0 0.0
        %568 = vmatpush1.msra.mxu0 0.0
        %569 = vmatprep.subr.mxu0 0.0
        %570 = vmatpush1.msra.mxu0 0.0
        %571 = vmatprep.subr.mxu0 0.0
        %572 = vmatpush1.msra.mxu0 0.0
        %573 = vmatprep.subr.mxu0 0.0
        %574 = vmatpush1.msra.mxu0 0.0
        %575 = vmatprep.subr.mxu0 0.0
        %576 = vmatpush1.msra.mxu0 0.0
        %577 = vmatprep.subr.mxu0 0.0
        %578 = vmatpush1.msra.mxu0 0.0
        %579 = vmatprep.subr.mxu0 0.0
        %580 = vmatpush1.msra.mxu0 0.0
        %581 = vmatprep.subr.mxu0 0.0
        %v582 = vand.u32 %v539, 4294901760
        %583 = vmatpush1.msra.mxu0 %v582
        %584 = vmatprep.subr.mxu0 0.0
        %v585 = vand.u32 %v538, 4294901760
        %586 = vmatpush1.msra.mxu0 %v585
        %587 = vmatprep.subr.mxu0 0.0
        %588 = vmatpush2.msra.mxu0 0.0
        %589 = vmatprep.subr.mxu0 0.0
        %590 = vmatpush2.msra.mxu0 0.0
        %591 = vmatprep.subr.mxu0 0.0
        %592 = vmatpush2.msra.mxu0 0.0
        %593 = vmatprep.subr.mxu0 0.0
        %594 = vmatpush2.msra.mxu0 0.0
        %595 = vmatprep.subr.mxu0 0.0
        %596 = vmatpush2.msra.mxu0 0.0
        %597 = vmatprep.subr.mxu0 0.0
        %598 = vmatpush2.msra.mxu0 0.0
        %599 = vmatprep.subr.mxu0 0.0
        %600 = vmatpush2.msra.mxu0 0.0
        %601 = vmatprep.subr.mxu0 0.0
        %602 = vmatpush2.msra.mxu0 0.0
        %603 = vmatprep.subr.mxu0 0.0
        %604 = vmatpush2.msra.mxu0 0.0
        %605 = vmatprep.subr.mxu0 0.0
        %606 = vmatpush2.msra.mxu0 0.0
        %607 = vmatprep.subr.mxu0 0.0
        %608 = vmatpush2.msra.mxu0 0.0
        %609 = vmatprep.subr.mxu0 0.0
        %610 = vmatpush2.msra.mxu0 0.0
        %611 = vmatprep.subr.mxu0 0.0
        %612 = vmatpush2.msra.mxu0 0.0
        %613 = vmatprep.subr.mxu0 0.0
        %614 = vmatpush2.msra.mxu0 0.0
        %615 = vmatprep.subr.mxu0 0.0
        %616 = vmatpush2.msra.mxu0 0.0
        %617 = vmatprep.subr.mxu0 0.0
        %618 = vmatpush2.msra.mxu0 0.0
        %619 = vmatprep.mubr.f32.mxu0 0.0
        %v620 = vand.u32 %v542, 4294901760
        %v621 = vsub.f32 %v542, %v620
        %v622 = vand.u32 %v621, 4294901760
        %v623 = vsub.f32 %v621, %v622
        %v624 = vand.u32 %v623, 4294901760
        %625 = vmatmul.mubr.f32.gmra.mxu0 %v624
        %v626 = vpop.f32.mrf.mxu0
        %v627 = vadd.f32 0.0, %v626
        %v628 = vpop.f32.mrf.mxu0
        %629 = vmatprep.mubr.f32.mxu0 0.0
        %v630 = vand.u32 %v545, 4294901760
        %v631 = vsub.f32 %v545, %v630
        %v632 = vand.u32 %v631, 4294901760
        %v633 = vsub.f32 %v631, %v632
        %v634 = vand.u32 %v633, 4294901760
        %635 = vmatmul.mubr.f32.gmra.mxu0 %v634
        %v636 = vpop.f32.mrf.mxu0
        %v637 = vadd.f32 0.0, %v636
        %v638 = vpop.f32.mrf.mxu0
        %639 = vmatprep.mubr.f32.mxu0 0.0
        %v640 = vand.u32 %v548, 4294901760
        %v641 = vsub.f32 %v548, %v640
        %v642 = vand.u32 %v641, 4294901760
        %v643 = vsub.f32 %v641, %v642
        %v644 = vand.u32 %v643, 4294901760
        %645 = vmatmul.mubr.f32.gmra.mxu0 %v644
        %v646 = vpop.f32.mrf.mxu0
        %v647 = vadd.f32 0.0, %v646
        %v648 = vpop.f32.mrf.mxu0
        %649 = vmatprep.mubr.f32.mxu0 0.0
        %v650 = vand.u32 %v551, 4294901760
        %v651 = vsub.f32 %v551, %v650
        %v652 = vand.u32 %v651, 4294901760
        %v653 = vsub.f32 %v651, %v652
        %v654 = vand.u32 %v653, 4294901760
        %655 = vmatmul.mubr.f32.gmra.mxu0 %v654
        %v656 = vpop.f32.mrf.mxu0
        %v657 = vadd.f32 0.0, %v656
        %v658 = vpop.f32.mrf.mxu0
        %659 = vdwg.mxu0
        %660 = vmatprep.subr.mxu0 0.0
        %661 = vmatpush1.msra.mxu0 0.0
        %662 = vmatprep.subr.mxu0 0.0
        %663 = vmatpush1.msra.mxu0 0.0
        %664 = vmatprep.subr.mxu0 0.0
        %665 = vmatpush1.msra.mxu0 0.0
        %666 = vmatprep.subr.mxu0 0.0
        %667 = vmatpush1.msra.mxu0 0.0
        %668 = vmatprep.subr.mxu0 0.0
        %669 = vmatpush1.msra.mxu0 0.0
        %670 = vmatprep.subr.mxu0 0.0
        %671 = vmatpush1.msra.mxu0 0.0
        %672 = vmatprep.subr.mxu0 0.0
        %673 = vmatpush1.msra.mxu0 0.0
        %674 = vmatprep.subr.mxu0 0.0
        %675 = vmatpush1.msra.mxu0 0.0
        %676 = vmatprep.subr.mxu0 0.0
        %677 = vmatpush1.msra.mxu0 0.0
        %678 = vmatprep.subr.mxu0 0.0
        %679 = vmatpush1.msra.mxu0 0.0
        %680 = vmatprep.subr.mxu0 0.0
        %681 = vmatpush1.msra.mxu0 0.0
        %682 = vmatprep.subr.mxu0 0.0
        %683 = vmatpush1.msra.mxu0 0.0
        %684 = vmatprep.subr.mxu0 0.0
        %685 = vmatpush1.msra.mxu0 0.0
        %686 = vmatprep.subr.mxu0 0.0
        %687 = vmatpush1.msra.mxu0 0.0
        %688 = vmatprep.subr.mxu0 0.0
        %v689 = vand.u32 %v539, 4294901760
        %v690 = vsub.f32 %v539, %v689
        %v691 = vand.u32 %v690, 4294901760
        %v692 = vsub.f32 %v690, %v691
        %v693 = vand.u32 %v692, 4294901760
        %694 = vmatpush1.msra.mxu0 %v693
        %695 = vmatprep.subr.mxu0 0.0
        %v696 = vand.u32 %v538, 4294901760
        %v697 = vsub.f32 %v538, %v696
        %v698 = vand.u32 %v697, 4294901760
        %v699 = vsub.f32 %v697, %v698
        %v700 = vand.u32 %v699, 4294901760
        %701 = vmatpush1.msra.mxu0 %v700
        %702 = vmatprep.subr.mxu0 0.0
        %703 = vmatpush2.msra.mxu0 0.0
        %704 = vmatprep.subr.mxu0 0.0
        %705 = vmatpush2.msra.mxu0 0.0
        %706 = vmatprep.subr.mxu0 0.0
        %707 = vmatpush2.msra.mxu0 0.0
        %708 = vmatprep.subr.mxu0 0.0
        %709 = vmatpush2.msra.mxu0 0.0
        %710 = vmatprep.subr.mxu0 0.0
        %711 = vmatpush2.msra.mxu0 0.0
        %712 = vmatprep.subr.mxu0 0.0
        %713 = vmatpush2.msra.mxu0 0.0
        %714 = vmatprep.subr.mxu0 0.0
        %715 = vmatpush2.msra.mxu0 0.0
        %716 = vmatprep.subr.mxu0 0.0
        %717 = vmatpush2.msra.mxu0 0.0
        %718 = vmatprep.subr.mxu0 0.0
        %719 = vmatpush2.msra.mxu0 0.0
        %720 = vmatprep.subr.mxu0 0.0
        %721 = vmatpush2.msra.mxu0 0.0
        %722 = vmatprep.subr.mxu0 0.0
        %723 = vmatpush2.msra.mxu0 0.0
        %724 = vmatprep.subr.mxu0 0.0
        %725 = vmatpush2.msra.mxu0 0.0
        %726 = vmatprep.subr.mxu0 0.0
        %727 = vmatpush2.msra.mxu0 0.0
        %728 = vmatprep.subr.mxu0 0.0
        %729 = vmatpush2.msra.mxu0 0.0
        %730 = vmatprep.subr.mxu0 0.0
        %731 = vmatpush2.msra.mxu0 0.0
        %732 = vmatprep.subr.mxu0 0.0
        %733 = vmatpush2.msra.mxu0 0.0
        %734 = vmatprep.mubr.f32.mxu0 0.0
        %v735 = vand.u32 %v542, 4294901760
        %736 = vmatmul.mubr.f32.gmra.mxu0 %v735
        %v737 = vpop.f32.mrf.mxu0
        %v738 = vadd.f32 %v627, %v737
        %v739 = vpop.f32.mrf.mxu0
        %740 = vmatprep.mubr.f32.mxu0 0.0
        %v741 = vand.u32 %v545, 4294901760
        %742 = vmatmul.mubr.f32.gmra.mxu0 %v741
        %v743 = vpop.f32.mrf.mxu0
        %v744 = vadd.f32 %v637, %v743
        %v745 = vpop.f32.mrf.mxu0
        %746 = vmatprep.mubr.f32.mxu0 0.0
        %v747 = vand.u32 %v548, 4294901760
        %748 = vmatmul.mubr.f32.gmra.mxu0 %v747
        %v749 = vpop.f32.mrf.mxu0
        %v750 = vadd.f32 %v647, %v749
        %v751 = vpop.f32.mrf.mxu0
        %752 = vmatprep.mubr.f32.mxu0 0.0
        %v753 = vand.u32 %v551, 4294901760
        %754 = vmatmul.mubr.f32.gmra.mxu0 %v753
        %v755 = vpop.f32.mrf.mxu0
        %v756 = vadd.f32 %v657, %v755
        %v757 = vpop.f32.mrf.mxu0
        %758 = vdwg.mxu0
        %759 = vmatprep.subr.mxu0 0.0
        %760 = vmatpush1.msra.mxu0 0.0
        %761 = vmatprep.subr.mxu0 0.0
        %762 = vmatpush1.msra.mxu0 0.0
        %763 = vmatprep.subr.mxu0 0.0
        %764 = vmatpush1.msra.mxu0 0.0
        %765 = vmatprep.subr.mxu0 0.0
        %766 = vmatpush1.msra.mxu0 0.0
        %767 = vmatprep.subr.mxu0 0.0
        %768 = vmatpush1.msra.mxu0 0.0
        %769 = vmatprep.subr.mxu0 0.0
        %770 = vmatpush1.msra.mxu0 0.0
        %771 = vmatprep.subr.mxu0 0.0
        %772 = vmatpush1.msra.mxu0 0.0
        %773 = vmatprep.subr.mxu0 0.0
        %774 = vmatpush1.msra.mxu0 0.0
        %775 = vmatprep.subr.mxu0 0.0
        %776 = vmatpush1.msra.mxu0 0.0
        %777 = vmatprep.subr.mxu0 0.0
        %778 = vmatpush1.msra.mxu0 0.0
        %779 = vmatprep.subr.mxu0 0.0
        %780 = vmatpush1.msra.mxu0 0.0
        %781 = vmatprep.subr.mxu0 0.0
        %782 = vmatpush1.msra.mxu0 0.0
        %783 = vmatprep.subr.mxu0 0.0
        %784 = vmatpush1.msra.mxu0 0.0
        %785 = vmatprep.subr.mxu0 0.0
        %786 = vmatpush1.msra.mxu0 0.0
        %787 = vmatprep.subr.mxu0 0.0
        %v788 = vand.u32 %v539, 4294901760
        %v789 = vsub.f32 %v539, %v788
        %790 = vmatpush1.msra.mxu0 %v789
        %791 = vmatprep.subr.mxu0 0.0
        %v792 = vand.u32 %v538, 4294901760
        %v793 = vsub.f32 %v538, %v792
        %794 = vmatpush1.msra.mxu0 %v793
        %795 = vmatprep.subr.mxu0 0.0
        %796 = vmatpush2.msra.mxu0 0.0
        %797 = vmatprep.subr.mxu0 0.0
        %798 = vmatpush2.msra.mxu0 0.0
        %799 = vmatprep.subr.mxu0 0.0
        %800 = vmatpush2.msra.mxu0 0.0
        %801 = vmatprep.subr.mxu0 0.0
        %802 = vmatpush2.msra.mxu0 0.0
        %803 = vmatprep.subr.mxu0 0.0
        %804 = vmatpush2.msra.mxu0 0.0
        %805 = vmatprep.subr.mxu0 0.0
        %806 = vmatpush2.msra.mxu0 0.0
        %807 = vmatprep.subr.mxu0 0.0
        %808 = vmatpush2.msra.mxu0 0.0
        %809 = vmatprep.subr.mxu0 0.0
        %810 = vmatpush2.msra.mxu0 0.0
        %811 = vmatprep.subr.mxu0 0.0
        %812 = vmatpush2.msra.mxu0 0.0
        %813 = vmatprep.subr.mxu0 0.0
        %814 = vmatpush2.msra.mxu0 0.0
        %815 = vmatprep.subr.mxu0 0.0
        %816 = vmatpush2.msra.mxu0 0.0
        %817 = vmatprep.subr.mxu0 0.0
        %818 = vmatpush2.msra.mxu0 0.0
        %819 = vmatprep.subr.mxu0 0.0
        %820 = vmatpush2.msra.mxu0 0.0
        %821 = vmatprep.subr.mxu0 0.0
        %822 = vmatpush2.msra.mxu0 0.0
        %823 = vmatprep.subr.mxu0 0.0
        %824 = vmatpush2.msra.mxu0 0.0
        %825 = vmatprep.subr.mxu0 0.0
        %826 = vmatpush2.msra.mxu0 0.0
        %827 = vmatprep.mubr.f32.mxu0 0.0
        %v828 = vand.u32 %v542, 4294901760
        %v829 = vsub.f32 %v542, %v828
        %830 = vmatmul.mubr.f32.gmra.mxu0 %v829
        %v831 = vpop.f32.mrf.mxu0
        %v832 = vadd.f32 %v738, %v831
        %v833 = vpop.f32.mrf.mxu0
        %834 = vmatprep.mubr.f32.mxu0 0.0
        %v835 = vand.u32 %v545, 4294901760
        %v836 = vsub.f32 %v545, %v835
        %837 = vmatmul.mubr.f32.gmra.mxu0 %v836
        %v838 = vpop.f32.mrf.mxu0
        %v839 = vadd.f32 %v744, %v838
        %v840 = vpop.f32.mrf.mxu0
        %841 = vmatprep.mubr.f32.mxu0 0.0
        %v842 = vand.u32 %v548, 4294901760
        %v843 = vsub.f32 %v548, %v842
        %844 = vmatmul.mubr.f32.gmra.mxu0 %v843
        %v845 = vpop.f32.mrf.mxu0
        %v846 = vadd.f32 %v750, %v845
        %v847 = vpop.f32.mrf.mxu0
        %848 = vmatprep.mubr.f32.mxu0 0.0
        %v849 = vand.u32 %v551, 4294901760
        %v850 = vsub.f32 %v551, %v849
        %851 = vmatmul.mubr.f32.gmra.mxu0 %v850
        %v852 = vpop.f32.mrf.mxu0
        %v853 = vadd.f32 %v756, %v852
        %v854 = vpop.f32.mrf.mxu0
        %855 = vdwg.mxu0
        %856 = vmatprep.subr.mxu0 0.0
        %857 = vmatpush1.msra.mxu0 0.0
        %858 = vmatprep.subr.mxu0 0.0
        %859 = vmatpush1.msra.mxu0 0.0
        %860 = vmatprep.subr.mxu0 0.0
        %861 = vmatpush1.msra.mxu0 0.0
        %862 = vmatprep.subr.mxu0 0.0
        %863 = vmatpush1.msra.mxu0 0.0
        %864 = vmatprep.subr.mxu0 0.0
        %865 = vmatpush1.msra.mxu0 0.0
        %866 = vmatprep.subr.mxu0 0.0
        %867 = vmatpush1.msra.mxu0 0.0
        %868 = vmatprep.subr.mxu0 0.0
        %869 = vmatpush1.msra.mxu0 0.0
        %870 = vmatprep.subr.mxu0 0.0
        %871 = vmatpush1.msra.mxu0 0.0
        %872 = vmatprep.subr.mxu0 0.0
        %873 = vmatpush1.msra.mxu0 0.0
        %874 = vmatprep.subr.mxu0 0.0
        %875 = vmatpush1.msra.mxu0 0.0
        %876 = vmatprep.subr.mxu0 0.0
        %877 = vmatpush1.msra.mxu0 0.0
        %878 = vmatprep.subr.mxu0 0.0
        %879 = vmatpush1.msra.mxu0 0.0
        %880 = vmatprep.subr.mxu0 0.0
        %881 = vmatpush1.msra.mxu0 0.0
        %882 = vmatprep.subr.mxu0 0.0
        %883 = vmatpush1.msra.mxu0 0.0
        %884 = vmatprep.subr.mxu0 0.0
        %v885 = vand.u32 %v539, 4294901760
        %886 = vmatpush1.msra.mxu0 %v885
        %887 = vmatprep.subr.mxu0 0.0
        %v888 = vand.u32 %v538, 4294901760
        %889 = vmatpush1.msra.mxu0 %v888
        %890 = vmatprep.subr.mxu0 0.0
        %891 = vmatpush2.msra.mxu0 0.0
        %892 = vmatprep.subr.mxu0 0.0
        %893 = vmatpush2.msra.mxu0 0.0
        %894 = vmatprep.subr.mxu0 0.0
        %895 = vmatpush2.msra.mxu0 0.0
        %896 = vmatprep.subr.mxu0 0.0
        %897 = vmatpush2.msra.mxu0 0.0
        %898 = vmatprep.subr.mxu0 0.0
        %899 = vmatpush2.msra.mxu0 0.0
        %900 = vmatprep.subr.mxu0 0.0
        %901 = vmatpush2.msra.mxu0 0.0
        %902 = vmatprep.subr.mxu0 0.0
        %903 = vmatpush2.msra.mxu0 0.0
        %904 = vmatprep.subr.mxu0 0.0
        %905 = vmatpush2.msra.mxu0 0.0
        %906 = vmatprep.subr.mxu0 0.0
        %907 = vmatpush2.msra.mxu0 0.0
        %908 = vmatprep.subr.mxu0 0.0
        %909 = vmatpush2.msra.mxu0 0.0
        %910 = vmatprep.subr.mxu0 0.0
        %911 = vmatpush2.msra.mxu0 0.0
        %912 = vmatprep.subr.mxu0 0.0
        %913 = vmatpush2.msra.mxu0 0.0
        %914 = vmatprep.subr.mxu0 0.0
        %915 = vmatpush2.msra.mxu0 0.0
        %916 = vmatprep.subr.mxu0 0.0
        %917 = vmatpush2.msra.mxu0 0.0
        %918 = vmatprep.subr.mxu0 0.0
        %919 = vmatpush2.msra.mxu0 0.0
        %920 = vmatprep.subr.mxu0 0.0
        %921 = vmatpush2.msra.mxu0 0.0
        %922 = vmatprep.mubr.f32.mxu0 0.0
        %v923 = vand.u32 %v542, 4294901760
        %v924 = vsub.f32 %v542, %v923
        %v925 = vand.u32 %v924, 4294901760
        %926 = vmatmul.mubr.f32.gmra.mxu0 %v925
        %v927 = vpop.f32.mrf.mxu0
        %v928 = vadd.f32 %v832, %v927
        %v929 = vpop.f32.mrf.mxu0
        %930 = vmatprep.mubr.f32.mxu0 0.0
        %v931 = vand.u32 %v545, 4294901760
        %v932 = vsub.f32 %v545, %v931
        %v933 = vand.u32 %v932, 4294901760
        %934 = vmatmul.mubr.f32.gmra.mxu0 %v933
        %v935 = vpop.f32.mrf.mxu0
        %v936 = vadd.f32 %v839, %v935
        %v937 = vpop.f32.mrf.mxu0
        %938 = vmatprep.mubr.f32.mxu0 0.0
        %v939 = vand.u32 %v548, 4294901760
        %v940 = vsub.f32 %v548, %v939
        %v941 = vand.u32 %v940, 4294901760
        %942 = vmatmul.mubr.f32.gmra.mxu0 %v941
        %v943 = vpop.f32.mrf.mxu0
        %v944 = vadd.f32 %v846, %v943
        %v945 = vpop.f32.mrf.mxu0
        %946 = vmatprep.mubr.f32.mxu0 0.0
        %v947 = vand.u32 %v551, 4294901760
        %v948 = vsub.f32 %v551, %v947
        %v949 = vand.u32 %v948, 4294901760
        %950 = vmatmul.mubr.f32.gmra.mxu0 %v949
        %v951 = vpop.f32.mrf.mxu0
        %v952 = vadd.f32 %v853, %v951
        %v953 = vpop.f32.mrf.mxu0
        %954 = vdwg.mxu0
        %955 = vmatprep.subr.mxu0 0.0
        %956 = vmatpush1.msra.mxu0 0.0
        %957 = vmatprep.subr.mxu0 0.0
        %958 = vmatpush1.msra.mxu0 0.0
        %959 = vmatprep.subr.mxu0 0.0
        %960 = vmatpush1.msra.mxu0 0.0
        %961 = vmatprep.subr.mxu0 0.0
        %962 = vmatpush1.msra.mxu0 0.0
        %963 = vmatprep.subr.mxu0 0.0
        %964 = vmatpush1.msra.mxu0 0.0
        %965 = vmatprep.subr.mxu0 0.0
        %966 = vmatpush1.msra.mxu0 0.0
        %967 = vmatprep.subr.mxu0 0.0
        %968 = vmatpush1.msra.mxu0 0.0
        %969 = vmatprep.subr.mxu0 0.0
        %970 = vmatpush1.msra.mxu0 0.0
        %971 = vmatprep.subr.mxu0 0.0
        %972 = vmatpush1.msra.mxu0 0.0
        %973 = vmatprep.subr.mxu0 0.0
        %974 = vmatpush1.msra.mxu0 0.0
        %975 = vmatprep.subr.mxu0 0.0
        %976 = vmatpush1.msra.mxu0 0.0
        %977 = vmatprep.subr.mxu0 0.0
        %978 = vmatpush1.msra.mxu0 0.0
        %979 = vmatprep.subr.mxu0 0.0
        %980 = vmatpush1.msra.mxu0 0.0
        %981 = vmatprep.subr.mxu0 0.0
        %982 = vmatpush1.msra.mxu0 0.0
        %983 = vmatprep.subr.mxu0 0.0
        %v984 = vand.u32 %v539, 4294901760
        %v985 = vsub.f32 %v539, %v984
        %v986 = vand.u32 %v985, 4294901760
        %987 = vmatpush1.msra.mxu0 %v986
        %988 = vmatprep.subr.mxu0 0.0
        %v989 = vand.u32 %v538, 4294901760
        %v990 = vsub.f32 %v538, %v989
        %v991 = vand.u32 %v990, 4294901760
        %992 = vmatpush1.msra.mxu0 %v991
        %993 = vmatprep.subr.mxu0 0.0
        %994 = vmatpush2.msra.mxu0 0.0
        %995 = vmatprep.subr.mxu0 0.0
        %996 = vmatpush2.msra.mxu0 0.0
        %997 = vmatprep.subr.mxu0 0.0
        %998 = vmatpush2.msra.mxu0 0.0
        %999 = vmatprep.subr.mxu0 0.0
        %1000 = vmatpush2.msra.mxu0 0.0
        %1001 = vmatprep.subr.mxu0 0.0
        %1002 = vmatpush2.msra.mxu0 0.0
        %1003 = vmatprep.subr.mxu0 0.0
        %1004 = vmatpush2.msra.mxu0 0.0
        %1005 = vmatprep.subr.mxu0 0.0
        %1006 = vmatpush2.msra.mxu0 0.0
        %1007 = vmatprep.subr.mxu0 0.0
        %1008 = vmatpush2.msra.mxu0 0.0
        %1009 = vmatprep.subr.mxu0 0.0
        %1010 = vmatpush2.msra.mxu0 0.0
        %1011 = vmatprep.subr.mxu0 0.0
        %1012 = vmatpush2.msra.mxu0 0.0
        %1013 = vmatprep.subr.mxu0 0.0
        %1014 = vmatpush2.msra.mxu0 0.0
        %1015 = vmatprep.subr.mxu0 0.0
        %1016 = vmatpush2.msra.mxu0 0.0
        %1017 = vmatprep.subr.mxu0 0.0
        %1018 = vmatpush2.msra.mxu0 0.0
        %1019 = vmatprep.subr.mxu0 0.0
        %1020 = vmatpush2.msra.mxu0 0.0
        %1021 = vmatprep.subr.mxu0 0.0
        %1022 = vmatpush2.msra.mxu0 0.0
        %1023 = vmatprep.subr.mxu0 0.0
        %1024 = vmatpush2.msra.mxu0 0.0
        %1025 = vmatprep.mubr.f32.mxu0 0.0
        %v1026 = vand.u32 %v542, 4294901760
        %1027 = vmatmul.mubr.f32.gmra.mxu0 %v1026
        %v1028 = vpop.f32.mrf.mxu0
        %v1029 = vadd.f32 %v928, %v1028
        %v1030 = vpop.f32.mrf.mxu0
        %1031 = vmatprep.mubr.f32.mxu0 0.0
        %v1032 = vand.u32 %v545, 4294901760
        %1033 = vmatmul.mubr.f32.gmra.mxu0 %v1032
        %v1034 = vpop.f32.mrf.mxu0
        %v1035 = vadd.f32 %v936, %v1034
        %v1036 = vpop.f32.mrf.mxu0
        %1037 = vmatprep.mubr.f32.mxu0 0.0
        %v1038 = vand.u32 %v548, 4294901760
        %1039 = vmatmul.mubr.f32.gmra.mxu0 %v1038
        %v1040 = vpop.f32.mrf.mxu0
        %v1041 = vadd.f32 %v944, %v1040
        %v1042 = vpop.f32.mrf.mxu0
        %1043 = vmatprep.mubr.f32.mxu0 0.0
        %v1044 = vand.u32 %v551, 4294901760
        %1045 = vmatmul.mubr.f32.gmra.mxu0 %v1044
        %v1046 = vpop.f32.mrf.mxu0
        %v1047 = vadd.f32 %v952, %v1046
        %v1048 = vpop.f32.mrf.mxu0
        %1049 = vdwg.mxu0
        %1050 = vmatprep.subr.mxu0 0.0
        %1051 = vmatpush1.msra.mxu0 0.0
        %1052 = vmatprep.subr.mxu0 0.0
        %1053 = vmatpush1.msra.mxu0 0.0
        %1054 = vmatprep.subr.mxu0 0.0
        %1055 = vmatpush1.msra.mxu0 0.0
        %1056 = vmatprep.subr.mxu0 0.0
        %1057 = vmatpush1.msra.mxu0 0.0
        %1058 = vmatprep.subr.mxu0 0.0
        %1059 = vmatpush1.msra.mxu0 0.0
        %1060 = vmatprep.subr.mxu0 0.0
        %1061 = vmatpush1.msra.mxu0 0.0
        %1062 = vmatprep.subr.mxu0 0.0
        %1063 = vmatpush1.msra.mxu0 0.0
        %1064 = vmatprep.subr.mxu0 0.0
        %1065 = vmatpush1.msra.mxu0 0.0
        %1066 = vmatprep.subr.mxu0 0.0
        %1067 = vmatpush1.msra.mxu0 0.0
        %1068 = vmatprep.subr.mxu0 0.0
        %1069 = vmatpush1.msra.mxu0 0.0
        %1070 = vmatprep.subr.mxu0 0.0
        %1071 = vmatpush1.msra.mxu0 0.0
        %1072 = vmatprep.subr.mxu0 0.0
        %1073 = vmatpush1.msra.mxu0 0.0
        %1074 = vmatprep.subr.mxu0 0.0
        %1075 = vmatpush1.msra.mxu0 0.0
        %1076 = vmatprep.subr.mxu0 0.0
        %1077 = vmatpush1.msra.mxu0 0.0
        %1078 = vmatprep.subr.mxu0 0.0
        %v1079 = vand.u32 %v539, 4294901760
        %1080 = vmatpush1.msra.mxu0 %v1079
        %1081 = vmatprep.subr.mxu0 0.0
        %v1082 = vand.u32 %v538, 4294901760
        %1083 = vmatpush1.msra.mxu0 %v1082
        %1084 = vmatprep.subr.mxu0 0.0
        %1085 = vmatpush2.msra.mxu0 0.0
        %1086 = vmatprep.subr.mxu0 0.0
        %1087 = vmatpush2.msra.mxu0 0.0
        %1088 = vmatprep.subr.mxu0 0.0
        %1089 = vmatpush2.msra.mxu0 0.0
        %1090 = vmatprep.subr.mxu0 0.0
        %1091 = vmatpush2.msra.mxu0 0.0
        %1092 = vmatprep.subr.mxu0 0.0
        %1093 = vmatpush2.msra.mxu0 0.0
        %1094 = vmatprep.subr.mxu0 0.0
        %1095 = vmatpush2.msra.mxu0 0.0
        %1096 = vmatprep.subr.mxu0 0.0
        %1097 = vmatpush2.msra.mxu0 0.0
        %1098 = vmatprep.subr.mxu0 0.0
        %1099 = vmatpush2.msra.mxu0 0.0
        %1100 = vmatprep.subr.mxu0 0.0
        %1101 = vmatpush2.msra.mxu0 0.0
        %1102 = vmatprep.subr.mxu0 0.0
        %1103 = vmatpush2.msra.mxu0 0.0
        %1104 = vmatprep.subr.mxu0 0.0
        %1105 = vmatpush2.msra.mxu0 0.0
        %1106 = vmatprep.subr.mxu0 0.0
        %1107 = vmatpush2.msra.mxu0 0.0
        %1108 = vmatprep.subr.mxu0 0.0
        %1109 = vmatpush2.msra.mxu0 0.0
        %1110 = vmatprep.subr.mxu0 0.0
        %1111 = vmatpush2.msra.mxu0 0.0
        %1112 = vmatprep.subr.mxu0 0.0
        %1113 = vmatpush2.msra.mxu0 0.0
        %1114 = vmatprep.subr.mxu0 0.0
        %1115 = vmatpush2.msra.mxu0 0.0
        %1116 = vmatprep.mubr.f32.mxu0 0.0
        %v1117 = vand.u32 %v542, 4294901760
        %1118 = vmatmul.mubr.f32.gmra.mxu0 %v1117
        %v1119 = vpop.f32.mrf.mxu0
        %v1120 = vadd.f32 %v1029, %v1119
        %v1121 = vpop.f32.mrf.mxu0
        %1122 = vmatprep.mubr.f32.mxu0 0.0
        %v1123 = vand.u32 %v545, 4294901760
        %1124 = vmatmul.mubr.f32.gmra.mxu0 %v1123
        %v1125 = vpop.f32.mrf.mxu0
        %v1126 = vadd.f32 %v1035, %v1125
        %v1127 = vpop.f32.mrf.mxu0
        %1128 = vmatprep.mubr.f32.mxu0 0.0
        %v1129 = vand.u32 %v548, 4294901760
        %1130 = vmatmul.mubr.f32.gmra.mxu0 %v1129
        %v1131 = vpop.f32.mrf.mxu0
        %v1132 = vadd.f32 %v1041, %v1131
        %v1133 = vpop.f32.mrf.mxu0
        %1134 = vmatprep.mubr.f32.mxu0 0.0
        %v1135 = vand.u32 %v551, 4294901760
        %1136 = vmatmul.mubr.f32.gmra.mxu0 %v1135
        %v1137 = vpop.f32.mrf.mxu0
        %v1138 = vadd.f32 %v1047, %v1137
        %v1139 = vpop.f32.mrf.mxu0
        %1140 = vdwg.mxu0
        %v1141 = vld [vmem:[%s2] sm:$0xff]
        %v1142 = vld [vmem:[%s2 + $0x8] sm:$0xff]
        %1143 = vmatprep.subr.mxu0 0.0
        %1144 = vmatpush1.msra.mxu0 0.0
        %1145 = vmatprep.subr.mxu0 0.0
        %1146 = vmatpush1.msra.mxu0 0.0
        %1147 = vmatprep.subr.mxu0 0.0
        %1148 = vmatpush1.msra.mxu0 0.0
        %1149 = vmatprep.subr.mxu0 0.0
        %1150 = vmatpush1.msra.mxu0 0.0
        %1151 = vmatprep.subr.mxu0 0.0
        %1152 = vmatpush1.msra.mxu0 0.0
        %1153 = vmatprep.subr.mxu0 0.0
        %1154 = vmatpush1.msra.mxu0 0.0
        %1155 = vmatprep.subr.mxu0 0.0
        %1156 = vmatpush1.msra.mxu0 0.0
        %1157 = vmatprep.subr.mxu0 0.0
        %1158 = vmatpush1.msra.mxu0 0.0
        %1159 = vmatprep.subr.mxu0 0.0
        %1160 = vmatpush1.msra.mxu0 0.0
        %1161 = vmatprep.subr.mxu0 0.0
        %1162 = vmatpush1.msra.mxu0 0.0
        %1163 = vmatprep.subr.mxu0 0.0
        %1164 = vmatpush1.msra.mxu0 0.0
        %1165 = vmatprep.subr.mxu0 0.0
        %1166 = vmatpush1.msra.mxu0 0.0
        %1167 = vmatprep.subr.mxu0 0.0
        %1168 = vmatpush1.msra.mxu0 0.0
        %1169 = vmatprep.subr.mxu0 0.0
        %1170 = vmatpush1.msra.mxu0 0.0
        %1171 = vmatprep.subr.mxu0 0.0
        %v1172 = vand.u32 %v1142, 4294901760
        %1173 = vmatpush1.msra.mxu0 %v1172
        %1174 = vmatprep.subr.mxu0 0.0
        %v1175 = vand.u32 %v1141, 4294901760
        %1176 = vmatpush1.msra.mxu0 %v1175
        %1177 = vmatprep.subr.mxu0 0.0
        %1178 = vmatpush2.msra.mxu0 0.0
        %1179 = vmatprep.subr.mxu0 0.0
        %1180 = vmatpush2.msra.mxu0 0.0
        %1181 = vmatprep.subr.mxu0 0.0
        %1182 = vmatpush2.msra.mxu0 0.0
        %1183 = vmatprep.subr.mxu0 0.0
        %1184 = vmatpush2.msra.mxu0 0.0
        %1185 = vmatprep.subr.mxu0 0.0
        %1186 = vmatpush2.msra.mxu0 0.0
        %1187 = vmatprep.subr.mxu0 0.0
        %1188 = vmatpush2.msra.mxu0 0.0
        %1189 = vmatprep.subr.mxu0 0.0
        %1190 = vmatpush2.msra.mxu0 0.0
        %1191 = vmatprep.subr.mxu0 0.0
        %1192 = vmatpush2.msra.mxu0 0.0
        %1193 = vmatprep.subr.mxu0 0.0
        %1194 = vmatpush2.msra.mxu0 0.0
        %1195 = vmatprep.subr.mxu0 0.0
        %1196 = vmatpush2.msra.mxu0 0.0
        %1197 = vmatprep.subr.mxu0 0.0
        %1198 = vmatpush2.msra.mxu0 0.0
        %1199 = vmatprep.subr.mxu0 0.0
        %1200 = vmatpush2.msra.mxu0 0.0
        %1201 = vmatprep.subr.mxu0 0.0
        %1202 = vmatpush2.msra.mxu0 0.0
        %1203 = vmatprep.subr.mxu0 0.0
        %1204 = vmatpush2.msra.mxu0 0.0
        %1205 = vmatprep.subr.mxu0 0.0
        %1206 = vmatpush2.msra.mxu0 0.0
        %1207 = vmatprep.subr.mxu0 0.0
        %1208 = vmatpush2.msra.mxu0 0.0
        %1209 = vmatprep.mubr.f32.mxu0 0.0
        %v1210 = vand.u32 %v542, 4294901760
        %v1211 = vsub.f32 %v542, %v1210
        %v1212 = vand.u32 %v1211, 4294901760
        %v1213 = vsub.f32 %v1211, %v1212
        %v1214 = vand.u32 %v1213, 4294901760
        %1215 = vmatmul.mubr.f32.gmra.mxu0 %v1214
        %v1216 = vpop.f32.mrf.mxu0
        %v1217 = vadd.f32 0.0, %v1216
        %v1218 = vpop.f32.mrf.mxu0
        %1219 = vmatprep.mubr.f32.mxu0 0.0
        %v1220 = vand.u32 %v545, 4294901760
        %v1221 = vsub.f32 %v545, %v1220
        %v1222 = vand.u32 %v1221, 4294901760
        %v1223 = vsub.f32 %v1221, %v1222
        %v1224 = vand.u32 %v1223, 4294901760
        %1225 = vmatmul.mubr.f32.gmra.mxu0 %v1224
        %v1226 = vpop.f32.mrf.mxu0
        %v1227 = vadd.f32 0.0, %v1226
        %v1228 = vpop.f32.mrf.mxu0
        %1229 = vmatprep.mubr.f32.mxu0 0.0
        %v1230 = vand.u32 %v548, 4294901760
        %v1231 = vsub.f32 %v548, %v1230
        %v1232 = vand.u32 %v1231, 4294901760
        %v1233 = vsub.f32 %v1231, %v1232
        %v1234 = vand.u32 %v1233, 4294901760
        %1235 = vmatmul.mubr.f32.gmra.mxu0 %v1234
        %v1236 = vpop.f32.mrf.mxu0
        %v1237 = vadd.f32 0.0, %v1236
        %v1238 = vpop.f32.mrf.mxu0
        %1239 = vmatprep.mubr.f32.mxu0 0.0
        %v1240 = vand.u32 %v551, 4294901760
        %v1241 = vsub.f32 %v551, %v1240
        %v1242 = vand.u32 %v1241, 4294901760
        %v1243 = vsub.f32 %v1241, %v1242
        %v1244 = vand.u32 %v1243, 4294901760
        %1245 = vmatmul.mubr.f32.gmra.mxu0 %v1244
        %v1246 = vpop.f32.mrf.mxu0
        %v1247 = vadd.f32 0.0, %v1246
        %v1248 = vpop.f32.mrf.mxu0
        %1249 = vdwg.mxu0
        %1250 = vmatprep.subr.mxu0 0.0
        %1251 = vmatpush1.msra.mxu0 0.0
        %1252 = vmatprep.subr.mxu0 0.0
        %1253 = vmatpush1.msra.mxu0 0.0
        %1254 = vmatprep.subr.mxu0 0.0
        %1255 = vmatpush1.msra.mxu0 0.0
        %1256 = vmatprep.subr.mxu0 0.0
        %1257 = vmatpush1.msra.mxu0 0.0
        %1258 = vmatprep.subr.mxu0 0.0
        %1259 = vmatpush1.msra.mxu0 0.0
        %1260 = vmatprep.subr.mxu0 0.0
        %1261 = vmatpush1.msra.mxu0 0.0
        %1262 = vmatprep.subr.mxu0 0.0
        %1263 = vmatpush1.msra.mxu0 0.0
        %1264 = vmatprep.subr.mxu0 0.0
        %1265 = vmatpush1.msra.mxu0 0.0
        %1266 = vmatprep.subr.mxu0 0.0
        %1267 = vmatpush1.msra.mxu0 0.0
        %1268 = vmatprep.subr.mxu0 0.0
        %1269 = vmatpush1.msra.mxu0 0.0
        %1270 = vmatprep.subr.mxu0 0.0
        %1271 = vmatpush1.msra.mxu0 0.0
        %1272 = vmatprep.subr.mxu0 0.0
        %1273 = vmatpush1.msra.mxu0 0.0
        %1274 = vmatprep.subr.mxu0 0.0
        %1275 = vmatpush1.msra.mxu0 0.0
        %1276 = vmatprep.subr.mxu0 0.0
        %1277 = vmatpush1.msra.mxu0 0.0
        %1278 = vmatprep.subr.mxu0 0.0
        %v1279 = vand.u32 %v1142, 4294901760
        %v1280 = vsub.f32 %v1142, %v1279
        %v1281 = vand.u32 %v1280, 4294901760
        %v1282 = vsub.f32 %v1280, %v1281
        %v1283 = vand.u32 %v1282, 4294901760
        %1284 = vmatpush1.msra.mxu0 %v1283
        %1285 = vmatprep.subr.mxu0 0.0
        %v1286 = vand.u32 %v1141, 4294901760
        %v1287 = vsub.f32 %v1141, %v1286
        %v1288 = vand.u32 %v1287, 4294901760
        %v1289 = vsub.f32 %v1287, %v1288
        %v1290 = vand.u32 %v1289, 4294901760
        %1291 = vmatpush1.msra.mxu0 %v1290
        %1292 = vmatprep.subr.mxu0 0.0
        %1293 = vmatpush2.msra.mxu0 0.0
        %1294 = vmatprep.subr.mxu0 0.0
        %1295 = vmatpush2.msra.mxu0 0.0
        %1296 = vmatprep.subr.mxu0 0.0
        %1297 = vmatpush2.msra.mxu0 0.0
        %1298 = vmatprep.subr.mxu0 0.0
        %1299 = vmatpush2.msra.mxu0 0.0
        %1300 = vmatprep.subr.mxu0 0.0
        %1301 = vmatpush2.msra.mxu0 0.0
        %1302 = vmatprep.subr.mxu0 0.0
        %1303 = vmatpush2.msra.mxu0 0.0
        %1304 = vmatprep.subr.mxu0 0.0
        %1305 = vmatpush2.msra.mxu0 0.0
        %1306 = vmatprep.subr.mxu0 0.0
        %1307 = vmatpush2.msra.mxu0 0.0
        %1308 = vmatprep.subr.mxu0 0.0
        %1309 = vmatpush2.msra.mxu0 0.0
        %1310 = vmatprep.subr.mxu0 0.0
        %1311 = vmatpush2.msra.mxu0 0.0
        %1312 = vmatprep.subr.mxu0 0.0
        %1313 = vmatpush2.msra.mxu0 0.0
        %1314 = vmatprep.subr.mxu0 0.0
        %1315 = vmatpush2.msra.mxu0 0.0
        %1316 = vmatprep.subr.mxu0 0.0
        %1317 = vmatpush2.msra.mxu0 0.0
        %1318 = vmatprep.subr.mxu0 0.0
        %1319 = vmatpush2.msra.mxu0 0.0
        %1320 = vmatprep.subr.mxu0 0.0
        %1321 = vmatpush2.msra.mxu0 0.0
        %1322 = vmatprep.subr.mxu0 0.0
        %1323 = vmatpush2.msra.mxu0 0.0
        %1324 = vmatprep.mubr.f32.mxu0 0.0
        %v1325 = vand.u32 %v542, 4294901760
        %1326 = vmatmul.mubr.f32.gmra.mxu0 %v1325
        %v1327 = vpop.f32.mrf.mxu0
        %v1328 = vadd.f32 %v1217, %v1327
        %v1329 = vpop.f32.mrf.mxu0
        %1330 = vmatprep.mubr.f32.mxu0 0.0
        %v1331 = vand.u32 %v545, 4294901760
        %1332 = vmatmul.mubr.f32.gmra.mxu0 %v1331
        %v1333 = vpop.f32.mrf.mxu0
        %v1334 = vadd.f32 %v1227, %v1333
        %v1335 = vpop.f32.mrf.mxu0
        %1336 = vmatprep.mubr.f32.mxu0 0.0
        %v1337 = vand.u32 %v548, 4294901760
        %1338 = vmatmul.mubr.f32.gmra.mxu0 %v1337
        %v1339 = vpop.f32.mrf.mxu0
        %v1340 = vadd.f32 %v1237, %v1339
        %v1341 = vpop.f32.mrf.mxu0
        %1342 = vmatprep.mubr.f32.mxu0 0.0
        %v1343 = vand.u32 %v551, 4294901760
        %1344 = vmatmul.mubr.f32.gmra.mxu0 %v1343
        %v1345 = vpop.f32.mrf.mxu0
        %v1346 = vadd.f32 %v1247, %v1345
        %v1347 = vpop.f32.mrf.mxu0
        %1348 = vdwg.mxu0
        %1349 = vmatprep.subr.mxu0 0.0
        %1350 = vmatpush1.msra.mxu0 0.0
        %1351 = vmatprep.subr.mxu0 0.0
        %1352 = vmatpush1.msra.mxu0 0.0
        %1353 = vmatprep.subr.mxu0 0.0
        %1354 = vmatpush1.msra.mxu0 0.0
        %1355 = vmatprep.subr.mxu0 0.0
        %1356 = vmatpush1.msra.mxu0 0.0
        %1357 = vmatprep.subr.mxu0 0.0
        %1358 = vmatpush1.msra.mxu0 0.0
        %1359 = vmatprep.subr.mxu0 0.0
        %1360 = vmatpush1.msra.mxu0 0.0
        %1361 = vmatprep.subr.mxu0 0.0
        %1362 = vmatpush1.msra.mxu0 0.0
        %1363 = vmatprep.subr.mxu0 0.0
        %1364 = vmatpush1.msra.mxu0 0.0
        %1365 = vmatprep.subr.mxu0 0.0
        %1366 = vmatpush1.msra.mxu0 0.0
        %1367 = vmatprep.subr.mxu0 0.0
        %1368 = vmatpush1.msra.mxu0 0.0
        %1369 = vmatprep.subr.mxu0 0.0
        %1370 = vmatpush1.msra.mxu0 0.0
        %1371 = vmatprep.subr.mxu0 0.0
        %1372 = vmatpush1.msra.mxu0 0.0
        %1373 = vmatprep.subr.mxu0 0.0
        %1374 = vmatpush1.msra.mxu0 0.0
        %1375 = vmatprep.subr.mxu0 0.0
        %1376 = vmatpush1.msra.mxu0 0.0
        %1377 = vmatprep.subr.mxu0 0.0
        %v1378 = vand.u32 %v1142, 4294901760
        %v1379 = vsub.f32 %v1142, %v1378
        %1380 = vmatpush1.msra.mxu0 %v1379
        %1381 = vmatprep.subr.mxu0 0.0
        %v1382 = vand.u32 %v1141, 4294901760
        %v1383 = vsub.f32 %v1141, %v1382
        %1384 = vmatpush1.msra.mxu0 %v1383
        %1385 = vmatprep.subr.mxu0 0.0
        %1386 = vmatpush2.msra.mxu0 0.0
        %1387 = vmatprep.subr.mxu0 0.0
        %1388 = vmatpush2.msra.mxu0 0.0
        %1389 = vmatprep.subr.mxu0 0.0
        %1390 = vmatpush2.msra.mxu0 0.0
        %1391 = vmatprep.subr.mxu0 0.0
        %1392 = vmatpush2.msra.mxu0 0.0
        %1393 = vmatprep.subr.mxu0 0.0
        %1394 = vmatpush2.msra.mxu0 0.0
        %1395 = vmatprep.subr.mxu0 0.0
        %1396 = vmatpush2.msra.mxu0 0.0
        %1397 = vmatprep.subr.mxu0 0.0
        %1398 = vmatpush2.msra.mxu0 0.0
        %1399 = vmatprep.subr.mxu0 0.0
        %1400 = vmatpush2.msra.mxu0 0.0
        %1401 = vmatprep.subr.mxu0 0.0
        %1402 = vmatpush2.msra.mxu0 0.0
        %1403 = vmatprep.subr.mxu0 0.0
        %1404 = vmatpush2.msra.mxu0 0.0
        %1405 = vmatprep.subr.mxu0 0.0
        %1406 = vmatpush2.msra.mxu0 0.0
        %1407 = vmatprep.subr.mxu0 0.0
        %1408 = vmatpush2.msra.mxu0 0.0
        %1409 = vmatprep.subr.mxu0 0.0
        %1410 = vmatpush2.msra.mxu0 0.0
        %1411 = vmatprep.subr.mxu0 0.0
        %1412 = vmatpush2.msra.mxu0 0.0
        %1413 = vmatprep.subr.mxu0 0.0
        %1414 = vmatpush2.msra.mxu0 0.0
        %1415 = vmatprep.subr.mxu0 0.0
        %1416 = vmatpush2.msra.mxu0 0.0
        %1417 = vmatprep.mubr.f32.mxu0 0.0
        %v1418 = vand.u32 %v542, 4294901760
        %v1419 = vsub.f32 %v542, %v1418
        %1420 = vmatmul.mubr.f32.gmra.mxu0 %v1419
        %v1421 = vpop.f32.mrf.mxu0
        %v1422 = vadd.f32 %v1328, %v1421
        %v1423 = vpop.f32.mrf.mxu0
        %1424 = vmatprep.mubr.f32.mxu0 0.0
        %v1425 = vand.u32 %v545, 4294901760
        %v1426 = vsub.f32 %v545, %v1425
        %1427 = vmatmul.mubr.f32.gmra.mxu0 %v1426
        %v1428 = vpop.f32.mrf.mxu0
        %v1429 = vadd.f32 %v1334, %v1428
        %v1430 = vpop.f32.mrf.mxu0
        %1431 = vmatprep.mubr.f32.mxu0 0.0
        %v1432 = vand.u32 %v548, 4294901760
        %v1433 = vsub.f32 %v548, %v1432
        %1434 = vmatmul.mubr.f32.gmra.mxu0 %v1433
        %v1435 = vpop.f32.mrf.mxu0
        %v1436 = vadd.f32 %v1340, %v1435
        %v1437 = vpop.f32.mrf.mxu0
        %1438 = vmatprep.mubr.f32.mxu0 0.0
        %v1439 = vand.u32 %v551, 4294901760
        %v1440 = vsub.f32 %v551, %v1439
        %1441 = vmatmul.mubr.f32.gmra.mxu0 %v1440
        %v1442 = vpop.f32.mrf.mxu0
        %v1443 = vadd.f32 %v1346, %v1442
        %v1444 = vpop.f32.mrf.mxu0
        %1445 = vdwg.mxu0
        %1446 = vmatprep.subr.mxu0 0.0
        %1447 = vmatpush1.msra.mxu0 0.0
        %1448 = vmatprep.subr.mxu0 0.0
        %1449 = vmatpush1.msra.mxu0 0.0
        %1450 = vmatprep.subr.mxu0 0.0
        %1451 = vmatpush1.msra.mxu0 0.0
        %1452 = vmatprep.subr.mxu0 0.0
        %1453 = vmatpush1.msra.mxu0 0.0
        %1454 = vmatprep.subr.mxu0 0.0
        %1455 = vmatpush1.msra.mxu0 0.0
        %1456 = vmatprep.subr.mxu0 0.0
        %1457 = vmatpush1.msra.mxu0 0.0
        %1458 = vmatprep.subr.mxu0 0.0
        %1459 = vmatpush1.msra.mxu0 0.0
        %1460 = vmatprep.subr.mxu0 0.0
        %1461 = vmatpush1.msra.mxu0 0.0
        %1462 = vmatprep.subr.mxu0 0.0
        %1463 = vmatpush1.msra.mxu0 0.0
        %1464 = vmatprep.subr.mxu0 0.0
        %1465 = vmatpush1.msra.mxu0 0.0
        %1466 = vmatprep.subr.mxu0 0.0
        %1467 = vmatpush1.msra.mxu0 0.0
        %1468 = vmatprep.subr.mxu0 0.0
        %1469 = vmatpush1.msra.mxu0 0.0
        %1470 = vmatprep.subr.mxu0 0.0
        %1471 = vmatpush1.msra.mxu0 0.0
        %1472 = vmatprep.subr.mxu0 0.0
        %1473 = vmatpush1.msra.mxu0 0.0
        %1474 = vmatprep.subr.mxu0 0.0
        %v1475 = vand.u32 %v1142, 4294901760
        %1476 = vmatpush1.msra.mxu0 %v1475
        %1477 = vmatprep.subr.mxu0 0.0
        %v1478 = vand.u32 %v1141, 4294901760
        %1479 = vmatpush1.msra.mxu0 %v1478
        %1480 = vmatprep.subr.mxu0 0.0
        %1481 = vmatpush2.msra.mxu0 0.0
        %1482 = vmatprep.subr.mxu0 0.0
        %1483 = vmatpush2.msra.mxu0 0.0
        %1484 = vmatprep.subr.mxu0 0.0
        %1485 = vmatpush2.msra.mxu0 0.0
        %1486 = vmatprep.subr.mxu0 0.0
        %1487 = vmatpush2.msra.mxu0 0.0
        %1488 = vmatprep.subr.mxu0 0.0
        %1489 = vmatpush2.msra.mxu0 0.0
        %1490 = vmatprep.subr.mxu0 0.0
        %1491 = vmatpush2.msra.mxu0 0.0
        %1492 = vmatprep.subr.mxu0 0.0
        %1493 = vmatpush2.msra.mxu0 0.0
        %1494 = vmatprep.subr.mxu0 0.0
        %1495 = vmatpush2.msra.mxu0 0.0
        %1496 = vmatprep.subr.mxu0 0.0
        %1497 = vmatpush2.msra.mxu0 0.0
        %1498 = vmatprep.subr.mxu0 0.0
        %1499 = vmatpush2.msra.mxu0 0.0
        %1500 = vmatprep.subr.mxu0 0.0
        %1501 = vmatpush2.msra.mxu0 0.0
        %1502 = vmatprep.subr.mxu0 0.0
        %1503 = vmatpush2.msra.mxu0 0.0
        %1504 = vmatprep.subr.mxu0 0.0
        %1505 = vmatpush2.msra.mxu0 0.0
        %1506 = vmatprep.subr.mxu0 0.0
        %1507 = vmatpush2.msra.mxu0 0.0
        %1508 = vmatprep.subr.mxu0 0.0
        %1509 = vmatpush2.msra.mxu0 0.0
        %1510 = vmatprep.subr.mxu0 0.0
        %1511 = vmatpush2.msra.mxu0 0.0
        %1512 = vmatprep.mubr.f32.mxu0 0.0
        %v1513 = vand.u32 %v542, 4294901760
        %v1514 = vsub.f32 %v542, %v1513
        %v1515 = vand.u32 %v1514, 4294901760
        %1516 = vmatmul.mubr.f32.gmra.mxu0 %v1515
        %v1517 = vpop.f32.mrf.mxu0
        %v1518 = vadd.f32 %v1422, %v1517
        %v1519 = vpop.f32.mrf.mxu0
        %1520 = vmatprep.mubr.f32.mxu0 0.0
        %v1521 = vand.u32 %v545, 4294901760
        %v1522 = vsub.f32 %v545, %v1521
        %v1523 = vand.u32 %v1522, 4294901760
        %1524 = vmatmul.mubr.f32.gmra.mxu0 %v1523
        %v1525 = vpop.f32.mrf.mxu0
        %v1526 = vadd.f32 %v1429, %v1525
        %v1527 = vpop.f32.mrf.mxu0
        %1528 = vmatprep.mubr.f32.mxu0 0.0
        %v1529 = vand.u32 %v548, 4294901760
        %v1530 = vsub.f32 %v548, %v1529
        %v1531 = vand.u32 %v1530, 4294901760
        %1532 = vmatmul.mubr.f32.gmra.mxu0 %v1531
        %v1533 = vpop.f32.mrf.mxu0
        %v1534 = vadd.f32 %v1436, %v1533
        %v1535 = vpop.f32.mrf.mxu0
        %1536 = vmatprep.mubr.f32.mxu0 0.0
        %v1537 = vand.u32 %v551, 4294901760
        %v1538 = vsub.f32 %v551, %v1537
        %v1539 = vand.u32 %v1538, 4294901760
        %1540 = vmatmul.mubr.f32.gmra.mxu0 %v1539
        %v1541 = vpop.f32.mrf.mxu0
        %v1542 = vadd.f32 %v1443, %v1541
        %v1543 = vpop.f32.mrf.mxu0
        %1544 = vdwg.mxu0
        %1545 = vmatprep.subr.mxu0 0.0
        %1546 = vmatpush1.msra.mxu0 0.0
        %1547 = vmatprep.subr.mxu0 0.0
        %1548 = vmatpush1.msra.mxu0 0.0
        %1549 = vmatprep.subr.mxu0 0.0
        %1550 = vmatpush1.msra.mxu0 0.0
        %1551 = vmatprep.subr.mxu0 0.0
        %1552 = vmatpush1.msra.mxu0 0.0
        %1553 = vmatprep.subr.mxu0 0.0
        %1554 = vmatpush1.msra.mxu0 0.0
        %1555 = vmatprep.subr.mxu0 0.0
        %1556 = vmatpush1.msra.mxu0 0.0
        %1557 = vmatprep.subr.mxu0 0.0
        %1558 = vmatpush1.msra.mxu0 0.0
        %1559 = vmatprep.subr.mxu0 0.0
        %1560 = vmatpush1.msra.mxu0 0.0
        %1561 = vmatprep.subr.mxu0 0.0
        %1562 = vmatpush1.msra.mxu0 0.0
        %1563 = vmatprep.subr.mxu0 0.0
        %1564 = vmatpush1.msra.mxu0 0.0
        %1565 = vmatprep.subr.mxu0 0.0
        %1566 = vmatpush1.msra.mxu0 0.0
        %1567 = vmatprep.subr.mxu0 0.0
        %1568 = vmatpush1.msra.mxu0 0.0
        %1569 = vmatprep.subr.mxu0 0.0
        %1570 = vmatpush1.msra.mxu0 0.0
        %1571 = vmatprep.subr.mxu0 0.0
        %1572 = vmatpush1.msra.mxu0 0.0
        %1573 = vmatprep.subr.mxu0 0.0
        %v1574 = vand.u32 %v1142, 4294901760
        %v1575 = vsub.f32 %v1142, %v1574
        %v1576 = vand.u32 %v1575, 4294901760
        %1577 = vmatpush1.msra.mxu0 %v1576
        %1578 = vmatprep.subr.mxu0 0.0
        %v1579 = vand.u32 %v1141, 4294901760
        %v1580 = vsub.f32 %v1141, %v1579
        %v1581 = vand.u32 %v1580, 4294901760
        %1582 = vmatpush1.msra.mxu0 %v1581
        %1583 = vmatprep.subr.mxu0 0.0
        %1584 = vmatpush2.msra.mxu0 0.0
        %1585 = vmatprep.subr.mxu0 0.0
        %1586 = vmatpush2.msra.mxu0 0.0
        %1587 = vmatprep.subr.mxu0 0.0
        %1588 = vmatpush2.msra.mxu0 0.0
        %1589 = vmatprep.subr.mxu0 0.0
        %1590 = vmatpush2.msra.mxu0 0.0
        %1591 = vmatprep.subr.mxu0 0.0
        %1592 = vmatpush2.msra.mxu0 0.0
        %1593 = vmatprep.subr.mxu0 0.0
        %1594 = vmatpush2.msra.mxu0 0.0
        %1595 = vmatprep.subr.mxu0 0.0
        %1596 = vmatpush2.msra.mxu0 0.0
        %1597 = vmatprep.subr.mxu0 0.0
        %1598 = vmatpush2.msra.mxu0 0.0
        %1599 = vmatprep.subr.mxu0 0.0
        %1600 = vmatpush2.msra.mxu0 0.0
        %1601 = vmatprep.subr.mxu0 0.0
        %1602 = vmatpush2.msra.mxu0 0.0
        %1603 = vmatprep.subr.mxu0 0.0
        %1604 = vmatpush2.msra.mxu0 0.0
        %1605 = vmatprep.subr.mxu0 0.0
        %1606 = vmatpush2.msra.mxu0 0.0
        %1607 = vmatprep.subr.mxu0 0.0
        %1608 = vmatpush2.msra.mxu0 0.0
        %1609 = vmatprep.subr.mxu0 0.0
        %1610 = vmatpush2.msra.mxu0 0.0
        %1611 = vmatprep.subr.mxu0 0.0
        %1612 = vmatpush2.msra.mxu0 0.0
        %1613 = vmatprep.subr.mxu0 0.0
        %1614 = vmatpush2.msra.mxu0 0.0
        %1615 = vmatprep.mubr.f32.mxu0 0.0
        %v1616 = vand.u32 %v542, 4294901760
        %1617 = vmatmul.mubr.f32.gmra.mxu0 %v1616
        %v1618 = vpop.f32.mrf.mxu0
        %v1619 = vadd.f32 %v1518, %v1618
        %v1620 = vpop.f32.mrf.mxu0
        %1621 = vmatprep.mubr.f32.mxu0 0.0
        %v1622 = vand.u32 %v545, 4294901760
        %1623 = vmatmul.mubr.f32.gmra.mxu0 %v1622
        %v1624 = vpop.f32.mrf.mxu0
        %v1625 = vadd.f32 %v1526, %v1624
        %v1626 = vpop.f32.mrf.mxu0
        %1627 = vmatprep.mubr.f32.mxu0 0.0
        %v1628 = vand.u32 %v548, 4294901760
        %1629 = vmatmul.mubr.f32.gmra.mxu0 %v1628
        %v1630 = vpop.f32.mrf.mxu0
        %v1631 = vadd.f32 %v1534, %v1630
        %v1632 = vpop.f32.mrf.mxu0
        %1633 = vmatprep.mubr.f32.mxu0 0.0
        %v1634 = vand.u32 %v551, 4294901760
        %1635 = vmatmul.mubr.f32.gmra.mxu0 %v1634
        %v1636 = vpop.f32.mrf.mxu0
        %v1637 = vadd.f32 %v1542, %v1636
        %v1638 = vpop.f32.mrf.mxu0
        %1639 = vdwg.mxu0
        %1640 = vmatprep.subr.mxu0 0.0
        %1641 = vmatpush1.msra.mxu0 0.0
        %1642 = vmatprep.subr.mxu0 0.0
        %1643 = vmatpush1.msra.mxu0 0.0
        %1644 = vmatprep.subr.mxu0 0.0
        %1645 = vmatpush1.msra.mxu0 0.0
        %1646 = vmatprep.subr.mxu0 0.0
        %1647 = vmatpush1.msra.mxu0 0.0
        %1648 = vmatprep.subr.mxu0 0.0
        %1649 = vmatpush1.msra.mxu0 0.0
        %1650 = vmatprep.subr.mxu0 0.0
        %1651 = vmatpush1.msra.mxu0 0.0
        %1652 = vmatprep.subr.mxu0 0.0
        %1653 = vmatpush1.msra.mxu0 0.0
        %1654 = vmatprep.subr.mxu0 0.0
        %1655 = vmatpush1.msra.mxu0 0.0
        %1656 = vmatprep.subr.mxu0 0.0
        %1657 = vmatpush1.msra.mxu0 0.0
        %1658 = vmatprep.subr.mxu0 0.0
        %1659 = vmatpush1.msra.mxu0 0.0
        %1660 = vmatprep.subr.mxu0 0.0
        %1661 = vmatpush1.msra.mxu0 0.0
        %1662 = vmatprep.subr.mxu0 0.0
        %1663 = vmatpush1.msra.mxu0 0.0
        %1664 = vmatprep.subr.mxu0 0.0
        %1665 = vmatpush1.msra.mxu0 0.0
        %1666 = vmatprep.subr.mxu0 0.0
        %1667 = vmatpush1.msra.mxu0 0.0
        %1668 = vmatprep.subr.mxu0 0.0
        %v1669 = vand.u32 %v1142, 4294901760
        %1670 = vmatpush1.msra.mxu0 %v1669
        %1671 = vmatprep.subr.mxu0 0.0
        %v1672 = vand.u32 %v1141, 4294901760
        %1673 = vmatpush1.msra.mxu0 %v1672
        %1674 = vmatprep.subr.mxu0 0.0
        %1675 = vmatpush2.msra.mxu0 0.0
        %1676 = vmatprep.subr.mxu0 0.0
        %1677 = vmatpush2.msra.mxu0 0.0
        %1678 = vmatprep.subr.mxu0 0.0
        %1679 = vmatpush2.msra.mxu0 0.0
        %1680 = vmatprep.subr.mxu0 0.0
        %1681 = vmatpush2.msra.mxu0 0.0
        %1682 = vmatprep.subr.mxu0 0.0
        %1683 = vmatpush2.msra.mxu0 0.0
        %1684 = vmatprep.subr.mxu0 0.0
        %1685 = vmatpush2.msra.mxu0 0.0
        %1686 = vmatprep.subr.mxu0 0.0
        %1687 = vmatpush2.msra.mxu0 0.0
        %1688 = vmatprep.subr.mxu0 0.0
        %1689 = vmatpush2.msra.mxu0 0.0
        %1690 = vmatprep.subr.mxu0 0.0
        %1691 = vmatpush2.msra.mxu0 0.0
        %1692 = vmatprep.subr.mxu0 0.0
        %1693 = vmatpush2.msra.mxu0 0.0
        %1694 = vmatprep.subr.mxu0 0.0
        %1695 = vmatpush2.msra.mxu0 0.0
        %1696 = vmatprep.subr.mxu0 0.0
        %1697 = vmatpush2.msra.mxu0 0.0
        %1698 = vmatprep.subr.mxu0 0.0
        %1699 = vmatpush2.msra.mxu0 0.0
        %1700 = vmatprep.subr.mxu0 0.0
        %1701 = vmatpush2.msra.mxu0 0.0
        %1702 = vmatprep.subr.mxu0 0.0
        %1703 = vmatpush2.msra.mxu0 0.0
        %1704 = vmatprep.subr.mxu0 0.0
        %1705 = vmatpush2.msra.mxu0 0.0
        %1706 = vmatprep.mubr.f32.mxu0 0.0
        %v1707 = vand.u32 %v542, 4294901760
        %1708 = vmatmul.mubr.f32.gmra.mxu0 %v1707
        %v1709 = vpop.f32.mrf.mxu0
        %v1710 = vadd.f32 %v1619, %v1709
        %v1711 = vpop.f32.mrf.mxu0
        %1712 = vmatprep.mubr.f32.mxu0 0.0
        %v1713 = vand.u32 %v545, 4294901760
        %1714 = vmatmul.mubr.f32.gmra.mxu0 %v1713
        %v1715 = vpop.f32.mrf.mxu0
        %v1716 = vadd.f32 %v1625, %v1715
        %v1717 = vpop.f32.mrf.mxu0
        %1718 = vmatprep.mubr.f32.mxu0 0.0
        %v1719 = vand.u32 %v548, 4294901760
        %1720 = vmatmul.mubr.f32.gmra.mxu0 %v1719
        %v1721 = vpop.f32.mrf.mxu0
        %v1722 = vadd.f32 %v1631, %v1721
        %v1723 = vpop.f32.mrf.mxu0
        %1724 = vmatprep.mubr.f32.mxu0 0.0
        %v1725 = vand.u32 %v551, 4294901760
        %1726 = vmatmul.mubr.f32.gmra.mxu0 %v1725
        %v1727 = vpop.f32.mrf.mxu0
        %v1728 = vadd.f32 %v1637, %v1727
        %v1729 = vpop.f32.mrf.mxu0
        %1730 = vdwg.mxu0
        %v1731 = vsub.f32 0.0, %v1710
        %v1732 = vsub.f32 0.0, %v1716
        %v1733 = vsub.f32 0.0, %v1722
        %v1734 = vsub.f32 0.0, %v1728
        %v1735 = vld [vmem:[%s3] sm:$0xff]
        %v1736 = vld [vmem:[%s3 + $0x8] sm:$0xff]
        %v1737 = vld [vmem:[%s3 + $0x10] sm:$0xff]
        %v1738 = vld [vmem:[%s3 + $0x18] sm:$0xff]
        %v1739 = vld [vmem:[%s4] sm:$0xff]
        %v1740 = vld [vmem:[%s4 + $0x8] sm:$0xff]
        %v1741 = vld [vmem:[%s4 + $0x10] sm:$0xff]
        %v1742 = vld [vmem:[%s4 + $0x18] sm:$0xff]
        %vm1743 = vcmask 261120
        %v1745 = vsel %vm1743, %v1739, 0
        %v1748 = vsel %vm1743, %v1740, 0
        %v1751 = vsel %vm1743, %v1741, 0
        %v1754 = vsel %vm1743, %v1742, 0
        %1756 = vmatprep.subr.mxu0 0.0
        %1757 = vmatpush1.msra.mxu0 0.0
        %1758 = vmatprep.subr.mxu0 0.0
        %1759 = vmatpush1.msra.mxu0 0.0
        %1760 = vmatprep.subr.mxu0 0.0
        %1761 = vmatpush1.msra.mxu0 0.0
        %1762 = vmatprep.subr.mxu0 0.0
        %1763 = vmatpush1.msra.mxu0 0.0
        %1764 = vmatprep.subr.mxu0 0.0
        %1765 = vmatpush1.msra.mxu0 0.0
        %1766 = vmatprep.subr.mxu0 0.0
        %1767 = vmatpush1.msra.mxu0 0.0
        %1768 = vmatprep.subr.mxu0 0.0
        %1769 = vmatpush1.msra.mxu0 0.0
        %1770 = vmatprep.subr.mxu0 0.0
        %1771 = vmatpush1.msra.mxu0 0.0
        %1772 = vmatprep.subr.mxu0 0.0
        %1773 = vmatpush1.msra.mxu0 0.0
        %1774 = vmatprep.subr.mxu0 0.0
        %1775 = vmatpush1.msra.mxu0 0.0
        %1776 = vmatprep.subr.mxu0 0.0
        %1777 = vmatpush1.msra.mxu0 0.0
        %1778 = vmatprep.subr.mxu0 0.0
        %1779 = vmatpush1.msra.mxu0 0.0
        %1780 = vmatprep.subr.mxu0 0.0
        %v1781 = vand.u32 %v1734, 4294901760
        %1782 = vmatpush1.msra.mxu0 %v1781
        %1783 = vmatprep.subr.mxu0 0.0
        %v1784 = vand.u32 %v1733, 4294901760
        %1785 = vmatpush1.msra.mxu0 %v1784
        %1786 = vmatprep.subr.mxu0 0.0
        %v1787 = vand.u32 %v1732, 4294901760
        %1788 = vmatpush1.msra.mxu0 %v1787
        %1789 = vmatprep.subr.mxu0 0.0
        %v1790 = vand.u32 %v1731, 4294901760
        %1791 = vmatpush1.msra.mxu0 %v1790
        %1792 = vmatprep.subr.mxu0 0.0
        %1793 = vmatpush2.msra.mxu0 0.0
        %1794 = vmatprep.subr.mxu0 0.0
        %1795 = vmatpush2.msra.mxu0 0.0
        %1796 = vmatprep.subr.mxu0 0.0
        %1797 = vmatpush2.msra.mxu0 0.0
        %1798 = vmatprep.subr.mxu0 0.0
        %1799 = vmatpush2.msra.mxu0 0.0
        %1800 = vmatprep.subr.mxu0 0.0
        %1801 = vmatpush2.msra.mxu0 0.0
        %1802 = vmatprep.subr.mxu0 0.0
        %1803 = vmatpush2.msra.mxu0 0.0
        %1804 = vmatprep.subr.mxu0 0.0
        %1805 = vmatpush2.msra.mxu0 0.0
        %1806 = vmatprep.subr.mxu0 0.0
        %1807 = vmatpush2.msra.mxu0 0.0
        %1808 = vmatprep.subr.mxu0 0.0
        %1809 = vmatpush2.msra.mxu0 0.0
        %1810 = vmatprep.subr.mxu0 0.0
        %1811 = vmatpush2.msra.mxu0 0.0
        %1812 = vmatprep.subr.mxu0 0.0
        %1813 = vmatpush2.msra.mxu0 0.0
        %1814 = vmatprep.subr.mxu0 0.0
        %1815 = vmatpush2.msra.mxu0 0.0
        %1816 = vmatprep.subr.mxu0 0.0
        %1817 = vmatpush2.msra.mxu0 0.0
        %1818 = vmatprep.subr.mxu0 0.0
        %1819 = vmatpush2.msra.mxu0 0.0
        %1820 = vmatprep.subr.mxu0 0.0
        %1821 = vmatpush2.msra.mxu0 0.0
        %1822 = vmatprep.subr.mxu0 0.0
        %1823 = vmatpush2.msra.mxu0 0.0
        %1824 = vmatprep.mubr.f32.mxu0 0.0
        %v1825 = vand.u32 %v1745, 4294901760
        %v1826 = vsub.f32 %v1745, %v1825
        %v1827 = vand.u32 %v1826, 4294901760
        %v1828 = vsub.f32 %v1826, %v1827
        %v1829 = vand.u32 %v1828, 4294901760
        %1830 = vmatmul.mubr.f32.gmra.mxu0 %v1829
        %v1831 = vpop.f32.mrf.mxu0
        %v1832 = vadd.f32 0.0, %v1831
        %v1833 = vpop.f32.mrf.mxu0
        %1834 = vmatprep.mubr.f32.mxu0 0.0
        %v1835 = vand.u32 %v1748, 4294901760
        %v1836 = vsub.f32 %v1748, %v1835
        %v1837 = vand.u32 %v1836, 4294901760
        %v1838 = vsub.f32 %v1836, %v1837
        %v1839 = vand.u32 %v1838, 4294901760
        %1840 = vmatmul.mubr.f32.gmra.mxu0 %v1839
        %v1841 = vpop.f32.mrf.mxu0
        %v1842 = vadd.f32 0.0, %v1841
        %v1843 = vpop.f32.mrf.mxu0
        %1844 = vmatprep.mubr.f32.mxu0 0.0
        %v1845 = vand.u32 %v1751, 4294901760
        %v1846 = vsub.f32 %v1751, %v1845
        %v1847 = vand.u32 %v1846, 4294901760
        %v1848 = vsub.f32 %v1846, %v1847
        %v1849 = vand.u32 %v1848, 4294901760
        %1850 = vmatmul.mubr.f32.gmra.mxu0 %v1849
        %v1851 = vpop.f32.mrf.mxu0
        %v1852 = vadd.f32 0.0, %v1851
        %v1853 = vpop.f32.mrf.mxu0
        %1854 = vmatprep.mubr.f32.mxu0 0.0
        %v1855 = vand.u32 %v1754, 4294901760
        %v1856 = vsub.f32 %v1754, %v1855
        %v1857 = vand.u32 %v1856, 4294901760
        %v1858 = vsub.f32 %v1856, %v1857
        %v1859 = vand.u32 %v1858, 4294901760
        %1860 = vmatmul.mubr.f32.gmra.mxu0 %v1859
        %v1861 = vpop.f32.mrf.mxu0
        %v1862 = vadd.f32 0.0, %v1861
        %v1863 = vpop.f32.mrf.mxu0
        %1864 = vdwg.mxu0
        %1865 = vmatprep.subr.mxu0 0.0
        %1866 = vmatpush1.msra.mxu0 0.0
        %1867 = vmatprep.subr.mxu0 0.0
        %1868 = vmatpush1.msra.mxu0 0.0
        %1869 = vmatprep.subr.mxu0 0.0
        %1870 = vmatpush1.msra.mxu0 0.0
        %1871 = vmatprep.subr.mxu0 0.0
        %1872 = vmatpush1.msra.mxu0 0.0
        %1873 = vmatprep.subr.mxu0 0.0
        %1874 = vmatpush1.msra.mxu0 0.0
        %1875 = vmatprep.subr.mxu0 0.0
        %1876 = vmatpush1.msra.mxu0 0.0
        %1877 = vmatprep.subr.mxu0 0.0
        %1878 = vmatpush1.msra.mxu0 0.0
        %1879 = vmatprep.subr.mxu0 0.0
        %1880 = vmatpush1.msra.mxu0 0.0
        %1881 = vmatprep.subr.mxu0 0.0
        %1882 = vmatpush1.msra.mxu0 0.0
        %1883 = vmatprep.subr.mxu0 0.0
        %1884 = vmatpush1.msra.mxu0 0.0
        %1885 = vmatprep.subr.mxu0 0.0
        %1886 = vmatpush1.msra.mxu0 0.0
        %1887 = vmatprep.subr.mxu0 0.0
        %1888 = vmatpush1.msra.mxu0 0.0
        %1889 = vmatprep.subr.mxu0 0.0
        %v1890 = vand.u32 %v1734, 4294901760
        %v1891 = vsub.f32 %v1734, %v1890
        %v1892 = vand.u32 %v1891, 4294901760
        %v1893 = vsub.f32 %v1891, %v1892
        %v1894 = vand.u32 %v1893, 4294901760
        %1895 = vmatpush1.msra.mxu0 %v1894
        %1896 = vmatprep.subr.mxu0 0.0
        %v1897 = vand.u32 %v1733, 4294901760
        %v1898 = vsub.f32 %v1733, %v1897
        %v1899 = vand.u32 %v1898, 4294901760
        %v1900 = vsub.f32 %v1898, %v1899
        %v1901 = vand.u32 %v1900, 4294901760
        %1902 = vmatpush1.msra.mxu0 %v1901
        %1903 = vmatprep.subr.mxu0 0.0
        %v1904 = vand.u32 %v1732, 4294901760
        %v1905 = vsub.f32 %v1732, %v1904
        %v1906 = vand.u32 %v1905, 4294901760
        %v1907 = vsub.f32 %v1905, %v1906
        %v1908 = vand.u32 %v1907, 4294901760
        %1909 = vmatpush1.msra.mxu0 %v1908
        %1910 = vmatprep.subr.mxu0 0.0
        %v1911 = vand.u32 %v1731, 4294901760
        %v1912 = vsub.f32 %v1731, %v1911
        %v1913 = vand.u32 %v1912, 4294901760
        %v1914 = vsub.f32 %v1912, %v1913
        %v1915 = vand.u32 %v1914, 4294901760
        %1916 = vmatpush1.msra.mxu0 %v1915
        %1917 = vmatprep.subr.mxu0 0.0
        %1918 = vmatpush2.msra.mxu0 0.0
        %1919 = vmatprep.subr.mxu0 0.0
        %1920 = vmatpush2.msra.mxu0 0.0
        %1921 = vmatprep.subr.mxu0 0.0
        %1922 = vmatpush2.msra.mxu0 0.0
        %1923 = vmatprep.subr.mxu0 0.0
        %1924 = vmatpush2.msra.mxu0 0.0
        %1925 = vmatprep.subr.mxu0 0.0
        %1926 = vmatpush2.msra.mxu0 0.0
        %1927 = vmatprep.subr.mxu0 0.0
        %1928 = vmatpush2.msra.mxu0 0.0
        %1929 = vmatprep.subr.mxu0 0.0
        %1930 = vmatpush2.msra.mxu0 0.0
        %1931 = vmatprep.subr.mxu0 0.0
        %1932 = vmatpush2.msra.mxu0 0.0
        %1933 = vmatprep.subr.mxu0 0.0
        %1934 = vmatpush2.msra.mxu0 0.0
        %1935 = vmatprep.subr.mxu0 0.0
        %1936 = vmatpush2.msra.mxu0 0.0
        %1937 = vmatprep.subr.mxu0 0.0
        %1938 = vmatpush2.msra.mxu0 0.0
        %1939 = vmatprep.subr.mxu0 0.0
        %1940 = vmatpush2.msra.mxu0 0.0
        %1941 = vmatprep.subr.mxu0 0.0
        %1942 = vmatpush2.msra.mxu0 0.0
        %1943 = vmatprep.subr.mxu0 0.0
        %1944 = vmatpush2.msra.mxu0 0.0
        %1945 = vmatprep.subr.mxu0 0.0
        %1946 = vmatpush2.msra.mxu0 0.0
        %1947 = vmatprep.subr.mxu0 0.0
        %1948 = vmatpush2.msra.mxu0 0.0
        %1949 = vmatprep.mubr.f32.mxu0 0.0
        %v1950 = vand.u32 %v1745, 4294901760
        %1951 = vmatmul.mubr.f32.gmra.mxu0 %v1950
        %v1952 = vpop.f32.mrf.mxu0
        %v1953 = vadd.f32 %v1832, %v1952
        %v1954 = vpop.f32.mrf.mxu0
        %1955 = vmatprep.mubr.f32.mxu0 0.0
        %v1956 = vand.u32 %v1748, 4294901760
        %1957 = vmatmul.mubr.f32.gmra.mxu0 %v1956
        %v1958 = vpop.f32.mrf.mxu0
        %v1959 = vadd.f32 %v1842, %v1958
        %v1960 = vpop.f32.mrf.mxu0
        %1961 = vmatprep.mubr.f32.mxu0 0.0
        %v1962 = vand.u32 %v1751, 4294901760
        %1963 = vmatmul.mubr.f32.gmra.mxu0 %v1962
        %v1964 = vpop.f32.mrf.mxu0
        %v1965 = vadd.f32 %v1852, %v1964
        %v1966 = vpop.f32.mrf.mxu0
        %1967 = vmatprep.mubr.f32.mxu0 0.0
        %v1968 = vand.u32 %v1754, 4294901760
        %1969 = vmatmul.mubr.f32.gmra.mxu0 %v1968
        %v1970 = vpop.f32.mrf.mxu0
        %v1971 = vadd.f32 %v1862, %v1970
        %v1972 = vpop.f32.mrf.mxu0
        %1973 = vdwg.mxu0
        %1974 = vmatprep.subr.mxu0 0.0
        %1975 = vmatpush1.msra.mxu0 0.0
        %1976 = vmatprep.subr.mxu0 0.0
        %1977 = vmatpush1.msra.mxu0 0.0
        %1978 = vmatprep.subr.mxu0 0.0
        %1979 = vmatpush1.msra.mxu0 0.0
        %1980 = vmatprep.subr.mxu0 0.0
        %1981 = vmatpush1.msra.mxu0 0.0
        %1982 = vmatprep.subr.mxu0 0.0
        %1983 = vmatpush1.msra.mxu0 0.0
        %1984 = vmatprep.subr.mxu0 0.0
        %1985 = vmatpush1.msra.mxu0 0.0
        %1986 = vmatprep.subr.mxu0 0.0
        %1987 = vmatpush1.msra.mxu0 0.0
        %1988 = vmatprep.subr.mxu0 0.0
        %1989 = vmatpush1.msra.mxu0 0.0
        %1990 = vmatprep.subr.mxu0 0.0
        %1991 = vmatpush1.msra.mxu0 0.0
        %1992 = vmatprep.subr.mxu0 0.0
        %1993 = vmatpush1.msra.mxu0 0.0
        %1994 = vmatprep.subr.mxu0 0.0
        %1995 = vmatpush1.msra.mxu0 0.0
        %1996 = vmatprep.subr.mxu0 0.0
        %1997 = vmatpush1.msra.mxu0 0.0
        %1998 = vmatprep.subr.mxu0 0.0
        %v1999 = vand.u32 %v1734, 4294901760
        %v2000 = vsub.f32 %v1734, %v1999
        %2001 = vmatpush1.msra.mxu0 %v2000
        %2002 = vmatprep.subr.mxu0 0.0
        %v2003 = vand.u32 %v1733, 4294901760
        %v2004 = vsub.f32 %v1733, %v2003
        %2005 = vmatpush1.msra.mxu0 %v2004
        %2006 = vmatprep.subr.mxu0 0.0
        %v2007 = vand.u32 %v1732, 4294901760
        %v2008 = vsub.f32 %v1732, %v2007
        %2009 = vmatpush1.msra.mxu0 %v2008
        %2010 = vmatprep.subr.mxu0 0.0
        %v2011 = vand.u32 %v1731, 4294901760
        %v2012 = vsub.f32 %v1731, %v2011
        %2013 = vmatpush1.msra.mxu0 %v2012
        %2014 = vmatprep.subr.mxu0 0.0
        %2015 = vmatpush2.msra.mxu0 0.0
        %2016 = vmatprep.subr.mxu0 0.0
        %2017 = vmatpush2.msra.mxu0 0.0
        %2018 = vmatprep.subr.mxu0 0.0
        %2019 = vmatpush2.msra.mxu0 0.0
        %2020 = vmatprep.subr.mxu0 0.0
        %2021 = vmatpush2.msra.mxu0 0.0
        %2022 = vmatprep.subr.mxu0 0.0
        %2023 = vmatpush2.msra.mxu0 0.0
        %2024 = vmatprep.subr.mxu0 0.0
        %2025 = vmatpush2.msra.mxu0 0.0
        %2026 = vmatprep.subr.mxu0 0.0
        %2027 = vmatpush2.msra.mxu0 0.0
        %2028 = vmatprep.subr.mxu0 0.0
        %2029 = vmatpush2.msra.mxu0 0.0
        %2030 = vmatprep.subr.mxu0 0.0
        %2031 = vmatpush2.msra.mxu0 0.0
        %2032 = vmatprep.subr.mxu0 0.0
        %2033 = vmatpush2.msra.mxu0 0.0
        %2034 = vmatprep.subr.mxu0 0.0
        %2035 = vmatpush2.msra.mxu0 0.0
        %2036 = vmatprep.subr.mxu0 0.0
        %2037 = vmatpush2.msra.mxu0 0.0
        %2038 = vmatprep.subr.mxu0 0.0
        %2039 = vmatpush2.msra.mxu0 0.0
        %2040 = vmatprep.subr.mxu0 0.0
        %2041 = vmatpush2.msra.mxu0 0.0
        %2042 = vmatprep.subr.mxu0 0.0
        %2043 = vmatpush2.msra.mxu0 0.0
        %2044 = vmatprep.subr.mxu0 0.0
        %2045 = vmatpush2.msra.mxu0 0.0
        %2046 = vmatprep.mubr.f32.mxu0 0.0
        %v2047 = vand.u32 %v1745, 4294901760
        %v2048 = vsub.f32 %v1745, %v2047
        %2049 = vmatmul.mubr.f32.gmra.mxu0 %v2048
        %v2050 = vpop.f32.mrf.mxu0
        %v2051 = vadd.f32 %v1953, %v2050
        %v2052 = vpop.f32.mrf.mxu0
        %2053 = vmatprep.mubr.f32.mxu0 0.0
        %v2054 = vand.u32 %v1748, 4294901760
        %v2055 = vsub.f32 %v1748, %v2054
        %2056 = vmatmul.mubr.f32.gmra.mxu0 %v2055
        %v2057 = vpop.f32.mrf.mxu0
        %v2058 = vadd.f32 %v1959, %v2057
        %v2059 = vpop.f32.mrf.mxu0
        %2060 = vmatprep.mubr.f32.mxu0 0.0
        %v2061 = vand.u32 %v1751, 4294901760
        %v2062 = vsub.f32 %v1751, %v2061
        %2063 = vmatmul.mubr.f32.gmra.mxu0 %v2062
        %v2064 = vpop.f32.mrf.mxu0
        %v2065 = vadd.f32 %v1965, %v2064
        %v2066 = vpop.f32.mrf.mxu0
        %2067 = vmatprep.mubr.f32.mxu0 0.0
        %v2068 = vand.u32 %v1754, 4294901760
        %v2069 = vsub.f32 %v1754, %v2068
        %2070 = vmatmul.mubr.f32.gmra.mxu0 %v2069
        %v2071 = vpop.f32.mrf.mxu0
        %v2072 = vadd.f32 %v1971, %v2071
        %v2073 = vpop.f32.mrf.mxu0
        %2074 = vdwg.mxu0
        %2075 = vmatprep.subr.mxu0 0.0
        %2076 = vmatpush1.msra.mxu0 0.0
        %2077 = vmatprep.subr.mxu0 0.0
        %2078 = vmatpush1.msra.mxu0 0.0
        %2079 = vmatprep.subr.mxu0 0.0
        %2080 = vmatpush1.msra.mxu0 0.0
        %2081 = vmatprep.subr.mxu0 0.0
        %2082 = vmatpush1.msra.mxu0 0.0
        %2083 = vmatprep.subr.mxu0 0.0
        %2084 = vmatpush1.msra.mxu0 0.0
        %2085 = vmatprep.subr.mxu0 0.0
        %2086 = vmatpush1.msra.mxu0 0.0
        %2087 = vmatprep.subr.mxu0 0.0
        %2088 = vmatpush1.msra.mxu0 0.0
        %2089 = vmatprep.subr.mxu0 0.0
        %2090 = vmatpush1.msra.mxu0 0.0
        %2091 = vmatprep.subr.mxu0 0.0
        %2092 = vmatpush1.msra.mxu0 0.0
        %2093 = vmatprep.subr.mxu0 0.0
        %2094 = vmatpush1.msra.mxu0 0.0
        %2095 = vmatprep.subr.mxu0 0.0
        %2096 = vmatpush1.msra.mxu0 0.0
        %2097 = vmatprep.subr.mxu0 0.0
        %2098 = vmatpush1.msra.mxu0 0.0
        %2099 = vmatprep.subr.mxu0 0.0
        %v2100 = vand.u32 %v1734, 4294901760
        %2101 = vmatpush1.msra.mxu0 %v2100
        %2102 = vmatprep.subr.mxu0 0.0
        %v2103 = vand.u32 %v1733, 4294901760
        %2104 = vmatpush1.msra.mxu0 %v2103
        %2105 = vmatprep.subr.mxu0 0.0
        %v2106 = vand.u32 %v1732, 4294901760
        %2107 = vmatpush1.msra.mxu0 %v2106
        %2108 = vmatprep.subr.mxu0 0.0
        %v2109 = vand.u32 %v1731, 4294901760
        %2110 = vmatpush1.msra.mxu0 %v2109
        %2111 = vmatprep.subr.mxu0 0.0
        %2112 = vmatpush2.msra.mxu0 0.0
        %2113 = vmatprep.subr.mxu0 0.0
        %2114 = vmatpush2.msra.mxu0 0.0
        %2115 = vmatprep.subr.mxu0 0.0
        %2116 = vmatpush2.msra.mxu0 0.0
        %2117 = vmatprep.subr.mxu0 0.0
        %2118 = vmatpush2.msra.mxu0 0.0
        %2119 = vmatprep.subr.mxu0 0.0
        %2120 = vmatpush2.msra.mxu0 0.0
        %2121 = vmatprep.subr.mxu0 0.0
        %2122 = vmatpush2.msra.mxu0 0.0
        %2123 = vmatprep.subr.mxu0 0.0
        %2124 = vmatpush2.msra.mxu0 0.0
        %2125 = vmatprep.subr.mxu0 0.0
        %2126 = vmatpush2.msra.mxu0 0.0
        %2127 = vmatprep.subr.mxu0 0.0
        %2128 = vmatpush2.msra.mxu0 0.0
        %2129 = vmatprep.subr.mxu0 0.0
        %2130 = vmatpush2.msra.mxu0 0.0
        %2131 = vmatprep.subr.mxu0 0.0
        %2132 = vmatpush2.msra.mxu0 0.0
        %2133 = vmatprep.subr.mxu0 0.0
        %2134 = vmatpush2.msra.mxu0 0.0
        %2135 = vmatprep.subr.mxu0 0.0
        %2136 = vmatpush2.msra.mxu0 0.0
        %2137 = vmatprep.subr.mxu0 0.0
        %2138 = vmatpush2.msra.mxu0 0.0
        %2139 = vmatprep.subr.mxu0 0.0
        %2140 = vmatpush2.msra.mxu0 0.0
        %2141 = vmatprep.subr.mxu0 0.0
        %2142 = vmatpush2.msra.mxu0 0.0
        %2143 = vmatprep.mubr.f32.mxu0 0.0
        %v2144 = vand.u32 %v1745, 4294901760
        %v2145 = vsub.f32 %v1745, %v2144
        %v2146 = vand.u32 %v2145, 4294901760
        %2147 = vmatmul.mubr.f32.gmra.mxu0 %v2146
        %v2148 = vpop.f32.mrf.mxu0
        %v2149 = vadd.f32 %v2051, %v2148
        %v2150 = vpop.f32.mrf.mxu0
        %2151 = vmatprep.mubr.f32.mxu0 0.0
        %v2152 = vand.u32 %v1748, 4294901760
        %v2153 = vsub.f32 %v1748, %v2152
        %v2154 = vand.u32 %v2153, 4294901760
        %2155 = vmatmul.mubr.f32.gmra.mxu0 %v2154
        %v2156 = vpop.f32.mrf.mxu0
        %v2157 = vadd.f32 %v2058, %v2156
        %v2158 = vpop.f32.mrf.mxu0
        %2159 = vmatprep.mubr.f32.mxu0 0.0
        %v2160 = vand.u32 %v1751, 4294901760
        %v2161 = vsub.f32 %v1751, %v2160
        %v2162 = vand.u32 %v2161, 4294901760
        %2163 = vmatmul.mubr.f32.gmra.mxu0 %v2162
        %v2164 = vpop.f32.mrf.mxu0
        %v2165 = vadd.f32 %v2065, %v2164
        %v2166 = vpop.f32.mrf.mxu0
        %2167 = vmatprep.mubr.f32.mxu0 0.0
        %v2168 = vand.u32 %v1754, 4294901760
        %v2169 = vsub.f32 %v1754, %v2168
        %v2170 = vand.u32 %v2169, 4294901760
        %2171 = vmatmul.mubr.f32.gmra.mxu0 %v2170
        %v2172 = vpop.f32.mrf.mxu0
        %v2173 = vadd.f32 %v2072, %v2172
        %v2174 = vpop.f32.mrf.mxu0
        %2175 = vdwg.mxu0
        %2176 = vmatprep.subr.mxu0 0.0
        %2177 = vmatpush1.msra.mxu0 0.0
        %2178 = vmatprep.subr.mxu0 0.0
        %2179 = vmatpush1.msra.mxu0 0.0
        %2180 = vmatprep.subr.mxu0 0.0
        %2181 = vmatpush1.msra.mxu0 0.0
        %2182 = vmatprep.subr.mxu0 0.0
        %2183 = vmatpush1.msra.mxu0 0.0
        %2184 = vmatprep.subr.mxu0 0.0
        %2185 = vmatpush1.msra.mxu0 0.0
        %2186 = vmatprep.subr.mxu0 0.0
        %2187 = vmatpush1.msra.mxu0 0.0
        %2188 = vmatprep.subr.mxu0 0.0
        %2189 = vmatpush1.msra.mxu0 0.0
        %2190 = vmatprep.subr.mxu0 0.0
        %2191 = vmatpush1.msra.mxu0 0.0
        %2192 = vmatprep.subr.mxu0 0.0
        %2193 = vmatpush1.msra.mxu0 0.0
        %2194 = vmatprep.subr.mxu0 0.0
        %2195 = vmatpush1.msra.mxu0 0.0
        %2196 = vmatprep.subr.mxu0 0.0
        %2197 = vmatpush1.msra.mxu0 0.0
        %2198 = vmatprep.subr.mxu0 0.0
        %2199 = vmatpush1.msra.mxu0 0.0
        %2200 = vmatprep.subr.mxu0 0.0
        %v2201 = vand.u32 %v1734, 4294901760
        %v2202 = vsub.f32 %v1734, %v2201
        %v2203 = vand.u32 %v2202, 4294901760
        %2204 = vmatpush1.msra.mxu0 %v2203
        %2205 = vmatprep.subr.mxu0 0.0
        %v2206 = vand.u32 %v1733, 4294901760
        %v2207 = vsub.f32 %v1733, %v2206
        %v2208 = vand.u32 %v2207, 4294901760
        %2209 = vmatpush1.msra.mxu0 %v2208
        %2210 = vmatprep.subr.mxu0 0.0
        %v2211 = vand.u32 %v1732, 4294901760
        %v2212 = vsub.f32 %v1732, %v2211
        %v2213 = vand.u32 %v2212, 4294901760
        %2214 = vmatpush1.msra.mxu0 %v2213
        %2215 = vmatprep.subr.mxu0 0.0
        %v2216 = vand.u32 %v1731, 4294901760
        %v2217 = vsub.f32 %v1731, %v2216
        %v2218 = vand.u32 %v2217, 4294901760
        %2219 = vmatpush1.msra.mxu0 %v2218
        %2220 = vmatprep.subr.mxu0 0.0
        %2221 = vmatpush2.msra.mxu0 0.0
        %2222 = vmatprep.subr.mxu0 0.0
        %2223 = vmatpush2.msra.mxu0 0.0
        %2224 = vmatprep.subr.mxu0 0.0
        %2225 = vmatpush2.msra.mxu0 0.0
        %2226 = vmatprep.subr.mxu0 0.0
        %2227 = vmatpush2.msra.mxu0 0.0
        %2228 = vmatprep.subr.mxu0 0.0
        %2229 = vmatpush2.msra.mxu0 0.0
        %2230 = vmatprep.subr.mxu0 0.0
        %2231 = vmatpush2.msra.mxu0 0.0
        %2232 = vmatprep.subr.mxu0 0.0
        %2233 = vmatpush2.msra.mxu0 0.0
        %2234 = vmatprep.subr.mxu0 0.0
        %2235 = vmatpush2.msra.mxu0 0.0
        %2236 = vmatprep.subr.mxu0 0.0
        %2237 = vmatpush2.msra.mxu0 0.0
        %2238 = vmatprep.subr.mxu0 0.0
        %2239 = vmatpush2.msra.mxu0 0.0
        %2240 = vmatprep.subr.mxu0 0.0
        %2241 = vmatpush2.msra.mxu0 0.0
        %2242 = vmatprep.subr.mxu0 0.0
        %2243 = vmatpush2.msra.mxu0 0.0
        %2244 = vmatprep.subr.mxu0 0.0
        %2245 = vmatpush2.msra.mxu0 0.0
        %2246 = vmatprep.subr.mxu0 0.0
        %2247 = vmatpush2.msra.mxu0 0.0
        %2248 = vmatprep.subr.mxu0 0.0
        %2249 = vmatpush2.msra.mxu0 0.0
        %2250 = vmatprep.subr.mxu0 0.0
        %2251 = vmatpush2.msra.mxu0 0.0
        %2252 = vmatprep.mubr.f32.mxu0 0.0
        %v2253 = vand.u32 %v1745, 4294901760
        %2254 = vmatmul.mubr.f32.gmra.mxu0 %v2253
        %v2255 = vpop.f32.mrf.mxu0
        %v2256 = vadd.f32 %v2149, %v2255
        %v2257 = vpop.f32.mrf.mxu0
        %2258 = vmatprep.mubr.f32.mxu0 0.0
        %v2259 = vand.u32 %v1748, 4294901760
        %2260 = vmatmul.mubr.f32.gmra.mxu0 %v2259
        %v2261 = vpop.f32.mrf.mxu0
        %v2262 = vadd.f32 %v2157, %v2261
        %v2263 = vpop.f32.mrf.mxu0
        %2264 = vmatprep.mubr.f32.mxu0 0.0
        %v2265 = vand.u32 %v1751, 4294901760
        %2266 = vmatmul.mubr.f32.gmra.mxu0 %v2265
        %v2267 = vpop.f32.mrf.mxu0
        %v2268 = vadd.f32 %v2165, %v2267
        %v2269 = vpop.f32.mrf.mxu0
        %2270 = vmatprep.mubr.f32.mxu0 0.0
        %v2271 = vand.u32 %v1754, 4294901760
        %2272 = vmatmul.mubr.f32.gmra.mxu0 %v2271
        %v2273 = vpop.f32.mrf.mxu0
        %v2274 = vadd.f32 %v2173, %v2273
        %v2275 = vpop.f32.mrf.mxu0
        %2276 = vdwg.mxu0
        %2277 = vmatprep.subr.mxu0 0.0
        %2278 = vmatpush1.msra.mxu0 0.0
        %2279 = vmatprep.subr.mxu0 0.0
        %2280 = vmatpush1.msra.mxu0 0.0
        %2281 = vmatprep.subr.mxu0 0.0
        %2282 = vmatpush1.msra.mxu0 0.0
        %2283 = vmatprep.subr.mxu0 0.0
        %2284 = vmatpush1.msra.mxu0 0.0
        %2285 = vmatprep.subr.mxu0 0.0
        %2286 = vmatpush1.msra.mxu0 0.0
        %2287 = vmatprep.subr.mxu0 0.0
        %2288 = vmatpush1.msra.mxu0 0.0
        %2289 = vmatprep.subr.mxu0 0.0
        %2290 = vmatpush1.msra.mxu0 0.0
        %2291 = vmatprep.subr.mxu0 0.0
        %2292 = vmatpush1.msra.mxu0 0.0
        %2293 = vmatprep.subr.mxu0 0.0
        %2294 = vmatpush1.msra.mxu0 0.0
        %2295 = vmatprep.subr.mxu0 0.0
        %2296 = vmatpush1.msra.mxu0 0.0
        %2297 = vmatprep.subr.mxu0 0.0
        %2298 = vmatpush1.msra.mxu0 0.0
        %2299 = vmatprep.subr.mxu0 0.0
        %2300 = vmatpush1.msra.mxu0 0.0
        %2301 = vmatprep.subr.mxu0 0.0
        %v2302 = vand.u32 %v1734, 4294901760
        %2303 = vmatpush1.msra.mxu0 %v2302
        %2304 = vmatprep.subr.mxu0 0.0
        %v2305 = vand.u32 %v1733, 4294901760
        %2306 = vmatpush1.msra.mxu0 %v2305
        %2307 = vmatprep.subr.mxu0 0.0
        %v2308 = vand.u32 %v1732, 4294901760
        %2309 = vmatpush1.msra.mxu0 %v2308
        %2310 = vmatprep.subr.mxu0 0.0
        %v2311 = vand.u32 %v1731, 4294901760
        %2312 = vmatpush1.msra.mxu0 %v2311
        %2313 = vmatprep.subr.mxu0 0.0
        %2314 = vmatpush2.msra.mxu0 0.0
        %2315 = vmatprep.subr.mxu0 0.0
        %2316 = vmatpush2.msra.mxu0 0.0
        %2317 = vmatprep.subr.mxu0 0.0
        %2318 = vmatpush2.msra.mxu0 0.0
        %2319 = vmatprep.subr.mxu0 0.0
        %2320 = vmatpush2.msra.mxu0 0.0
        %2321 = vmatprep.subr.mxu0 0.0
        %2322 = vmatpush2.msra.mxu0 0.0
        %2323 = vmatprep.subr.mxu0 0.0
        %2324 = vmatpush2.msra.mxu0 0.0
        %2325 = vmatprep.subr.mxu0 0.0
        %2326 = vmatpush2.msra.mxu0 0.0
        %2327 = vmatprep.subr.mxu0 0.0
        %2328 = vmatpush2.msra.mxu0 0.0
        %2329 = vmatprep.subr.mxu0 0.0
        %2330 = vmatpush2.msra.mxu0 0.0
        %2331 = vmatprep.subr.mxu0 0.0
        %2332 = vmatpush2.msra.mxu0 0.0
        %2333 = vmatprep.subr.mxu0 0.0
        %2334 = vmatpush2.msra.mxu0 0.0
        %2335 = vmatprep.subr.mxu0 0.0
        %2336 = vmatpush2.msra.mxu0 0.0
        %2337 = vmatprep.subr.mxu0 0.0
        %2338 = vmatpush2.msra.mxu0 0.0
        %2339 = vmatprep.subr.mxu0 0.0
        %2340 = vmatpush2.msra.mxu0 0.0
        %2341 = vmatprep.subr.mxu0 0.0
        %2342 = vmatpush2.msra.mxu0 0.0
        %2343 = vmatprep.subr.mxu0 0.0
        %2344 = vmatpush2.msra.mxu0 0.0
        %2345 = vmatprep.mubr.f32.mxu0 0.0
        %v2346 = vand.u32 %v1745, 4294901760
        %2347 = vmatmul.mubr.f32.gmra.mxu0 %v2346
        %v2348 = vpop.f32.mrf.mxu0
        %v2349 = vadd.f32 %v2256, %v2348
        %v2350 = vpop.f32.mrf.mxu0
        %2351 = vmatprep.mubr.f32.mxu0 0.0
        %v2352 = vand.u32 %v1748, 4294901760
        %2353 = vmatmul.mubr.f32.gmra.mxu0 %v2352
        %v2354 = vpop.f32.mrf.mxu0
        %v2355 = vadd.f32 %v2262, %v2354
        %v2356 = vpop.f32.mrf.mxu0
        %2357 = vmatprep.mubr.f32.mxu0 0.0
        %v2358 = vand.u32 %v1751, 4294901760
        %2359 = vmatmul.mubr.f32.gmra.mxu0 %v2358
        %v2360 = vpop.f32.mrf.mxu0
        %v2361 = vadd.f32 %v2268, %v2360
        %v2362 = vpop.f32.mrf.mxu0
        %2363 = vmatprep.mubr.f32.mxu0 0.0
        %v2364 = vand.u32 %v1754, 4294901760
        %2365 = vmatmul.mubr.f32.gmra.mxu0 %v2364
        %v2366 = vpop.f32.mrf.mxu0
        %v2367 = vadd.f32 %v2274, %v2366
        %v2368 = vpop.f32.mrf.mxu0
        %2369 = vdwg.mxu0
        %v2371 = vsel %vm1743, %v1735, 0
        %v2374 = vsel %vm1743, %v1736, 0
        %v2377 = vsel %vm1743, %v1737, 0
        %v2380 = vsel %vm1743, %v1738, 0
        %2382 = vmatprep.subr.mxu0 0.0
        %2383 = vmatpush1.msra.mxu0 0.0
        %2384 = vmatprep.subr.mxu0 0.0
        %2385 = vmatpush1.msra.mxu0 0.0
        %2386 = vmatprep.subr.mxu0 0.0
        %2387 = vmatpush1.msra.mxu0 0.0
        %2388 = vmatprep.subr.mxu0 0.0
        %2389 = vmatpush1.msra.mxu0 0.0
        %2390 = vmatprep.subr.mxu0 0.0
        %2391 = vmatpush1.msra.mxu0 0.0
        %2392 = vmatprep.subr.mxu0 0.0
        %2393 = vmatpush1.msra.mxu0 0.0
        %2394 = vmatprep.subr.mxu0 0.0
        %2395 = vmatpush1.msra.mxu0 0.0
        %2396 = vmatprep.subr.mxu0 0.0
        %2397 = vmatpush1.msra.mxu0 0.0
        %2398 = vmatprep.subr.mxu0 0.0
        %2399 = vmatpush1.msra.mxu0 0.0
        %2400 = vmatprep.subr.mxu0 0.0
        %2401 = vmatpush1.msra.mxu0 0.0
        %2402 = vmatprep.subr.mxu0 0.0
        %2403 = vmatpush1.msra.mxu0 0.0
        %2404 = vmatprep.subr.mxu0 0.0
        %2405 = vmatpush1.msra.mxu0 0.0
        %2406 = vmatprep.subr.mxu0 0.0
        %v2407 = vand.u32 %v1138, 4294901760
        %2408 = vmatpush1.msra.mxu0 %v2407
        %2409 = vmatprep.subr.mxu0 0.0
        %v2410 = vand.u32 %v1132, 4294901760
        %2411 = vmatpush1.msra.mxu0 %v2410
        %2412 = vmatprep.subr.mxu0 0.0
        %v2413 = vand.u32 %v1126, 4294901760
        %2414 = vmatpush1.msra.mxu0 %v2413
        %2415 = vmatprep.subr.mxu0 0.0
        %v2416 = vand.u32 %v1120, 4294901760
        %2417 = vmatpush1.msra.mxu0 %v2416
        %2418 = vmatprep.subr.mxu0 0.0
        %2419 = vmatpush2.msra.mxu0 0.0
        %2420 = vmatprep.subr.mxu0 0.0
        %2421 = vmatpush2.msra.mxu0 0.0
        %2422 = vmatprep.subr.mxu0 0.0
        %2423 = vmatpush2.msra.mxu0 0.0
        %2424 = vmatprep.subr.mxu0 0.0
        %2425 = vmatpush2.msra.mxu0 0.0
        %2426 = vmatprep.subr.mxu0 0.0
        %2427 = vmatpush2.msra.mxu0 0.0
        %2428 = vmatprep.subr.mxu0 0.0
        %2429 = vmatpush2.msra.mxu0 0.0
        %2430 = vmatprep.subr.mxu0 0.0
        %2431 = vmatpush2.msra.mxu0 0.0
        %2432 = vmatprep.subr.mxu0 0.0
        %2433 = vmatpush2.msra.mxu0 0.0
        %2434 = vmatprep.subr.mxu0 0.0
        %2435 = vmatpush2.msra.mxu0 0.0
        %2436 = vmatprep.subr.mxu0 0.0
        %2437 = vmatpush2.msra.mxu0 0.0
        %2438 = vmatprep.subr.mxu0 0.0
        %2439 = vmatpush2.msra.mxu0 0.0
        %2440 = vmatprep.subr.mxu0 0.0
        %2441 = vmatpush2.msra.mxu0 0.0
        %2442 = vmatprep.subr.mxu0 0.0
        %2443 = vmatpush2.msra.mxu0 0.0
        %2444 = vmatprep.subr.mxu0 0.0
        %2445 = vmatpush2.msra.mxu0 0.0
        %2446 = vmatprep.subr.mxu0 0.0
        %2447 = vmatpush2.msra.mxu0 0.0
        %2448 = vmatprep.subr.mxu0 0.0
        %2449 = vmatpush2.msra.mxu0 0.0
        %2450 = vmatprep.mubr.f32.mxu0 0.0
        %v2451 = vand.u32 %v2371, 4294901760
        %v2452 = vsub.f32 %v2371, %v2451
        %v2453 = vand.u32 %v2452, 4294901760
        %v2454 = vsub.f32 %v2452, %v2453
        %v2455 = vand.u32 %v2454, 4294901760
        %2456 = vmatmul.mubr.f32.gmra.mxu0 %v2455
        %v2457 = vpop.f32.mrf.mxu0
        %v2458 = vadd.f32 %v2349, %v2457
        %v2459 = vpop.f32.mrf.mxu0
        %2460 = vmatprep.mubr.f32.mxu0 0.0
        %v2461 = vand.u32 %v2374, 4294901760
        %v2462 = vsub.f32 %v2374, %v2461
        %v2463 = vand.u32 %v2462, 4294901760
        %v2464 = vsub.f32 %v2462, %v2463
        %v2465 = vand.u32 %v2464, 4294901760
        %2466 = vmatmul.mubr.f32.gmra.mxu0 %v2465
        %v2467 = vpop.f32.mrf.mxu0
        %v2468 = vadd.f32 %v2355, %v2467
        %v2469 = vpop.f32.mrf.mxu0
        %2470 = vmatprep.mubr.f32.mxu0 0.0
        %v2471 = vand.u32 %v2377, 4294901760
        %v2472 = vsub.f32 %v2377, %v2471
        %v2473 = vand.u32 %v2472, 4294901760
        %v2474 = vsub.f32 %v2472, %v2473
        %v2475 = vand.u32 %v2474, 4294901760
        %2476 = vmatmul.mubr.f32.gmra.mxu0 %v2475
        %v2477 = vpop.f32.mrf.mxu0
        %v2478 = vadd.f32 %v2361, %v2477
        %v2479 = vpop.f32.mrf.mxu0
        %2480 = vmatprep.mubr.f32.mxu0 0.0
        %v2481 = vand.u32 %v2380, 4294901760
        %v2482 = vsub.f32 %v2380, %v2481
        %v2483 = vand.u32 %v2482, 4294901760
        %v2484 = vsub.f32 %v2482, %v2483
        %v2485 = vand.u32 %v2484, 4294901760
        %2486 = vmatmul.mubr.f32.gmra.mxu0 %v2485
        %v2487 = vpop.f32.mrf.mxu0
        %v2488 = vadd.f32 %v2367, %v2487
        %v2489 = vpop.f32.mrf.mxu0
        %2490 = vdwg.mxu0
        %2491 = vmatprep.subr.mxu0 0.0
        %2492 = vmatpush1.msra.mxu0 0.0
        %2493 = vmatprep.subr.mxu0 0.0
        %2494 = vmatpush1.msra.mxu0 0.0
        %2495 = vmatprep.subr.mxu0 0.0
        %2496 = vmatpush1.msra.mxu0 0.0
        %2497 = vmatprep.subr.mxu0 0.0
        %2498 = vmatpush1.msra.mxu0 0.0
        %2499 = vmatprep.subr.mxu0 0.0
        %2500 = vmatpush1.msra.mxu0 0.0
        %2501 = vmatprep.subr.mxu0 0.0
        %2502 = vmatpush1.msra.mxu0 0.0
        %2503 = vmatprep.subr.mxu0 0.0
        %2504 = vmatpush1.msra.mxu0 0.0
        %2505 = vmatprep.subr.mxu0 0.0
        %2506 = vmatpush1.msra.mxu0 0.0
        %2507 = vmatprep.subr.mxu0 0.0
        %2508 = vmatpush1.msra.mxu0 0.0
        %2509 = vmatprep.subr.mxu0 0.0
        %2510 = vmatpush1.msra.mxu0 0.0
        %2511 = vmatprep.subr.mxu0 0.0
        %2512 = vmatpush1.msra.mxu0 0.0
        %2513 = vmatprep.subr.mxu0 0.0
        %2514 = vmatpush1.msra.mxu0 0.0
        %2515 = vmatprep.subr.mxu0 0.0
        %v2516 = vand.u32 %v1138, 4294901760
        %v2517 = vsub.f32 %v1138, %v2516
        %v2518 = vand.u32 %v2517, 4294901760
        %v2519 = vsub.f32 %v2517, %v2518
        %v2520 = vand.u32 %v2519, 4294901760
        %2521 = vmatpush1.msra.mxu0 %v2520
        %2522 = vmatprep.subr.mxu0 0.0
        %v2523 = vand.u32 %v1132, 4294901760
        %v2524 = vsub.f32 %v1132, %v2523
        %v2525 = vand.u32 %v2524, 4294901760
        %v2526 = vsub.f32 %v2524, %v2525
        %v2527 = vand.u32 %v2526, 4294901760
        %2528 = vmatpush1.msra.mxu0 %v2527
        %2529 = vmatprep.subr.mxu0 0.0
        %v2530 = vand.u32 %v1126, 4294901760
        %v2531 = vsub.f32 %v1126, %v2530
        %v2532 = vand.u32 %v2531, 4294901760
        %v2533 = vsub.f32 %v2531, %v2532
        %v2534 = vand.u32 %v2533, 4294901760
        %2535 = vmatpush1.msra.mxu0 %v2534
        %2536 = vmatprep.subr.mxu0 0.0
        %v2537 = vand.u32 %v1120, 4294901760
        %v2538 = vsub.f32 %v1120, %v2537
        %v2539 = vand.u32 %v2538, 4294901760
        %v2540 = vsub.f32 %v2538, %v2539
        %v2541 = vand.u32 %v2540, 4294901760
        %2542 = vmatpush1.msra.mxu0 %v2541
        %2543 = vmatprep.subr.mxu0 0.0
        %2544 = vmatpush2.msra.mxu0 0.0
        %2545 = vmatprep.subr.mxu0 0.0
        %2546 = vmatpush2.msra.mxu0 0.0
        %2547 = vmatprep.subr.mxu0 0.0
        %2548 = vmatpush2.msra.mxu0 0.0
        %2549 = vmatprep.subr.mxu0 0.0
        %2550 = vmatpush2.msra.mxu0 0.0
        %2551 = vmatprep.subr.mxu0 0.0
        %2552 = vmatpush2.msra.mxu0 0.0
        %2553 = vmatprep.subr.mxu0 0.0
        %2554 = vmatpush2.msra.mxu0 0.0
        %2555 = vmatprep.subr.mxu0 0.0
        %2556 = vmatpush2.msra.mxu0 0.0
        %2557 = vmatprep.subr.mxu0 0.0
        %2558 = vmatpush2.msra.mxu0 0.0
        %2559 = vmatprep.subr.mxu0 0.0
        %2560 = vmatpush2.msra.mxu0 0.0
        %2561 = vmatprep.subr.mxu0 0.0
        %2562 = vmatpush2.msra.mxu0 0.0
        %2563 = vmatprep.subr.mxu0 0.0
        %2564 = vmatpush2.msra.mxu0 0.0
        %2565 = vmatprep.subr.mxu0 0.0
        %2566 = vmatpush2.msra.mxu0 0.0
        %2567 = vmatprep.subr.mxu0 0.0
        %2568 = vmatpush2.msra.mxu0 0.0
        %2569 = vmatprep.subr.mxu0 0.0
        %2570 = vmatpush2.msra.mxu0 0.0
        %2571 = vmatprep.subr.mxu0 0.0
        %2572 = vmatpush2.msra.mxu0 0.0
        %2573 = vmatprep.subr.mxu0 0.0
        %2574 = vmatpush2.msra.mxu0 0.0
        %2575 = vmatprep.mubr.f32.mxu0 0.0
        %v2576 = vand.u32 %v2371, 4294901760
        %2577 = vmatmul.mubr.f32.gmra.mxu0 %v2576
        %v2578 = vpop.f32.mrf.mxu0
        %v2579 = vadd.f32 %v2458, %v2578
        %v2580 = vpop.f32.mrf.mxu0
        %2581 = vmatprep.mubr.f32.mxu0 0.0
        %v2582 = vand.u32 %v2374, 4294901760
        %2583 = vmatmul.mubr.f32.gmra.mxu0 %v2582
        %v2584 = vpop.f32.mrf.mxu0
        %v2585 = vadd.f32 %v2468, %v2584
        %v2586 = vpop.f32.mrf.mxu0
        %2587 = vmatprep.mubr.f32.mxu0 0.0
        %v2588 = vand.u32 %v2377, 4294901760
        %2589 = vmatmul.mubr.f32.gmra.mxu0 %v2588
        %v2590 = vpop.f32.mrf.mxu0
        %v2591 = vadd.f32 %v2478, %v2590
        %v2592 = vpop.f32.mrf.mxu0
        %2593 = vmatprep.mubr.f32.mxu0 0.0
        %v2594 = vand.u32 %v2380, 4294901760
        %2595 = vmatmul.mubr.f32.gmra.mxu0 %v2594
        %v2596 = vpop.f32.mrf.mxu0
        %v2597 = vadd.f32 %v2488, %v2596
        %v2598 = vpop.f32.mrf.mxu0
        %2599 = vdwg.mxu0
        %2600 = vmatprep.subr.mxu0 0.0
        %2601 = vmatpush1.msra.mxu0 0.0
        %2602 = vmatprep.subr.mxu0 0.0
        %2603 = vmatpush1.msra.mxu0 0.0
        %2604 = vmatprep.subr.mxu0 0.0
        %2605 = vmatpush1.msra.mxu0 0.0
        %2606 = vmatprep.subr.mxu0 0.0
        %2607 = vmatpush1.msra.mxu0 0.0
        %2608 = vmatprep.subr.mxu0 0.0
        %2609 = vmatpush1.msra.mxu0 0.0
        %2610 = vmatprep.subr.mxu0 0.0
        %2611 = vmatpush1.msra.mxu0 0.0
        %2612 = vmatprep.subr.mxu0 0.0
        %2613 = vmatpush1.msra.mxu0 0.0
        %2614 = vmatprep.subr.mxu0 0.0
        %2615 = vmatpush1.msra.mxu0 0.0
        %2616 = vmatprep.subr.mxu0 0.0
        %2617 = vmatpush1.msra.mxu0 0.0
        %2618 = vmatprep.subr.mxu0 0.0
        %2619 = vmatpush1.msra.mxu0 0.0
        %2620 = vmatprep.subr.mxu0 0.0
        %2621 = vmatpush1.msra.mxu0 0.0
        %2622 = vmatprep.subr.mxu0 0.0
        %2623 = vmatpush1.msra.mxu0 0.0
        %2624 = vmatprep.subr.mxu0 0.0
        %v2625 = vand.u32 %v1138, 4294901760
        %v2626 = vsub.f32 %v1138, %v2625
        %2627 = vmatpush1.msra.mxu0 %v2626
        %2628 = vmatprep.subr.mxu0 0.0
        %v2629 = vand.u32 %v1132, 4294901760
        %v2630 = vsub.f32 %v1132, %v2629
        %2631 = vmatpush1.msra.mxu0 %v2630
        %2632 = vmatprep.subr.mxu0 0.0
        %v2633 = vand.u32 %v1126, 4294901760
        %v2634 = vsub.f32 %v1126, %v2633
        %2635 = vmatpush1.msra.mxu0 %v2634
        %2636 = vmatprep.subr.mxu0 0.0
        %v2637 = vand.u32 %v1120, 4294901760
        %v2638 = vsub.f32 %v1120, %v2637
        %2639 = vmatpush1.msra.mxu0 %v2638
        %2640 = vmatprep.subr.mxu0 0.0
        %2641 = vmatpush2.msra.mxu0 0.0
        %2642 = vmatprep.subr.mxu0 0.0
        %2643 = vmatpush2.msra.mxu0 0.0
        %2644 = vmatprep.subr.mxu0 0.0
        %2645 = vmatpush2.msra.mxu0 0.0
        %2646 = vmatprep.subr.mxu0 0.0
        %2647 = vmatpush2.msra.mxu0 0.0
        %2648 = vmatprep.subr.mxu0 0.0
        %2649 = vmatpush2.msra.mxu0 0.0
        %2650 = vmatprep.subr.mxu0 0.0
        %2651 = vmatpush2.msra.mxu0 0.0
        %2652 = vmatprep.subr.mxu0 0.0
        %2653 = vmatpush2.msra.mxu0 0.0
        %2654 = vmatprep.subr.mxu0 0.0
        %2655 = vmatpush2.msra.mxu0 0.0
        %2656 = vmatprep.subr.mxu0 0.0
        %2657 = vmatpush2.msra.mxu0 0.0
        %2658 = vmatprep.subr.mxu0 0.0
        %2659 = vmatpush2.msra.mxu0 0.0
        %2660 = vmatprep.subr.mxu0 0.0
        %2661 = vmatpush2.msra.mxu0 0.0
        %2662 = vmatprep.subr.mxu0 0.0
        %2663 = vmatpush2.msra.mxu0 0.0
        %2664 = vmatprep.subr.mxu0 0.0
        %2665 = vmatpush2.msra.mxu0 0.0
        %2666 = vmatprep.subr.mxu0 0.0
        %2667 = vmatpush2.msra.mxu0 0.0
        %2668 = vmatprep.subr.mxu0 0.0
        %2669 = vmatpush2.msra.mxu0 0.0
        %2670 = vmatprep.subr.mxu0 0.0
        %2671 = vmatpush2.msra.mxu0 0.0
        %2672 = vmatprep.mubr.f32.mxu0 0.0
        %v2673 = vand.u32 %v2371, 4294901760
        %v2674 = vsub.f32 %v2371, %v2673
        %2675 = vmatmul.mubr.f32.gmra.mxu0 %v2674
        %v2676 = vpop.f32.mrf.mxu0
        %v2677 = vadd.f32 %v2579, %v2676
        %v2678 = vpop.f32.mrf.mxu0
        %2679 = vmatprep.mubr.f32.mxu0 0.0
        %v2680 = vand.u32 %v2374, 4294901760
        %v2681 = vsub.f32 %v2374, %v2680
        %2682 = vmatmul.mubr.f32.gmra.mxu0 %v2681
        %v2683 = vpop.f32.mrf.mxu0
        %v2684 = vadd.f32 %v2585, %v2683
        %v2685 = vpop.f32.mrf.mxu0
        %2686 = vmatprep.mubr.f32.mxu0 0.0
        %v2687 = vand.u32 %v2377, 4294901760
        %v2688 = vsub.f32 %v2377, %v2687
        %2689 = vmatmul.mubr.f32.gmra.mxu0 %v2688
        %v2690 = vpop.f32.mrf.mxu0
        %v2691 = vadd.f32 %v2591, %v2690
        %v2692 = vpop.f32.mrf.mxu0
        %2693 = vmatprep.mubr.f32.mxu0 0.0
        %v2694 = vand.u32 %v2380, 4294901760
        %v2695 = vsub.f32 %v2380, %v2694
        %2696 = vmatmul.mubr.f32.gmra.mxu0 %v2695
        %v2697 = vpop.f32.mrf.mxu0
        %v2698 = vadd.f32 %v2597, %v2697
        %v2699 = vpop.f32.mrf.mxu0
        %2700 = vdwg.mxu0
        %2701 = vmatprep.subr.mxu0 0.0
        %2702 = vmatpush1.msra.mxu0 0.0
        %2703 = vmatprep.subr.mxu0 0.0
        %2704 = vmatpush1.msra.mxu0 0.0
        %2705 = vmatprep.subr.mxu0 0.0
        %2706 = vmatpush1.msra.mxu0 0.0
        %2707 = vmatprep.subr.mxu0 0.0
        %2708 = vmatpush1.msra.mxu0 0.0
        %2709 = vmatprep.subr.mxu0 0.0
        %2710 = vmatpush1.msra.mxu0 0.0
        %2711 = vmatprep.subr.mxu0 0.0
        %2712 = vmatpush1.msra.mxu0 0.0
        %2713 = vmatprep.subr.mxu0 0.0
        %2714 = vmatpush1.msra.mxu0 0.0
        %2715 = vmatprep.subr.mxu0 0.0
        %2716 = vmatpush1.msra.mxu0 0.0
        %2717 = vmatprep.subr.mxu0 0.0
        %2718 = vmatpush1.msra.mxu0 0.0
        %2719 = vmatprep.subr.mxu0 0.0
        %2720 = vmatpush1.msra.mxu0 0.0
        %2721 = vmatprep.subr.mxu0 0.0
        %2722 = vmatpush1.msra.mxu0 0.0
        %2723 = vmatprep.subr.mxu0 0.0
        %2724 = vmatpush1.msra.mxu0 0.0
        %2725 = vmatprep.subr.mxu0 0.0
        %v2726 = vand.u32 %v1138, 4294901760
        %2727 = vmatpush1.msra.mxu0 %v2726
        %2728 = vmatprep.subr.mxu0 0.0
        %v2729 = vand.u32 %v1132, 4294901760
        %2730 = vmatpush1.msra.mxu0 %v2729
        %2731 = vmatprep.subr.mxu0 0.0
        %v2732 = vand.u32 %v1126, 4294901760
        %2733 = vmatpush1.msra.mxu0 %v2732
        %2734 = vmatprep.subr.mxu0 0.0
        %v2735 = vand.u32 %v1120, 4294901760
        %2736 = vmatpush1.msra.mxu0 %v2735
        %2737 = vmatprep.subr.mxu0 0.0
        %2738 = vmatpush2.msra.mxu0 0.0
        %2739 = vmatprep.subr.mxu0 0.0
        %2740 = vmatpush2.msra.mxu0 0.0
        %2741 = vmatprep.subr.mxu0 0.0
        %2742 = vmatpush2.msra.mxu0 0.0
        %2743 = vmatprep.subr.mxu0 0.0
        %2744 = vmatpush2.msra.mxu0 0.0
        %2745 = vmatprep.subr.mxu0 0.0
        %2746 = vmatpush2.msra.mxu0 0.0
        %2747 = vmatprep.subr.mxu0 0.0
        %2748 = vmatpush2.msra.mxu0 0.0
        %2749 = vmatprep.subr.mxu0 0.0
        %2750 = vmatpush2.msra.mxu0 0.0
        %2751 = vmatprep.subr.mxu0 0.0
        %2752 = vmatpush2.msra.mxu0 0.0
        %2753 = vmatprep.subr.mxu0 0.0
        %2754 = vmatpush2.msra.mxu0 0.0
        %2755 = vmatprep.subr.mxu0 0.0
        %2756 = vmatpush2.msra.mxu0 0.0
        %2757 = vmatprep.subr.mxu0 0.0
        %2758 = vmatpush2.msra.mxu0 0.0
        %2759 = vmatprep.subr.mxu0 0.0
        %2760 = vmatpush2.msra.mxu0 0.0
        %2761 = vmatprep.subr.mxu0 0.0
        %2762 = vmatpush2.msra.mxu0 0.0
        %2763 = vmatprep.subr.mxu0 0.0
        %2764 = vmatpush2.msra.mxu0 0.0
        %2765 = vmatprep.subr.mxu0 0.0
        %2766 = vmatpush2.msra.mxu0 0.0
        %2767 = vmatprep.subr.mxu0 0.0
        %2768 = vmatpush2.msra.mxu0 0.0
        %2769 = vmatprep.mubr.f32.mxu0 0.0
        %v2770 = vand.u32 %v2371, 4294901760
        %v2771 = vsub.f32 %v2371, %v2770
        %v2772 = vand.u32 %v2771, 4294901760
        %2773 = vmatmul.mubr.f32.gmra.mxu0 %v2772
        %v2774 = vpop.f32.mrf.mxu0
        %v2775 = vadd.f32 %v2677, %v2774
        %v2776 = vpop.f32.mrf.mxu0
        %2777 = vmatprep.mubr.f32.mxu0 0.0
        %v2778 = vand.u32 %v2374, 4294901760
        %v2779 = vsub.f32 %v2374, %v2778
        %v2780 = vand.u32 %v2779, 4294901760
        %2781 = vmatmul.mubr.f32.gmra.mxu0 %v2780
        %v2782 = vpop.f32.mrf.mxu0
        %v2783 = vadd.f32 %v2684, %v2782
        %v2784 = vpop.f32.mrf.mxu0
        %2785 = vmatprep.mubr.f32.mxu0 0.0
        %v2786 = vand.u32 %v2377, 4294901760
        %v2787 = vsub.f32 %v2377, %v2786
        %v2788 = vand.u32 %v2787, 4294901760
        %2789 = vmatmul.mubr.f32.gmra.mxu0 %v2788
        %v2790 = vpop.f32.mrf.mxu0
        %v2791 = vadd.f32 %v2691, %v2790
        %v2792 = vpop.f32.mrf.mxu0
        %2793 = vmatprep.mubr.f32.mxu0 0.0
        %v2794 = vand.u32 %v2380, 4294901760
        %v2795 = vsub.f32 %v2380, %v2794
        %v2796 = vand.u32 %v2795, 4294901760
        %2797 = vmatmul.mubr.f32.gmra.mxu0 %v2796
        %v2798 = vpop.f32.mrf.mxu0
        %v2799 = vadd.f32 %v2698, %v2798
        %v2800 = vpop.f32.mrf.mxu0
        %2801 = vdwg.mxu0
        %2802 = vmatprep.subr.mxu0 0.0
        %2803 = vmatpush1.msra.mxu0 0.0
        %2804 = vmatprep.subr.mxu0 0.0
        %2805 = vmatpush1.msra.mxu0 0.0
        %2806 = vmatprep.subr.mxu0 0.0
        %2807 = vmatpush1.msra.mxu0 0.0
        %2808 = vmatprep.subr.mxu0 0.0
        %2809 = vmatpush1.msra.mxu0 0.0
        %2810 = vmatprep.subr.mxu0 0.0
        %2811 = vmatpush1.msra.mxu0 0.0
        %2812 = vmatprep.subr.mxu0 0.0
        %2813 = vmatpush1.msra.mxu0 0.0
        %2814 = vmatprep.subr.mxu0 0.0
        %2815 = vmatpush1.msra.mxu0 0.0
        %2816 = vmatprep.subr.mxu0 0.0
        %2817 = vmatpush1.msra.mxu0 0.0
        %2818 = vmatprep.subr.mxu0 0.0
        %2819 = vmatpush1.msra.mxu0 0.0
        %2820 = vmatprep.subr.mxu0 0.0
        %2821 = vmatpush1.msra.mxu0 0.0
        %2822 = vmatprep.subr.mxu0 0.0
        %2823 = vmatpush1.msra.mxu0 0.0
        %2824 = vmatprep.subr.mxu0 0.0
        %2825 = vmatpush1.msra.mxu0 0.0
        %2826 = vmatprep.subr.mxu0 0.0
        %v2827 = vand.u32 %v1138, 4294901760
        %v2828 = vsub.f32 %v1138, %v2827
        %v2829 = vand.u32 %v2828, 4294901760
        %2830 = vmatpush1.msra.mxu0 %v2829
        %2831 = vmatprep.subr.mxu0 0.0
        %v2832 = vand.u32 %v1132, 4294901760
        %v2833 = vsub.f32 %v1132, %v2832
        %v2834 = vand.u32 %v2833, 4294901760
        %2835 = vmatpush1.msra.mxu0 %v2834
        %2836 = vmatprep.subr.mxu0 0.0
        %v2837 = vand.u32 %v1126, 4294901760
        %v2838 = vsub.f32 %v1126, %v2837
        %v2839 = vand.u32 %v2838, 4294901760
        %2840 = vmatpush1.msra.mxu0 %v2839
        %2841 = vmatprep.subr.mxu0 0.0
        %v2842 = vand.u32 %v1120, 4294901760
        %v2843 = vsub.f32 %v1120, %v2842
        %v2844 = vand.u32 %v2843, 4294901760
        %2845 = vmatpush1.msra.mxu0 %v2844
        %2846 = vmatprep.subr.mxu0 0.0
        %2847 = vmatpush2.msra.mxu0 0.0
        %2848 = vmatprep.subr.mxu0 0.0
        %2849 = vmatpush2.msra.mxu0 0.0
        %2850 = vmatprep.subr.mxu0 0.0
        %2851 = vmatpush2.msra.mxu0 0.0
        %2852 = vmatprep.subr.mxu0 0.0
        %2853 = vmatpush2.msra.mxu0 0.0
        %2854 = vmatprep.subr.mxu0 0.0
        %2855 = vmatpush2.msra.mxu0 0.0
        %2856 = vmatprep.subr.mxu0 0.0
        %2857 = vmatpush2.msra.mxu0 0.0
        %2858 = vmatprep.subr.mxu0 0.0
        %2859 = vmatpush2.msra.mxu0 0.0
        %2860 = vmatprep.subr.mxu0 0.0
        %2861 = vmatpush2.msra.mxu0 0.0
        %2862 = vmatprep.subr.mxu0 0.0
        %2863 = vmatpush2.msra.mxu0 0.0
        %2864 = vmatprep.subr.mxu0 0.0
        %2865 = vmatpush2.msra.mxu0 0.0
        %2866 = vmatprep.subr.mxu0 0.0
        %2867 = vmatpush2.msra.mxu0 0.0
        %2868 = vmatprep.subr.mxu0 0.0
        %2869 = vmatpush2.msra.mxu0 0.0
        %2870 = vmatprep.subr.mxu0 0.0
        %2871 = vmatpush2.msra.mxu0 0.0
        %2872 = vmatprep.subr.mxu0 0.0
        %2873 = vmatpush2.msra.mxu0 0.0
        %2874 = vmatprep.subr.mxu0 0.0
        %2875 = vmatpush2.msra.mxu0 0.0
        %2876 = vmatprep.subr.mxu0 0.0
        %2877 = vmatpush2.msra.mxu0 0.0
        %2878 = vmatprep.mubr.f32.mxu0 0.0
        %v2879 = vand.u32 %v2371, 4294901760
        %2880 = vmatmul.mubr.f32.gmra.mxu0 %v2879
        %v2881 = vpop.f32.mrf.mxu0
        %v2882 = vadd.f32 %v2775, %v2881
        %v2883 = vpop.f32.mrf.mxu0
        %2884 = vmatprep.mubr.f32.mxu0 0.0
        %v2885 = vand.u32 %v2374, 4294901760
        %2886 = vmatmul.mubr.f32.gmra.mxu0 %v2885
        %v2887 = vpop.f32.mrf.mxu0
        %v2888 = vadd.f32 %v2783, %v2887
        %v2889 = vpop.f32.mrf.mxu0
        %2890 = vmatprep.mubr.f32.mxu0 0.0
        %v2891 = vand.u32 %v2377, 4294901760
        %2892 = vmatmul.mubr.f32.gmra.mxu0 %v2891
        %v2893 = vpop.f32.mrf.mxu0
        %v2894 = vadd.f32 %v2791, %v2893
        %v2895 = vpop.f32.mrf.mxu0
        %2896 = vmatprep.mubr.f32.mxu0 0.0
        %v2897 = vand.u32 %v2380, 4294901760
        %2898 = vmatmul.mubr.f32.gmra.mxu0 %v2897
        %v2899 = vpop.f32.mrf.mxu0
        %v2900 = vadd.f32 %v2799, %v2899
        %v2901 = vpop.f32.mrf.mxu0
        %2902 = vdwg.mxu0
        %2903 = vmatprep.subr.mxu0 0.0
        %2904 = vmatpush1.msra.mxu0 0.0
        %2905 = vmatprep.subr.mxu0 0.0
        %2906 = vmatpush1.msra.mxu0 0.0
        %2907 = vmatprep.subr.mxu0 0.0
        %2908 = vmatpush1.msra.mxu0 0.0
        %2909 = vmatprep.subr.mxu0 0.0
        %2910 = vmatpush1.msra.mxu0 0.0
        %2911 = vmatprep.subr.mxu0 0.0
        %2912 = vmatpush1.msra.mxu0 0.0
        %2913 = vmatprep.subr.mxu0 0.0
        %2914 = vmatpush1.msra.mxu0 0.0
        %2915 = vmatprep.subr.mxu0 0.0
        %2916 = vmatpush1.msra.mxu0 0.0
        %2917 = vmatprep.subr.mxu0 0.0
        %2918 = vmatpush1.msra.mxu0 0.0
        %2919 = vmatprep.subr.mxu0 0.0
        %2920 = vmatpush1.msra.mxu0 0.0
        %2921 = vmatprep.subr.mxu0 0.0
        %2922 = vmatpush1.msra.mxu0 0.0
        %2923 = vmatprep.subr.mxu0 0.0
        %2924 = vmatpush1.msra.mxu0 0.0
        %2925 = vmatprep.subr.mxu0 0.0
        %2926 = vmatpush1.msra.mxu0 0.0
        %2927 = vmatprep.subr.mxu0 0.0
        %v2928 = vand.u32 %v1138, 4294901760
        %2929 = vmatpush1.msra.mxu0 %v2928
        %2930 = vmatprep.subr.mxu0 0.0
        %v2931 = vand.u32 %v1132, 4294901760
        %2932 = vmatpush1.msra.mxu0 %v2931
        %2933 = vmatprep.subr.mxu0 0.0
        %v2934 = vand.u32 %v1126, 4294901760
        %2935 = vmatpush1.msra.mxu0 %v2934
        %2936 = vmatprep.subr.mxu0 0.0
        %v2937 = vand.u32 %v1120, 4294901760
        %2938 = vmatpush1.msra.mxu0 %v2937
        %2939 = vmatprep.subr.mxu0 0.0
        %2940 = vmatpush2.msra.mxu0 0.0
        %2941 = vmatprep.subr.mxu0 0.0
        %2942 = vmatpush2.msra.mxu0 0.0
        %2943 = vmatprep.subr.mxu0 0.0
        %2944 = vmatpush2.msra.mxu0 0.0
        %2945 = vmatprep.subr.mxu0 0.0
        %2946 = vmatpush2.msra.mxu0 0.0
        %2947 = vmatprep.subr.mxu0 0.0
        %2948 = vmatpush2.msra.mxu0 0.0
        %2949 = vmatprep.subr.mxu0 0.0
        %2950 = vmatpush2.msra.mxu0 0.0
        %2951 = vmatprep.subr.mxu0 0.0
        %2952 = vmatpush2.msra.mxu0 0.0
        %2953 = vmatprep.subr.mxu0 0.0
        %2954 = vmatpush2.msra.mxu0 0.0
        %2955 = vmatprep.subr.mxu0 0.0
        %2956 = vmatpush2.msra.mxu0 0.0
        %2957 = vmatprep.subr.mxu0 0.0
        %2958 = vmatpush2.msra.mxu0 0.0
        %2959 = vmatprep.subr.mxu0 0.0
        %2960 = vmatpush2.msra.mxu0 0.0
        %2961 = vmatprep.subr.mxu0 0.0
        %2962 = vmatpush2.msra.mxu0 0.0
        %2963 = vmatprep.subr.mxu0 0.0
        %2964 = vmatpush2.msra.mxu0 0.0
        %2965 = vmatprep.subr.mxu0 0.0
        %2966 = vmatpush2.msra.mxu0 0.0
        %2967 = vmatprep.subr.mxu0 0.0
        %2968 = vmatpush2.msra.mxu0 0.0
        %2969 = vmatprep.subr.mxu0 0.0
        %2970 = vmatpush2.msra.mxu0 0.0
        %2971 = vmatprep.mubr.f32.mxu0 0.0
        %v2972 = vand.u32 %v2371, 4294901760
        %2973 = vmatmul.mubr.f32.gmra.mxu0 %v2972
        %v2974 = vpop.f32.mrf.mxu0
        %v2975 = vadd.f32 %v2882, %v2974
        %v2976 = vpop.f32.mrf.mxu0
        %2977 = vmatprep.mubr.f32.mxu0 0.0
        %v2978 = vand.u32 %v2374, 4294901760
        %2979 = vmatmul.mubr.f32.gmra.mxu0 %v2978
        %v2980 = vpop.f32.mrf.mxu0
        %v2981 = vadd.f32 %v2888, %v2980
        %v2982 = vpop.f32.mrf.mxu0
        %2983 = vmatprep.mubr.f32.mxu0 0.0
        %v2984 = vand.u32 %v2377, 4294901760
        %2985 = vmatmul.mubr.f32.gmra.mxu0 %v2984
        %v2986 = vpop.f32.mrf.mxu0
        %v2987 = vadd.f32 %v2894, %v2986
        %v2988 = vpop.f32.mrf.mxu0
        %2989 = vmatprep.mubr.f32.mxu0 0.0
        %v2990 = vand.u32 %v2380, 4294901760
        %2991 = vmatmul.mubr.f32.gmra.mxu0 %v2990
        %v2992 = vpop.f32.mrf.mxu0
        %v2993 = vadd.f32 %v2900, %v2992
        %v2994 = vpop.f32.mrf.mxu0
        %2995 = vdwg.mxu0
        %2996 = vmatprep.subr.mxu0 0.0
        %2997 = vmatpush1.msra.mxu0 0.0
        %2998 = vmatprep.subr.mxu0 0.0
        %2999 = vmatpush1.msra.mxu0 0.0
        %3000 = vmatprep.subr.mxu0 0.0
        %3001 = vmatpush1.msra.mxu0 0.0
        %3002 = vmatprep.subr.mxu0 0.0
        %3003 = vmatpush1.msra.mxu0 0.0
        %3004 = vmatprep.subr.mxu0 0.0
        %3005 = vmatpush1.msra.mxu0 0.0
        %3006 = vmatprep.subr.mxu0 0.0
        %3007 = vmatpush1.msra.mxu0 0.0
        %3008 = vmatprep.subr.mxu0 0.0
        %3009 = vmatpush1.msra.mxu0 0.0
        %3010 = vmatprep.subr.mxu0 0.0
        %3011 = vmatpush1.msra.mxu0 0.0
        %3012 = vmatprep.subr.mxu0 0.0
        %3013 = vmatpush1.msra.mxu0 0.0
        %3014 = vmatprep.subr.mxu0 0.0
        %3015 = vmatpush1.msra.mxu0 0.0
        %3016 = vmatprep.subr.mxu0 0.0
        %3017 = vmatpush1.msra.mxu0 0.0
        %3018 = vmatprep.subr.mxu0 0.0
        %3019 = vmatpush1.msra.mxu0 0.0
        %3020 = vmatprep.subr.mxu0 0.0
        %v3021 = vand.u32 %v1734, 4294901760
        %3022 = vmatpush1.msra.mxu0 %v3021
        %3023 = vmatprep.subr.mxu0 0.0
        %v3024 = vand.u32 %v1733, 4294901760
        %3025 = vmatpush1.msra.mxu0 %v3024
        %3026 = vmatprep.subr.mxu0 0.0
        %v3027 = vand.u32 %v1732, 4294901760
        %3028 = vmatpush1.msra.mxu0 %v3027
        %3029 = vmatprep.subr.mxu0 0.0
        %v3030 = vand.u32 %v1731, 4294901760
        %3031 = vmatpush1.msra.mxu0 %v3030
        %3032 = vmatprep.subr.mxu0 0.0
        %3033 = vmatpush2.msra.mxu0 0.0
        %3034 = vmatprep.subr.mxu0 0.0
        %3035 = vmatpush2.msra.mxu0 0.0
        %3036 = vmatprep.subr.mxu0 0.0
        %3037 = vmatpush2.msra.mxu0 0.0
        %3038 = vmatprep.subr.mxu0 0.0
        %3039 = vmatpush2.msra.mxu0 0.0
        %3040 = vmatprep.subr.mxu0 0.0
        %3041 = vmatpush2.msra.mxu0 0.0
        %3042 = vmatprep.subr.mxu0 0.0
        %3043 = vmatpush2.msra.mxu0 0.0
        %3044 = vmatprep.subr.mxu0 0.0
        %3045 = vmatpush2.msra.mxu0 0.0
        %3046 = vmatprep.subr.mxu0 0.0
        %3047 = vmatpush2.msra.mxu0 0.0
        %3048 = vmatprep.subr.mxu0 0.0
        %3049 = vmatpush2.msra.mxu0 0.0
        %3050 = vmatprep.subr.mxu0 0.0
        %3051 = vmatpush2.msra.mxu0 0.0
        %3052 = vmatprep.subr.mxu0 0.0
        %3053 = vmatpush2.msra.mxu0 0.0
        %3054 = vmatprep.subr.mxu0 0.0
        %3055 = vmatpush2.msra.mxu0 0.0
        %3056 = vmatprep.subr.mxu0 0.0
        %3057 = vmatpush2.msra.mxu0 0.0
        %3058 = vmatprep.subr.mxu0 0.0
        %3059 = vmatpush2.msra.mxu0 0.0
        %3060 = vmatprep.subr.mxu0 0.0
        %3061 = vmatpush2.msra.mxu0 0.0
        %3062 = vmatprep.subr.mxu0 0.0
        %3063 = vmatpush2.msra.mxu0 0.0
        %3064 = vmatprep.mubr.f32.mxu0 0.0
        %v3065 = vand.u32 %v2371, 4294901760
        %v3066 = vsub.f32 %v2371, %v3065
        %v3067 = vand.u32 %v3066, 4294901760
        %v3068 = vsub.f32 %v3066, %v3067
        %v3069 = vand.u32 %v3068, 4294901760
        %3070 = vmatmul.mubr.f32.gmra.mxu0 %v3069
        %v3071 = vpop.f32.mrf.mxu0
        %v3072 = vadd.f32 0.0, %v3071
        %v3073 = vpop.f32.mrf.mxu0
        %3074 = vmatprep.mubr.f32.mxu0 0.0
        %v3075 = vand.u32 %v2374, 4294901760
        %v3076 = vsub.f32 %v2374, %v3075
        %v3077 = vand.u32 %v3076, 4294901760
        %v3078 = vsub.f32 %v3076, %v3077
        %v3079 = vand.u32 %v3078, 4294901760
        %3080 = vmatmul.mubr.f32.gmra.mxu0 %v3079
        %v3081 = vpop.f32.mrf.mxu0
        %v3082 = vadd.f32 0.0, %v3081
        %v3083 = vpop.f32.mrf.mxu0
        %3084 = vmatprep.mubr.f32.mxu0 0.0
        %v3085 = vand.u32 %v2377, 4294901760
        %v3086 = vsub.f32 %v2377, %v3085
        %v3087 = vand.u32 %v3086, 4294901760
        %v3088 = vsub.f32 %v3086, %v3087
        %v3089 = vand.u32 %v3088, 4294901760
        %3090 = vmatmul.mubr.f32.gmra.mxu0 %v3089
        %v3091 = vpop.f32.mrf.mxu0
        %v3092 = vadd.f32 0.0, %v3091
        %v3093 = vpop.f32.mrf.mxu0
        %3094 = vmatprep.mubr.f32.mxu0 0.0
        %v3095 = vand.u32 %v2380, 4294901760
        %v3096 = vsub.f32 %v2380, %v3095
        %v3097 = vand.u32 %v3096, 4294901760
        %v3098 = vsub.f32 %v3096, %v3097
        %v3099 = vand.u32 %v3098, 4294901760
        %3100 = vmatmul.mubr.f32.gmra.mxu0 %v3099
        %v3101 = vpop.f32.mrf.mxu0
        %v3102 = vadd.f32 0.0, %v3101
        %v3103 = vpop.f32.mrf.mxu0
        %3104 = vdwg.mxu0
        %3105 = vmatprep.subr.mxu0 0.0
        %3106 = vmatpush1.msra.mxu0 0.0
        %3107 = vmatprep.subr.mxu0 0.0
        %3108 = vmatpush1.msra.mxu0 0.0
        %3109 = vmatprep.subr.mxu0 0.0
        %3110 = vmatpush1.msra.mxu0 0.0
        %3111 = vmatprep.subr.mxu0 0.0
        %3112 = vmatpush1.msra.mxu0 0.0
        %3113 = vmatprep.subr.mxu0 0.0
        %3114 = vmatpush1.msra.mxu0 0.0
        %3115 = vmatprep.subr.mxu0 0.0
        %3116 = vmatpush1.msra.mxu0 0.0
        %3117 = vmatprep.subr.mxu0 0.0
        %3118 = vmatpush1.msra.mxu0 0.0
        %3119 = vmatprep.subr.mxu0 0.0
        %3120 = vmatpush1.msra.mxu0 0.0
        %3121 = vmatprep.subr.mxu0 0.0
        %3122 = vmatpush1.msra.mxu0 0.0
        %3123 = vmatprep.subr.mxu0 0.0
        %3124 = vmatpush1.msra.mxu0 0.0
        %3125 = vmatprep.subr.mxu0 0.0
        %3126 = vmatpush1.msra.mxu0 0.0
        %3127 = vmatprep.subr.mxu0 0.0
        %3128 = vmatpush1.msra.mxu0 0.0
        %3129 = vmatprep.subr.mxu0 0.0
        %v3130 = vand.u32 %v1734, 4294901760
        %v3131 = vsub.f32 %v1734, %v3130
        %v3132 = vand.u32 %v3131, 4294901760
        %v3133 = vsub.f32 %v3131, %v3132
        %v3134 = vand.u32 %v3133, 4294901760
        %3135 = vmatpush1.msra.mxu0 %v3134
        %3136 = vmatprep.subr.mxu0 0.0
        %v3137 = vand.u32 %v1733, 4294901760
        %v3138 = vsub.f32 %v1733, %v3137
        %v3139 = vand.u32 %v3138, 4294901760
        %v3140 = vsub.f32 %v3138, %v3139
        %v3141 = vand.u32 %v3140, 4294901760
        %3142 = vmatpush1.msra.mxu0 %v3141
        %3143 = vmatprep.subr.mxu0 0.0
        %v3144 = vand.u32 %v1732, 4294901760
        %v3145 = vsub.f32 %v1732, %v3144
        %v3146 = vand.u32 %v3145, 4294901760
        %v3147 = vsub.f32 %v3145, %v3146
        %v3148 = vand.u32 %v3147, 4294901760
        %3149 = vmatpush1.msra.mxu0 %v3148
        %3150 = vmatprep.subr.mxu0 0.0
        %v3151 = vand.u32 %v1731, 4294901760
        %v3152 = vsub.f32 %v1731, %v3151
        %v3153 = vand.u32 %v3152, 4294901760
        %v3154 = vsub.f32 %v3152, %v3153
        %v3155 = vand.u32 %v3154, 4294901760
        %3156 = vmatpush1.msra.mxu0 %v3155
        %3157 = vmatprep.subr.mxu0 0.0
        %3158 = vmatpush2.msra.mxu0 0.0
        %3159 = vmatprep.subr.mxu0 0.0
        %3160 = vmatpush2.msra.mxu0 0.0
        %3161 = vmatprep.subr.mxu0 0.0
        %3162 = vmatpush2.msra.mxu0 0.0
        %3163 = vmatprep.subr.mxu0 0.0
        %3164 = vmatpush2.msra.mxu0 0.0
        %3165 = vmatprep.subr.mxu0 0.0
        %3166 = vmatpush2.msra.mxu0 0.0
        %3167 = vmatprep.subr.mxu0 0.0
        %3168 = vmatpush2.msra.mxu0 0.0
        %3169 = vmatprep.subr.mxu0 0.0
        %3170 = vmatpush2.msra.mxu0 0.0
        %3171 = vmatprep.subr.mxu0 0.0
        %3172 = vmatpush2.msra.mxu0 0.0
        %3173 = vmatprep.subr.mxu0 0.0
        %3174 = vmatpush2.msra.mxu0 0.0
        %3175 = vmatprep.subr.mxu0 0.0
        %3176 = vmatpush2.msra.mxu0 0.0
        %3177 = vmatprep.subr.mxu0 0.0
        %3178 = vmatpush2.msra.mxu0 0.0
        %3179 = vmatprep.subr.mxu0 0.0
        %3180 = vmatpush2.msra.mxu0 0.0
        %3181 = vmatprep.subr.mxu0 0.0
        %3182 = vmatpush2.msra.mxu0 0.0
        %3183 = vmatprep.subr.mxu0 0.0
        %3184 = vmatpush2.msra.mxu0 0.0
        %3185 = vmatprep.subr.mxu0 0.0
        %3186 = vmatpush2.msra.mxu0 0.0
        %3187 = vmatprep.subr.mxu0 0.0
        %3188 = vmatpush2.msra.mxu0 0.0
        %3189 = vmatprep.mubr.f32.mxu0 0.0
        %v3190 = vand.u32 %v2371, 4294901760
        %3191 = vmatmul.mubr.f32.gmra.mxu0 %v3190
        %v3192 = vpop.f32.mrf.mxu0
        %v3193 = vadd.f32 %v3072, %v3192
        %v3194 = vpop.f32.mrf.mxu0
        %3195 = vmatprep.mubr.f32.mxu0 0.0
        %v3196 = vand.u32 %v2374, 4294901760
        %3197 = vmatmul.mubr.f32.gmra.mxu0 %v3196
        %v3198 = vpop.f32.mrf.mxu0
        %v3199 = vadd.f32 %v3082, %v3198
        %v3200 = vpop.f32.mrf.mxu0
        %3201 = vmatprep.mubr.f32.mxu0 0.0
        %v3202 = vand.u32 %v2377, 4294901760
        %3203 = vmatmul.mubr.f32.gmra.mxu0 %v3202
        %v3204 = vpop.f32.mrf.mxu0
        %v3205 = vadd.f32 %v3092, %v3204
        %v3206 = vpop.f32.mrf.mxu0
        %3207 = vmatprep.mubr.f32.mxu0 0.0
        %v3208 = vand.u32 %v2380, 4294901760
        %3209 = vmatmul.mubr.f32.gmra.mxu0 %v3208
        %v3210 = vpop.f32.mrf.mxu0
        %v3211 = vadd.f32 %v3102, %v3210
        %v3212 = vpop.f32.mrf.mxu0
        %3213 = vdwg.mxu0
        %3214 = vmatprep.subr.mxu0 0.0
        %3215 = vmatpush1.msra.mxu0 0.0
        %3216 = vmatprep.subr.mxu0 0.0
        %3217 = vmatpush1.msra.mxu0 0.0
        %3218 = vmatprep.subr.mxu0 0.0
        %3219 = vmatpush1.msra.mxu0 0.0
        %3220 = vmatprep.subr.mxu0 0.0
        %3221 = vmatpush1.msra.mxu0 0.0
        %3222 = vmatprep.subr.mxu0 0.0
        %3223 = vmatpush1.msra.mxu0 0.0
        %3224 = vmatprep.subr.mxu0 0.0
        %3225 = vmatpush1.msra.mxu0 0.0
        %3226 = vmatprep.subr.mxu0 0.0
        %3227 = vmatpush1.msra.mxu0 0.0
        %3228 = vmatprep.subr.mxu0 0.0
        %3229 = vmatpush1.msra.mxu0 0.0
        %3230 = vmatprep.subr.mxu0 0.0
        %3231 = vmatpush1.msra.mxu0 0.0
        %3232 = vmatprep.subr.mxu0 0.0
        %3233 = vmatpush1.msra.mxu0 0.0
        %3234 = vmatprep.subr.mxu0 0.0
        %3235 = vmatpush1.msra.mxu0 0.0
        %3236 = vmatprep.subr.mxu0 0.0
        %3237 = vmatpush1.msra.mxu0 0.0
        %3238 = vmatprep.subr.mxu0 0.0
        %v3239 = vand.u32 %v1734, 4294901760
        %v3240 = vsub.f32 %v1734, %v3239
        %3241 = vmatpush1.msra.mxu0 %v3240
        %3242 = vmatprep.subr.mxu0 0.0
        %v3243 = vand.u32 %v1733, 4294901760
        %v3244 = vsub.f32 %v1733, %v3243
        %3245 = vmatpush1.msra.mxu0 %v3244
        %3246 = vmatprep.subr.mxu0 0.0
        %v3247 = vand.u32 %v1732, 4294901760
        %v3248 = vsub.f32 %v1732, %v3247
        %3249 = vmatpush1.msra.mxu0 %v3248
        %3250 = vmatprep.subr.mxu0 0.0
        %v3251 = vand.u32 %v1731, 4294901760
        %v3252 = vsub.f32 %v1731, %v3251
        %3253 = vmatpush1.msra.mxu0 %v3252
        %3254 = vmatprep.subr.mxu0 0.0
        %3255 = vmatpush2.msra.mxu0 0.0
        %3256 = vmatprep.subr.mxu0 0.0
        %3257 = vmatpush2.msra.mxu0 0.0
        %3258 = vmatprep.subr.mxu0 0.0
        %3259 = vmatpush2.msra.mxu0 0.0
        %3260 = vmatprep.subr.mxu0 0.0
        %3261 = vmatpush2.msra.mxu0 0.0
        %3262 = vmatprep.subr.mxu0 0.0
        %3263 = vmatpush2.msra.mxu0 0.0
        %3264 = vmatprep.subr.mxu0 0.0
        %3265 = vmatpush2.msra.mxu0 0.0
        %3266 = vmatprep.subr.mxu0 0.0
        %3267 = vmatpush2.msra.mxu0 0.0
        %3268 = vmatprep.subr.mxu0 0.0
        %3269 = vmatpush2.msra.mxu0 0.0
        %3270 = vmatprep.subr.mxu0 0.0
        %3271 = vmatpush2.msra.mxu0 0.0
        %3272 = vmatprep.subr.mxu0 0.0
        %3273 = vmatpush2.msra.mxu0 0.0
        %3274 = vmatprep.subr.mxu0 0.0
        %3275 = vmatpush2.msra.mxu0 0.0
        %3276 = vmatprep.subr.mxu0 0.0
        %3277 = vmatpush2.msra.mxu0 0.0
        %3278 = vmatprep.subr.mxu0 0.0
        %3279 = vmatpush2.msra.mxu0 0.0
        %3280 = vmatprep.subr.mxu0 0.0
        %3281 = vmatpush2.msra.mxu0 0.0
        %3282 = vmatprep.subr.mxu0 0.0
        %3283 = vmatpush2.msra.mxu0 0.0
        %3284 = vmatprep.subr.mxu0 0.0
        %3285 = vmatpush2.msra.mxu0 0.0
        %3286 = vmatprep.mubr.f32.mxu0 0.0
        %v3287 = vand.u32 %v2371, 4294901760
        %v3288 = vsub.f32 %v2371, %v3287
        %3289 = vmatmul.mubr.f32.gmra.mxu0 %v3288
        %v3290 = vpop.f32.mrf.mxu0
        %v3291 = vadd.f32 %v3193, %v3290
        %v3292 = vpop.f32.mrf.mxu0
        %3293 = vmatprep.mubr.f32.mxu0 0.0
        %v3294 = vand.u32 %v2374, 4294901760
        %v3295 = vsub.f32 %v2374, %v3294
        %3296 = vmatmul.mubr.f32.gmra.mxu0 %v3295
        %v3297 = vpop.f32.mrf.mxu0
        %v3298 = vadd.f32 %v3199, %v3297
        %v3299 = vpop.f32.mrf.mxu0
        %3300 = vmatprep.mubr.f32.mxu0 0.0
        %v3301 = vand.u32 %v2377, 4294901760
        %v3302 = vsub.f32 %v2377, %v3301
        %3303 = vmatmul.mubr.f32.gmra.mxu0 %v3302
        %v3304 = vpop.f32.mrf.mxu0
        %v3305 = vadd.f32 %v3205, %v3304
        %v3306 = vpop.f32.mrf.mxu0
        %3307 = vmatprep.mubr.f32.mxu0 0.0
        %v3308 = vand.u32 %v2380, 4294901760
        %v3309 = vsub.f32 %v2380, %v3308
        %3310 = vmatmul.mubr.f32.gmra.mxu0 %v3309
        %v3311 = vpop.f32.mrf.mxu0
        %v3312 = vadd.f32 %v3211, %v3311
        %v3313 = vpop.f32.mrf.mxu0
        %3314 = vdwg.mxu0
        %3315 = vmatprep.subr.mxu0 0.0
        %3316 = vmatpush1.msra.mxu0 0.0
        %3317 = vmatprep.subr.mxu0 0.0
        %3318 = vmatpush1.msra.mxu0 0.0
        %3319 = vmatprep.subr.mxu0 0.0
        %3320 = vmatpush1.msra.mxu0 0.0
        %3321 = vmatprep.subr.mxu0 0.0
        %3322 = vmatpush1.msra.mxu0 0.0
        %3323 = vmatprep.subr.mxu0 0.0
        %3324 = vmatpush1.msra.mxu0 0.0
        %3325 = vmatprep.subr.mxu0 0.0
        %3326 = vmatpush1.msra.mxu0 0.0
        %3327 = vmatprep.subr.mxu0 0.0
        %3328 = vmatpush1.msra.mxu0 0.0
        %3329 = vmatprep.subr.mxu0 0.0
        %3330 = vmatpush1.msra.mxu0 0.0
        %3331 = vmatprep.subr.mxu0 0.0
        %3332 = vmatpush1.msra.mxu0 0.0
        %3333 = vmatprep.subr.mxu0 0.0
        %3334 = vmatpush1.msra.mxu0 0.0
        %3335 = vmatprep.subr.mxu0 0.0
        %3336 = vmatpush1.msra.mxu0 0.0
        %3337 = vmatprep.subr.mxu0 0.0
        %3338 = vmatpush1.msra.mxu0 0.0
        %3339 = vmatprep.subr.mxu0 0.0
        %v3340 = vand.u32 %v1734, 4294901760
        %3341 = vmatpush1.msra.mxu0 %v3340
        %3342 = vmatprep.subr.mxu0 0.0
        %v3343 = vand.u32 %v1733, 4294901760
        %3344 = vmatpush1.msra.mxu0 %v3343
        %3345 = vmatprep.subr.mxu0 0.0
        %v3346 = vand.u32 %v1732, 4294901760
        %3347 = vmatpush1.msra.mxu0 %v3346
        %3348 = vmatprep.subr.mxu0 0.0
        %v3349 = vand.u32 %v1731, 4294901760
        %3350 = vmatpush1.msra.mxu0 %v3349
        %3351 = vmatprep.subr.mxu0 0.0
        %3352 = vmatpush2.msra.mxu0 0.0
        %3353 = vmatprep.subr.mxu0 0.0
        %3354 = vmatpush2.msra.mxu0 0.0
        %3355 = vmatprep.subr.mxu0 0.0
        %3356 = vmatpush2.msra.mxu0 0.0
        %3357 = vmatprep.subr.mxu0 0.0
        %3358 = vmatpush2.msra.mxu0 0.0
        %3359 = vmatprep.subr.mxu0 0.0
        %3360 = vmatpush2.msra.mxu0 0.0
        %3361 = vmatprep.subr.mxu0 0.0
        %3362 = vmatpush2.msra.mxu0 0.0
        %3363 = vmatprep.subr.mxu0 0.0
        %3364 = vmatpush2.msra.mxu0 0.0
        %3365 = vmatprep.subr.mxu0 0.0
        %3366 = vmatpush2.msra.mxu0 0.0
        %3367 = vmatprep.subr.mxu0 0.0
        %3368 = vmatpush2.msra.mxu0 0.0
        %3369 = vmatprep.subr.mxu0 0.0
        %3370 = vmatpush2.msra.mxu0 0.0
        %3371 = vmatprep.subr.mxu0 0.0
        %3372 = vmatpush2.msra.mxu0 0.0
        %3373 = vmatprep.subr.mxu0 0.0
        %3374 = vmatpush2.msra.mxu0 0.0
        %3375 = vmatprep.subr.mxu0 0.0
        %3376 = vmatpush2.msra.mxu0 0.0
        %3377 = vmatprep.subr.mxu0 0.0
        %3378 = vmatpush2.msra.mxu0 0.0
        %3379 = vmatprep.subr.mxu0 0.0
        %3380 = vmatpush2.msra.mxu0 0.0
        %3381 = vmatprep.subr.mxu0 0.0
        %3382 = vmatpush2.msra.mxu0 0.0
        %3383 = vmatprep.mubr.f32.mxu0 0.0
        %v3384 = vand.u32 %v2371, 4294901760
        %v3385 = vsub.f32 %v2371, %v3384
        %v3386 = vand.u32 %v3385, 4294901760
        %3387 = vmatmul.mubr.f32.gmra.mxu0 %v3386
        %v3388 = vpop.f32.mrf.mxu0
        %v3389 = vadd.f32 %v3291, %v3388
        %v3390 = vpop.f32.mrf.mxu0
        %3391 = vmatprep.mubr.f32.mxu0 0.0
        %v3392 = vand.u32 %v2374, 4294901760
        %v3393 = vsub.f32 %v2374, %v3392
        %v3394 = vand.u32 %v3393, 4294901760
        %3395 = vmatmul.mubr.f32.gmra.mxu0 %v3394
        %v3396 = vpop.f32.mrf.mxu0
        %v3397 = vadd.f32 %v3298, %v3396
        %v3398 = vpop.f32.mrf.mxu0
        %3399 = vmatprep.mubr.f32.mxu0 0.0
        %v3400 = vand.u32 %v2377, 4294901760
        %v3401 = vsub.f32 %v2377, %v3400
        %v3402 = vand.u32 %v3401, 4294901760
        %3403 = vmatmul.mubr.f32.gmra.mxu0 %v3402
        %v3404 = vpop.f32.mrf.mxu0
        %v3405 = vadd.f32 %v3305, %v3404
        %v3406 = vpop.f32.mrf.mxu0
        %3407 = vmatprep.mubr.f32.mxu0 0.0
        %v3408 = vand.u32 %v2380, 4294901760
        %v3409 = vsub.f32 %v2380, %v3408
        %v3410 = vand.u32 %v3409, 4294901760
        %3411 = vmatmul.mubr.f32.gmra.mxu0 %v3410
        %v3412 = vpop.f32.mrf.mxu0
        %v3413 = vadd.f32 %v3312, %v3412
        %v3414 = vpop.f32.mrf.mxu0
        %3415 = vdwg.mxu0
        %3416 = vmatprep.subr.mxu0 0.0
        %3417 = vmatpush1.msra.mxu0 0.0
        %3418 = vmatprep.subr.mxu0 0.0
        %3419 = vmatpush1.msra.mxu0 0.0
        %3420 = vmatprep.subr.mxu0 0.0
        %3421 = vmatpush1.msra.mxu0 0.0
        %3422 = vmatprep.subr.mxu0 0.0
        %3423 = vmatpush1.msra.mxu0 0.0
        %3424 = vmatprep.subr.mxu0 0.0
        %3425 = vmatpush1.msra.mxu0 0.0
        %3426 = vmatprep.subr.mxu0 0.0
        %3427 = vmatpush1.msra.mxu0 0.0
        %3428 = vmatprep.subr.mxu0 0.0
        %3429 = vmatpush1.msra.mxu0 0.0
        %3430 = vmatprep.subr.mxu0 0.0
        %3431 = vmatpush1.msra.mxu0 0.0
        %3432 = vmatprep.subr.mxu0 0.0
        %3433 = vmatpush1.msra.mxu0 0.0
        %3434 = vmatprep.subr.mxu0 0.0
        %3435 = vmatpush1.msra.mxu0 0.0
        %3436 = vmatprep.subr.mxu0 0.0
        %3437 = vmatpush1.msra.mxu0 0.0
        %3438 = vmatprep.subr.mxu0 0.0
        %3439 = vmatpush1.msra.mxu0 0.0
        %3440 = vmatprep.subr.mxu0 0.0
        %v3441 = vand.u32 %v1734, 4294901760
        %v3442 = vsub.f32 %v1734, %v3441
        %v3443 = vand.u32 %v3442, 4294901760
        %3444 = vmatpush1.msra.mxu0 %v3443
        %3445 = vmatprep.subr.mxu0 0.0
        %v3446 = vand.u32 %v1733, 4294901760
        %v3447 = vsub.f32 %v1733, %v3446
        %v3448 = vand.u32 %v3447, 4294901760
        %3449 = vmatpush1.msra.mxu0 %v3448
        %3450 = vmatprep.subr.mxu0 0.0
        %v3451 = vand.u32 %v1732, 4294901760
        %v3452 = vsub.f32 %v1732, %v3451
        %v3453 = vand.u32 %v3452, 4294901760
        %3454 = vmatpush1.msra.mxu0 %v3453
        %3455 = vmatprep.subr.mxu0 0.0
        %v3456 = vand.u32 %v1731, 4294901760
        %v3457 = vsub.f32 %v1731, %v3456
        %v3458 = vand.u32 %v3457, 4294901760
        %3459 = vmatpush1.msra.mxu0 %v3458
        %3460 = vmatprep.subr.mxu0 0.0
        %3461 = vmatpush2.msra.mxu0 0.0
        %3462 = vmatprep.subr.mxu0 0.0
        %3463 = vmatpush2.msra.mxu0 0.0
        %3464 = vmatprep.subr.mxu0 0.0
        %3465 = vmatpush2.msra.mxu0 0.0
        %3466 = vmatprep.subr.mxu0 0.0
        %3467 = vmatpush2.msra.mxu0 0.0
        %3468 = vmatprep.subr.mxu0 0.0
        %3469 = vmatpush2.msra.mxu0 0.0
        %3470 = vmatprep.subr.mxu0 0.0
        %3471 = vmatpush2.msra.mxu0 0.0
        %3472 = vmatprep.subr.mxu0 0.0
        %3473 = vmatpush2.msra.mxu0 0.0
        %3474 = vmatprep.subr.mxu0 0.0
        %3475 = vmatpush2.msra.mxu0 0.0
        %3476 = vmatprep.subr.mxu0 0.0
        %3477 = vmatpush2.msra.mxu0 0.0
        %3478 = vmatprep.subr.mxu0 0.0
        %3479 = vmatpush2.msra.mxu0 0.0
        %3480 = vmatprep.subr.mxu0 0.0
        %3481 = vmatpush2.msra.mxu0 0.0
        %3482 = vmatprep.subr.mxu0 0.0
        %3483 = vmatpush2.msra.mxu0 0.0
        %3484 = vmatprep.subr.mxu0 0.0
        %3485 = vmatpush2.msra.mxu0 0.0
        %3486 = vmatprep.subr.mxu0 0.0
        %3487 = vmatpush2.msra.mxu0 0.0
        %3488 = vmatprep.subr.mxu0 0.0
        %3489 = vmatpush2.msra.mxu0 0.0
        %3490 = vmatprep.subr.mxu0 0.0
        %3491 = vmatpush2.msra.mxu0 0.0
        %3492 = vmatprep.mubr.f32.mxu0 0.0
        %v3493 = vand.u32 %v2371, 4294901760
        %3494 = vmatmul.mubr.f32.gmra.mxu0 %v3493
        %v3495 = vpop.f32.mrf.mxu0
        %v3496 = vadd.f32 %v3389, %v3495
        %v3497 = vpop.f32.mrf.mxu0
        %3498 = vmatprep.mubr.f32.mxu0 0.0
        %v3499 = vand.u32 %v2374, 4294901760
        %3500 = vmatmul.mubr.f32.gmra.mxu0 %v3499
        %v3501 = vpop.f32.mrf.mxu0
        %v3502 = vadd.f32 %v3397, %v3501
        %v3503 = vpop.f32.mrf.mxu0
        %3504 = vmatprep.mubr.f32.mxu0 0.0
        %v3505 = vand.u32 %v2377, 4294901760
        %3506 = vmatmul.mubr.f32.gmra.mxu0 %v3505
        %v3507 = vpop.f32.mrf.mxu0
        %v3508 = vadd.f32 %v3405, %v3507
        %v3509 = vpop.f32.mrf.mxu0
        %3510 = vmatprep.mubr.f32.mxu0 0.0
        %v3511 = vand.u32 %v2380, 4294901760
        %3512 = vmatmul.mubr.f32.gmra.mxu0 %v3511
        %v3513 = vpop.f32.mrf.mxu0
        %v3514 = vadd.f32 %v3413, %v3513
        %v3515 = vpop.f32.mrf.mxu0
        %3516 = vdwg.mxu0
        %3517 = vmatprep.subr.mxu0 0.0
        %3518 = vmatpush1.msra.mxu0 0.0
        %3519 = vmatprep.subr.mxu0 0.0
        %3520 = vmatpush1.msra.mxu0 0.0
        %3521 = vmatprep.subr.mxu0 0.0
        %3522 = vmatpush1.msra.mxu0 0.0
        %3523 = vmatprep.subr.mxu0 0.0
        %3524 = vmatpush1.msra.mxu0 0.0
        %3525 = vmatprep.subr.mxu0 0.0
        %3526 = vmatpush1.msra.mxu0 0.0
        %3527 = vmatprep.subr.mxu0 0.0
        %3528 = vmatpush1.msra.mxu0 0.0
        %3529 = vmatprep.subr.mxu0 0.0
        %3530 = vmatpush1.msra.mxu0 0.0
        %3531 = vmatprep.subr.mxu0 0.0
        %3532 = vmatpush1.msra.mxu0 0.0
        %3533 = vmatprep.subr.mxu0 0.0
        %3534 = vmatpush1.msra.mxu0 0.0
        %3535 = vmatprep.subr.mxu0 0.0
        %3536 = vmatpush1.msra.mxu0 0.0
        %3537 = vmatprep.subr.mxu0 0.0
        %3538 = vmatpush1.msra.mxu0 0.0
        %3539 = vmatprep.subr.mxu0 0.0
        %3540 = vmatpush1.msra.mxu0 0.0
        %3541 = vmatprep.subr.mxu0 0.0
        %v3542 = vand.u32 %v1734, 4294901760
        %3543 = vmatpush1.msra.mxu0 %v3542
        %3544 = vmatprep.subr.mxu0 0.0
        %v3545 = vand.u32 %v1733, 4294901760
        %3546 = vmatpush1.msra.mxu0 %v3545
        %3547 = vmatprep.subr.mxu0 0.0
        %v3548 = vand.u32 %v1732, 4294901760
        %3549 = vmatpush1.msra.mxu0 %v3548
        %3550 = vmatprep.subr.mxu0 0.0
        %v3551 = vand.u32 %v1731, 4294901760
        %3552 = vmatpush1.msra.mxu0 %v3551
        %3553 = vmatprep.subr.mxu0 0.0
        %3554 = vmatpush2.msra.mxu0 0.0
        %3555 = vmatprep.subr.mxu0 0.0
        %3556 = vmatpush2.msra.mxu0 0.0
        %3557 = vmatprep.subr.mxu0 0.0
        %3558 = vmatpush2.msra.mxu0 0.0
        %3559 = vmatprep.subr.mxu0 0.0
        %3560 = vmatpush2.msra.mxu0 0.0
        %3561 = vmatprep.subr.mxu0 0.0
        %3562 = vmatpush2.msra.mxu0 0.0
        %3563 = vmatprep.subr.mxu0 0.0
        %3564 = vmatpush2.msra.mxu0 0.0
        %3565 = vmatprep.subr.mxu0 0.0
        %3566 = vmatpush2.msra.mxu0 0.0
        %3567 = vmatprep.subr.mxu0 0.0
        %3568 = vmatpush2.msra.mxu0 0.0
        %3569 = vmatprep.subr.mxu0 0.0
        %3570 = vmatpush2.msra.mxu0 0.0
        %3571 = vmatprep.subr.mxu0 0.0
        %3572 = vmatpush2.msra.mxu0 0.0
        %3573 = vmatprep.subr.mxu0 0.0
        %3574 = vmatpush2.msra.mxu0 0.0
        %3575 = vmatprep.subr.mxu0 0.0
        %3576 = vmatpush2.msra.mxu0 0.0
        %3577 = vmatprep.subr.mxu0 0.0
        %3578 = vmatpush2.msra.mxu0 0.0
        %3579 = vmatprep.subr.mxu0 0.0
        %3580 = vmatpush2.msra.mxu0 0.0
        %3581 = vmatprep.subr.mxu0 0.0
        %3582 = vmatpush2.msra.mxu0 0.0
        %3583 = vmatprep.subr.mxu0 0.0
        %3584 = vmatpush2.msra.mxu0 0.0
        %3585 = vmatprep.mubr.f32.mxu0 0.0
        %v3586 = vand.u32 %v2371, 4294901760
        %3587 = vmatmul.mubr.f32.gmra.mxu0 %v3586
        %v3588 = vpop.f32.mrf.mxu0
        %v3589 = vadd.f32 %v3496, %v3588
        %v3590 = vpop.f32.mrf.mxu0
        %3591 = vmatprep.mubr.f32.mxu0 0.0
        %v3592 = vand.u32 %v2374, 4294901760
        %3593 = vmatmul.mubr.f32.gmra.mxu0 %v3592
        %v3594 = vpop.f32.mrf.mxu0
        %v3595 = vadd.f32 %v3502, %v3594
        %v3596 = vpop.f32.mrf.mxu0
        %3597 = vmatprep.mubr.f32.mxu0 0.0
        %v3598 = vand.u32 %v2377, 4294901760
        %3599 = vmatmul.mubr.f32.gmra.mxu0 %v3598
        %v3600 = vpop.f32.mrf.mxu0
        %v3601 = vadd.f32 %v3508, %v3600
        %v3602 = vpop.f32.mrf.mxu0
        %3603 = vmatprep.mubr.f32.mxu0 0.0
        %v3604 = vand.u32 %v2380, 4294901760
        %3605 = vmatmul.mubr.f32.gmra.mxu0 %v3604
        %v3606 = vpop.f32.mrf.mxu0
        %v3607 = vadd.f32 %v3514, %v3606
        %v3608 = vpop.f32.mrf.mxu0
        %3609 = vdwg.mxu0
        %3610 = vmatprep.subr.mxu0 0.0
        %3611 = vmatpush1.msra.mxu0 0.0
        %3612 = vmatprep.subr.mxu0 0.0
        %3613 = vmatpush1.msra.mxu0 0.0
        %3614 = vmatprep.subr.mxu0 0.0
        %3615 = vmatpush1.msra.mxu0 0.0
        %3616 = vmatprep.subr.mxu0 0.0
        %3617 = vmatpush1.msra.mxu0 0.0
        %3618 = vmatprep.subr.mxu0 0.0
        %3619 = vmatpush1.msra.mxu0 0.0
        %3620 = vmatprep.subr.mxu0 0.0
        %3621 = vmatpush1.msra.mxu0 0.0
        %3622 = vmatprep.subr.mxu0 0.0
        %3623 = vmatpush1.msra.mxu0 0.0
        %3624 = vmatprep.subr.mxu0 0.0
        %3625 = vmatpush1.msra.mxu0 0.0
        %3626 = vmatprep.subr.mxu0 0.0
        %3627 = vmatpush1.msra.mxu0 0.0
        %3628 = vmatprep.subr.mxu0 0.0
        %3629 = vmatpush1.msra.mxu0 0.0
        %3630 = vmatprep.subr.mxu0 0.0
        %3631 = vmatpush1.msra.mxu0 0.0
        %3632 = vmatprep.subr.mxu0 0.0
        %3633 = vmatpush1.msra.mxu0 0.0
        %3634 = vmatprep.subr.mxu0 0.0
        %v3635 = vand.u32 %v1138, 4294901760
        %3636 = vmatpush1.msra.mxu0 %v3635
        %3637 = vmatprep.subr.mxu0 0.0
        %v3638 = vand.u32 %v1132, 4294901760
        %3639 = vmatpush1.msra.mxu0 %v3638
        %3640 = vmatprep.subr.mxu0 0.0
        %v3641 = vand.u32 %v1126, 4294901760
        %3642 = vmatpush1.msra.mxu0 %v3641
        %3643 = vmatprep.subr.mxu0 0.0
        %v3644 = vand.u32 %v1120, 4294901760
        %3645 = vmatpush1.msra.mxu0 %v3644
        %3646 = vmatprep.subr.mxu0 0.0
        %3647 = vmatpush2.msra.mxu0 0.0
        %3648 = vmatprep.subr.mxu0 0.0
        %3649 = vmatpush2.msra.mxu0 0.0
        %3650 = vmatprep.subr.mxu0 0.0
        %3651 = vmatpush2.msra.mxu0 0.0
        %3652 = vmatprep.subr.mxu0 0.0
        %3653 = vmatpush2.msra.mxu0 0.0
        %3654 = vmatprep.subr.mxu0 0.0
        %3655 = vmatpush2.msra.mxu0 0.0
        %3656 = vmatprep.subr.mxu0 0.0
        %3657 = vmatpush2.msra.mxu0 0.0
        %3658 = vmatprep.subr.mxu0 0.0
        %3659 = vmatpush2.msra.mxu0 0.0
        %3660 = vmatprep.subr.mxu0 0.0
        %3661 = vmatpush2.msra.mxu0 0.0
        %3662 = vmatprep.subr.mxu0 0.0
        %3663 = vmatpush2.msra.mxu0 0.0
        %3664 = vmatprep.subr.mxu0 0.0
        %3665 = vmatpush2.msra.mxu0 0.0
        %3666 = vmatprep.subr.mxu0 0.0
        %3667 = vmatpush2.msra.mxu0 0.0
        %3668 = vmatprep.subr.mxu0 0.0
        %3669 = vmatpush2.msra.mxu0 0.0
        %3670 = vmatprep.subr.mxu0 0.0
        %3671 = vmatpush2.msra.mxu0 0.0
        %3672 = vmatprep.subr.mxu0 0.0
        %3673 = vmatpush2.msra.mxu0 0.0
        %3674 = vmatprep.subr.mxu0 0.0
        %3675 = vmatpush2.msra.mxu0 0.0
        %3676 = vmatprep.subr.mxu0 0.0
        %3677 = vmatpush2.msra.mxu0 0.0
        %3678 = vmatprep.mubr.f32.mxu0 0.0
        %v3679 = vand.u32 %v1745, 4294901760
        %v3680 = vsub.f32 %v1745, %v3679
        %v3681 = vand.u32 %v3680, 4294901760
        %v3682 = vsub.f32 %v3680, %v3681
        %v3683 = vand.u32 %v3682, 4294901760
        %3684 = vmatmul.mubr.f32.gmra.mxu0 %v3683
        %v3685 = vpop.f32.mrf.mxu0
        %v3686 = vadd.f32 0.0, %v3685
        %v3687 = vpop.f32.mrf.mxu0
        %3688 = vmatprep.mubr.f32.mxu0 0.0
        %v3689 = vand.u32 %v1748, 4294901760
        %v3690 = vsub.f32 %v1748, %v3689
        %v3691 = vand.u32 %v3690, 4294901760
        %v3692 = vsub.f32 %v3690, %v3691
        %v3693 = vand.u32 %v3692, 4294901760
        %3694 = vmatmul.mubr.f32.gmra.mxu0 %v3693
        %v3695 = vpop.f32.mrf.mxu0
        %v3696 = vadd.f32 0.0, %v3695
        %v3697 = vpop.f32.mrf.mxu0
        %3698 = vmatprep.mubr.f32.mxu0 0.0
        %v3699 = vand.u32 %v1751, 4294901760
        %v3700 = vsub.f32 %v1751, %v3699
        %v3701 = vand.u32 %v3700, 4294901760
        %v3702 = vsub.f32 %v3700, %v3701
        %v3703 = vand.u32 %v3702, 4294901760
        %3704 = vmatmul.mubr.f32.gmra.mxu0 %v3703
        %v3705 = vpop.f32.mrf.mxu0
        %v3706 = vadd.f32 0.0, %v3705
        %v3707 = vpop.f32.mrf.mxu0
        %3708 = vmatprep.mubr.f32.mxu0 0.0
        %v3709 = vand.u32 %v1754, 4294901760
        %v3710 = vsub.f32 %v1754, %v3709
        %v3711 = vand.u32 %v3710, 4294901760
        %v3712 = vsub.f32 %v3710, %v3711
        %v3713 = vand.u32 %v3712, 4294901760
        %3714 = vmatmul.mubr.f32.gmra.mxu0 %v3713
        %v3715 = vpop.f32.mrf.mxu0
        %v3716 = vadd.f32 0.0, %v3715
        %v3717 = vpop.f32.mrf.mxu0
        %3718 = vdwg.mxu0
        %3719 = vmatprep.subr.mxu0 0.0
        %3720 = vmatpush1.msra.mxu0 0.0
        %3721 = vmatprep.subr.mxu0 0.0
        %3722 = vmatpush1.msra.mxu0 0.0
        %3723 = vmatprep.subr.mxu0 0.0
        %3724 = vmatpush1.msra.mxu0 0.0
        %3725 = vmatprep.subr.mxu0 0.0
        %3726 = vmatpush1.msra.mxu0 0.0
        %3727 = vmatprep.subr.mxu0 0.0
        %3728 = vmatpush1.msra.mxu0 0.0
        %3729 = vmatprep.subr.mxu0 0.0
        %3730 = vmatpush1.msra.mxu0 0.0
        %3731 = vmatprep.subr.mxu0 0.0
        %3732 = vmatpush1.msra.mxu0 0.0
        %3733 = vmatprep.subr.mxu0 0.0
        %3734 = vmatpush1.msra.mxu0 0.0
        %3735 = vmatprep.subr.mxu0 0.0
        %3736 = vmatpush1.msra.mxu0 0.0
        %3737 = vmatprep.subr.mxu0 0.0
        %3738 = vmatpush1.msra.mxu0 0.0
        %3739 = vmatprep.subr.mxu0 0.0
        %3740 = vmatpush1.msra.mxu0 0.0
        %3741 = vmatprep.subr.mxu0 0.0
        %3742 = vmatpush1.msra.mxu0 0.0
        %3743 = vmatprep.subr.mxu0 0.0
        %v3744 = vand.u32 %v1138, 4294901760
        %v3745 = vsub.f32 %v1138, %v3744
        %v3746 = vand.u32 %v3745, 4294901760
        %v3747 = vsub.f32 %v3745, %v3746
        %v3748 = vand.u32 %v3747, 4294901760
        %3749 = vmatpush1.msra.mxu0 %v3748
        %3750 = vmatprep.subr.mxu0 0.0
        %v3751 = vand.u32 %v1132, 4294901760
        %v3752 = vsub.f32 %v1132, %v3751
        %v3753 = vand.u32 %v3752, 4294901760
        %v3754 = vsub.f32 %v3752, %v3753
        %v3755 = vand.u32 %v3754, 4294901760
        %3756 = vmatpush1.msra.mxu0 %v3755
        %3757 = vmatprep.subr.mxu0 0.0
        %v3758 = vand.u32 %v1126, 4294901760
        %v3759 = vsub.f32 %v1126, %v3758
        %v3760 = vand.u32 %v3759, 4294901760
        %v3761 = vsub.f32 %v3759, %v3760
        %v3762 = vand.u32 %v3761, 4294901760
        %3763 = vmatpush1.msra.mxu0 %v3762
        %3764 = vmatprep.subr.mxu0 0.0
        %v3765 = vand.u32 %v1120, 4294901760
        %v3766 = vsub.f32 %v1120, %v3765
        %v3767 = vand.u32 %v3766, 4294901760
        %v3768 = vsub.f32 %v3766, %v3767
        %v3769 = vand.u32 %v3768, 4294901760
        %3770 = vmatpush1.msra.mxu0 %v3769
        %3771 = vmatprep.subr.mxu0 0.0
        %3772 = vmatpush2.msra.mxu0 0.0
        %3773 = vmatprep.subr.mxu0 0.0
        %3774 = vmatpush2.msra.mxu0 0.0
        %3775 = vmatprep.subr.mxu0 0.0
        %3776 = vmatpush2.msra.mxu0 0.0
        %3777 = vmatprep.subr.mxu0 0.0
        %3778 = vmatpush2.msra.mxu0 0.0
        %3779 = vmatprep.subr.mxu0 0.0
        %3780 = vmatpush2.msra.mxu0 0.0
        %3781 = vmatprep.subr.mxu0 0.0
        %3782 = vmatpush2.msra.mxu0 0.0
        %3783 = vmatprep.subr.mxu0 0.0
        %3784 = vmatpush2.msra.mxu0 0.0
        %3785 = vmatprep.subr.mxu0 0.0
        %3786 = vmatpush2.msra.mxu0 0.0
        %3787 = vmatprep.subr.mxu0 0.0
        %3788 = vmatpush2.msra.mxu0 0.0
        %3789 = vmatprep.subr.mxu0 0.0
        %3790 = vmatpush2.msra.mxu0 0.0
        %3791 = vmatprep.subr.mxu0 0.0
        %3792 = vmatpush2.msra.mxu0 0.0
        %3793 = vmatprep.subr.mxu0 0.0
        %3794 = vmatpush2.msra.mxu0 0.0
        %3795 = vmatprep.subr.mxu0 0.0
        %3796 = vmatpush2.msra.mxu0 0.0
        %3797 = vmatprep.subr.mxu0 0.0
        %3798 = vmatpush2.msra.mxu0 0.0
        %3799 = vmatprep.subr.mxu0 0.0
        %3800 = vmatpush2.msra.mxu0 0.0
        %3801 = vmatprep.subr.mxu0 0.0
        %3802 = vmatpush2.msra.mxu0 0.0
        %3803 = vmatprep.mubr.f32.mxu0 0.0
        %v3804 = vand.u32 %v1745, 4294901760
        %3805 = vmatmul.mubr.f32.gmra.mxu0 %v3804
        %v3806 = vpop.f32.mrf.mxu0
        %v3807 = vadd.f32 %v3686, %v3806
        %v3808 = vpop.f32.mrf.mxu0
        %3809 = vmatprep.mubr.f32.mxu0 0.0
        %v3810 = vand.u32 %v1748, 4294901760
        %3811 = vmatmul.mubr.f32.gmra.mxu0 %v3810
        %v3812 = vpop.f32.mrf.mxu0
        %v3813 = vadd.f32 %v3696, %v3812
        %v3814 = vpop.f32.mrf.mxu0
        %3815 = vmatprep.mubr.f32.mxu0 0.0
        %v3816 = vand.u32 %v1751, 4294901760
        %3817 = vmatmul.mubr.f32.gmra.mxu0 %v3816
        %v3818 = vpop.f32.mrf.mxu0
        %v3819 = vadd.f32 %v3706, %v3818
        %v3820 = vpop.f32.mrf.mxu0
        %3821 = vmatprep.mubr.f32.mxu0 0.0
        %v3822 = vand.u32 %v1754, 4294901760
        %3823 = vmatmul.mubr.f32.gmra.mxu0 %v3822
        %v3824 = vpop.f32.mrf.mxu0
        %v3825 = vadd.f32 %v3716, %v3824
        %v3826 = vpop.f32.mrf.mxu0
        %3827 = vdwg.mxu0
        %3828 = vmatprep.subr.mxu0 0.0
        %3829 = vmatpush1.msra.mxu0 0.0
        %3830 = vmatprep.subr.mxu0 0.0
        %3831 = vmatpush1.msra.mxu0 0.0
        %3832 = vmatprep.subr.mxu0 0.0
        %3833 = vmatpush1.msra.mxu0 0.0
        %3834 = vmatprep.subr.mxu0 0.0
        %3835 = vmatpush1.msra.mxu0 0.0
        %3836 = vmatprep.subr.mxu0 0.0
        %3837 = vmatpush1.msra.mxu0 0.0
        %3838 = vmatprep.subr.mxu0 0.0
        %3839 = vmatpush1.msra.mxu0 0.0
        %3840 = vmatprep.subr.mxu0 0.0
        %3841 = vmatpush1.msra.mxu0 0.0
        %3842 = vmatprep.subr.mxu0 0.0
        %3843 = vmatpush1.msra.mxu0 0.0
        %3844 = vmatprep.subr.mxu0 0.0
        %3845 = vmatpush1.msra.mxu0 0.0
        %3846 = vmatprep.subr.mxu0 0.0
        %3847 = vmatpush1.msra.mxu0 0.0
        %3848 = vmatprep.subr.mxu0 0.0
        %3849 = vmatpush1.msra.mxu0 0.0
        %3850 = vmatprep.subr.mxu0 0.0
        %3851 = vmatpush1.msra.mxu0 0.0
        %3852 = vmatprep.subr.mxu0 0.0
        %v3853 = vand.u32 %v1138, 4294901760
        %v3854 = vsub.f32 %v1138, %v3853
        %3855 = vmatpush1.msra.mxu0 %v3854
        %3856 = vmatprep.subr.mxu0 0.0
        %v3857 = vand.u32 %v1132, 4294901760
        %v3858 = vsub.f32 %v1132, %v3857
        %3859 = vmatpush1.msra.mxu0 %v3858
        %3860 = vmatprep.subr.mxu0 0.0
        %v3861 = vand.u32 %v1126, 4294901760
        %v3862 = vsub.f32 %v1126, %v3861
        %3863 = vmatpush1.msra.mxu0 %v3862
        %3864 = vmatprep.subr.mxu0 0.0
        %v3865 = vand.u32 %v1120, 4294901760
        %v3866 = vsub.f32 %v1120, %v3865
        %3867 = vmatpush1.msra.mxu0 %v3866
        %3868 = vmatprep.subr.mxu0 0.0
        %3869 = vmatpush2.msra.mxu0 0.0
        %3870 = vmatprep.subr.mxu0 0.0
        %3871 = vmatpush2.msra.mxu0 0.0
        %3872 = vmatprep.subr.mxu0 0.0
        %3873 = vmatpush2.msra.mxu0 0.0
        %3874 = vmatprep.subr.mxu0 0.0
        %3875 = vmatpush2.msra.mxu0 0.0
        %3876 = vmatprep.subr.mxu0 0.0
        %3877 = vmatpush2.msra.mxu0 0.0
        %3878 = vmatprep.subr.mxu0 0.0
        %3879 = vmatpush2.msra.mxu0 0.0
        %3880 = vmatprep.subr.mxu0 0.0
        %3881 = vmatpush2.msra.mxu0 0.0
        %3882 = vmatprep.subr.mxu0 0.0
        %3883 = vmatpush2.msra.mxu0 0.0
        %3884 = vmatprep.subr.mxu0 0.0
        %3885 = vmatpush2.msra.mxu0 0.0
        %3886 = vmatprep.subr.mxu0 0.0
        %3887 = vmatpush2.msra.mxu0 0.0
        %3888 = vmatprep.subr.mxu0 0.0
        %3889 = vmatpush2.msra.mxu0 0.0
        %3890 = vmatprep.subr.mxu0 0.0
        %3891 = vmatpush2.msra.mxu0 0.0
        %3892 = vmatprep.subr.mxu0 0.0
        %3893 = vmatpush2.msra.mxu0 0.0
        %3894 = vmatprep.subr.mxu0 0.0
        %3895 = vmatpush2.msra.mxu0 0.0
        %3896 = vmatprep.subr.mxu0 0.0
        %3897 = vmatpush2.msra.mxu0 0.0
        %3898 = vmatprep.subr.mxu0 0.0
        %3899 = vmatpush2.msra.mxu0 0.0
        %3900 = vmatprep.mubr.f32.mxu0 0.0
        %v3901 = vand.u32 %v1745, 4294901760
        %v3902 = vsub.f32 %v1745, %v3901
        %3903 = vmatmul.mubr.f32.gmra.mxu0 %v3902
        %v3904 = vpop.f32.mrf.mxu0
        %v3905 = vadd.f32 %v3807, %v3904
        %v3906 = vpop.f32.mrf.mxu0
        %3907 = vmatprep.mubr.f32.mxu0 0.0
        %v3908 = vand.u32 %v1748, 4294901760
        %v3909 = vsub.f32 %v1748, %v3908
        %3910 = vmatmul.mubr.f32.gmra.mxu0 %v3909
        %v3911 = vpop.f32.mrf.mxu0
        %v3912 = vadd.f32 %v3813, %v3911
        %v3913 = vpop.f32.mrf.mxu0
        %3914 = vmatprep.mubr.f32.mxu0 0.0
        %v3915 = vand.u32 %v1751, 4294901760
        %v3916 = vsub.f32 %v1751, %v3915
        %3917 = vmatmul.mubr.f32.gmra.mxu0 %v3916
        %v3918 = vpop.f32.mrf.mxu0
        %v3919 = vadd.f32 %v3819, %v3918
        %v3920 = vpop.f32.mrf.mxu0
        %3921 = vmatprep.mubr.f32.mxu0 0.0
        %v3922 = vand.u32 %v1754, 4294901760
        %v3923 = vsub.f32 %v1754, %v3922
        %3924 = vmatmul.mubr.f32.gmra.mxu0 %v3923
        %v3925 = vpop.f32.mrf.mxu0
        %v3926 = vadd.f32 %v3825, %v3925
        %v3927 = vpop.f32.mrf.mxu0
        %3928 = vdwg.mxu0
        %3929 = vmatprep.subr.mxu0 0.0
        %3930 = vmatpush1.msra.mxu0 0.0
        %3931 = vmatprep.subr.mxu0 0.0
        %3932 = vmatpush1.msra.mxu0 0.0
        %3933 = vmatprep.subr.mxu0 0.0
        %3934 = vmatpush1.msra.mxu0 0.0
        %3935 = vmatprep.subr.mxu0 0.0
        %3936 = vmatpush1.msra.mxu0 0.0
        %3937 = vmatprep.subr.mxu0 0.0
        %3938 = vmatpush1.msra.mxu0 0.0
        %3939 = vmatprep.subr.mxu0 0.0
        %3940 = vmatpush1.msra.mxu0 0.0
        %3941 = vmatprep.subr.mxu0 0.0
        %3942 = vmatpush1.msra.mxu0 0.0
        %3943 = vmatprep.subr.mxu0 0.0
        %3944 = vmatpush1.msra.mxu0 0.0
        %3945 = vmatprep.subr.mxu0 0.0
        %3946 = vmatpush1.msra.mxu0 0.0
        %3947 = vmatprep.subr.mxu0 0.0
        %3948 = vmatpush1.msra.mxu0 0.0
        %3949 = vmatprep.subr.mxu0 0.0
        %3950 = vmatpush1.msra.mxu0 0.0
        %3951 = vmatprep.subr.mxu0 0.0
        %3952 = vmatpush1.msra.mxu0 0.0
        %3953 = vmatprep.subr.mxu0 0.0
        %v3954 = vand.u32 %v1138, 4294901760
        %3955 = vmatpush1.msra.mxu0 %v3954
        %3956 = vmatprep.subr.mxu0 0.0
        %v3957 = vand.u32 %v1132, 4294901760
        %3958 = vmatpush1.msra.mxu0 %v3957
        %3959 = vmatprep.subr.mxu0 0.0
        %v3960 = vand.u32 %v1126, 4294901760
        %3961 = vmatpush1.msra.mxu0 %v3960
        %3962 = vmatprep.subr.mxu0 0.0
        %v3963 = vand.u32 %v1120, 4294901760
        %3964 = vmatpush1.msra.mxu0 %v3963
        %3965 = vmatprep.subr.mxu0 0.0
        %3966 = vmatpush2.msra.mxu0 0.0
        %3967 = vmatprep.subr.mxu0 0.0
        %3968 = vmatpush2.msra.mxu0 0.0
        %3969 = vmatprep.subr.mxu0 0.0
        %3970 = vmatpush2.msra.mxu0 0.0
        %3971 = vmatprep.subr.mxu0 0.0
        %3972 = vmatpush2.msra.mxu0 0.0
        %3973 = vmatprep.subr.mxu0 0.0
        %3974 = vmatpush2.msra.mxu0 0.0
        %3975 = vmatprep.subr.mxu0 0.0
        %3976 = vmatpush2.msra.mxu0 0.0
        %3977 = vmatprep.subr.mxu0 0.0
        %3978 = vmatpush2.msra.mxu0 0.0
        %3979 = vmatprep.subr.mxu0 0.0
        %3980 = vmatpush2.msra.mxu0 0.0
        %3981 = vmatprep.subr.mxu0 0.0
        %3982 = vmatpush2.msra.mxu0 0.0
        %3983 = vmatprep.subr.mxu0 0.0
        %3984 = vmatpush2.msra.mxu0 0.0
        %3985 = vmatprep.subr.mxu0 0.0
        %3986 = vmatpush2.msra.mxu0 0.0
        %3987 = vmatprep.subr.mxu0 0.0
        %3988 = vmatpush2.msra.mxu0 0.0
        %3989 = vmatprep.subr.mxu0 0.0
        %3990 = vmatpush2.msra.mxu0 0.0
        %3991 = vmatprep.subr.mxu0 0.0
        %3992 = vmatpush2.msra.mxu0 0.0
        %3993 = vmatprep.subr.mxu0 0.0
        %3994 = vmatpush2.msra.mxu0 0.0
        %3995 = vmatprep.subr.mxu0 0.0
        %3996 = vmatpush2.msra.mxu0 0.0
        %3997 = vmatprep.mubr.f32.mxu0 0.0
        %v3998 = vand.u32 %v1745, 4294901760
        %v3999 = vsub.f32 %v1745, %v3998
        %v4000 = vand.u32 %v3999, 4294901760
        %4001 = vmatmul.mubr.f32.gmra.mxu0 %v4000
        %v4002 = vpop.f32.mrf.mxu0
        %v4003 = vadd.f32 %v3905, %v4002
        %v4004 = vpop.f32.mrf.mxu0
        %4005 = vmatprep.mubr.f32.mxu0 0.0
        %v4006 = vand.u32 %v1748, 4294901760
        %v4007 = vsub.f32 %v1748, %v4006
        %v4008 = vand.u32 %v4007, 4294901760
        %4009 = vmatmul.mubr.f32.gmra.mxu0 %v4008
        %v4010 = vpop.f32.mrf.mxu0
        %v4011 = vadd.f32 %v3912, %v4010
        %v4012 = vpop.f32.mrf.mxu0
        %4013 = vmatprep.mubr.f32.mxu0 0.0
        %v4014 = vand.u32 %v1751, 4294901760
        %v4015 = vsub.f32 %v1751, %v4014
        %v4016 = vand.u32 %v4015, 4294901760
        %4017 = vmatmul.mubr.f32.gmra.mxu0 %v4016
        %v4018 = vpop.f32.mrf.mxu0
        %v4019 = vadd.f32 %v3919, %v4018
        %v4020 = vpop.f32.mrf.mxu0
        %4021 = vmatprep.mubr.f32.mxu0 0.0
        %v4022 = vand.u32 %v1754, 4294901760
        %v4023 = vsub.f32 %v1754, %v4022
        %v4024 = vand.u32 %v4023, 4294901760
        %4025 = vmatmul.mubr.f32.gmra.mxu0 %v4024
        %v4026 = vpop.f32.mrf.mxu0
        %v4027 = vadd.f32 %v3926, %v4026
        %v4028 = vpop.f32.mrf.mxu0
        %4029 = vdwg.mxu0
        %4030 = vmatprep.subr.mxu0 0.0
        %4031 = vmatpush1.msra.mxu0 0.0
        %4032 = vmatprep.subr.mxu0 0.0
        %4033 = vmatpush1.msra.mxu0 0.0
        %4034 = vmatprep.subr.mxu0 0.0
        %4035 = vmatpush1.msra.mxu0 0.0
        %4036 = vmatprep.subr.mxu0 0.0
        %4037 = vmatpush1.msra.mxu0 0.0
        %4038 = vmatprep.subr.mxu0 0.0
        %4039 = vmatpush1.msra.mxu0 0.0
        %4040 = vmatprep.subr.mxu0 0.0
        %4041 = vmatpush1.msra.mxu0 0.0
        %4042 = vmatprep.subr.mxu0 0.0
        %4043 = vmatpush1.msra.mxu0 0.0
        %4044 = vmatprep.subr.mxu0 0.0
        %4045 = vmatpush1.msra.mxu0 0.0
        %4046 = vmatprep.subr.mxu0 0.0
        %4047 = vmatpush1.msra.mxu0 0.0
        %4048 = vmatprep.subr.mxu0 0.0
        %4049 = vmatpush1.msra.mxu0 0.0
        %4050 = vmatprep.subr.mxu0 0.0
        %4051 = vmatpush1.msra.mxu0 0.0
        %4052 = vmatprep.subr.mxu0 0.0
        %4053 = vmatpush1.msra.mxu0 0.0
        %4054 = vmatprep.subr.mxu0 0.0
        %v4055 = vand.u32 %v1138, 4294901760
        %v4056 = vsub.f32 %v1138, %v4055
        %v4057 = vand.u32 %v4056, 4294901760
        %4058 = vmatpush1.msra.mxu0 %v4057
        %4059 = vmatprep.subr.mxu0 0.0
        %v4060 = vand.u32 %v1132, 4294901760
        %v4061 = vsub.f32 %v1132, %v4060
        %v4062 = vand.u32 %v4061, 4294901760
        %4063 = vmatpush1.msra.mxu0 %v4062
        %4064 = vmatprep.subr.mxu0 0.0
        %v4065 = vand.u32 %v1126, 4294901760
        %v4066 = vsub.f32 %v1126, %v4065
        %v4067 = vand.u32 %v4066, 4294901760
        %4068 = vmatpush1.msra.mxu0 %v4067
        %4069 = vmatprep.subr.mxu0 0.0
        %v4070 = vand.u32 %v1120, 4294901760
        %v4071 = vsub.f32 %v1120, %v4070
        %v4072 = vand.u32 %v4071, 4294901760
        %4073 = vmatpush1.msra.mxu0 %v4072
        %4074 = vmatprep.subr.mxu0 0.0
        %4075 = vmatpush2.msra.mxu0 0.0
        %4076 = vmatprep.subr.mxu0 0.0
        %4077 = vmatpush2.msra.mxu0 0.0
        %4078 = vmatprep.subr.mxu0 0.0
        %4079 = vmatpush2.msra.mxu0 0.0
        %4080 = vmatprep.subr.mxu0 0.0
        %4081 = vmatpush2.msra.mxu0 0.0
        %4082 = vmatprep.subr.mxu0 0.0
        %4083 = vmatpush2.msra.mxu0 0.0
        %4084 = vmatprep.subr.mxu0 0.0
        %4085 = vmatpush2.msra.mxu0 0.0
        %4086 = vmatprep.subr.mxu0 0.0
        %4087 = vmatpush2.msra.mxu0 0.0
        %4088 = vmatprep.subr.mxu0 0.0
        %4089 = vmatpush2.msra.mxu0 0.0
        %4090 = vmatprep.subr.mxu0 0.0
        %4091 = vmatpush2.msra.mxu0 0.0
        %4092 = vmatprep.subr.mxu0 0.0
        %4093 = vmatpush2.msra.mxu0 0.0
        %4094 = vmatprep.subr.mxu0 0.0
        %4095 = vmatpush2.msra.mxu0 0.0
        %4096 = vmatprep.subr.mxu0 0.0
        %4097 = vmatpush2.msra.mxu0 0.0
        %4098 = vmatprep.subr.mxu0 0.0
        %4099 = vmatpush2.msra.mxu0 0.0
        %4100 = vmatprep.subr.mxu0 0.0
        %4101 = vmatpush2.msra.mxu0 0.0
        %4102 = vmatprep.subr.mxu0 0.0
        %4103 = vmatpush2.msra.mxu0 0.0
        %4104 = vmatprep.subr.mxu0 0.0
        %4105 = vmatpush2.msra.mxu0 0.0
        %4106 = vmatprep.mubr.f32.mxu0 0.0
        %v4107 = vand.u32 %v1745, 4294901760
        %4108 = vmatmul.mubr.f32.gmra.mxu0 %v4107
        %v4109 = vpop.f32.mrf.mxu0
        %v4110 = vadd.f32 %v4003, %v4109
        %v4111 = vpop.f32.mrf.mxu0
        %4112 = vmatprep.mubr.f32.mxu0 0.0
        %v4113 = vand.u32 %v1748, 4294901760
        %4114 = vmatmul.mubr.f32.gmra.mxu0 %v4113
        %v4115 = vpop.f32.mrf.mxu0
        %v4116 = vadd.f32 %v4011, %v4115
        %v4117 = vpop.f32.mrf.mxu0
        %4118 = vmatprep.mubr.f32.mxu0 0.0
        %v4119 = vand.u32 %v1751, 4294901760
        %4120 = vmatmul.mubr.f32.gmra.mxu0 %v4119
        %v4121 = vpop.f32.mrf.mxu0
        %v4122 = vadd.f32 %v4019, %v4121
        %v4123 = vpop.f32.mrf.mxu0
        %4124 = vmatprep.mubr.f32.mxu0 0.0
        %v4125 = vand.u32 %v1754, 4294901760
        %4126 = vmatmul.mubr.f32.gmra.mxu0 %v4125
        %v4127 = vpop.f32.mrf.mxu0
        %v4128 = vadd.f32 %v4027, %v4127
        %v4129 = vpop.f32.mrf.mxu0
        %4130 = vdwg.mxu0
        %4131 = vmatprep.subr.mxu0 0.0
        %4132 = vmatpush1.msra.mxu0 0.0
        %4133 = vmatprep.subr.mxu0 0.0
        %4134 = vmatpush1.msra.mxu0 0.0
        %4135 = vmatprep.subr.mxu0 0.0
        %4136 = vmatpush1.msra.mxu0 0.0
        %4137 = vmatprep.subr.mxu0 0.0
        %4138 = vmatpush1.msra.mxu0 0.0
        %4139 = vmatprep.subr.mxu0 0.0
        %4140 = vmatpush1.msra.mxu0 0.0
        %4141 = vmatprep.subr.mxu0 0.0
        %4142 = vmatpush1.msra.mxu0 0.0
        %4143 = vmatprep.subr.mxu0 0.0
        %4144 = vmatpush1.msra.mxu0 0.0
        %4145 = vmatprep.subr.mxu0 0.0
        %4146 = vmatpush1.msra.mxu0 0.0
        %4147 = vmatprep.subr.mxu0 0.0
        %4148 = vmatpush1.msra.mxu0 0.0
        %4149 = vmatprep.subr.mxu0 0.0
        %4150 = vmatpush1.msra.mxu0 0.0
        %4151 = vmatprep.subr.mxu0 0.0
        %4152 = vmatpush1.msra.mxu0 0.0
        %4153 = vmatprep.subr.mxu0 0.0
        %4154 = vmatpush1.msra.mxu0 0.0
        %4155 = vmatprep.subr.mxu0 0.0
        %v4156 = vand.u32 %v1138, 4294901760
        %4157 = vmatpush1.msra.mxu0 %v4156
        %4158 = vmatprep.subr.mxu0 0.0
        %v4159 = vand.u32 %v1132, 4294901760
        %4160 = vmatpush1.msra.mxu0 %v4159
        %4161 = vmatprep.subr.mxu0 0.0
        %v4162 = vand.u32 %v1126, 4294901760
        %4163 = vmatpush1.msra.mxu0 %v4162
        %4164 = vmatprep.subr.mxu0 0.0
        %v4165 = vand.u32 %v1120, 4294901760
        %4166 = vmatpush1.msra.mxu0 %v4165
        %4167 = vmatprep.subr.mxu0 0.0
        %4168 = vmatpush2.msra.mxu0 0.0
        %4169 = vmatprep.subr.mxu0 0.0
        %4170 = vmatpush2.msra.mxu0 0.0
        %4171 = vmatprep.subr.mxu0 0.0
        %4172 = vmatpush2.msra.mxu0 0.0
        %4173 = vmatprep.subr.mxu0 0.0
        %4174 = vmatpush2.msra.mxu0 0.0
        %4175 = vmatprep.subr.mxu0 0.0
        %4176 = vmatpush2.msra.mxu0 0.0
        %4177 = vmatprep.subr.mxu0 0.0
        %4178 = vmatpush2.msra.mxu0 0.0
        %4179 = vmatprep.subr.mxu0 0.0
        %4180 = vmatpush2.msra.mxu0 0.0
        %4181 = vmatprep.subr.mxu0 0.0
        %4182 = vmatpush2.msra.mxu0 0.0
        %4183 = vmatprep.subr.mxu0 0.0
        %4184 = vmatpush2.msra.mxu0 0.0
        %4185 = vmatprep.subr.mxu0 0.0
        %4186 = vmatpush2.msra.mxu0 0.0
        %4187 = vmatprep.subr.mxu0 0.0
        %4188 = vmatpush2.msra.mxu0 0.0
        %4189 = vmatprep.subr.mxu0 0.0
        %4190 = vmatpush2.msra.mxu0 0.0
        %4191 = vmatprep.subr.mxu0 0.0
        %4192 = vmatpush2.msra.mxu0 0.0
        %4193 = vmatprep.subr.mxu0 0.0
        %4194 = vmatpush2.msra.mxu0 0.0
        %4195 = vmatprep.subr.mxu0 0.0
        %4196 = vmatpush2.msra.mxu0 0.0
        %4197 = vmatprep.subr.mxu0 0.0
        %4198 = vmatpush2.msra.mxu0 0.0
        %4199 = vmatprep.mubr.f32.mxu0 0.0
        %v4200 = vand.u32 %v1745, 4294901760
        %4201 = vmatmul.mubr.f32.gmra.mxu0 %v4200
        %v4202 = vpop.f32.mrf.mxu0
        %v4203 = vadd.f32 %v4110, %v4202
        %v4204 = vpop.f32.mrf.mxu0
        %4205 = vmatprep.mubr.f32.mxu0 0.0
        %v4206 = vand.u32 %v1748, 4294901760
        %4207 = vmatmul.mubr.f32.gmra.mxu0 %v4206
        %v4208 = vpop.f32.mrf.mxu0
        %v4209 = vadd.f32 %v4116, %v4208
        %v4210 = vpop.f32.mrf.mxu0
        %4211 = vmatprep.mubr.f32.mxu0 0.0
        %v4212 = vand.u32 %v1751, 4294901760
        %4213 = vmatmul.mubr.f32.gmra.mxu0 %v4212
        %v4214 = vpop.f32.mrf.mxu0
        %v4215 = vadd.f32 %v4122, %v4214
        %v4216 = vpop.f32.mrf.mxu0
        %4217 = vmatprep.mubr.f32.mxu0 0.0
        %v4218 = vand.u32 %v1754, 4294901760
        %4219 = vmatmul.mubr.f32.gmra.mxu0 %v4218
        %v4220 = vpop.f32.mrf.mxu0
        %v4221 = vadd.f32 %v4128, %v4220
        %v4222 = vpop.f32.mrf.mxu0
        %4223 = vdwg.mxu0
        %v4224 = vsub.f32 %v3589, %v4203
        %v4225 = vsub.f32 %v3595, %v4209
        %v4226 = vsub.f32 %v3601, %v4215
        %v4227 = vsub.f32 %v3607, %v4221
        %v4228 = vand.u32 2147483647, %v2975
        %v4229 = vand.u32 2147483647, %v2981
        %v4230 = vand.u32 2147483647, %v2987
        %v4231 = vand.u32 2147483647, %v2993
        %v4232 = vand.u32 2147483647, %v4224
        %v4233 = vand.u32 2147483647, %v4225
        %v4234 = vand.u32 2147483647, %v4226
        %v4235 = vand.u32 2147483647, %v4227
        %v4236 = vmax.f32 %v4228, %v4232
        %v4237 = vmax.f32 %v4229, %v4233
        %v4238 = vmax.f32 %v4230, %v4234
        %v4239 = vmax.f32 %v4231, %v4235
        %v4240 = vmin.f32 %v4228, %v4232
        %v4241 = vmin.f32 %v4229, %v4233
        %v4242 = vmin.f32 %v4230, %v4234
        %v4243 = vmin.f32 %v4231, %v4235
        %vm4244 = vcmp.gt.f32.partialorder %v4236, 0.0
        %vm4245 = vcmp.gt.f32.partialorder %v4237, 0.0
        %vm4246 = vcmp.gt.f32.partialorder %v4238, 0.0
        %vm4247 = vcmp.gt.f32.partialorder %v4239, 0.0
        %v4248 = vsel %vm4244, %v4236, 1.0
        %v4249 = vsel %vm4245, %v4237, 1.0
        %v4250 = vsel %vm4246, %v4238, 1.0
        %v4251 = vsel %vm4247, %v4239, 1.0
        %v4252 = vrcp.pop %v4248
        %v4253 = vmul.f32 %v4240, %v4252
        %v4254 = vrcp.pop %v4249
        %v4255 = vmul.f32 %v4241, %v4254
        %v4256 = vrcp.pop %v4250
        %v4257 = vmul.f32 %v4242, %v4256
        %v4258 = vrcp.pop %v4251
        %v4259 = vmul.f32 %v4243, %v4258
        %vm4260 = vcmp.gt.f32.partialorder %v4253, 0.41421357
        %vm4261 = vcmp.gt.f32.partialorder %v4255, 0.41421357
        %vm4262 = vcmp.gt.f32.partialorder %v4257, 0.41421357
        %vm4263 = vcmp.gt.f32.partialorder %v4259, 0.41421357
        %v4264 = vsub.f32 %v4253, 1.0
        %v4265 = vsub.f32 %v4255, 1.0
        %v4266 = vsub.f32 %v4257, 1.0
        %v4267 = vsub.f32 %v4259, 1.0
        %v4268 = vadd.f32 %v4253, 1.0
        %v4269 = vadd.f32 %v4255, 1.0
        %v4270 = vadd.f32 %v4257, 1.0
        %v4271 = vadd.f32 %v4259, 1.0
        %v4272 = vrcp.pop %v4268
        %v4273 = vmul.f32 %v4264, %v4272
        %v4274 = vrcp.pop %v4269
        %v4275 = vmul.f32 %v4265, %v4274
        %v4276 = vrcp.pop %v4270
        %v4277 = vmul.f32 %v4266, %v4276
        %v4278 = vrcp.pop %v4271
        %v4279 = vmul.f32 %v4267, %v4278
        %v4280 = vsel %vm4260, %v4273, %v4253
        %v4281 = vsel %vm4261, %v4275, %v4255
        %v4282 = vsel %vm4262, %v4277, %v4257
        %v4283 = vsel %vm4263, %v4279, %v4259
        %v4284 = vmul.f32 %v4280, %v4280
        %v4285 = vmul.f32 %v4281, %v4281
        %v4286 = vmul.f32 %v4282, %v4282
        %v4287 = vmul.f32 %v4283, %v4283
        %v4288 = vmul.f32 %v4284, 0.080537446
        %v4289 = vmul.f32 %v4285, 0.080537446
        %v4290 = vmul.f32 %v4286, 0.080537446
        %v4291 = vmul.f32 %v4287, 0.080537446
        %v4292 = vsub.f32 %v4288, 0.13877685
        %v4293 = vsub.f32 %v4289, 0.13877685
        %v4294 = vsub.f32 %v4290, 0.13877685
        %v4295 = vsub.f32 %v4291, 0.13877685
        %v4296 = vmul.f32 %v4292, %v4284
        %v4297 = vmul.f32 %v4293, %v4285
        %v4298 = vmul.f32 %v4294, %v4286
        %v4299 = vmul.f32 %v4295, %v4287
        %v4300 = vadd.f32 %v4296, 0.19977711
        %v4301 = vadd.f32 %v4297, 0.19977711
        %v4302 = vadd.f32 %v4298, 0.19977711
        %v4303 = vadd.f32 %v4299, 0.19977711
        %v4304 = vmul.f32 %v4300, %v4284
        %v4305 = vmul.f32 %v4301, %v4285
        %v4306 = vmul.f32 %v4302, %v4286
        %v4307 = vmul.f32 %v4303, %v4287
        %v4308 = vsub.f32 %v4304, 0.3333295
        %v4309 = vsub.f32 %v4305, 0.3333295
        %v4310 = vsub.f32 %v4306, 0.3333295
        %v4311 = vsub.f32 %v4307, 0.3333295
        %v4312 = vmul.f32 %v4308, %v4284
        %v4313 = vmul.f32 %v4309, %v4285
        %v4314 = vmul.f32 %v4310, %v4286
        %v4315 = vmul.f32 %v4311, %v4287
        %v4316 = vmul.f32 %v4312, %v4280
        %v4317 = vmul.f32 %v4313, %v4281
        %v4318 = vmul.f32 %v4314, %v4282
        %v4319 = vmul.f32 %v4315, %v4283
        %v4320 = vadd.f32 %v4316, %v4280
        %v4321 = vadd.f32 %v4317, %v4281
        %v4322 = vadd.f32 %v4318, %v4282
        %v4323 = vadd.f32 %v4319, %v4283
        %v4324 = vadd.f32 %v4320, 0.7853982
        %v4325 = vadd.f32 %v4321, 0.7853982
        %v4326 = vadd.f32 %v4322, 0.7853982
        %v4327 = vadd.f32 %v4323, 0.7853982
        %v4328 = vsel %vm4260, %v4324, %v4320
        %v4329 = vsel %vm4261, %v4325, %v4321
        %v4330 = vsel %vm4262, %v4326, %v4322
        %v4331 = vsel %vm4263, %v4327, %v4323
        %vm4332 = vcmp.gt.f32.partialorder %v4232, %v4228
        %vm4333 = vcmp.gt.f32.partialorder %v4233, %v4229
        %vm4334 = vcmp.gt.f32.partialorder %v4234, %v4230
        %vm4335 = vcmp.gt.f32.partialorder %v4235, %v4231
        %v4336 = vsub.f32 1.5707964, %v4328
        %v4337 = vsub.f32 1.5707964, %v4329
        %v4338 = vsub.f32 1.5707964, %v4330
        %v4339 = vsub.f32 1.5707964, %v4331
        %v4340 = vsel %vm4332, %v4336, %v4328
        %v4341 = vsel %vm4333, %v4337, %v4329
        %v4342 = vsel %vm4334, %v4338, %v4330
        %v4343 = vsel %vm4335, %v4339, %v4331
        %vm4344 = vcmp.lt.f32.partialorder %v2975, 0.0
        %vm4345 = vcmp.lt.f32.partialorder %v2981, 0.0
        %vm4346 = vcmp.lt.f32.partialorder %v2987, 0.0
        %vm4347 = vcmp.lt.f32.partialorder %v2993, 0.0
        %v4348 = vsub.f32 3.1415927, %v4340
        %v4349 = vsub.f32 3.1415927, %v4341
        %v4350 = vsub.f32 3.1415927, %v4342
        %v4351 = vsub.f32 3.1415927, %v4343
        %v4352 = vsel %vm4344, %v4348, %v4340
        %v4353 = vsel %vm4345, %v4349, %v4341
        %v4354 = vsel %vm4346, %v4350, %v4342
        %v4355 = vsel %vm4347, %v4351, %v4343
        %vm4356 = vcmp.lt.f32.partialorder %v4224, 0.0
        %vm4357 = vcmp.lt.f32.partialorder %v4225, 0.0
        %vm4358 = vcmp.lt.f32.partialorder %v4226, 0.0
        %vm4359 = vcmp.lt.f32.partialorder %v4227, 0.0
        %v4360 = vsub.f32 0.0, %v4352
        %v4361 = vsub.f32 0.0, %v4353
        %v4362 = vsub.f32 0.0, %v4354
        %v4363 = vsub.f32 0.0, %v4355
        %v4364 = vsel %vm4356, %v4360, %v4352
        %v4365 = vsel %vm4357, %v4361, %v4353
        %v4366 = vsel %vm4358, %v4362, %v4354
        %v4367 = vsel %vm4359, %v4363, %v4355
        %4368 = vst [vmem:[%s528] sm:$0xff] %v4364
        %4369 = vst [vmem:[%s528 + $0x8] sm:$0xff] %v4365
        %4370 = vst [vmem:[%s528 + $0x10] sm:$0xff] %v4366
        %4371 = vst [vmem:[%s528 + $0x18] sm:$0xff] %v4367
        %v4372 = vlaneseq
        %v4373 = vshrl.u32 %v4372, 7
        %v4374 = vadd.s32 %v4373, 8
        %v4375 = vadd.s32 %v4373, 16
        %v4376 = vadd.s32 %v4373, 24
        %v4377 = vlaneseq
        %v4378 = vand.u32 %v4377, 127
        %vm4379 = vcmp.lt.s32.totalorder %v4378, 9
        %vm4380 = vcmp.eq.s32.totalorder %v4373, 0
        %vm4381 = vcmp.eq.s32.totalorder %v4374, 0
        %vm4382 = vcmp.eq.s32.totalorder %v4375, 0
        %vm4383 = vcmp.eq.s32.totalorder %v4376, 0
        %vm4384 = vcmp.eq.s32.totalorder %v4373, 15
        %vm4385 = vcmp.eq.s32.totalorder %v4374, 15
        %vm4386 = vcmp.eq.s32.totalorder %v4375, 15
        %vm4387 = vcmp.eq.s32.totalorder %v4376, 15
        %vm4388 = vcmp.eq.s32.totalorder %v4373, 16
        %vm4389 = vcmp.eq.s32.totalorder %v4374, 16
        %vm4390 = vcmp.eq.s32.totalorder %v4375, 16
        %vm4391 = vcmp.eq.s32.totalorder %v4376, 16
        %vm4392 = vmor %vm4380, %vm4388
        %vm4393 = vmor %vm4381, %vm4389
        %vm4394 = vmor %vm4382, %vm4390
        %vm4395 = vmor %vm4383, %vm4391
        %vm4396 = vcmp.eq.s32.totalorder %v4373, 31
        %vm4397 = vcmp.eq.s32.totalorder %v4374, 31
        %vm4398 = vcmp.eq.s32.totalorder %v4375, 31
        %vm4399 = vcmp.eq.s32.totalorder %v4376, 31
        %vm4400 = vmor %vm4384, %vm4396
        %vm4401 = vmor %vm4385, %vm4397
        %vm4402 = vmor %vm4386, %vm4398
        %vm4403 = vmor %vm4387, %vm4399
        %v4404 = vmul.f32 %v2975, %v2975
        %v4405 = vmul.f32 %v2981, %v2981
        %v4406 = vmul.f32 %v2987, %v2987
        %v4407 = vmul.f32 %v2993, %v2993
        %v4408 = vmul.f32 %v4224, %v4224
        %v4409 = vmul.f32 %v4225, %v4225
        %v4410 = vmul.f32 %v4226, %v4226
        %v4411 = vmul.f32 %v4227, %v4227
        %v4412 = vadd.f32 %v4404, %v4408
        %v4413 = vadd.f32 %v4405, %v4409
        %v4414 = vadd.f32 %v4406, %v4410
        %v4415 = vadd.f32 %v4407, %v4411
        %v4416 = vrsqrt.pop %v4412
        %v4417 = vmul.f32 %v4412, %v4416
        %vm4418 = vcmp.eq.f32.partialorder %v4412, inf
        %v4419 = vsel %vm4418, %v4412, %v4417
        %vm4420 = vcmp.eq.f32.partialorder %v4412, 0.0
        %v4421 = vand.u32 %v4412, 2147483648
        %v4422 = vsel %vm4420, %v4421, %v4419
        %v4423 = vrsqrt.pop %v4413
        %v4424 = vmul.f32 %v4413, %v4423
        %vm4425 = vcmp.eq.f32.partialorder %v4413, inf
        %v4426 = vsel %vm4425, %v4413, %v4424
        %vm4427 = vcmp.eq.f32.partialorder %v4413, 0.0
        %v4428 = vand.u32 %v4413, 2147483648
        %v4429 = vsel %vm4427, %v4428, %v4426
        %v4430 = vrsqrt.pop %v4414
        %v4431 = vmul.f32 %v4414, %v4430
        %vm4432 = vcmp.eq.f32.partialorder %v4414, inf
        %v4433 = vsel %vm4432, %v4414, %v4431
        %vm4434 = vcmp.eq.f32.partialorder %v4414, 0.0
        %v4435 = vand.u32 %v4414, 2147483648
        %v4436 = vsel %vm4434, %v4435, %v4433
        %v4437 = vrsqrt.pop %v4415
        %v4438 = vmul.f32 %v4415, %v4437
        %vm4439 = vcmp.eq.f32.partialorder %v4415, inf
        %v4440 = vsel %vm4439, %v4415, %v4438
        %vm4441 = vcmp.eq.f32.partialorder %v4415, 0.0
        %v4442 = vand.u32 %v4415, 2147483648
        %v4443 = vsel %vm4441, %v4442, %v4440
        %v4444 = vadd.f32 %v4422, 1e-07
        %v4445 = vadd.f32 %v4429, 1e-07
        %v4446 = vadd.f32 %v4436, 1e-07
        %v4447 = vadd.f32 %v4443, 1e-07
        %v4448 = vsel %vm4379, %v4444, 0.0
        %v4449 = vsel %vm4379, %v4445, 0.0
        %v4450 = vsel %vm4379, %v4446, 0.0
        %v4451 = vsel %vm4379, %v4447, 0.0
        %v4452 = vrot.slane %v4448, 7
        %v4453 = vrot.slane %v4449, 7
        %v4454 = vrot.slane %v4450, 7
        %v4455 = vrot.slane %v4451, 7
        %vm4456 = vcmp.lt.s32.totalorder %v4373, 1
        %v4457 = vsel %vm4456, %v4454, %v4455
        %v4458 = vsel %vm4456, %v4453, %v4454
        %v4459 = vsel %vm4456, %v4452, %v4453
        %v4460 = vsel %vm4456, %v4455, %v4452
        %v4461 = vsel %vm4392, 0.0, %v4460
        %v4462 = vsel %vm4393, 0.0, %v4459
        %v4463 = vsel %vm4394, 0.0, %v4458
        %v4464 = vsel %vm4395, 0.0, %v4457
        %v4465 = vrot.slane %v4448, 1
        %v4466 = vrot.slane %v4449, 1
        %v4467 = vrot.slane %v4450, 1
        %v4468 = vrot.slane %v4451, 1
        %vm4469 = vcmp.lt.s32.totalorder %v4373, 7
        %v4470 = vsel %vm4469, %v4467, %v4468
        %v4471 = vsel %vm4469, %v4466, %v4467
        %v4472 = vsel %vm4469, %v4465, %v4466
        %v4473 = vsel %vm4469, %v4468, %v4465
        %v4474 = vsel %vm4400, 0.0, %v4472
        %v4475 = vsel %vm4401, 0.0, %v4471
        %v4476 = vsel %vm4402, 0.0, %v4470
        %v4477 = vsel %vm4403, 0.0, %v4473
        %vm4478 = vcmp.eq.s32.totalorder %v4378, 0
        %4479 = vrot.lane.b32.xlu0 %v4461, 1
        %v4480 = vpop.permute.xlu0 %4479
        %4481 = vrot.lane.b32.xlu0 %v4462, 1
        %v4482 = vpop.permute.xlu0 %4481
        %4483 = vrot.lane.b32.xlu0 %v4463, 1
        %v4484 = vpop.permute.xlu0 %4483
        %4485 = vrot.lane.b32.xlu0 %v4464, 1
        %v4486 = vpop.permute.xlu0 %4485
        %v4487 = vsel %vm4478, 0.0, %v4480
        %v4488 = vsel %vm4478, 0.0, %v4482
        %v4489 = vsel %vm4478, 0.0, %v4484
        %v4490 = vsel %vm4478, 0.0, %v4486
        %vm4491 = vcmp.eq.s32.totalorder %v4378, 8
        %4492 = vrot.lane.b32.xlu0 %v4461, 127
        %v4493 = vpop.permute.xlu0 %4492
        %4494 = vrot.lane.b32.xlu0 %v4462, 127
        %v4495 = vpop.permute.xlu0 %4494
        %4496 = vrot.lane.b32.xlu0 %v4463, 127
        %v4497 = vpop.permute.xlu0 %4496
        %4498 = vrot.lane.b32.xlu0 %v4464, 127
        %v4499 = vpop.permute.xlu0 %4498
        %v4500 = vsel %vm4491, 0.0, %v4493
        %v4501 = vsel %vm4491, 0.0, %v4495
        %v4502 = vsel %vm4491, 0.0, %v4497
        %v4503 = vsel %vm4491, 0.0, %v4499
        %4504 = vrot.lane.b32.xlu0 %v4448, 1
        %v4505 = vpop.permute.xlu0 %4504
        %4506 = vrot.lane.b32.xlu0 %v4449, 1
        %v4507 = vpop.permute.xlu0 %4506
        %4508 = vrot.lane.b32.xlu0 %v4450, 1
        %v4509 = vpop.permute.xlu0 %4508
        %4510 = vrot.lane.b32.xlu0 %v4451, 1
        %v4511 = vpop.permute.xlu0 %4510
        %v4512 = vsel %vm4478, 0.0, %v4505
        %v4513 = vsel %vm4478, 0.0, %v4507
        %v4514 = vsel %vm4478, 0.0, %v4509
        %v4515 = vsel %vm4478, 0.0, %v4511
        %4516 = vrot.lane.b32.xlu0 %v4448, 127
        %v4517 = vpop.permute.xlu0 %4516
        %4518 = vrot.lane.b32.xlu0 %v4449, 127
        %v4519 = vpop.permute.xlu0 %4518
        %4520 = vrot.lane.b32.xlu0 %v4450, 127
        %v4521 = vpop.permute.xlu0 %4520
        %4522 = vrot.lane.b32.xlu0 %v4451, 127
        %v4523 = vpop.permute.xlu0 %4522
        %v4524 = vsel %vm4491, 0.0, %v4517
        %v4525 = vsel %vm4491, 0.0, %v4519
        %v4526 = vsel %vm4491, 0.0, %v4521
        %v4527 = vsel %vm4491, 0.0, %v4523
        %4528 = vrot.lane.b32.xlu0 %v4474, 1
        %v4529 = vpop.permute.xlu0 %4528
        %4530 = vrot.lane.b32.xlu0 %v4475, 1
        %v4531 = vpop.permute.xlu0 %4530
        %4532 = vrot.lane.b32.xlu0 %v4476, 1
        %v4533 = vpop.permute.xlu0 %4532
        %4534 = vrot.lane.b32.xlu0 %v4477, 1
        %v4535 = vpop.permute.xlu0 %4534
        %v4536 = vsel %vm4478, 0.0, %v4529
        %v4537 = vsel %vm4478, 0.0, %v4531
        %v4538 = vsel %vm4478, 0.0, %v4533
        %v4539 = vsel %vm4478, 0.0, %v4535
        %4540 = vrot.lane.b32.xlu0 %v4474, 127
        %v4541 = vpop.permute.xlu0 %4540
        %4542 = vrot.lane.b32.xlu0 %v4475, 127
        %v4543 = vpop.permute.xlu0 %4542
        %4544 = vrot.lane.b32.xlu0 %v4476, 127
        %v4545 = vpop.permute.xlu0 %4544
        %4546 = vrot.lane.b32.xlu0 %v4477, 127
        %v4547 = vpop.permute.xlu0 %4546
        %v4548 = vsel %vm4491, 0.0, %v4541
        %v4549 = vsel %vm4491, 0.0, %v4543
        %v4550 = vsel %vm4491, 0.0, %v4545
        %v4551 = vsel %vm4491, 0.0, %v4547
        %s4552 = smul.u32 %s35, 128
        %s4553 = sld [smem:[#allocation3 + %s4552]]
        %v4554 = vstv %s4553
        %v4555 = vmul.f32 %v4487, %v4554
        %v4556 = vmul.f32 %v4488, %v4554
        %v4557 = vmul.f32 %v4489, %v4554
        %v4558 = vmul.f32 %v4490, %v4554
        %s4559 = sadd.s32 %s4552, 1
        %s4560 = sld [smem:[#allocation3 + %s4559]]
        %v4561 = vstv %s4560
        %v4562 = vmul.f32 %v4461, %v4561
        %v4563 = vmul.f32 %v4462, %v4561
        %v4564 = vmul.f32 %v4463, %v4561
        %v4565 = vmul.f32 %v4464, %v4561
        %v4566 = vadd.f32 %v4555, %v4562
        %v4567 = vadd.f32 %v4556, %v4563
        %v4568 = vadd.f32 %v4557, %v4564
        %v4569 = vadd.f32 %v4558, %v4565
        %s4570 = sadd.s32 %s4552, 2
        %s4571 = sld [smem:[#allocation3 + %s4570]]
        %v4572 = vstv %s4571
        %v4573 = vmul.f32 %v4500, %v4572
        %v4574 = vmul.f32 %v4501, %v4572
        %v4575 = vmul.f32 %v4502, %v4572
        %v4576 = vmul.f32 %v4503, %v4572
        %v4577 = vadd.f32 %v4566, %v4573
        %v4578 = vadd.f32 %v4567, %v4574
        %v4579 = vadd.f32 %v4568, %v4575
        %v4580 = vadd.f32 %v4569, %v4576
        %s4581 = sadd.s32 %s4552, 3
        %s4582 = sld [smem:[#allocation3 + %s4581]]
        %v4583 = vstv %s4582
        %v4584 = vmul.f32 %v4512, %v4583
        %v4585 = vmul.f32 %v4513, %v4583
        %v4586 = vmul.f32 %v4514, %v4583
        %v4587 = vmul.f32 %v4515, %v4583
        %v4588 = vadd.f32 %v4577, %v4584
        %v4589 = vadd.f32 %v4578, %v4585
        %v4590 = vadd.f32 %v4579, %v4586
        %v4591 = vadd.f32 %v4580, %v4587
        %s4592 = sadd.s32 %s4552, 4
        %s4593 = sld [smem:[#allocation3 + %s4592]]
        %v4594 = vstv %s4593
        %v4595 = vmul.f32 %v4448, %v4594
        %v4596 = vmul.f32 %v4449, %v4594
        %v4597 = vmul.f32 %v4450, %v4594
        %v4598 = vmul.f32 %v4451, %v4594
        %v4599 = vadd.f32 %v4588, %v4595
        %v4600 = vadd.f32 %v4589, %v4596
        %v4601 = vadd.f32 %v4590, %v4597
        %v4602 = vadd.f32 %v4591, %v4598
        %s4603 = sadd.s32 %s4552, 5
        %s4604 = sld [smem:[#allocation3 + %s4603]]
        %v4605 = vstv %s4604
        %v4606 = vmul.f32 %v4524, %v4605
        %v4607 = vmul.f32 %v4525, %v4605
        %v4608 = vmul.f32 %v4526, %v4605
        %v4609 = vmul.f32 %v4527, %v4605
        %v4610 = vadd.f32 %v4599, %v4606
        %v4611 = vadd.f32 %v4600, %v4607
        %v4612 = vadd.f32 %v4601, %v4608
        %v4613 = vadd.f32 %v4602, %v4609
        %s4614 = sadd.s32 %s4552, 6
        %s4615 = sld [smem:[#allocation3 + %s4614]]
        %v4616 = vstv %s4615
        %v4617 = vmul.f32 %v4536, %v4616
        %v4618 = vmul.f32 %v4537, %v4616
        %v4619 = vmul.f32 %v4538, %v4616
        %v4620 = vmul.f32 %v4539, %v4616
        %v4621 = vadd.f32 %v4610, %v4617
        %v4622 = vadd.f32 %v4611, %v4618
        %v4623 = vadd.f32 %v4612, %v4619
        %v4624 = vadd.f32 %v4613, %v4620
        %s4625 = sadd.s32 %s4552, 7
        %s4626 = sld [smem:[#allocation3 + %s4625]]
        %v4627 = vstv %s4626
        %v4628 = vmul.f32 %v4474, %v4627
        %v4629 = vmul.f32 %v4475, %v4627
        %v4630 = vmul.f32 %v4476, %v4627
        %v4631 = vmul.f32 %v4477, %v4627
        %v4632 = vadd.f32 %v4621, %v4628
        %v4633 = vadd.f32 %v4622, %v4629
        %v4634 = vadd.f32 %v4623, %v4630
        %v4635 = vadd.f32 %v4624, %v4631
        %s4636 = sadd.s32 %s4552, 8
        %s4637 = sld [smem:[#allocation3 + %s4636]]
        %v4638 = vstv %s4637
        %v4639 = vmul.f32 %v4548, %v4638
        %v4640 = vmul.f32 %v4549, %v4638
        %v4641 = vmul.f32 %v4550, %v4638
        %v4642 = vmul.f32 %v4551, %v4638
        %v4643 = vadd.f32 %v4632, %v4639
        %v4644 = vadd.f32 %v4633, %v4640
        %v4645 = vadd.f32 %v4634, %v4641
        %v4646 = vadd.f32 %v4635, %v4642
        %s4647 = sld [smem:[#allocation6]]
        %v4648 = vstv %s4647
        %v4649 = vadd.f32 %v4643, %v4648
        %v4650 = vadd.f32 %v4644, %v4648
        %v4651 = vadd.f32 %v4645, %v4648
        %v4652 = vadd.f32 %v4646, %v4648
        %4653 = vst [vmem:[#allocation2] sm:$0xff] %v4649
        %4654 = vst [vmem:[#allocation2 + $0x8] sm:$0xff] %v4650
        %4655 = vst [vmem:[#allocation2 + $0x10] sm:$0xff] %v4651
        %4656 = vst [vmem:[#allocation2 + $0x18] sm:$0xff] %v4652
        %v4657 = vsel %vm4379, %v4649, 0.0
        %v4658 = vsel %vm4379, %v4650, 0.0
        %v4659 = vsel %vm4379, %v4651, 0.0
        %v4660 = vsel %vm4379, %v4652, 0.0
        %v4661 = vadd.f32 %v4657, %v4658
        %v4662 = vadd.f32 %v4661, %v4659
        %v4663 = vadd.f32 %v4662, %v4660
        %4664 = vadd.xlane.f32.xlu0 %v4663
        %v4665 = vpop.xlane.xlu0 %4664
        %v4666 = vrot.slane %v4665, 4
        %v4667 = vadd.f32 %v4665, %v4666
        %v4668 = vrot.slane %v4667, 2
        %v4669 = vadd.f32 %v4667, %v4668
        %v4670 = vrot.slane %v4669, 1
        %v4671 = vadd.f32 %v4669, %v4670
        %s4672 = vtos %v4671
        %v4673 = vmul.f32 %v4657, %v4657
        %v4674 = vmul.f32 %v4658, %v4658
        %v4675 = vmul.f32 %v4659, %v4659
        %v4676 = vmul.f32 %v4660, %v4660
        %v4677 = vadd.f32 %v4673, %v4674
        %v4678 = vadd.f32 %v4677, %v4675
        %v4679 = vadd.f32 %v4678, %v4676
        %4680 = vadd.xlane.f32.xlu0 %v4679
        %v4681 = vpop.xlane.xlu0 %4680
        %v4682 = vrot.slane %v4681, 4
        %v4683 = vadd.f32 %v4681, %v4682
        %v4684 = vrot.slane %v4683, 2
        %v4685 = vadd.f32 %v4683, %v4684
        %v4686 = vrot.slane %v4685, 1
        %v4687 = vadd.f32 %v4685, %v4686
        %s4688 = vtos %v4687
        %s4689 = sadd.s32 %s4552, 9
        %s4690 = sld [smem:[#allocation3 + %s4689]]
        %v4691 = vstv %s4690
        %v4692 = vmul.f32 %v4487, %v4691
        %v4693 = vmul.f32 %v4488, %v4691
        %v4694 = vmul.f32 %v4489, %v4691
        %v4695 = vmul.f32 %v4490, %v4691
        %s4696 = sadd.s32 %s4552, 10
        %s4697 = sld [smem:[#allocation3 + %s4696]]
        %v4698 = vstv %s4697
        %v4699 = vmul.f32 %v4461, %v4698
        %v4700 = vmul.f32 %v4462, %v4698
        %v4701 = vmul.f32 %v4463, %v4698
        %v4702 = vmul.f32 %v4464, %v4698
        %v4703 = vadd.f32 %v4692, %v4699
        %v4704 = vadd.f32 %v4693, %v4700
        %v4705 = vadd.f32 %v4694, %v4701
        %v4706 = vadd.f32 %v4695, %v4702
        %s4707 = sadd.s32 %s4552, 11
        %s4708 = sld [smem:[#allocation3 + %s4707]]
        %v4709 = vstv %s4708
        %v4710 = vmul.f32 %v4500, %v4709
        %v4711 = vmul.f32 %v4501, %v4709
        %v4712 = vmul.f32 %v4502, %v4709
        %v4713 = vmul.f32 %v4503, %v4709
        %v4714 = vadd.f32 %v4703, %v4710
        %v4715 = vadd.f32 %v4704, %v4711
        %v4716 = vadd.f32 %v4705, %v4712
        %v4717 = vadd.f32 %v4706, %v4713
        %s4718 = sadd.s32 %s4552, 12
        %s4719 = sld [smem:[#allocation3 + %s4718]]
        %v4720 = vstv %s4719
        %v4721 = vmul.f32 %v4512, %v4720
        %v4722 = vmul.f32 %v4513, %v4720
        %v4723 = vmul.f32 %v4514, %v4720
        %v4724 = vmul.f32 %v4515, %v4720
        %v4725 = vadd.f32 %v4714, %v4721
        %v4726 = vadd.f32 %v4715, %v4722
        %v4727 = vadd.f32 %v4716, %v4723
        %v4728 = vadd.f32 %v4717, %v4724
        %s4729 = sadd.s32 %s4552, 13
        %s4730 = sld [smem:[#allocation3 + %s4729]]
        %v4731 = vstv %s4730
        %v4732 = vmul.f32 %v4448, %v4731
        %v4733 = vmul.f32 %v4449, %v4731
        %v4734 = vmul.f32 %v4450, %v4731
        %v4735 = vmul.f32 %v4451, %v4731
        %v4736 = vadd.f32 %v4725, %v4732
        %v4737 = vadd.f32 %v4726, %v4733
        %v4738 = vadd.f32 %v4727, %v4734
        %v4739 = vadd.f32 %v4728, %v4735
        %s4740 = sadd.s32 %s4552, 14
        %s4741 = sld [smem:[#allocation3 + %s4740]]
        %v4742 = vstv %s4741
        %v4743 = vmul.f32 %v4524, %v4742
        %v4744 = vmul.f32 %v4525, %v4742
        %v4745 = vmul.f32 %v4526, %v4742
        %v4746 = vmul.f32 %v4527, %v4742
        %v4747 = vadd.f32 %v4736, %v4743
        %v4748 = vadd.f32 %v4737, %v4744
        %v4749 = vadd.f32 %v4738, %v4745
        %v4750 = vadd.f32 %v4739, %v4746
        %s4751 = sadd.s32 %s4552, 15
        %s4752 = sld [smem:[#allocation3 + %s4751]]
        %v4753 = vstv %s4752
        %v4754 = vmul.f32 %v4536, %v4753
        %v4755 = vmul.f32 %v4537, %v4753
        %v4756 = vmul.f32 %v4538, %v4753
        %v4757 = vmul.f32 %v4539, %v4753
        %v4758 = vadd.f32 %v4747, %v4754
        %v4759 = vadd.f32 %v4748, %v4755
        %v4760 = vadd.f32 %v4749, %v4756
        %v4761 = vadd.f32 %v4750, %v4757
        %s4762 = sadd.s32 %s4552, 16
        %s4763 = sld [smem:[#allocation3 + %s4762]]
        %v4764 = vstv %s4763
        %v4765 = vmul.f32 %v4474, %v4764
        %v4766 = vmul.f32 %v4475, %v4764
        %v4767 = vmul.f32 %v4476, %v4764
        %v4768 = vmul.f32 %v4477, %v4764
        %v4769 = vadd.f32 %v4758, %v4765
        %v4770 = vadd.f32 %v4759, %v4766
        %v4771 = vadd.f32 %v4760, %v4767
        %v4772 = vadd.f32 %v4761, %v4768
        %s4773 = sadd.s32 %s4552, 17
        %s4774 = sld [smem:[#allocation3 + %s4773]]
        %v4775 = vstv %s4774
        %v4776 = vmul.f32 %v4548, %v4775
        %v4777 = vmul.f32 %v4549, %v4775
        %v4778 = vmul.f32 %v4550, %v4775
        %v4779 = vmul.f32 %v4551, %v4775
        %v4780 = vadd.f32 %v4769, %v4776
        %v4781 = vadd.f32 %v4770, %v4777
        %v4782 = vadd.f32 %v4771, %v4778
        %v4783 = vadd.f32 %v4772, %v4779
        %s4784 = sld [smem:[#allocation6 + $0x1]]
        %v4785 = vstv %s4784
        %v4786 = vadd.f32 %v4780, %v4785
        %v4787 = vadd.f32 %v4781, %v4785
        %v4788 = vadd.f32 %v4782, %v4785
        %v4789 = vadd.f32 %v4783, %v4785
        %s4790 = scalar_lea.vmem [#allocation2], 32
        %4791 = vst [vmem:[%s4790] sm:$0xff] %v4786
        %4792 = vst [vmem:[%s4790 + $0x8] sm:$0xff] %v4787
        %4793 = vst [vmem:[%s4790 + $0x10] sm:$0xff] %v4788
        %4794 = vst [vmem:[%s4790 + $0x18] sm:$0xff] %v4789
        %v4795 = vsel %vm4379, %v4786, 0.0
        %v4796 = vsel %vm4379, %v4787, 0.0
        %v4797 = vsel %vm4379, %v4788, 0.0
        %v4798 = vsel %vm4379, %v4789, 0.0
        %v4799 = vadd.f32 %v4795, %v4796
        %v4800 = vadd.f32 %v4799, %v4797
        %v4801 = vadd.f32 %v4800, %v4798
        %4802 = vadd.xlane.f32.xlu0 %v4801
        %v4803 = vpop.xlane.xlu0 %4802
        %v4804 = vrot.slane %v4803, 4
        %v4805 = vadd.f32 %v4803, %v4804
        %v4806 = vrot.slane %v4805, 2
        %v4807 = vadd.f32 %v4805, %v4806
        %v4808 = vrot.slane %v4807, 1
        %v4809 = vadd.f32 %v4807, %v4808
        %s4810 = vtos %v4809
        %v4811 = vmul.f32 %v4795, %v4795
        %v4812 = vmul.f32 %v4796, %v4796
        %v4813 = vmul.f32 %v4797, %v4797
        %v4814 = vmul.f32 %v4798, %v4798
        %v4815 = vadd.f32 %v4811, %v4812
        %v4816 = vadd.f32 %v4815, %v4813
        %v4817 = vadd.f32 %v4816, %v4814
        %4818 = vadd.xlane.f32.xlu0 %v4817
        %v4819 = vpop.xlane.xlu0 %4818
        %v4820 = vrot.slane %v4819, 4
        %v4821 = vadd.f32 %v4819, %v4820
        %v4822 = vrot.slane %v4821, 2
        %v4823 = vadd.f32 %v4821, %v4822
        %v4824 = vrot.slane %v4823, 1
        %v4825 = vadd.f32 %v4823, %v4824
        %s4826 = vtos %v4825
        %s4827 = sadd.s32 %s4552, 18
        %s4828 = sld [smem:[#allocation3 + %s4827]]
        %v4829 = vstv %s4828
        %v4830 = vmul.f32 %v4487, %v4829
        %v4831 = vmul.f32 %v4488, %v4829
        %v4832 = vmul.f32 %v4489, %v4829
        %v4833 = vmul.f32 %v4490, %v4829
        %s4834 = sadd.s32 %s4552, 19
        %s4835 = sld [smem:[#allocation3 + %s4834]]
        %v4836 = vstv %s4835
        %v4837 = vmul.f32 %v4461, %v4836
        %v4838 = vmul.f32 %v4462, %v4836
        %v4839 = vmul.f32 %v4463, %v4836
        %v4840 = vmul.f32 %v4464, %v4836
        %v4841 = vadd.f32 %v4830, %v4837
        %v4842 = vadd.f32 %v4831, %v4838
        %v4843 = vadd.f32 %v4832, %v4839
        %v4844 = vadd.f32 %v4833, %v4840
        %s4845 = sadd.s32 %s4552, 20
        %s4846 = sld [smem:[#allocation3 + %s4845]]
        %v4847 = vstv %s4846
        %v4848 = vmul.f32 %v4500, %v4847
        %v4849 = vmul.f32 %v4501, %v4847
        %v4850 = vmul.f32 %v4502, %v4847
        %v4851 = vmul.f32 %v4503, %v4847
        %v4852 = vadd.f32 %v4841, %v4848
        %v4853 = vadd.f32 %v4842, %v4849
        %v4854 = vadd.f32 %v4843, %v4850
        %v4855 = vadd.f32 %v4844, %v4851
        %s4856 = sadd.s32 %s4552, 21
        %s4857 = sld [smem:[#allocation3 + %s4856]]
        %v4858 = vstv %s4857
        %v4859 = vmul.f32 %v4512, %v4858
        %v4860 = vmul.f32 %v4513, %v4858
        %v4861 = vmul.f32 %v4514, %v4858
        %v4862 = vmul.f32 %v4515, %v4858
        %v4863 = vadd.f32 %v4852, %v4859
        %v4864 = vadd.f32 %v4853, %v4860
        %v4865 = vadd.f32 %v4854, %v4861
        %v4866 = vadd.f32 %v4855, %v4862
        %s4867 = sadd.s32 %s4552, 22
        %s4868 = sld [smem:[#allocation3 + %s4867]]
        %v4869 = vstv %s4868
        %v4870 = vmul.f32 %v4448, %v4869
        %v4871 = vmul.f32 %v4449, %v4869
        %v4872 = vmul.f32 %v4450, %v4869
        %v4873 = vmul.f32 %v4451, %v4869
        %v4874 = vadd.f32 %v4863, %v4870
        %v4875 = vadd.f32 %v4864, %v4871
        %v4876 = vadd.f32 %v4865, %v4872
        %v4877 = vadd.f32 %v4866, %v4873
        %s4878 = sadd.s32 %s4552, 23
        %s4879 = sld [smem:[#allocation3 + %s4878]]
        %v4880 = vstv %s4879
        %v4881 = vmul.f32 %v4524, %v4880
        %v4882 = vmul.f32 %v4525, %v4880
        %v4883 = vmul.f32 %v4526, %v4880
        %v4884 = vmul.f32 %v4527, %v4880
        %v4885 = vadd.f32 %v4874, %v4881
        %v4886 = vadd.f32 %v4875, %v4882
        %v4887 = vadd.f32 %v4876, %v4883
        %v4888 = vadd.f32 %v4877, %v4884
        %s4889 = sadd.s32 %s4552, 24
        %s4890 = sld [smem:[#allocation3 + %s4889]]
        %v4891 = vstv %s4890
        %v4892 = vmul.f32 %v4536, %v4891
        %v4893 = vmul.f32 %v4537, %v4891
        %v4894 = vmul.f32 %v4538, %v4891
        %v4895 = vmul.f32 %v4539, %v4891
        %v4896 = vadd.f32 %v4885, %v4892
        %v4897 = vadd.f32 %v4886, %v4893
        %v4898 = vadd.f32 %v4887, %v4894
        %v4899 = vadd.f32 %v4888, %v4895
        %s4900 = sadd.s32 %s4552, 25
        %s4901 = sld [smem:[#allocation3 + %s4900]]
        %v4902 = vstv %s4901
        %v4903 = vmul.f32 %v4474, %v4902
        %v4904 = vmul.f32 %v4475, %v4902
        %v4905 = vmul.f32 %v4476, %v4902
        %v4906 = vmul.f32 %v4477, %v4902
        %v4907 = vadd.f32 %v4896, %v4903
        %v4908 = vadd.f32 %v4897, %v4904
        %v4909 = vadd.f32 %v4898, %v4905
        %v4910 = vadd.f32 %v4899, %v4906
        %s4911 = sadd.s32 %s4552, 26
        %s4912 = sld [smem:[#allocation3 + %s4911]]
        %v4913 = vstv %s4912
        %v4914 = vmul.f32 %v4548, %v4913
        %v4915 = vmul.f32 %v4549, %v4913
        %v4916 = vmul.f32 %v4550, %v4913
        %v4917 = vmul.f32 %v4551, %v4913
        %v4918 = vadd.f32 %v4907, %v4914
        %v4919 = vadd.f32 %v4908, %v4915
        %v4920 = vadd.f32 %v4909, %v4916
        %v4921 = vadd.f32 %v4910, %v4917
        %s4922 = sld [smem:[#allocation6 + $0x2]]
        %v4923 = vstv %s4922
        %v4924 = vadd.f32 %v4918, %v4923
        %v4925 = vadd.f32 %v4919, %v4923
        %v4926 = vadd.f32 %v4920, %v4923
        %v4927 = vadd.f32 %v4921, %v4923
        %s4928 = scalar_lea.vmem [#allocation2], 64
        %4929 = vst [vmem:[%s4928] sm:$0xff] %v4924
        %4930 = vst [vmem:[%s4928 + $0x8] sm:$0xff] %v4925
        %4931 = vst [vmem:[%s4928 + $0x10] sm:$0xff] %v4926
        %4932 = vst [vmem:[%s4928 + $0x18] sm:$0xff] %v4927
        %v4933 = vsel %vm4379, %v4924, 0.0
        %v4934 = vsel %vm4379, %v4925, 0.0
        %v4935 = vsel %vm4379, %v4926, 0.0
        %v4936 = vsel %vm4379, %v4927, 0.0
        %v4937 = vadd.f32 %v4933, %v4934
        %v4938 = vadd.f32 %v4937, %v4935
        %v4939 = vadd.f32 %v4938, %v4936
        %4940 = vadd.xlane.f32.xlu0 %v4939
        %v4941 = vpop.xlane.xlu0 %4940
        %v4942 = vrot.slane %v4941, 4
        %v4943 = vadd.f32 %v4941, %v4942
        %v4944 = vrot.slane %v4943, 2
        %v4945 = vadd.f32 %v4943, %v4944
        %v4946 = vrot.slane %v4945, 1
        %v4947 = vadd.f32 %v4945, %v4946
        %s4948 = vtos %v4947
        %v4949 = vmul.f32 %v4933, %v4933
        %v4950 = vmul.f32 %v4934, %v4934
        %v4951 = vmul.f32 %v4935, %v4935
        %v4952 = vmul.f32 %v4936, %v4936
        %v4953 = vadd.f32 %v4949, %v4950
        %v4954 = vadd.f32 %v4953, %v4951
        %v4955 = vadd.f32 %v4954, %v4952
        %4956 = vadd.xlane.f32.xlu0 %v4955
        %v4957 = vpop.xlane.xlu0 %4956
        %v4958 = vrot.slane %v4957, 4
        %v4959 = vadd.f32 %v4957, %v4958
        %v4960 = vrot.slane %v4959, 2
        %v4961 = vadd.f32 %v4959, %v4960
        %v4962 = vrot.slane %v4961, 1
        %v4963 = vadd.f32 %v4961, %v4962
        %s4964 = vtos %v4963
        %s4965 = sadd.s32 %s4552, 27
        %s4966 = sld [smem:[#allocation3 + %s4965]]
        %v4967 = vstv %s4966
        %v4968 = vmul.f32 %v4487, %v4967
        %v4969 = vmul.f32 %v4488, %v4967
        %v4970 = vmul.f32 %v4489, %v4967
        %v4971 = vmul.f32 %v4490, %v4967
        %s4972 = sadd.s32 %s4552, 28
        %s4973 = sld [smem:[#allocation3 + %s4972]]
        %v4974 = vstv %s4973
        %v4975 = vmul.f32 %v4461, %v4974
        %v4976 = vmul.f32 %v4462, %v4974
        %v4977 = vmul.f32 %v4463, %v4974
        %v4978 = vmul.f32 %v4464, %v4974
        %v4979 = vadd.f32 %v4968, %v4975
        %v4980 = vadd.f32 %v4969, %v4976
        %v4981 = vadd.f32 %v4970, %v4977
        %v4982 = vadd.f32 %v4971, %v4978
        %s4983 = sadd.s32 %s4552, 29
        %s4984 = sld [smem:[#allocation3 + %s4983]]
        %v4985 = vstv %s4984
        %v4986 = vmul.f32 %v4500, %v4985
        %v4987 = vmul.f32 %v4501, %v4985
        %v4988 = vmul.f32 %v4502, %v4985
        %v4989 = vmul.f32 %v4503, %v4985
        %v4990 = vadd.f32 %v4979, %v4986
        %v4991 = vadd.f32 %v4980, %v4987
        %v4992 = vadd.f32 %v4981, %v4988
        %v4993 = vadd.f32 %v4982, %v4989
        %s4994 = sadd.s32 %s4552, 30
        %s4995 = sld [smem:[#allocation3 + %s4994]]
        %v4996 = vstv %s4995
        %v4997 = vmul.f32 %v4512, %v4996
        %v4998 = vmul.f32 %v4513, %v4996
        %v4999 = vmul.f32 %v4514, %v4996
        %v5000 = vmul.f32 %v4515, %v4996
        %v5001 = vadd.f32 %v4990, %v4997
        %v5002 = vadd.f32 %v4991, %v4998
        %v5003 = vadd.f32 %v4992, %v4999
        %v5004 = vadd.f32 %v4993, %v5000
        %s5005 = sadd.s32 %s4552, 31
        %s5006 = sld [smem:[#allocation3 + %s5005]]
        %v5007 = vstv %s5006
        %v5008 = vmul.f32 %v4448, %v5007
        %v5009 = vmul.f32 %v4449, %v5007
        %v5010 = vmul.f32 %v4450, %v5007
        %v5011 = vmul.f32 %v4451, %v5007
        %v5012 = vadd.f32 %v5001, %v5008
        %v5013 = vadd.f32 %v5002, %v5009
        %v5014 = vadd.f32 %v5003, %v5010
        %v5015 = vadd.f32 %v5004, %v5011
        %s5016 = sadd.s32 %s4552, 32
        %s5017 = sld [smem:[#allocation3 + %s5016]]
        %v5018 = vstv %s5017
        %v5019 = vmul.f32 %v4524, %v5018
        %v5020 = vmul.f32 %v4525, %v5018
        %v5021 = vmul.f32 %v4526, %v5018
        %v5022 = vmul.f32 %v4527, %v5018
        %v5023 = vadd.f32 %v5012, %v5019
        %v5024 = vadd.f32 %v5013, %v5020
        %v5025 = vadd.f32 %v5014, %v5021
        %v5026 = vadd.f32 %v5015, %v5022
        %s5027 = sadd.s32 %s4552, 33
        %s5028 = sld [smem:[#allocation3 + %s5027]]
        %v5029 = vstv %s5028
        %v5030 = vmul.f32 %v4536, %v5029
        %v5031 = vmul.f32 %v4537, %v5029
        %v5032 = vmul.f32 %v4538, %v5029
        %v5033 = vmul.f32 %v4539, %v5029
        %v5034 = vadd.f32 %v5023, %v5030
        %v5035 = vadd.f32 %v5024, %v5031
        %v5036 = vadd.f32 %v5025, %v5032
        %v5037 = vadd.f32 %v5026, %v5033
        %s5038 = sadd.s32 %s4552, 34
        %s5039 = sld [smem:[#allocation3 + %s5038]]
        %v5040 = vstv %s5039
        %v5041 = vmul.f32 %v4474, %v5040
        %v5042 = vmul.f32 %v4475, %v5040
        %v5043 = vmul.f32 %v4476, %v5040
        %v5044 = vmul.f32 %v4477, %v5040
        %v5045 = vadd.f32 %v5034, %v5041
        %v5046 = vadd.f32 %v5035, %v5042
        %v5047 = vadd.f32 %v5036, %v5043
        %v5048 = vadd.f32 %v5037, %v5044
        %s5049 = sadd.s32 %s4552, 35
        %s5050 = sld [smem:[#allocation3 + %s5049]]
        %v5051 = vstv %s5050
        %v5052 = vmul.f32 %v4548, %v5051
        %v5053 = vmul.f32 %v4549, %v5051
        %v5054 = vmul.f32 %v4550, %v5051
        %v5055 = vmul.f32 %v4551, %v5051
        %v5056 = vadd.f32 %v5045, %v5052
        %v5057 = vadd.f32 %v5046, %v5053
        %v5058 = vadd.f32 %v5047, %v5054
        %v5059 = vadd.f32 %v5048, %v5055
        %s5060 = sld [smem:[#allocation6 + $0x3]]
        %v5061 = vstv %s5060
        %v5062 = vadd.f32 %v5056, %v5061
        %v5063 = vadd.f32 %v5057, %v5061
        %v5064 = vadd.f32 %v5058, %v5061
        %v5065 = vadd.f32 %v5059, %v5061
        %s5066 = scalar_lea.vmem [#allocation2], 96
        %5067 = vst [vmem:[%s5066] sm:$0xff] %v5062
        %5068 = vst [vmem:[%s5066 + $0x8] sm:$0xff] %v5063
        %5069 = vst [vmem:[%s5066 + $0x10] sm:$0xff] %v5064
        %5070 = vst [vmem:[%s5066 + $0x18] sm:$0xff] %v5065
        %v5071 = vsel %vm4379, %v5062, 0.0
        %v5072 = vsel %vm4379, %v5063, 0.0
        %v5073 = vsel %vm4379, %v5064, 0.0
        %v5074 = vsel %vm4379, %v5065, 0.0
        %v5075 = vadd.f32 %v5071, %v5072
        %v5076 = vadd.f32 %v5075, %v5073
        %v5077 = vadd.f32 %v5076, %v5074
        %5078 = vadd.xlane.f32.xlu0 %v5077
        %v5079 = vpop.xlane.xlu0 %5078
        %v5080 = vrot.slane %v5079, 4
        %v5081 = vadd.f32 %v5079, %v5080
        %v5082 = vrot.slane %v5081, 2
        %v5083 = vadd.f32 %v5081, %v5082
        %v5084 = vrot.slane %v5083, 1
        %v5085 = vadd.f32 %v5083, %v5084
        %s5086 = vtos %v5085
        %v5087 = vmul.f32 %v5071, %v5071
        %v5088 = vmul.f32 %v5072, %v5072
        %v5089 = vmul.f32 %v5073, %v5073
        %v5090 = vmul.f32 %v5074, %v5074
        %v5091 = vadd.f32 %v5087, %v5088
        %v5092 = vadd.f32 %v5091, %v5089
        %v5093 = vadd.f32 %v5092, %v5090
        %5094 = vadd.xlane.f32.xlu0 %v5093
        %v5095 = vpop.xlane.xlu0 %5094
        %v5096 = vrot.slane %v5095, 4
        %v5097 = vadd.f32 %v5095, %v5096
        %v5098 = vrot.slane %v5097, 2
        %v5099 = vadd.f32 %v5097, %v5098
        %v5100 = vrot.slane %v5099, 1
        %v5101 = vadd.f32 %v5099, %v5100
        %s5102 = vtos %v5101
        %s5103 = sadd.s32 %s4552, 36
        %s5104 = sld [smem:[#allocation3 + %s5103]]
        %v5105 = vstv %s5104
        %v5106 = vmul.f32 %v4487, %v5105
        %v5107 = vmul.f32 %v4488, %v5105
        %v5108 = vmul.f32 %v4489, %v5105
        %v5109 = vmul.f32 %v4490, %v5105
        %s5110 = sadd.s32 %s4552, 37
        %s5111 = sld [smem:[#allocation3 + %s5110]]
        %v5112 = vstv %s5111
        %v5113 = vmul.f32 %v4461, %v5112
        %v5114 = vmul.f32 %v4462, %v5112
        %v5115 = vmul.f32 %v4463, %v5112
        %v5116 = vmul.f32 %v4464, %v5112
        %v5117 = vadd.f32 %v5106, %v5113
        %v5118 = vadd.f32 %v5107, %v5114
        %v5119 = vadd.f32 %v5108, %v5115
        %v5120 = vadd.f32 %v5109, %v5116
        %s5121 = sadd.s32 %s4552, 38
        %s5122 = sld [smem:[#allocation3 + %s5121]]
        %v5123 = vstv %s5122
        %v5124 = vmul.f32 %v4500, %v5123
        %v5125 = vmul.f32 %v4501, %v5123
        %v5126 = vmul.f32 %v4502, %v5123
        %v5127 = vmul.f32 %v4503, %v5123
        %v5128 = vadd.f32 %v5117, %v5124
        %v5129 = vadd.f32 %v5118, %v5125
        %v5130 = vadd.f32 %v5119, %v5126
        %v5131 = vadd.f32 %v5120, %v5127
        %s5132 = sadd.s32 %s4552, 39
        %s5133 = sld [smem:[#allocation3 + %s5132]]
        %v5134 = vstv %s5133
        %v5135 = vmul.f32 %v4512, %v5134
        %v5136 = vmul.f32 %v4513, %v5134
        %v5137 = vmul.f32 %v4514, %v5134
        %v5138 = vmul.f32 %v4515, %v5134
        %v5139 = vadd.f32 %v5128, %v5135
        %v5140 = vadd.f32 %v5129, %v5136
        %v5141 = vadd.f32 %v5130, %v5137
        %v5142 = vadd.f32 %v5131, %v5138
        %s5143 = sadd.s32 %s4552, 40
        %s5144 = sld [smem:[#allocation3 + %s5143]]
        %v5145 = vstv %s5144
        %v5146 = vmul.f32 %v4448, %v5145
        %v5147 = vmul.f32 %v4449, %v5145
        %v5148 = vmul.f32 %v4450, %v5145
        %v5149 = vmul.f32 %v4451, %v5145
        %v5150 = vadd.f32 %v5139, %v5146
        %v5151 = vadd.f32 %v5140, %v5147
        %v5152 = vadd.f32 %v5141, %v5148
        %v5153 = vadd.f32 %v5142, %v5149
        %s5154 = sadd.s32 %s4552, 41
        %s5155 = sld [smem:[#allocation3 + %s5154]]
        %v5156 = vstv %s5155
        %v5157 = vmul.f32 %v4524, %v5156
        %v5158 = vmul.f32 %v4525, %v5156
        %v5159 = vmul.f32 %v4526, %v5156
        %v5160 = vmul.f32 %v4527, %v5156
        %v5161 = vadd.f32 %v5150, %v5157
        %v5162 = vadd.f32 %v5151, %v5158
        %v5163 = vadd.f32 %v5152, %v5159
        %v5164 = vadd.f32 %v5153, %v5160
        %s5165 = sadd.s32 %s4552, 42
        %s5166 = sld [smem:[#allocation3 + %s5165]]
        %v5167 = vstv %s5166
        %v5168 = vmul.f32 %v4536, %v5167
        %v5169 = vmul.f32 %v4537, %v5167
        %v5170 = vmul.f32 %v4538, %v5167
        %v5171 = vmul.f32 %v4539, %v5167
        %v5172 = vadd.f32 %v5161, %v5168
        %v5173 = vadd.f32 %v5162, %v5169
        %v5174 = vadd.f32 %v5163, %v5170
        %v5175 = vadd.f32 %v5164, %v5171
        %s5176 = sadd.s32 %s4552, 43
        %s5177 = sld [smem:[#allocation3 + %s5176]]
        %v5178 = vstv %s5177
        %v5179 = vmul.f32 %v4474, %v5178
        %v5180 = vmul.f32 %v4475, %v5178
        %v5181 = vmul.f32 %v4476, %v5178
        %v5182 = vmul.f32 %v4477, %v5178
        %v5183 = vadd.f32 %v5172, %v5179
        %v5184 = vadd.f32 %v5173, %v5180
        %v5185 = vadd.f32 %v5174, %v5181
        %v5186 = vadd.f32 %v5175, %v5182
        %s5187 = sadd.s32 %s4552, 44
        %s5188 = sld [smem:[#allocation3 + %s5187]]
        %v5189 = vstv %s5188
        %v5190 = vmul.f32 %v4548, %v5189
        %v5191 = vmul.f32 %v4549, %v5189
        %v5192 = vmul.f32 %v4550, %v5189
        %v5193 = vmul.f32 %v4551, %v5189
        %v5194 = vadd.f32 %v5183, %v5190
        %v5195 = vadd.f32 %v5184, %v5191
        %v5196 = vadd.f32 %v5185, %v5192
        %v5197 = vadd.f32 %v5186, %v5193
        %s5198 = sld [smem:[#allocation6 + $0x4]]
        %v5199 = vstv %s5198
        %v5200 = vadd.f32 %v5194, %v5199
        %v5201 = vadd.f32 %v5195, %v5199
        %v5202 = vadd.f32 %v5196, %v5199
        %v5203 = vadd.f32 %v5197, %v5199
        %s5204 = scalar_lea.vmem [#allocation2], 128
        %5205 = vst [vmem:[%s5204] sm:$0xff] %v5200
        %5206 = vst [vmem:[%s5204 + $0x8] sm:$0xff] %v5201
        %5207 = vst [vmem:[%s5204 + $0x10] sm:$0xff] %v5202
        %5208 = vst [vmem:[%s5204 + $0x18] sm:$0xff] %v5203
        %v5209 = vsel %vm4379, %v5200, 0.0
        %v5210 = vsel %vm4379, %v5201, 0.0
        %v5211 = vsel %vm4379, %v5202, 0.0
        %v5212 = vsel %vm4379, %v5203, 0.0
        %v5213 = vadd.f32 %v5209, %v5210
        %v5214 = vadd.f32 %v5213, %v5211
        %v5215 = vadd.f32 %v5214, %v5212
        %5216 = vadd.xlane.f32.xlu0 %v5215
        %v5217 = vpop.xlane.xlu0 %5216
        %v5218 = vrot.slane %v5217, 4
        %v5219 = vadd.f32 %v5217, %v5218
        %v5220 = vrot.slane %v5219, 2
        %v5221 = vadd.f32 %v5219, %v5220
        %v5222 = vrot.slane %v5221, 1
        %v5223 = vadd.f32 %v5221, %v5222
        %s5224 = vtos %v5223
        %v5225 = vmul.f32 %v5209, %v5209
        %v5226 = vmul.f32 %v5210, %v5210
        %v5227 = vmul.f32 %v5211, %v5211
        %v5228 = vmul.f32 %v5212, %v5212
        %v5229 = vadd.f32 %v5225, %v5226
        %v5230 = vadd.f32 %v5229, %v5227
        %v5231 = vadd.f32 %v5230, %v5228
        %5232 = vadd.xlane.f32.xlu0 %v5231
        %v5233 = vpop.xlane.xlu0 %5232
        %v5234 = vrot.slane %v5233, 4
        %v5235 = vadd.f32 %v5233, %v5234
        %v5236 = vrot.slane %v5235, 2
        %v5237 = vadd.f32 %v5235, %v5236
        %v5238 = vrot.slane %v5237, 1
        %v5239 = vadd.f32 %v5237, %v5238
        %s5240 = vtos %v5239
        %s5241 = sadd.s32 %s4552, 45
        %s5242 = sld [smem:[#allocation3 + %s5241]]
        %v5243 = vstv %s5242
        %v5244 = vmul.f32 %v4487, %v5243
        %v5245 = vmul.f32 %v4488, %v5243
        %v5246 = vmul.f32 %v4489, %v5243
        %v5247 = vmul.f32 %v4490, %v5243
        %s5248 = sadd.s32 %s4552, 46
        %s5249 = sld [smem:[#allocation3 + %s5248]]
        %v5250 = vstv %s5249
        %v5251 = vmul.f32 %v4461, %v5250
        %v5252 = vmul.f32 %v4462, %v5250
        %v5253 = vmul.f32 %v4463, %v5250
        %v5254 = vmul.f32 %v4464, %v5250
        %v5255 = vadd.f32 %v5244, %v5251
        %v5256 = vadd.f32 %v5245, %v5252
        %v5257 = vadd.f32 %v5246, %v5253
        %v5258 = vadd.f32 %v5247, %v5254
        %s5259 = sadd.s32 %s4552, 47
        %s5260 = sld [smem:[#allocation3 + %s5259]]
        %v5261 = vstv %s5260
        %v5262 = vmul.f32 %v4500, %v5261
        %v5263 = vmul.f32 %v4501, %v5261
        %v5264 = vmul.f32 %v4502, %v5261
        %v5265 = vmul.f32 %v4503, %v5261
        %v5266 = vadd.f32 %v5255, %v5262
        %v5267 = vadd.f32 %v5256, %v5263
        %v5268 = vadd.f32 %v5257, %v5264
        %v5269 = vadd.f32 %v5258, %v5265
        %s5270 = sadd.s32 %s4552, 48
        %s5271 = sld [smem:[#allocation3 + %s5270]]
        %v5272 = vstv %s5271
        %v5273 = vmul.f32 %v4512, %v5272
        %v5274 = vmul.f32 %v4513, %v5272
        %v5275 = vmul.f32 %v4514, %v5272
        %v5276 = vmul.f32 %v4515, %v5272
        %v5277 = vadd.f32 %v5266, %v5273
        %v5278 = vadd.f32 %v5267, %v5274
        %v5279 = vadd.f32 %v5268, %v5275
        %v5280 = vadd.f32 %v5269, %v5276
        %s5281 = sadd.s32 %s4552, 49
        %s5282 = sld [smem:[#allocation3 + %s5281]]
        %v5283 = vstv %s5282
        %v5284 = vmul.f32 %v4448, %v5283
        %v5285 = vmul.f32 %v4449, %v5283
        %v5286 = vmul.f32 %v4450, %v5283
        %v5287 = vmul.f32 %v4451, %v5283
        %v5288 = vadd.f32 %v5277, %v5284
        %v5289 = vadd.f32 %v5278, %v5285
        %v5290 = vadd.f32 %v5279, %v5286
        %v5291 = vadd.f32 %v5280, %v5287
        %s5292 = sadd.s32 %s4552, 50
        %s5293 = sld [smem:[#allocation3 + %s5292]]
        %v5294 = vstv %s5293
        %v5295 = vmul.f32 %v4524, %v5294
        %v5296 = vmul.f32 %v4525, %v5294
        %v5297 = vmul.f32 %v4526, %v5294
        %v5298 = vmul.f32 %v4527, %v5294
        %v5299 = vadd.f32 %v5288, %v5295
        %v5300 = vadd.f32 %v5289, %v5296
        %v5301 = vadd.f32 %v5290, %v5297
        %v5302 = vadd.f32 %v5291, %v5298
        %s5303 = sadd.s32 %s4552, 51
        %s5304 = sld [smem:[#allocation3 + %s5303]]
        %v5305 = vstv %s5304
        %v5306 = vmul.f32 %v4536, %v5305
        %v5307 = vmul.f32 %v4537, %v5305
        %v5308 = vmul.f32 %v4538, %v5305
        %v5309 = vmul.f32 %v4539, %v5305
        %v5310 = vadd.f32 %v5299, %v5306
        %v5311 = vadd.f32 %v5300, %v5307
        %v5312 = vadd.f32 %v5301, %v5308
        %v5313 = vadd.f32 %v5302, %v5309
        %s5314 = sadd.s32 %s4552, 52
        %s5315 = sld [smem:[#allocation3 + %s5314]]
        %v5316 = vstv %s5315
        %v5317 = vmul.f32 %v4474, %v5316
        %v5318 = vmul.f32 %v4475, %v5316
        %v5319 = vmul.f32 %v4476, %v5316
        %v5320 = vmul.f32 %v4477, %v5316
        %v5321 = vadd.f32 %v5310, %v5317
        %v5322 = vadd.f32 %v5311, %v5318
        %v5323 = vadd.f32 %v5312, %v5319
        %v5324 = vadd.f32 %v5313, %v5320
        %s5325 = sadd.s32 %s4552, 53
        %s5326 = sld [smem:[#allocation3 + %s5325]]
        %v5327 = vstv %s5326
        %v5328 = vmul.f32 %v4548, %v5327
        %v5329 = vmul.f32 %v4549, %v5327
        %v5330 = vmul.f32 %v4550, %v5327
        %v5331 = vmul.f32 %v4551, %v5327
        %v5332 = vadd.f32 %v5321, %v5328
        %v5333 = vadd.f32 %v5322, %v5329
        %v5334 = vadd.f32 %v5323, %v5330
        %v5335 = vadd.f32 %v5324, %v5331
        %s5336 = sld [smem:[#allocation6 + $0x5]]
        %v5337 = vstv %s5336
        %v5338 = vadd.f32 %v5332, %v5337
        %v5339 = vadd.f32 %v5333, %v5337
        %v5340 = vadd.f32 %v5334, %v5337
        %v5341 = vadd.f32 %v5335, %v5337
        %s5342 = scalar_lea.vmem [#allocation2], 160
        %5343 = vst [vmem:[%s5342] sm:$0xff] %v5338
        %5344 = vst [vmem:[%s5342 + $0x8] sm:$0xff] %v5339
        %5345 = vst [vmem:[%s5342 + $0x10] sm:$0xff] %v5340
        %5346 = vst [vmem:[%s5342 + $0x18] sm:$0xff] %v5341
        %v5347 = vsel %vm4379, %v5338, 0.0
        %v5348 = vsel %vm4379, %v5339, 0.0
        %v5349 = vsel %vm4379, %v5340, 0.0
        %v5350 = vsel %vm4379, %v5341, 0.0
        %v5351 = vadd.f32 %v5347, %v5348
        %v5352 = vadd.f32 %v5351, %v5349
        %v5353 = vadd.f32 %v5352, %v5350
        %5354 = vadd.xlane.f32.xlu0 %v5353
        %v5355 = vpop.xlane.xlu0 %5354
        %v5356 = vrot.slane %v5355, 4
        %v5357 = vadd.f32 %v5355, %v5356
        %v5358 = vrot.slane %v5357, 2
        %v5359 = vadd.f32 %v5357, %v5358
        %v5360 = vrot.slane %v5359, 1
        %v5361 = vadd.f32 %v5359, %v5360
        %s5362 = vtos %v5361
        %v5363 = vmul.f32 %v5347, %v5347
        %v5364 = vmul.f32 %v5348, %v5348
        %v5365 = vmul.f32 %v5349, %v5349
        %v5366 = vmul.f32 %v5350, %v5350
        %v5367 = vadd.f32 %v5363, %v5364
        %v5368 = vadd.f32 %v5367, %v5365
        %v5369 = vadd.f32 %v5368, %v5366
        %5370 = vadd.xlane.f32.xlu0 %v5369
        %v5371 = vpop.xlane.xlu0 %5370
        %v5372 = vrot.slane %v5371, 4
        %v5373 = vadd.f32 %v5371, %v5372
        %v5374 = vrot.slane %v5373, 2
        %v5375 = vadd.f32 %v5373, %v5374
        %v5376 = vrot.slane %v5375, 1
        %v5377 = vadd.f32 %v5375, %v5376
        %s5378 = vtos %v5377
        %s5379 = sadd.s32 %s4552, 54
        %s5380 = sld [smem:[#allocation3 + %s5379]]
        %v5381 = vstv %s5380
        %v5382 = vmul.f32 %v4487, %v5381
        %v5383 = vmul.f32 %v4488, %v5381
        %v5384 = vmul.f32 %v4489, %v5381
        %v5385 = vmul.f32 %v4490, %v5381
        %s5386 = sadd.s32 %s4552, 55
        %s5387 = sld [smem:[#allocation3 + %s5386]]
        %v5388 = vstv %s5387
        %v5389 = vmul.f32 %v4461, %v5388
        %v5390 = vmul.f32 %v4462, %v5388
        %v5391 = vmul.f32 %v4463, %v5388
        %v5392 = vmul.f32 %v4464, %v5388
        %v5393 = vadd.f32 %v5382, %v5389
        %v5394 = vadd.f32 %v5383, %v5390
        %v5395 = vadd.f32 %v5384, %v5391
        %v5396 = vadd.f32 %v5385, %v5392
        %s5397 = sadd.s32 %s4552, 56
        %s5398 = sld [smem:[#allocation3 + %s5397]]
        %v5399 = vstv %s5398
        %v5400 = vmul.f32 %v4500, %v5399
        %v5401 = vmul.f32 %v4501, %v5399
        %v5402 = vmul.f32 %v4502, %v5399
        %v5403 = vmul.f32 %v4503, %v5399
        %v5404 = vadd.f32 %v5393, %v5400
        %v5405 = vadd.f32 %v5394, %v5401
        %v5406 = vadd.f32 %v5395, %v5402
        %v5407 = vadd.f32 %v5396, %v5403
        %s5408 = sadd.s32 %s4552, 57
        %s5409 = sld [smem:[#allocation3 + %s5408]]
        %v5410 = vstv %s5409
        %v5411 = vmul.f32 %v4512, %v5410
        %v5412 = vmul.f32 %v4513, %v5410
        %v5413 = vmul.f32 %v4514, %v5410
        %v5414 = vmul.f32 %v4515, %v5410
        %v5415 = vadd.f32 %v5404, %v5411
        %v5416 = vadd.f32 %v5405, %v5412
        %v5417 = vadd.f32 %v5406, %v5413
        %v5418 = vadd.f32 %v5407, %v5414
        %s5419 = sadd.s32 %s4552, 58
        %s5420 = sld [smem:[#allocation3 + %s5419]]
        %v5421 = vstv %s5420
        %v5422 = vmul.f32 %v4448, %v5421
        %v5423 = vmul.f32 %v4449, %v5421
        %v5424 = vmul.f32 %v4450, %v5421
        %v5425 = vmul.f32 %v4451, %v5421
        %v5426 = vadd.f32 %v5415, %v5422
        %v5427 = vadd.f32 %v5416, %v5423
        %v5428 = vadd.f32 %v5417, %v5424
        %v5429 = vadd.f32 %v5418, %v5425
        %s5430 = sadd.s32 %s4552, 59
        %s5431 = sld [smem:[#allocation3 + %s5430]]
        %v5432 = vstv %s5431
        %v5433 = vmul.f32 %v4524, %v5432
        %v5434 = vmul.f32 %v4525, %v5432
        %v5435 = vmul.f32 %v4526, %v5432
        %v5436 = vmul.f32 %v4527, %v5432
        %v5437 = vadd.f32 %v5426, %v5433
        %v5438 = vadd.f32 %v5427, %v5434
        %v5439 = vadd.f32 %v5428, %v5435
        %v5440 = vadd.f32 %v5429, %v5436
        %s5441 = sadd.s32 %s4552, 60
        %s5442 = sld [smem:[#allocation3 + %s5441]]
        %v5443 = vstv %s5442
        %v5444 = vmul.f32 %v4536, %v5443
        %v5445 = vmul.f32 %v4537, %v5443
        %v5446 = vmul.f32 %v4538, %v5443
        %v5447 = vmul.f32 %v4539, %v5443
        %v5448 = vadd.f32 %v5437, %v5444
        %v5449 = vadd.f32 %v5438, %v5445
        %v5450 = vadd.f32 %v5439, %v5446
        %v5451 = vadd.f32 %v5440, %v5447
        %s5452 = sadd.s32 %s4552, 61
        %s5453 = sld [smem:[#allocation3 + %s5452]]
        %v5454 = vstv %s5453
        %v5455 = vmul.f32 %v4474, %v5454
        %v5456 = vmul.f32 %v4475, %v5454
        %v5457 = vmul.f32 %v4476, %v5454
        %v5458 = vmul.f32 %v4477, %v5454
        %v5459 = vadd.f32 %v5448, %v5455
        %v5460 = vadd.f32 %v5449, %v5456
        %v5461 = vadd.f32 %v5450, %v5457
        %v5462 = vadd.f32 %v5451, %v5458
        %s5463 = sadd.s32 %s4552, 62
        %s5464 = sld [smem:[#allocation3 + %s5463]]
        %v5465 = vstv %s5464
        %v5466 = vmul.f32 %v4548, %v5465
        %v5467 = vmul.f32 %v4549, %v5465
        %v5468 = vmul.f32 %v4550, %v5465
        %v5469 = vmul.f32 %v4551, %v5465
        %v5470 = vadd.f32 %v5459, %v5466
        %v5471 = vadd.f32 %v5460, %v5467
        %v5472 = vadd.f32 %v5461, %v5468
        %v5473 = vadd.f32 %v5462, %v5469
        %s5474 = sld [smem:[#allocation6 + $0x6]]
        %v5475 = vstv %s5474
        %v5476 = vadd.f32 %v5470, %v5475
        %v5477 = vadd.f32 %v5471, %v5475
        %v5478 = vadd.f32 %v5472, %v5475
        %v5479 = vadd.f32 %v5473, %v5475
        %s5480 = scalar_lea.vmem [#allocation2], 192
        %5481 = vst [vmem:[%s5480] sm:$0xff] %v5476
        %5482 = vst [vmem:[%s5480 + $0x8] sm:$0xff] %v5477
        %5483 = vst [vmem:[%s5480 + $0x10] sm:$0xff] %v5478
        %5484 = vst [vmem:[%s5480 + $0x18] sm:$0xff] %v5479
        %v5485 = vsel %vm4379, %v5476, 0.0
        %v5486 = vsel %vm4379, %v5477, 0.0
        %v5487 = vsel %vm4379, %v5478, 0.0
        %v5488 = vsel %vm4379, %v5479, 0.0
        %v5489 = vadd.f32 %v5485, %v5486
        %v5490 = vadd.f32 %v5489, %v5487
        %v5491 = vadd.f32 %v5490, %v5488
        %5492 = vadd.xlane.f32.xlu0 %v5491
        %v5493 = vpop.xlane.xlu0 %5492
        %v5494 = vrot.slane %v5493, 4
        %v5495 = vadd.f32 %v5493, %v5494
        %v5496 = vrot.slane %v5495, 2
        %v5497 = vadd.f32 %v5495, %v5496
        %v5498 = vrot.slane %v5497, 1
        %v5499 = vadd.f32 %v5497, %v5498
        %s5500 = vtos %v5499
        %v5501 = vmul.f32 %v5485, %v5485
        %v5502 = vmul.f32 %v5486, %v5486
        %v5503 = vmul.f32 %v5487, %v5487
        %v5504 = vmul.f32 %v5488, %v5488
        %v5505 = vadd.f32 %v5501, %v5502
        %v5506 = vadd.f32 %v5505, %v5503
        %v5507 = vadd.f32 %v5506, %v5504
        %5508 = vadd.xlane.f32.xlu0 %v5507
        %v5509 = vpop.xlane.xlu0 %5508
        %v5510 = vrot.slane %v5509, 4
        %v5511 = vadd.f32 %v5509, %v5510
        %v5512 = vrot.slane %v5511, 2
        %v5513 = vadd.f32 %v5511, %v5512
        %v5514 = vrot.slane %v5513, 1
        %v5515 = vadd.f32 %v5513, %v5514
        %s5516 = vtos %v5515
        %s5517 = sadd.s32 %s4552, 63
        %s5518 = sld [smem:[#allocation3 + %s5517]]
        %v5519 = vstv %s5518
        %v5520 = vmul.f32 %v4487, %v5519
        %v5521 = vmul.f32 %v4488, %v5519
        %v5522 = vmul.f32 %v4489, %v5519
        %v5523 = vmul.f32 %v4490, %v5519
        %s5524 = sadd.s32 %s4552, 64
        %s5525 = sld [smem:[#allocation3 + %s5524]]
        %v5526 = vstv %s5525
        %v5527 = vmul.f32 %v4461, %v5526
        %v5528 = vmul.f32 %v4462, %v5526
        %v5529 = vmul.f32 %v4463, %v5526
        %v5530 = vmul.f32 %v4464, %v5526
        %v5531 = vadd.f32 %v5520, %v5527
        %v5532 = vadd.f32 %v5521, %v5528
        %v5533 = vadd.f32 %v5522, %v5529
        %v5534 = vadd.f32 %v5523, %v5530
        %s5535 = sadd.s32 %s4552, 65
        %s5536 = sld [smem:[#allocation3 + %s5535]]
        %v5537 = vstv %s5536
        %v5538 = vmul.f32 %v4500, %v5537
        %v5539 = vmul.f32 %v4501, %v5537
        %v5540 = vmul.f32 %v4502, %v5537
        %v5541 = vmul.f32 %v4503, %v5537
        %v5542 = vadd.f32 %v5531, %v5538
        %v5543 = vadd.f32 %v5532, %v5539
        %v5544 = vadd.f32 %v5533, %v5540
        %v5545 = vadd.f32 %v5534, %v5541
        %s5546 = sadd.s32 %s4552, 66
        %s5547 = sld [smem:[#allocation3 + %s5546]]
        %v5548 = vstv %s5547
        %v5549 = vmul.f32 %v4512, %v5548
        %v5550 = vmul.f32 %v4513, %v5548
        %v5551 = vmul.f32 %v4514, %v5548
        %v5552 = vmul.f32 %v4515, %v5548
        %v5553 = vadd.f32 %v5542, %v5549
        %v5554 = vadd.f32 %v5543, %v5550
        %v5555 = vadd.f32 %v5544, %v5551
        %v5556 = vadd.f32 %v5545, %v5552
        %s5557 = sadd.s32 %s4552, 67
        %s5558 = sld [smem:[#allocation3 + %s5557]]
        %v5559 = vstv %s5558
        %v5560 = vmul.f32 %v4448, %v5559
        %v5561 = vmul.f32 %v4449, %v5559
        %v5562 = vmul.f32 %v4450, %v5559
        %v5563 = vmul.f32 %v4451, %v5559
        %v5564 = vadd.f32 %v5553, %v5560
        %v5565 = vadd.f32 %v5554, %v5561
        %v5566 = vadd.f32 %v5555, %v5562
        %v5567 = vadd.f32 %v5556, %v5563
        %s5568 = sadd.s32 %s4552, 68
        %s5569 = sld [smem:[#allocation3 + %s5568]]
        %v5570 = vstv %s5569
        %v5571 = vmul.f32 %v4524, %v5570
        %v5572 = vmul.f32 %v4525, %v5570
        %v5573 = vmul.f32 %v4526, %v5570
        %v5574 = vmul.f32 %v4527, %v5570
        %v5575 = vadd.f32 %v5564, %v5571
        %v5576 = vadd.f32 %v5565, %v5572
        %v5577 = vadd.f32 %v5566, %v5573
        %v5578 = vadd.f32 %v5567, %v5574
        %s5579 = sadd.s32 %s4552, 69
        %s5580 = sld [smem:[#allocation3 + %s5579]]
        %v5581 = vstv %s5580
        %v5582 = vmul.f32 %v4536, %v5581
        %v5583 = vmul.f32 %v4537, %v5581
        %v5584 = vmul.f32 %v4538, %v5581
        %v5585 = vmul.f32 %v4539, %v5581
        %v5586 = vadd.f32 %v5575, %v5582
        %v5587 = vadd.f32 %v5576, %v5583
        %v5588 = vadd.f32 %v5577, %v5584
        %v5589 = vadd.f32 %v5578, %v5585
        %s5590 = sadd.s32 %s4552, 70
        %s5591 = sld [smem:[#allocation3 + %s5590]]
        %v5592 = vstv %s5591
        %v5593 = vmul.f32 %v4474, %v5592
        %v5594 = vmul.f32 %v4475, %v5592
        %v5595 = vmul.f32 %v4476, %v5592
        %v5596 = vmul.f32 %v4477, %v5592
        %v5597 = vadd.f32 %v5586, %v5593
        %v5598 = vadd.f32 %v5587, %v5594
        %v5599 = vadd.f32 %v5588, %v5595
        %v5600 = vadd.f32 %v5589, %v5596
        %s5601 = sadd.s32 %s4552, 71
        %s5602 = sld [smem:[#allocation3 + %s5601]]
        %v5603 = vstv %s5602
        %v5604 = vmul.f32 %v4548, %v5603
        %v5605 = vmul.f32 %v4549, %v5603
        %v5606 = vmul.f32 %v4550, %v5603
        %v5607 = vmul.f32 %v4551, %v5603
        %v5608 = vadd.f32 %v5597, %v5604
        %v5609 = vadd.f32 %v5598, %v5605
        %v5610 = vadd.f32 %v5599, %v5606
        %v5611 = vadd.f32 %v5600, %v5607
        %s5612 = sld [smem:[#allocation6 + $0x7]]
        %v5613 = vstv %s5612
        %v5614 = vadd.f32 %v5608, %v5613
        %v5615 = vadd.f32 %v5609, %v5613
        %v5616 = vadd.f32 %v5610, %v5613
        %v5617 = vadd.f32 %v5611, %v5613
        %s5618 = scalar_lea.vmem [#allocation2], 224
        %5619 = vst [vmem:[%s5618] sm:$0xff] %v5614
        %5620 = vst [vmem:[%s5618 + $0x8] sm:$0xff] %v5615
        %5621 = vst [vmem:[%s5618 + $0x10] sm:$0xff] %v5616
        %5622 = vst [vmem:[%s5618 + $0x18] sm:$0xff] %v5617
        %v5623 = vsel %vm4379, %v5614, 0.0
        %v5624 = vsel %vm4379, %v5615, 0.0
        %v5625 = vsel %vm4379, %v5616, 0.0
        %v5626 = vsel %vm4379, %v5617, 0.0
        %v5627 = vadd.f32 %v5623, %v5624
        %v5628 = vadd.f32 %v5627, %v5625
        %v5629 = vadd.f32 %v5628, %v5626
        %5630 = vadd.xlane.f32.xlu0 %v5629
        %v5631 = vpop.xlane.xlu0 %5630
        %v5632 = vrot.slane %v5631, 4
        %v5633 = vadd.f32 %v5631, %v5632
        %v5634 = vrot.slane %v5633, 2
        %v5635 = vadd.f32 %v5633, %v5634
        %v5636 = vrot.slane %v5635, 1
        %v5637 = vadd.f32 %v5635, %v5636
        %s5638 = vtos %v5637
        %v5639 = vmul.f32 %v5623, %v5623
        %v5640 = vmul.f32 %v5624, %v5624
        %v5641 = vmul.f32 %v5625, %v5625
        %v5642 = vmul.f32 %v5626, %v5626
        %v5643 = vadd.f32 %v5639, %v5640
        %v5644 = vadd.f32 %v5643, %v5641
        %v5645 = vadd.f32 %v5644, %v5642
        %5646 = vadd.xlane.f32.xlu0 %v5645
        %v5647 = vpop.xlane.xlu0 %5646
        %v5648 = vrot.slane %v5647, 4
        %v5649 = vadd.f32 %v5647, %v5648
        %v5650 = vrot.slane %v5649, 2
        %v5651 = vadd.f32 %v5649, %v5650
        %v5652 = vrot.slane %v5651, 1
        %v5653 = vadd.f32 %v5651, %v5652
        %s5654 = vtos %v5653
        %s5655 = sld [smem:[#allocation12]]
        %s5656 = sld [smem:[#allocation12 + $0x1]]
        %s5657 = sld [smem:[#allocation12 + $0x2]]
        %s5658 = smul.f32 %s4672, 0.0034722222
        %s5659 = smul.f32 %s4688, 0.0034722222
        %s5660 = smul.f32 %s5658, %s5658
        %s5661 = ssub.f32 %s5659, %s5660
        %s5662 = smax.f32 %s5661, 0.0
        %s5663 = sld [smem:[#allocation8]]
        %s5664 = sadd.f32 %s5662, 1e-05
        %v5665 = vstv %s5664
        %v5666 = vrsqrt.pop %v5665
        %s5667 = vtos %v5666
        %s5668 = smul.f32 %s5663, %s5667
        %s5669 = sld [smem:[#allocation9]]
        %s5670 = smul.f32 %s5658, %s5668
        %s5671 = ssub.f32 %s5669, %s5670
        %v5672 = vld [vmem:[#allocation2] sm:$0xff]
        %v5673 = vld [vmem:[#allocation2 + $0x8] sm:$0xff]
        %v5674 = vld [vmem:[#allocation2 + $0x10] sm:$0xff]
        %v5675 = vld [vmem:[#allocation2 + $0x18] sm:$0xff]
        %v5676 = vstv %s5668
        %v5677 = vmul.f32 %v5672, %v5676
        %v5678 = vmul.f32 %v5673, %v5676
        %v5679 = vmul.f32 %v5674, %v5676
        %v5680 = vmul.f32 %v5675, %v5676
        %v5681 = vstv %s5671
        %v5682 = vadd.f32 %v5677, %v5681
        %v5683 = vadd.f32 %v5678, %v5681
        %v5684 = vadd.f32 %v5679, %v5681
        %v5685 = vadd.f32 %v5680, %v5681
        %v5686 = vmax.f32 %v5682, 0.0
        %v5687 = vmax.f32 %v5683, 0.0
        %v5688 = vmax.f32 %v5684, 0.0
        %v5689 = vmax.f32 %v5685, 0.0
        %s5690 = sld [smem:[#allocation11]]
        %v5691 = vstv %s5690
        %v5692 = vmul.f32 %v5686, %v5691
        %v5693 = vmul.f32 %v5687, %v5691
        %v5694 = vmul.f32 %v5688, %v5691
        %v5695 = vmul.f32 %v5689, %v5691
        %s5696 = smul.f32 %s4810, 0.0034722222
        %s5697 = smul.f32 %s4826, 0.0034722222
        %s5698 = smul.f32 %s5696, %s5696
        %s5699 = ssub.f32 %s5697, %s5698
        %s5700 = smax.f32 %s5699, 0.0
        %s5701 = sld [smem:[#allocation8 + $0x1]]
        %s5702 = sadd.f32 %s5700, 1e-05
        %v5703 = vstv %s5702
        %v5704 = vrsqrt.pop %v5703
        %s5705 = vtos %v5704
        %s5706 = smul.f32 %s5701, %s5705
        %s5707 = sld [smem:[#allocation9 + $0x1]]
        %s5708 = smul.f32 %s5696, %s5706
        %s5709 = ssub.f32 %s5707, %s5708
        %v5710 = vld [vmem:[%s4790] sm:$0xff]
        %v5711 = vld [vmem:[%s4790 + $0x8] sm:$0xff]
        %v5712 = vld [vmem:[%s4790 + $0x10] sm:$0xff]
        %v5713 = vld [vmem:[%s4790 + $0x18] sm:$0xff]
        %v5714 = vstv %s5706
        %v5715 = vmul.f32 %v5710, %v5714
        %v5716 = vmul.f32 %v5711, %v5714
        %v5717 = vmul.f32 %v5712, %v5714
        %v5718 = vmul.f32 %v5713, %v5714
        %v5719 = vstv %s5709
        %v5720 = vadd.f32 %v5715, %v5719
        %v5721 = vadd.f32 %v5716, %v5719
        %v5722 = vadd.f32 %v5717, %v5719
        %v5723 = vadd.f32 %v5718, %v5719
        %v5724 = vmax.f32 %v5720, 0.0
        %v5725 = vmax.f32 %v5721, 0.0
        %v5726 = vmax.f32 %v5722, 0.0
        %v5727 = vmax.f32 %v5723, 0.0
        %s5728 = sld [smem:[#allocation11 + $0x1]]
        %v5729 = vstv %s5728
        %v5730 = vmul.f32 %v5724, %v5729
        %v5731 = vmul.f32 %v5725, %v5729
        %v5732 = vmul.f32 %v5726, %v5729
        %v5733 = vmul.f32 %v5727, %v5729
        %v5734 = vadd.f32 %v5692, %v5730
        %v5735 = vadd.f32 %v5693, %v5731
        %v5736 = vadd.f32 %v5694, %v5732
        %v5737 = vadd.f32 %v5695, %v5733
        %s5738 = smul.f32 %s4948, 0.0034722222
        %s5739 = smul.f32 %s4964, 0.0034722222
        %s5740 = smul.f32 %s5738, %s5738
        %s5741 = ssub.f32 %s5739, %s5740
        %s5742 = smax.f32 %s5741, 0.0
        %s5743 = sld [smem:[#allocation8 + $0x2]]
        %s5744 = sadd.f32 %s5742, 1e-05
        %v5745 = vstv %s5744
        %v5746 = vrsqrt.pop %v5745
        %s5747 = vtos %v5746
        %s5748 = smul.f32 %s5743, %s5747
        %s5749 = sld [smem:[#allocation9 + $0x2]]
        %s5750 = smul.f32 %s5738, %s5748
        %s5751 = ssub.f32 %s5749, %s5750
        %v5752 = vld [vmem:[%s4928] sm:$0xff]
        %v5753 = vld [vmem:[%s4928 + $0x8] sm:$0xff]
        %v5754 = vld [vmem:[%s4928 + $0x10] sm:$0xff]
        %v5755 = vld [vmem:[%s4928 + $0x18] sm:$0xff]
        %v5756 = vstv %s5748
        %v5757 = vmul.f32 %v5752, %v5756
        %v5758 = vmul.f32 %v5753, %v5756
        %v5759 = vmul.f32 %v5754, %v5756
        %v5760 = vmul.f32 %v5755, %v5756
        %v5761 = vstv %s5751
        %v5762 = vadd.f32 %v5757, %v5761
        %v5763 = vadd.f32 %v5758, %v5761
        %v5764 = vadd.f32 %v5759, %v5761
        %v5765 = vadd.f32 %v5760, %v5761
        %v5766 = vmax.f32 %v5762, 0.0
        %v5767 = vmax.f32 %v5763, 0.0
        %v5768 = vmax.f32 %v5764, 0.0
        %v5769 = vmax.f32 %v5765, 0.0
        %s5770 = sld [smem:[#allocation11 + $0x2]]
        %v5771 = vstv %s5770
        %v5772 = vmul.f32 %v5766, %v5771
        %v5773 = vmul.f32 %v5767, %v5771
        %v5774 = vmul.f32 %v5768, %v5771
        %v5775 = vmul.f32 %v5769, %v5771
        %v5776 = vadd.f32 %v5734, %v5772
        %v5777 = vadd.f32 %v5735, %v5773
        %v5778 = vadd.f32 %v5736, %v5774
        %v5779 = vadd.f32 %v5737, %v5775
        %s5780 = smul.f32 %s5086, 0.0034722222
        %s5781 = smul.f32 %s5102, 0.0034722222
        %s5782 = smul.f32 %s5780, %s5780
        %s5783 = ssub.f32 %s5781, %s5782
        %s5784 = smax.f32 %s5783, 0.0
        %s5785 = sld [smem:[#allocation8 + $0x3]]
        %s5786 = sadd.f32 %s5784, 1e-05
        %v5787 = vstv %s5786
        %v5788 = vrsqrt.pop %v5787
        %s5789 = vtos %v5788
        %s5790 = smul.f32 %s5785, %s5789
        %s5791 = sld [smem:[#allocation9 + $0x3]]
        %s5792 = smul.f32 %s5780, %s5790
        %s5793 = ssub.f32 %s5791, %s5792
        %v5794 = vld [vmem:[%s5066] sm:$0xff]
        %v5795 = vld [vmem:[%s5066 + $0x8] sm:$0xff]
        %v5796 = vld [vmem:[%s5066 + $0x10] sm:$0xff]
        %v5797 = vld [vmem:[%s5066 + $0x18] sm:$0xff]
        %v5798 = vstv %s5790
        %v5799 = vmul.f32 %v5794, %v5798
        %v5800 = vmul.f32 %v5795, %v5798
        %v5801 = vmul.f32 %v5796, %v5798
        %v5802 = vmul.f32 %v5797, %v5798
        %v5803 = vstv %s5793
        %v5804 = vadd.f32 %v5799, %v5803
        %v5805 = vadd.f32 %v5800, %v5803
        %v5806 = vadd.f32 %v5801, %v5803
        %v5807 = vadd.f32 %v5802, %v5803
        %v5808 = vmax.f32 %v5804, 0.0
        %v5809 = vmax.f32 %v5805, 0.0
        %v5810 = vmax.f32 %v5806, 0.0
        %v5811 = vmax.f32 %v5807, 0.0
        %s5812 = sld [smem:[#allocation11 + $0x3]]
        %v5813 = vstv %s5812
        %v5814 = vmul.f32 %v5808, %v5813
        %v5815 = vmul.f32 %v5809, %v5813
        %v5816 = vmul.f32 %v5810, %v5813
        %v5817 = vmul.f32 %v5811, %v5813
        %v5818 = vadd.f32 %v5776, %v5814
        %v5819 = vadd.f32 %v5777, %v5815
        %v5820 = vadd.f32 %v5778, %v5816
        %v5821 = vadd.f32 %v5779, %v5817
        %s5822 = smul.f32 %s5224, 0.0034722222
        %s5823 = smul.f32 %s5240, 0.0034722222
        %s5824 = smul.f32 %s5822, %s5822
        %s5825 = ssub.f32 %s5823, %s5824
        %s5826 = smax.f32 %s5825, 0.0
        %s5827 = sld [smem:[#allocation8 + $0x4]]
        %s5828 = sadd.f32 %s5826, 1e-05
        %v5829 = vstv %s5828
        %v5830 = vrsqrt.pop %v5829
        %s5831 = vtos %v5830
        %s5832 = smul.f32 %s5827, %s5831
        %s5833 = sld [smem:[#allocation9 + $0x4]]
        %s5834 = smul.f32 %s5822, %s5832
        %s5835 = ssub.f32 %s5833, %s5834
        %v5836 = vld [vmem:[%s5204] sm:$0xff]
        %v5837 = vld [vmem:[%s5204 + $0x8] sm:$0xff]
        %v5838 = vld [vmem:[%s5204 + $0x10] sm:$0xff]
        %v5839 = vld [vmem:[%s5204 + $0x18] sm:$0xff]
        %v5840 = vstv %s5832
        %v5841 = vmul.f32 %v5836, %v5840
        %v5842 = vmul.f32 %v5837, %v5840
        %v5843 = vmul.f32 %v5838, %v5840
        %v5844 = vmul.f32 %v5839, %v5840
        %v5845 = vstv %s5835
        %v5846 = vadd.f32 %v5841, %v5845
        %v5847 = vadd.f32 %v5842, %v5845
        %v5848 = vadd.f32 %v5843, %v5845
        %v5849 = vadd.f32 %v5844, %v5845
        %v5850 = vmax.f32 %v5846, 0.0
        %v5851 = vmax.f32 %v5847, 0.0
        %v5852 = vmax.f32 %v5848, 0.0
        %v5853 = vmax.f32 %v5849, 0.0
        %s5854 = sld [smem:[#allocation11 + $0x4]]
        %v5855 = vstv %s5854
        %v5856 = vmul.f32 %v5850, %v5855
        %v5857 = vmul.f32 %v5851, %v5855
        %v5858 = vmul.f32 %v5852, %v5855
        %v5859 = vmul.f32 %v5853, %v5855
        %v5860 = vadd.f32 %v5818, %v5856
        %v5861 = vadd.f32 %v5819, %v5857
        %v5862 = vadd.f32 %v5820, %v5858
        %v5863 = vadd.f32 %v5821, %v5859
        %s5864 = smul.f32 %s5362, 0.0034722222
        %s5865 = smul.f32 %s5378, 0.0034722222
        %s5866 = smul.f32 %s5864, %s5864
        %s5867 = ssub.f32 %s5865, %s5866
        %s5868 = smax.f32 %s5867, 0.0
        %s5869 = sld [smem:[#allocation8 + $0x5]]
        %s5870 = sadd.f32 %s5868, 1e-05
        %v5871 = vstv %s5870
        %v5872 = vrsqrt.pop %v5871
        %s5873 = vtos %v5872
        %s5874 = smul.f32 %s5869, %s5873
        %s5875 = sld [smem:[#allocation9 + $0x5]]
        %s5876 = smul.f32 %s5864, %s5874
        %s5877 = ssub.f32 %s5875, %s5876
        %v5878 = vld [vmem:[%s5342] sm:$0xff]
        %v5879 = vld [vmem:[%s5342 + $0x8] sm:$0xff]
        %v5880 = vld [vmem:[%s5342 + $0x10] sm:$0xff]
        %v5881 = vld [vmem:[%s5342 + $0x18] sm:$0xff]
        %v5882 = vstv %s5874
        %v5883 = vmul.f32 %v5878, %v5882
        %v5884 = vmul.f32 %v5879, %v5882
        %v5885 = vmul.f32 %v5880, %v5882
        %v5886 = vmul.f32 %v5881, %v5882
        %v5887 = vstv %s5877
        %v5888 = vadd.f32 %v5883, %v5887
        %v5889 = vadd.f32 %v5884, %v5887
        %v5890 = vadd.f32 %v5885, %v5887
        %v5891 = vadd.f32 %v5886, %v5887
        %v5892 = vmax.f32 %v5888, 0.0
        %v5893 = vmax.f32 %v5889, 0.0
        %v5894 = vmax.f32 %v5890, 0.0
        %v5895 = vmax.f32 %v5891, 0.0
        %s5896 = sld [smem:[#allocation11 + $0x5]]
        %v5897 = vstv %s5896
        %v5898 = vmul.f32 %v5892, %v5897
        %v5899 = vmul.f32 %v5893, %v5897
        %v5900 = vmul.f32 %v5894, %v5897
        %v5901 = vmul.f32 %v5895, %v5897
        %v5902 = vadd.f32 %v5860, %v5898
        %v5903 = vadd.f32 %v5861, %v5899
        %v5904 = vadd.f32 %v5862, %v5900
        %v5905 = vadd.f32 %v5863, %v5901
        %s5906 = smul.f32 %s5500, 0.0034722222
        %s5907 = smul.f32 %s5516, 0.0034722222
        %s5908 = smul.f32 %s5906, %s5906
        %s5909 = ssub.f32 %s5907, %s5908
        %s5910 = smax.f32 %s5909, 0.0
        %s5911 = sld [smem:[#allocation8 + $0x6]]
        %s5912 = sadd.f32 %s5910, 1e-05
        %v5913 = vstv %s5912
        %v5914 = vrsqrt.pop %v5913
        %s5915 = vtos %v5914
        %s5916 = smul.f32 %s5911, %s5915
        %s5917 = sld [smem:[#allocation9 + $0x6]]
        %s5918 = smul.f32 %s5906, %s5916
        %s5919 = ssub.f32 %s5917, %s5918
        %v5920 = vld [vmem:[%s5480] sm:$0xff]
        %v5921 = vld [vmem:[%s5480 + $0x8] sm:$0xff]
        %v5922 = vld [vmem:[%s5480 + $0x10] sm:$0xff]
        %v5923 = vld [vmem:[%s5480 + $0x18] sm:$0xff]
        %v5924 = vstv %s5916
        %v5925 = vmul.f32 %v5920, %v5924
        %v5926 = vmul.f32 %v5921, %v5924
        %v5927 = vmul.f32 %v5922, %v5924
        %v5928 = vmul.f32 %v5923, %v5924
        %v5929 = vstv %s5919
        %v5930 = vadd.f32 %v5925, %v5929
        %v5931 = vadd.f32 %v5926, %v5929
        %v5932 = vadd.f32 %v5927, %v5929
        %v5933 = vadd.f32 %v5928, %v5929
        %v5934 = vmax.f32 %v5930, 0.0
        %v5935 = vmax.f32 %v5931, 0.0
        %v5936 = vmax.f32 %v5932, 0.0
        %v5937 = vmax.f32 %v5933, 0.0
        %s5938 = sld [smem:[#allocation11 + $0x6]]
        %v5939 = vstv %s5938
        %v5940 = vmul.f32 %v5934, %v5939
        %v5941 = vmul.f32 %v5935, %v5939
        %v5942 = vmul.f32 %v5936, %v5939
        %v5943 = vmul.f32 %v5937, %v5939
        %v5944 = vadd.f32 %v5902, %v5940
        %v5945 = vadd.f32 %v5903, %v5941
        %v5946 = vadd.f32 %v5904, %v5942
        %v5947 = vadd.f32 %v5905, %v5943
        %s5948 = smul.f32 %s5638, 0.0034722222
        %s5949 = smul.f32 %s5654, 0.0034722222
        %s5950 = smul.f32 %s5948, %s5948
        %s5951 = ssub.f32 %s5949, %s5950
        %s5952 = smax.f32 %s5951, 0.0
        %s5953 = sld [smem:[#allocation8 + $0x7]]
        %s5954 = sadd.f32 %s5952, 1e-05
        %v5955 = vstv %s5954
        %v5956 = vrsqrt.pop %v5955
        %s5957 = vtos %v5956
        %s5958 = smul.f32 %s5953, %s5957
        %s5959 = sld [smem:[#allocation9 + $0x7]]
        %s5960 = smul.f32 %s5948, %s5958
        %s5961 = ssub.f32 %s5959, %s5960
        %v5962 = vld [vmem:[%s5618] sm:$0xff]
        %v5963 = vld [vmem:[%s5618 + $0x8] sm:$0xff]
        %v5964 = vld [vmem:[%s5618 + $0x10] sm:$0xff]
        %v5965 = vld [vmem:[%s5618 + $0x18] sm:$0xff]
        %v5966 = vstv %s5958
        %v5967 = vmul.f32 %v5962, %v5966
        %v5968 = vmul.f32 %v5963, %v5966
        %v5969 = vmul.f32 %v5964, %v5966
        %v5970 = vmul.f32 %v5965, %v5966
        %v5971 = vstv %s5961
        %v5972 = vadd.f32 %v5967, %v5971
        %v5973 = vadd.f32 %v5968, %v5971
        %v5974 = vadd.f32 %v5969, %v5971
        %v5975 = vadd.f32 %v5970, %v5971
        %v5976 = vmax.f32 %v5972, 0.0
        %v5977 = vmax.f32 %v5973, 0.0
        %v5978 = vmax.f32 %v5974, 0.0
        %v5979 = vmax.f32 %v5975, 0.0
        %s5980 = sld [smem:[#allocation11 + $0x7]]
        %v5981 = vstv %s5980
        %v5982 = vmul.f32 %v5976, %v5981
        %v5983 = vmul.f32 %v5977, %v5981
        %v5984 = vmul.f32 %v5978, %v5981
        %v5985 = vmul.f32 %v5979, %v5981
        %v5986 = vadd.f32 %v5944, %v5982
        %v5987 = vadd.f32 %v5945, %v5983
        %v5988 = vadd.f32 %v5946, %v5984
        %v5989 = vadd.f32 %v5947, %v5985
        %v5990 = vstv %s5655
        %v5991 = vadd.f32 %v5986, %v5990
        %v5992 = vadd.f32 %v5987, %v5990
        %v5993 = vadd.f32 %v5988, %v5990
        %v5994 = vadd.f32 %v5989, %v5990
        %v5995 = vxor.u32 %v5991, 2147483648
        %v5996 = vxor.u32 %v5992, 2147483648
        %v5997 = vxor.u32 %v5993, 2147483648
        %v5998 = vxor.u32 %v5994, 2147483648
        %v5999 = vmul.f32 %v5995, 1.442695
        %v6000 = vpow.pop %v5999
        %v6001 = vmul.f32 %v5996, 1.442695
        %v6002 = vpow.pop %v6001
        %v6003 = vmul.f32 %v5997, 1.442695
        %v6004 = vpow.pop %v6003
        %v6005 = vmul.f32 %v5998, 1.442695
        %v6006 = vpow.pop %v6005
        %v6007 = vadd.f32 %v6000, 1.0
        %v6008 = vadd.f32 %v6002, 1.0
        %v6009 = vadd.f32 %v6004, 1.0
        %v6010 = vadd.f32 %v6006, 1.0
        %v6011 = vrcp.pop %v6007
        %v6012 = vmul.f32 1.0, %v6011
        %v6013 = vrcp.pop %v6008
        %v6014 = vmul.f32 1.0, %v6013
        %v6015 = vrcp.pop %v6009
        %v6016 = vmul.f32 1.0, %v6015
        %v6017 = vrcp.pop %v6010
        %v6018 = vmul.f32 1.0, %v6017
        %v6019 = vstv %s5656
        %v6020 = vsub.f32 %v6012, %v6019
        %v6021 = vsub.f32 %v6014, %v6019
        %v6022 = vsub.f32 %v6016, %v6019
        %v6023 = vsub.f32 %v6018, %v6019
        %v6024 = vstv %s5657
        %v6025 = vmul.f32 %v6020, %v6024
        %v6026 = vmul.f32 %v6021, %v6024
        %v6027 = vmul.f32 %v6022, %v6024
        %v6028 = vmul.f32 %v6023, %v6024
        %v6029 = vxor.u32 %v6025, 2147483648
        %v6030 = vxor.u32 %v6026, 2147483648
        %v6031 = vxor.u32 %v6027, 2147483648
        %v6032 = vxor.u32 %v6028, 2147483648
        %v6033 = vmul.f32 %v6029, 1.442695
        %v6034 = vpow.pop %v6033
        %v6035 = vmul.f32 %v6030, 1.442695
        %v6036 = vpow.pop %v6035
        %v6037 = vmul.f32 %v6031, 1.442695
        %v6038 = vpow.pop %v6037
        %v6039 = vmul.f32 %v6032, 1.442695
        %v6040 = vpow.pop %v6039
        %v6041 = vadd.f32 %v6034, 1.0
        %v6042 = vadd.f32 %v6036, 1.0
        %v6043 = vadd.f32 %v6038, 1.0
        %v6044 = vadd.f32 %v6040, 1.0
        %v6045 = vrcp.pop %v6041
        %v6046 = vmul.f32 1.0, %v6045
        %v6047 = vrcp.pop %v6042
        %v6048 = vmul.f32 1.0, %v6047
        %v6049 = vrcp.pop %v6043
        %v6050 = vmul.f32 1.0, %v6049
        %v6051 = vrcp.pop %v6044
        %v6052 = vmul.f32 1.0, %v6051
        %v6053 = vmul.f32 %v6012, %v6046
        %v6054 = vmul.f32 %v6014, %v6048
        %v6055 = vmul.f32 %v6016, %v6050
        %v6056 = vmul.f32 %v6018, %v6052
        %v6057 = vmax.f32 %v6053, 0.0
        %v6058 = vmax.f32 %v6054, 0.0
        %v6059 = vmax.f32 %v6055, 0.0
        %v6060 = vmax.f32 %v6056, 0.0
        %v6061 = vmin.f32 %v6057, 5.0
        %v6062 = vmin.f32 %v6058, 5.0
        %v6063 = vmin.f32 %v6059, 5.0
        %v6064 = vmin.f32 %v6060, 5.0
        %6065 = vst [vmem:[%s514] sm:$0xff] %v6061
        %6066 = vst [vmem:[%s514 + $0x8] sm:$0xff] %v6062
        %6067 = vst [vmem:[%s514 + $0x10] sm:$0xff] %v6063
        %6068 = vst [vmem:[%s514 + $0x18] sm:$0xff] %v6064
        %v6069 = vsub.f32 1.0, %v6046
        %v6070 = vsub.f32 1.0, %v6048
        %v6071 = vsub.f32 1.0, %v6050
        %v6072 = vsub.f32 1.0, %v6052
        %v6073 = vmul.f32 %v6012, %v6069
        %v6074 = vmul.f32 %v6014, %v6070
        %v6075 = vmul.f32 %v6016, %v6071
        %v6076 = vmul.f32 %v6018, %v6072
        %v6077 = vmax.f32 %v6073, 0.0
        %v6078 = vmax.f32 %v6074, 0.0
        %v6079 = vmax.f32 %v6075, 0.0
        %v6080 = vmax.f32 %v6076, 0.0
        %v6081 = vmin.f32 %v6077, 5.0
        %v6082 = vmin.f32 %v6078, 5.0
        %v6083 = vmin.f32 %v6079, 5.0
        %v6084 = vmin.f32 %v6080, 5.0
        %6085 = vst [vmem:[%s521] sm:$0xff] %v6081
        %6086 = vst [vmem:[%s521 + $0x8] sm:$0xff] %v6082
        %6087 = vst [vmem:[%s521 + $0x10] sm:$0xff] %v6083
        %6088 = vst [vmem:[%s521 + $0x18] sm:$0xff] %v6084
        %s6089 = sand.u32 %s279, 1
        %s6090 = scalar_lea.sflag [#allocation4], %s6089
        %s6091 = sand.u32 %s279, 1
        %s6092 = smul.addr %s6091, 32
        %s6093 = scalar_lea.vmem [#allocation14], %s6092
        %s6094 = sand.u32 %s35, 1
        %s6095 = scalar_lea.sflag [#allocation16], %s6094
        %s6096 = sand.u32 %s305, 1
        %s6097 = smul.addr %s6096, 32
        %s6098 = scalar_lea.vmem [#allocation15], %s6097
        %s6099 = sand.u32 %s35, 1
        %s6100 = scalar_lea.sflag [#allocation16], %s6099
        %s6101 = sand.u32 %s331, 1
        %s6102 = smul.addr %s6101, 32
        %s6103 = scalar_lea.vmem [#allocation17], %s6102
        // Predicated region
        $region89: #{tpu_custom_call.1} parent=63 // pred_check
          %p6104 = pneg %p289
        $region90: #{tpu_custom_call.1} parent=63 // pred_check_branch
          %6106 = sbr.rel (%p6104) target = $region92
        $region91: #{tpu_custom_call.1} parent=63 // pred_region
          %s6108 = ssub.s32 512, 512
          %6109 = vsyncadd %s6090, %s6108
          %s6110 = smul.addr %s35, 4
          %s6111 = smul.addr %s6110, 128
          %s6112 = scalar_lea.hbm %s11, %s6111
          %s6113 = sshll.u32 %s6093, 4
          %s6114 = int_to_ptr.vmem [resolvable:$true] %s6113
          %6119 = dma.vmem_to_hbm [thread:$0]  %s6114, 512, %s6112, %s6090, 128, 128, 8
        $region92: #{tpu_custom_call.1} parent=63 // pred_fallthru
          _
        // Predicated region
        $region93: #{tpu_custom_call.1} parent=63 // pred_check
          %p6120 = pneg %p315
        $region94: #{tpu_custom_call.1} parent=63 // pred_check_branch
          %6122 = sbr.rel (%p6120) target = $region96
        $region95: #{tpu_custom_call.1} parent=63 // pred_region
          %s6124 = ssub.s32 512, 512
          %6125 = vsyncadd %s6095, %s6124
          %s6126 = smul.addr %s35, 4
          %s6127 = smul.addr %s6126, 128
          %s6128 = scalar_lea.hbm %s12, %s6127
          %s6129 = sshll.u32 %s6098, 4
          %s6130 = int_to_ptr.vmem [resolvable:$true] %s6129
          %6135 = dma.vmem_to_hbm [thread:$0]  %s6130, 512, %s6128, %s6095, 128, 128, 8
        $region96: #{tpu_custom_call.1} parent=63 // pred_fallthru
          _
        // Predicated region
        $region97: #{tpu_custom_call.1} parent=63 // pred_check
          %p6136 = pneg %p341
        $region98: #{tpu_custom_call.1} parent=63 // pred_check_branch
          %6138 = sbr.rel (%p6136) target = $region100
        $region99: #{tpu_custom_call.1} parent=63 // pred_region
          %s6140 = ssub.s32 512, 512
          %6141 = vsyncadd %s6100, %s6140
          %s6142 = smul.addr %s35, 4
          %s6143 = smul.addr %s6142, 128
          %s6144 = scalar_lea.hbm %s13, %s6143
          %s6145 = sshll.u32 %s6103, 4
          %s6146 = int_to_ptr.vmem [resolvable:$true] %s6145
          %6151 = dma.vmem_to_hbm [thread:$0]  %s6146, 512, %s6144, %s6100, 128, 128, 8
        $region100: #{tpu_custom_call.1} parent=63 // pred_fallthru
          _
      $region64: #{tpu_custom_call.1} parent=5 // pred_fallthru
        _
      %p6152 = scmp.le.s32.totalorder 2, %s30
      // Predicated region
      $region101: #{tpu_custom_call.1} parent=5 // pred_check
        %p6153 = pneg %p6152
      $region102: #{tpu_custom_call.1} parent=5 // pred_check_branch
        %6155 = sbr.rel (%p6153) target = $region104
      $region103: #{tpu_custom_call.1} parent=5 // pred_region
        %s6156 = ssub.s32 %s30, 2
        // Predicated region
        $region105: #{tpu_custom_call.1} parent=103 // pred_check
          %p6157 = pneg %p295
        $region106: #{tpu_custom_call.1} parent=103 // pred_check_branch
          %6159 = sbr.rel (%p6157) target = $region108
        $region107: #{tpu_custom_call.1} parent=103 // pred_region
          %s6160 = sand.u32 %s280, 1
          %s6161 = scalar_lea.sflag [#allocation4], %s6160
          %s6162 = sand.u32 %s280, 1
          %s6163 = smul.addr %s6162, 32
          %s6164 = scalar_lea.vmem [#allocation14], %s6163
          %6165 = dma.done %s6161, 512
        $region108: #{tpu_custom_call.1} parent=103 // pred_fallthru
          _
        // Predicated region
        $region109: #{tpu_custom_call.1} parent=103 // pred_check
          %p6166 = pneg %p321
        $region110: #{tpu_custom_call.1} parent=103 // pred_check_branch
          %6168 = sbr.rel (%p6166) target = $region112
        $region111: #{tpu_custom_call.1} parent=103 // pred_region
          %s6169 = sand.u32 %s36, 1
          %s6170 = scalar_lea.sflag [#allocation16], %s6169
          %s6171 = sand.u32 %s306, 1
          %s6172 = smul.addr %s6171, 32
          %s6173 = scalar_lea.vmem [#allocation15], %s6172
          %6174 = dma.done %s6170, 512
        $region112: #{tpu_custom_call.1} parent=103 // pred_fallthru
          _
        // Predicated region
        $region113: #{tpu_custom_call.1} parent=103 // pred_check
          %p6175 = pneg %p347
        $region114: #{tpu_custom_call.1} parent=103 // pred_check_branch
          %6177 = sbr.rel (%p6175) target = $region116
        $region115: #{tpu_custom_call.1} parent=103 // pred_region
          %s6178 = sand.u32 %s36, 1
          %s6179 = scalar_lea.sflag [#allocation16], %s6178
          %s6180 = sand.u32 %s332, 1
          %s6181 = smul.addr %s6180, 32
          %s6182 = scalar_lea.vmem [#allocation17], %s6181
          %6183 = dma.done %s6179, 512
        $region116: #{tpu_custom_call.1} parent=103 // pred_fallthru
          _
      $region104: #{tpu_custom_call.1} parent=5 // pred_fallthru
        _
    $region6: #{tpu_custom_call.1} parent=1 // loop_footer
      %s34 = sadd.s32 1, %s30
    $region7: #{tpu_custom_call.1} parent=1 // loop_footer_branch
      %29 = sbr.rel target = $region3
    $region8: #{tpu_custom_call.1} parent=1 // loop_exit
      _
    %6184 = vsyncpa [#allocation4], 1
    %s6185 = scalar_lea.sflag [#allocation4], 1
    %6186 = vsyncpa %s6185, 1
    %6187 = vsyncpa [#allocation16], 1
    %s6188 = scalar_lea.sflag [#allocation16], 1
    %6189 = vsyncpa %s6188, 1
    %6190 = vsyncpa [#allocation5], 1
    %s6191 = scalar_lea.sflag [#allocation5], 1
    %6192 = vsyncpa %s6191, 1
    %6193 = vsyncpa [#allocation7], 1
    %6194 = vsyncpa [#allocation10], 1
    %6195 = vsyncpa [#allocation13], 1

</llo_original>
